<compile_context>
chip_gen: v7x
topology: tpu7x:2x2x1
jax: 0.10.0
libtpu: 0.0.40
codegen_flags: <defaults>
</compile_context>

<pallas_src>
import functools

import jax
import jax.numpy as jnp
from jax.experimental import pallas as pl
from jax.experimental.pallas import tpu as pltpu


def _attention_kernel(x_ref, wq_ref, wk_ref, wv_ref, wo_ref, o_ref, *,
                      heads, dim_head, block_b, n, dim):
    m = block_b * n          # rows fed to the projection matmuls
    g = heads * block_b      # (head, batch) pairs batched through attention

    x = x_ref[...].reshape(m, dim)                           # bf16, free reshape
    xh = jnp.broadcast_to(x[None, :, :], (heads, m, dim))    # (h, m, dim)

    # --- Q/K/V projections: head-batched matmuls, bf16 in, f32 accumulate. ---
    def proj(w_ref):
        y = jnp.einsum("hmd,hde->hme", xh, w_ref[...],
                       preferred_element_type=jnp.float32)   # (h, m, dh)
        return y.astype(jnp.bfloat16).reshape(g, n, dim_head)

    q = proj(wq_ref)   # softmax scale already folded into W_q in the wrapper
    k = proj(wk_ref)
    v = proj(wv_ref)

    # --- Scaled dot-product attention, batched over (head, batch). ---
    s = jnp.einsum("gqe,gke->gqk", q, k,
                   preferred_element_type=jnp.float32)        # (g, n, n) f32
    s = s - jnp.max(s, axis=-1, keepdims=True)                # stable softmax (f32)
    p = jnp.exp(s)
    denom = jnp.sum(p, axis=-1, keepdims=True)                # (g, n, 1) f32
    o = jnp.einsum("gqk,gke->gqe", p.astype(jnp.bfloat16), v,
                   preferred_element_type=jnp.float32)        # (g, n, dh) f32
    # Normalize the (n, dim_head) output instead of the (n, n) probabilities;
    # approx reciprocal runs on the otherwise-idle EUP slot.
    o = o * pl.reciprocal(denom, approx=True)
    o = o.astype(jnp.bfloat16).reshape(heads, m, dim_head)    # free reshape

    # --- Output projection: per-head partials on MXU, reduced over heads (VPU).
    # No lane-misaligned concat of head outputs.
    yh = jnp.einsum("hme,hed->hmd", o, wo_ref[...],
                    preferred_element_type=jnp.float32)       # (h, m, dim)
    y = jnp.sum(yh, axis=0)                                   # (m, dim) f32
    # Dropout(p=0.0) is the identity in eval mode.
    o_ref[...] = y.reshape(block_b, n, dim).astype(o_ref.dtype)


def _choose_block_b(b, n, target_rows=256):
    """Pick batch-block so block_b*n approaches the MXU row target, b % block_b == 0,
    and (when possible) at least 2 grid steps remain for v7x's two TensorCores."""
    bb = max(1, min(b, target_rows // max(n, 1)))
    while b % bb:
        bb -= 1
    if bb == b and b > 1:          # keep >= 2 parallel grid steps
        bb = b // 2
        while b % bb:
            bb -= 1
    return max(bb, 1)


def attention_forward(x, w_qkv, w_out, *, heads, dim_head, block_b=None):
    """x: (b, n, dim); w_qkv: (dim, 3*heads*dim_head) (pre-transposed Linear weight,
    columns ordered [Q | K | V]); w_out: (heads*dim_head, dim)."""
    b, n, dim = x.shape
    inner = heads * dim_head
    assert w_qkv.shape == (dim, 3 * inner), w_qkv.shape
    assert w_out.shape == (inner, dim), w_out.shape
    scale = dim_head ** -0.5

    if block_b is None:
        block_b = _choose_block_b(b, n)
    assert b % block_b == 0

    # Head-major weight views prepared once in the wrapper (cheap XLA ops):
    # the kernel then never needs 64-lane head slices.
    w3 = w_qkv.reshape(dim, 3, heads, dim_head).transpose(1, 2, 0, 3)  # (3,h,dim,dh)
    wq = (w3[0] * scale).astype(jnp.bfloat16)   # fold softmax scale into W_q
    wk = w3[1].astype(jnp.bfloat16)
    wv = w3[2].astype(jnp.bfloat16)
    wo = w_out.reshape(heads, dim_head, dim).astype(jnp.bfloat16)
    xb = x.astype(jnp.bfloat16)

    kernel = functools.partial(
        _attention_kernel, heads=heads, dim_head=dim_head,
        block_b=block_b, n=n, dim=dim)

    return pl.pallas_call(
        kernel,
        out_shape=jax.ShapeDtypeStruct((b, n, dim), x.dtype),
        grid=(b // block_b,),
        in_specs=[
            # one batch-block per grid step; last two block dims equal the full
            # array dims -> (8,128) tiling constraint satisfied.
            pl.BlockSpec((block_b, n, dim), lambda i: (i, 0, 0)),
            # weights: constant index_map -> fetched once, kept VMEM-resident.
            pl.BlockSpec((heads, dim, dim_head), lambda i: (0, 0, 0)),
            pl.BlockSpec((heads, dim, dim_head), lambda i: (0, 0, 0)),
            pl.BlockSpec((heads, dim, dim_head), lambda i: (0, 0, 0)),
            pl.BlockSpec((heads, dim_head, dim), lambda i: (0, 0, 0)),
        ],
        out_specs=pl.BlockSpec((block_b, n, dim), lambda i: (i, 0, 0)),
        compiler_params=pltpu.CompilerParams(
            dimension_semantics=("parallel",),
            vmem_limit_bytes=32 * 1024 * 1024,
        ),
    )(xb, wq, wk, wv, wo)


if __name__ == "__main__":
    # Small shapes consistent with the module defaults (heads=8, dim_head=64).
    B, N, DIM = 4, 64, 128
    HEADS, DIM_HEAD = 8, 64
    INNER = HEADS * DIM_HEAD

    key = jax.random.PRNGKey(0)
    k_x, k_qkv, k_out = jax.random.split(key, 3)

    x = jax.random.normal(k_x, (B, N, DIM), dtype=jnp.float32)
    # Fan-in-scaled random weights; stored pre-transposed (in_dim, out_dim).
    w_qkv = jax.random.normal(k_qkv, (DIM, 3 * INNER), dtype=jnp.float32) * (DIM ** -0.5)
    w_out = jax.random.normal(k_out, (INNER, DIM), dtype=jnp.float32) * (INNER ** -0.5)

    fwd = jax.jit(functools.partial(attention_forward, heads=HEADS, dim_head=DIM_HEAD))
    out = fwd(x, w_qkv, w_out)
    jax.block_until_ready(out)

    # Pure-JAX f32 reference of the PyTorch forward.
    def reference(x, w_qkv, w_out):
        qkv = x @ w_qkv
        q, k, v = jnp.split(qkv, 3, axis=-1)

        def to_heads(t):
            return t.reshape(B, N, HEADS, DIM_HEAD).transpose(0, 2, 1, 3)

        q, k, v = map(to_heads, (q, k, v))
        dots = jnp.einsum("bhid,bhjd->bhij", q, k) * (DIM_HEAD ** -0.5)
        attn = jax.nn.softmax(dots, axis=-1)
        o = jnp.einsum("bhij,bhjd->bhid", attn, v)
        o = o.transpose(0, 2, 1, 3).reshape(B, N, INNER)
        return o @ w_out

    ref = reference(x, w_qkv, w_out)
    assert out.shape == ref.shape
    # bf16 operands (f32 accumulation) -> expect ~1e-2 level diffs vs f32 reference.
    assert jnp.allclose(out, ref, atol=5e-2, rtol=5e-2), \
        float(jnp.max(jnp.abs(out - ref)))

    print("KERNEL_OK")
</pallas_src>

<mosaic_0001>
module attributes {stable_mosaic.version = 11 : i64} {
  func.func @_attention_kernel(%arg0: i32, %arg1: memref<2x64x128xbf16, #tpu.memory_space<vmem>>, %arg2: memref<8x128x64xbf16, #tpu.memory_space<vmem>>, %arg3: memref<8x128x64xbf16, #tpu.memory_space<vmem>>, %arg4: memref<8x128x64xbf16, #tpu.memory_space<vmem>>, %arg5: memref<8x64x128xbf16, #tpu.memory_space<vmem>>, %arg6: memref<2x64x128xf32, #tpu.memory_space<vmem>>) attributes {dimension_semantics = [#tpu.dimension_semantics<parallel>], iteration_bounds = array<i64: 2>, scalar_prefetch = 0 : i64, scratch_operands = 0 : i64, tpu.core_type = #tpu.core_type<tc>, window_params = [{transform_indices = @transform_0, window_bounds = array<i64: 2, 64, 128>}, {pipeline_mode = #tpu.pipeline_mode<synchronous>, transform_indices = @transform_1, window_bounds = array<i64: 8, 128, 64>}, {pipeline_mode = #tpu.pipeline_mode<synchronous>, transform_indices = @transform_2, window_bounds = array<i64: 8, 128, 64>}, {pipeline_mode = #tpu.pipeline_mode<synchronous>, transform_indices = @transform_3, window_bounds = array<i64: 8, 128, 64>}, {pipeline_mode = #tpu.pipeline_mode<synchronous>, transform_indices = @transform_4, window_bounds = array<i64: 8, 64, 128>}, {transform_indices = @transform_5, window_bounds = array<i64: 2, 64, 128>}]} {
    %c0 = arith.constant 0 : index
    %c0_0 = arith.constant 0 : index
    %c0_1 = arith.constant 0 : index
    %0 = vector.load %arg1[%c0, %c0_0, %c0_1] : memref<2x64x128xbf16, #tpu.memory_space<vmem>>, vector<2x64x128xbf16>
    %1 = vector.shape_cast %0 : vector<2x64x128xbf16> to vector<128x128xbf16>
    %2 = vector.shape_cast %1 : vector<128x128xbf16> to vector<1x128x128xbf16>
    %3 = vector.shape_cast %2 : vector<1x128x128xbf16> to vector<1x128x128xbf16>
    %4 = vector.broadcast %3 : vector<1x128x128xbf16> to vector<8x128x128xbf16>
    %c0_2 = arith.constant 0 : index
    %c0_3 = arith.constant 0 : index
    %c0_4 = arith.constant 0 : index
    %5 = vector.load %arg2[%c0_2, %c0_3, %c0_4] : memref<8x128x64xbf16, #tpu.memory_space<vmem>>, vector<8x128x64xbf16>
    "tpu.trace_start"() <{level = 10 : i32, message = "hmd,hde->hme"}> : () -> ()
    %cst = arith.constant dense<0.000000e+00> : vector<8x128x64xf32>
    %6 = tpu.matmul %4, %5, %cst {dimension_numbers = #tpu.dot_dimension_numbers<[2], [1], [1], [2], [0, 0, 0, 1, 1, 2], [0], [0]>} : vector<8x128x128xbf16>, vector<8x128x64xbf16>, vector<8x128x64xf32> -> vector<8x128x64xf32>
    "tpu.trace_stop"() : () -> ()
    %7 = arith.truncf %6 : vector<8x128x64xf32> to vector<8x128x64xbf16>
    %8 = vector.shape_cast %7 : vector<8x128x64xbf16> to vector<16x64x64xbf16>
    %c0_5 = arith.constant 0 : index
    %c0_6 = arith.constant 0 : index
    %c0_7 = arith.constant 0 : index
    %9 = vector.load %arg3[%c0_5, %c0_6, %c0_7] : memref<8x128x64xbf16, #tpu.memory_space<vmem>>, vector<8x128x64xbf16>
    "tpu.trace_start"() <{level = 10 : i32, message = "hmd,hde->hme"}> : () -> ()
    %cst_8 = arith.constant dense<0.000000e+00> : vector<8x128x64xf32>
    %10 = tpu.matmul %4, %9, %cst_8 {dimension_numbers = #tpu.dot_dimension_numbers<[2], [1], [1], [2], [0, 0, 0, 1, 1, 2], [0], [0]>} : vector<8x128x128xbf16>, vector<8x128x64xbf16>, vector<8x128x64xf32> -> vector<8x128x64xf32>
    "tpu.trace_stop"() : () -> ()
    %11 = arith.truncf %10 : vector<8x128x64xf32> to vector<8x128x64xbf16>
    %12 = vector.shape_cast %11 : vector<8x128x64xbf16> to vector<16x64x64xbf16>
    %c0_9 = arith.constant 0 : index
    %c0_10 = arith.constant 0 : index
    %c0_11 = arith.constant 0 : index
    %13 = vector.load %arg4[%c0_9, %c0_10, %c0_11] : memref<8x128x64xbf16, #tpu.memory_space<vmem>>, vector<8x128x64xbf16>
    "tpu.trace_start"() <{level = 10 : i32, message = "hmd,hde->hme"}> : () -> ()
    %cst_12 = arith.constant dense<0.000000e+00> : vector<8x128x64xf32>
    %14 = tpu.matmul %4, %13, %cst_12 {dimension_numbers = #tpu.dot_dimension_numbers<[2], [1], [1], [2], [0, 0, 0, 1, 1, 2], [0], [0]>} : vector<8x128x128xbf16>, vector<8x128x64xbf16>, vector<8x128x64xf32> -> vector<8x128x64xf32>
    "tpu.trace_stop"() : () -> ()
    %15 = arith.truncf %14 : vector<8x128x64xf32> to vector<8x128x64xbf16>
    %16 = vector.shape_cast %15 : vector<8x128x64xbf16> to vector<16x64x64xbf16>
    "tpu.trace_start"() <{level = 10 : i32, message = "gqe,gke->gqk"}> : () -> ()
    %cst_13 = arith.constant dense<0.000000e+00> : vector<16x64x64xf32>
    %17 = tpu.matmul %8, %12, %cst_13 {dimension_numbers = #tpu.dot_dimension_numbers<[2], [2], [1], [1], [0, 0, 0, 1, 1, 1], [0], [0]>} : vector<16x64x64xbf16>, vector<16x64x64xbf16>, vector<16x64x64xf32> -> vector<16x64x64xf32>
    "tpu.trace_stop"() : () -> ()
    %cst_14 = arith.constant dense<0xFF800000> : vector<16x64xf32>
    %18 = vector.multi_reduction <maximumf>, %17, %cst_14 [2] : vector<16x64x64xf32> to vector<16x64xf32>
    %19 = vector.shape_cast %18 : vector<16x64xf32> to vector<16x64x1xf32>
    %20 = vector.broadcast %19 : vector<16x64x1xf32> to vector<16x64x64xf32>
    %21 = arith.subf %17, %20 : vector<16x64x64xf32>
    %22 = math.exp %21 : vector<16x64x64xf32>
    %cst_15 = arith.constant dense<0.000000e+00> : vector<16x64xf32>
    %23 = vector.multi_reduction <add>, %22, %cst_15 [2] : vector<16x64x64xf32> to vector<16x64xf32>
    %24 = vector.shape_cast %23 : vector<16x64xf32> to vector<16x64x1xf32>
    %25 = arith.truncf %22 : vector<16x64x64xf32> to vector<16x64x64xbf16>
    "tpu.trace_start"() <{level = 10 : i32, message = "gqk,gke->gqe"}> : () -> ()
    %cst_16 = arith.constant dense<0.000000e+00> : vector<16x64x64xf32>
    %26 = tpu.matmul %25, %16, %cst_16 {dimension_numbers = #tpu.dot_dimension_numbers<[2], [1], [1], [2], [0, 0, 0, 1, 1, 2], [0], [0]>} : vector<16x64x64xbf16>, vector<16x64x64xbf16>, vector<16x64x64xf32> -> vector<16x64x64xf32>
    "tpu.trace_stop"() : () -> ()
    %27 = tpu.reciprocal %24 {approx = true} : vector<16x64x1xf32> -> vector<16x64x1xf32>
    %28 = vector.broadcast %27 : vector<16x64x1xf32> to vector<16x64x64xf32>
    %29 = arith.mulf %26, %28 : vector<16x64x64xf32>
    %30 = arith.truncf %29 : vector<16x64x64xf32> to vector<16x64x64xbf16>
    %31 = vector.shape_cast %30 : vector<16x64x64xbf16> to vector<8x128x64xbf16>
    %c0_17 = arith.constant 0 : index
    %c0_18 = arith.constant 0 : index
    %c0_19 = arith.constant 0 : index
    %32 = vector.load %arg5[%c0_17, %c0_18, %c0_19] : memref<8x64x128xbf16, #tpu.memory_space<vmem>>, vector<8x64x128xbf16>
    "tpu.trace_start"() <{level = 10 : i32, message = "hme,hed->hmd"}> : () -> ()
    %cst_20 = arith.constant dense<0.000000e+00> : vector<8x128x128xf32>
    %33 = tpu.matmul %31, %32, %cst_20 {dimension_numbers = #tpu.dot_dimension_numbers<[2], [1], [1], [2], [0, 0, 0, 1, 1, 2], [0], [0]>} : vector<8x128x64xbf16>, vector<8x64x128xbf16>, vector<8x128x128xf32> -> vector<8x128x128xf32>
    "tpu.trace_stop"() : () -> ()
    %cst_21 = arith.constant dense<0.000000e+00> : vector<128x128xf32>
    %34 = vector.multi_reduction <add>, %33, %cst_21 [0] : vector<8x128x128xf32> to vector<128x128xf32>
    %35 = vector.shape_cast %34 : vector<128x128xf32> to vector<2x64x128xf32>
    %c0_22 = arith.constant 0 : index
    %c0_23 = arith.constant 0 : index
    %c0_24 = arith.constant 0 : index
    %36 = vector.load %arg6[%c0_22, %c0_23, %c0_24] : memref<2x64x128xf32, #tpu.memory_space<vmem>>, vector<2x64x128xf32>
    tpu.vector_store %arg6[%c0_22, %c0_23, %c0_24], %35 {strides = array<i32>} : memref<2x64x128xf32, #tpu.memory_space<vmem>>, vector<2x64x128xf32>,
    return
  }
  func.func @transform_0(%arg0: i32) -> (i32, i32, i32) {
    %c0_i32 = arith.constant 0 : i32
    %c0_i32_0 = arith.constant 0 : i32
    %c0_i32_1 = arith.constant 0 : i32
    return %arg0, %c0_i32, %c0_i32_0 : i32, i32, i32
  }
  func.func @transform_1(%arg0: i32) -> (i32, i32, i32) {
    %c0_i32 = arith.constant 0 : i32
    %c0_i32_0 = arith.constant 0 : i32
    %c0_i32_1 = arith.constant 0 : i32
    %c0_i32_2 = arith.constant 0 : i32
    return %c0_i32, %c0_i32_0, %c0_i32_1 : i32, i32, i32
  }
  func.func @transform_2(%arg0: i32) -> (i32, i32, i32) {
    %c0_i32 = arith.constant 0 : i32
    %c0_i32_0 = arith.constant 0 : i32
    %c0_i32_1 = arith.constant 0 : i32
    %c0_i32_2 = arith.constant 0 : i32
    return %c0_i32, %c0_i32_0, %c0_i32_1 : i32, i32, i32
  }
  func.func @transform_3(%arg0: i32) -> (i32, i32, i32) {
    %c0_i32 = arith.constant 0 : i32
    %c0_i32_0 = arith.constant 0 : i32
    %c0_i32_1 = arith.constant 0 : i32
    %c0_i32_2 = arith.constant 0 : i32
    return %c0_i32, %c0_i32_0, %c0_i32_1 : i32, i32, i32
  }
  func.func @transform_4(%arg0: i32) -> (i32, i32, i32) {
    %c0_i32 = arith.constant 0 : i32
    %c0_i32_0 = arith.constant 0 : i32
    %c0_i32_1 = arith.constant 0 : i32
    %c0_i32_2 = arith.constant 0 : i32
    return %c0_i32, %c0_i32_0, %c0_i32_1 : i32, i32, i32
  }
  func.func @transform_5(%arg0: i32) -> (i32, i32, i32) {
    %c0_i32 = arith.constant 0 : i32
    %c0_i32_0 = arith.constant 0 : i32
    %c0_i32_1 = arith.constant 0 : i32
    return %arg0, %c0_i32, %c0_i32_0 : i32, i32, i32
  }
}

</mosaic_0001>

<llo_original>
// kernel: attention_forward.1
$region0: #{attention_forward.1}
  #allocation0 [shape = 'u32[]', space=smem, size = 0x4, offset = 0x4, fixed_abs, tag = 'smem constant byte address 0x4 - core index']
  #allocation1 [shape = 'u32[144,128]{1,0:T(1,128)}', space=vmem, size = 0x12000, scoped, tag = 'internal scratch']
  %s0 = inlined_call_operand.vmem [shape: bf16[4,64,128], index: 0, kind: input, shape index: {}]
  %s1 = inlined_call_operand.vmem [shape: bf16[8,128,64], index: 1, kind: input, shape index: {}]
  %s2 = inlined_call_operand.vmem [shape: bf16[8,128,64], index: 2, kind: input, shape index: {}]
  %s3 = inlined_call_operand.vmem [shape: bf16[8,128,64], index: 3, kind: input, shape index: {}]
  %s4 = inlined_call_operand.vmem [shape: bf16[8,64,128], index: 4, kind: input, shape index: {}]
  %s5 = inlined_call_operand.hbm [shape: f32[4,64,128], index: 5, kind: output, shape index: {}]
  %s6 = sld [smem:[#allocation0]]
  $region53: #{attention_forward.1} parent=0
    _
  %s8 = ssub.s32 1, %s6
  %s9 = scalar_select 0, %s8, %s6
  $region1: #{attention_forward.1} parent=0
    #allocation2 [shape = 'u8[131072]{0}', space=vmem, size = 0x20000, scoped, tag = 'output window, operand 0']
    #allocation3 [shape = 's32[2]{0}', space=sflag, size = 0x8, scoped, tag = 'scoped memory for attention_forward.1']
    %10 = vsyncpa [#allocation3], 0
    %s11 = scalar_lea.sflag [#allocation3], 1
    %12 = vsyncpa %s11, 0
    loop: start=0, step=1, limit=4
    $region2: #{attention_forward.1} parent=1 // loop_pre_header
      _
    $region3: #{attention_forward.1} parent=1 // loop_header
      %s14 = sphi 0, %s18
      %p15 = scmp.ge.s32.totalorder %s14, 4
      %s24 = sphi 0, %s26
      %s27 = sphi 0, %s24
      %s28 = sphi 0, %s27
      %s44 = sphi 0, %s28
      %s48 = sphi 0, %s48
      %s50 = sphi 0, %s48
      %s51 = sphi 0, %s50
      %s65 = sphi 0, %s51
      %s69 = sphi 0, %s69
      %s71 = sphi 0, %s69
      %s72 = sphi 0, %s71
      %s86 = sphi 0, %s72
      %s90 = sphi 0, %s90
      %s92 = sphi 0, %s90
      %s93 = sphi 0, %s92
      %s107 = sphi 0, %s93
      %s111 = sphi 0, %s111
      %s113 = sphi 0, %s111
      %s114 = sphi 0, %s113
      %s128 = sphi 0, %s114
      %s134 = sphi 0, %s136
      %s137 = sphi 0, %s134
      %s138 = sphi 0, %s137
      %s154 = sphi 0, %s138
    $region4: #{attention_forward.1} parent=1 // loop_header_branch
      %17 = sbr.rel (%p15) target = $region8
    $region5: #{attention_forward.1} parent=1 // loop_body
      %s19 = ssub.s32 %s14, 1
      %s20 = ssub.s32 %s14, 2
      %s21 = sadd.s32 %s14, 1
      %s22 = ssub.s32 %s14, %s21
      %p23 = scmp.eq.s32.totalorder %s22, 0
      %s25 = sadd.s32 %s24, 1
      %s26 = scalar_select %p23, %s24, %s25
      %p29 = pneg %p23
      %p30 = scmp.eq.s32.totalorder %s14, 1
      %p31 = por %p29, %p30
      %p32 = scmp.ne.s32.totalorder %s24, %s27
      %p33 = scmp.eq.s32.totalorder %s14, 0
      %p34 = por %p32, %p33
      %p35 = scmp.ne.s32.totalorder %s24, %s27
      %p36 = scmp.eq.s32.totalorder %s19, 1
      %p37 = por %p35, %p36
      %p38 = scmp.ne.s32.totalorder %s27, %s28
      %p39 = scmp.eq.s32.totalorder %s19, 0
      %p40 = por %p38, %p39
      %p41 = scmp.ne.s32.totalorder %s27, %s28
      %p42 = scmp.eq.s32.totalorder %s20, 1
      %p43 = por %p41, %p42
      %p45 = scmp.ne.s32.totalorder %s28, %s44
      %p46 = scmp.eq.s32.totalorder %s20, 0
      %p47 = por %p45, %p46
      %s49 = sadd.s32 %s48, 1
      %p52 = scmp.eq.s32.totalorder %s14, 1
      %p53 = scmp.ne.s32.totalorder %s48, %s50
      %p54 = scmp.eq.s32.totalorder %s14, 0
      %p55 = por %p53, %p54
      %p56 = scmp.ne.s32.totalorder %s48, %s50
      %p57 = scmp.eq.s32.totalorder %s19, 1
      %p58 = por %p56, %p57
      %p59 = scmp.ne.s32.totalorder %s50, %s51
      %p60 = scmp.eq.s32.totalorder %s19, 0
      %p61 = por %p59, %p60
      %p62 = scmp.ne.s32.totalorder %s50, %s51
      %p63 = scmp.eq.s32.totalorder %s20, 1
      %p64 = por %p62, %p63
      %p66 = scmp.ne.s32.totalorder %s51, %s65
      %p67 = scmp.eq.s32.totalorder %s20, 0
      %p68 = por %p66, %p67
      %s70 = sadd.s32 %s69, 1
      %p73 = scmp.eq.s32.totalorder %s14, 1
      %p74 = scmp.ne.s32.totalorder %s69, %s71
      %p75 = scmp.eq.s32.totalorder %s14, 0
      %p76 = por %p74, %p75
      %p77 = scmp.ne.s32.totalorder %s69, %s71
      %p78 = scmp.eq.s32.totalorder %s19, 1
      %p79 = por %p77, %p78
      %p80 = scmp.ne.s32.totalorder %s71, %s72
      %p81 = scmp.eq.s32.totalorder %s19, 0
      %p82 = por %p80, %p81
      %p83 = scmp.ne.s32.totalorder %s71, %s72
      %p84 = scmp.eq.s32.totalorder %s20, 1
      %p85 = por %p83, %p84
      %p87 = scmp.ne.s32.totalorder %s72, %s86
      %p88 = scmp.eq.s32.totalorder %s20, 0
      %p89 = por %p87, %p88
      %s91 = sadd.s32 %s90, 1
      %p94 = scmp.eq.s32.totalorder %s14, 1
      %p95 = scmp.ne.s32.totalorder %s90, %s92
      %p96 = scmp.eq.s32.totalorder %s14, 0
      %p97 = por %p95, %p96
      %p98 = scmp.ne.s32.totalorder %s90, %s92
      %p99 = scmp.eq.s32.totalorder %s19, 1
      %p100 = por %p98, %p99
      %p101 = scmp.ne.s32.totalorder %s92, %s93
      %p102 = scmp.eq.s32.totalorder %s19, 0
      %p103 = por %p101, %p102
      %p104 = scmp.ne.s32.totalorder %s92, %s93
      %p105 = scmp.eq.s32.totalorder %s20, 1
      %p106 = por %p104, %p105
      %p108 = scmp.ne.s32.totalorder %s93, %s107
      %p109 = scmp.eq.s32.totalorder %s20, 0
      %p110 = por %p108, %p109
      %s112 = sadd.s32 %s111, 1
      %p115 = scmp.eq.s32.totalorder %s14, 1
      %p116 = scmp.ne.s32.totalorder %s111, %s113
      %p117 = scmp.eq.s32.totalorder %s14, 0
      %p118 = por %p116, %p117
      %p119 = scmp.ne.s32.totalorder %s111, %s113
      %p120 = scmp.eq.s32.totalorder %s19, 1
      %p121 = por %p119, %p120
      %p122 = scmp.ne.s32.totalorder %s113, %s114
      %p123 = scmp.eq.s32.totalorder %s19, 0
      %p124 = por %p122, %p123
      %p125 = scmp.ne.s32.totalorder %s113, %s114
      %p126 = scmp.eq.s32.totalorder %s20, 1
      %p127 = por %p125, %p126
      %p129 = scmp.ne.s32.totalorder %s114, %s128
      %p130 = scmp.eq.s32.totalorder %s20, 0
      %p131 = por %p129, %p130
      %s132 = ssub.s32 %s14, %s21
      %p133 = scmp.eq.s32.totalorder %s132, 0
      %s135 = sadd.s32 %s134, 1
      %s136 = scalar_select %p133, %s134, %s135
      %p139 = pneg %p133
      %p140 = scmp.eq.s32.totalorder %s14, 1
      %p141 = por %p139, %p140
      %p142 = scmp.ne.s32.totalorder %s134, %s137
      %p143 = scmp.eq.s32.totalorder %s14, 0
      %p144 = por %p142, %p143
      %p145 = scmp.ne.s32.totalorder %s134, %s137
      %p146 = scmp.eq.s32.totalorder %s19, 1
      %p147 = por %p145, %p146
      %p148 = scmp.ne.s32.totalorder %s137, %s138
      %p149 = scmp.eq.s32.totalorder %s19, 0
      %p150 = por %p148, %p149
      %p151 = scmp.ne.s32.totalorder %s137, %s138
      %p152 = scmp.eq.s32.totalorder %s20, 1
      %p153 = por %p151, %p152
      %p155 = scmp.ne.s32.totalorder %s138, %s154
      %p156 = scmp.eq.s32.totalorder %s20, 0
      %p157 = por %p155, %p156
      %p158 = scmp.le.s32.totalorder 1, %s14
      %p159 = scmp.lt.s32.totalorder %s14, 3
      %p160 = pnand %p158, %p159
      %p161 = pneg %p160
      // Predicated region
      $region9: #{attention_forward.1} parent=5 // pred_check
        _
      $region10: #{attention_forward.1} parent=5 // pred_check_branch
        %163 = sbr.rel (%p160) target = $region12
      $region11: #{attention_forward.1} parent=5 // pred_region
        %s164 = ssub.s32 %s14, 1
        // Predicated region
        $region13: #{attention_forward.1} parent=11 // pred_check
          %p165 = pneg %p61
        $region14: #{attention_forward.1} parent=11 // pred_check_branch
          %167 = sbr.rel (%p165) target = $region16
        $region15: #{attention_forward.1} parent=11 // pred_region
          _
        $region16: #{attention_forward.1} parent=11 // pred_fallthru
          _
        // Predicated region
        $region17: #{attention_forward.1} parent=11 // pred_check
          %p168 = pneg %p82
        $region18: #{attention_forward.1} parent=11 // pred_check_branch
          %170 = sbr.rel (%p168) target = $region20
        $region19: #{attention_forward.1} parent=11 // pred_region
          _
        $region20: #{attention_forward.1} parent=11 // pred_fallthru
          _
        // Predicated region
        $region21: #{attention_forward.1} parent=11 // pred_check
          %p171 = pneg %p103
        $region22: #{attention_forward.1} parent=11 // pred_check_branch
          %173 = sbr.rel (%p171) target = $region24
        $region23: #{attention_forward.1} parent=11 // pred_region
          _
        $region24: #{attention_forward.1} parent=11 // pred_fallthru
          _
        // Predicated region
        $region25: #{attention_forward.1} parent=11 // pred_check
          %p174 = pneg %p124
        $region26: #{attention_forward.1} parent=11 // pred_check_branch
          %176 = sbr.rel (%p174) target = $region28
        $region27: #{attention_forward.1} parent=11 // pred_region
          _
        $region28: #{attention_forward.1} parent=11 // pred_fallthru
          _
      $region12: #{attention_forward.1} parent=5 // pred_fallthru
        _
      %p177 = scmp.lt.s32.totalorder %s14, 2
      // Predicated region
      $region29: #{attention_forward.1} parent=5 // pred_check
        %p178 = pneg %p177
      $region30: #{attention_forward.1} parent=5 // pred_check_branch
        %180 = sbr.rel (%p178) target = $region32
      $region31: #{attention_forward.1} parent=5 // pred_region
        // Predicated region
        $region33: #{attention_forward.1} parent=31 // pred_check
          %p181 = pneg %p34
        $region34: #{attention_forward.1} parent=31 // pred_check_branch
          %183 = sbr.rel (%p181) target = $region36
        $region35: #{attention_forward.1} parent=31 // pred_region
          %s184 = smul.u32 2, %s14
          %p185 = scmp.lt.s32.totalorder %s184, 3
          %s186 = scalar_select %p185, %s184, 3
          %s187 = smul.addr %s186, 8
          %s188 = smul.addr %s187, 4
          %s189 = scalar_lea.vmem %s0, %s188
          %s190 = smul.u32 2, %s14
        $region36: #{attention_forward.1} parent=31 // pred_fallthru
          _
      $region32: #{attention_forward.1} parent=5 // pred_fallthru
        _
      %p191 = scmp.le.s32.totalorder 1, %s14
      %p192 = scmp.lt.s32.totalorder %s14, 3
      %p193 = pnand %p191, %p192
      %p194 = pneg %p193
      // Predicated region
      $region37: #{attention_forward.1} parent=5 // pred_check
        _
      $region38: #{attention_forward.1} parent=5 // pred_check_branch
        %196 = sbr.rel (%p193) target = $region40
      $region39: #{attention_forward.1} parent=5 // pred_region
        %s197 = ssub.s32 %s14, 1
        %s198 = smul.u32 2, %s19
        %p199 = scmp.lt.s32.totalorder %s198, 3
        %s200 = scalar_select %p199, %s198, 3
        %s201 = smul.addr %s200, 8
        %s202 = smul.addr %s201, 4
        %s203 = scalar_lea.vmem %s0, %s202
        %p204 = pneg %p40
        %p205 = pneg %p37
        %p206 = pneg %p61
        %p207 = pneg %p58
        %p208 = pneg %p82
        %p209 = pneg %p79
        %p210 = pneg %p103
        %p211 = pneg %p100
        %p212 = pneg %p124
        %p213 = pneg %p121
        %p214 = pneg %p150
        %p215 = pneg %p147
        %s216 = sand.u32 %s137, 1
        %s217 = scalar_lea.sflag [#allocation3], %s216
        %s218 = sand.u32 %s137, 1
        %s219 = smul.addr %s218, 128
        %s220 = scalar_lea.vmem [#allocation2], %s219
        %s221 = smul.u32 2, %s19
        %p222 = scmp.lt.s32.totalorder %s221, 3
        %s223 = scalar_select %p222, %s221, 3
        %s224 = smul.addr %s223, 8
        %s225 = smul.addr %s224, 4
        %s226 = scalar_lea.vmem %s0, %s225
        %s227 = smul.u32 2, %s19
        %s228 = smul.u32 2, %s19
        %v230 = vld [vmem:[%s226] sm:$0xf]
        %v231 = vld [vmem:[%s226 + $0x4] sm:$0xf]
        %v232 = vld [vmem:[%s226 + $0x8] sm:$0xf]
        %v233 = vld [vmem:[%s226 + $0xc] sm:$0xf]
        %v234 = vld [vmem:[%s226 + $0x10] sm:$0xf]
        %v235 = vld [vmem:[%s226 + $0x14] sm:$0xf]
        %v236 = vld [vmem:[%s226 + $0x18] sm:$0xf]
        %v237 = vld [vmem:[%s226 + $0x1c] sm:$0xf]
        %v238 = vld [vmem:[%s226 + $0x20] sm:$0xf]
        %v239 = vld [vmem:[%s226 + $0x24] sm:$0xf]
        %v240 = vld [vmem:[%s226 + $0x28] sm:$0xf]
        %v241 = vld [vmem:[%s226 + $0x2c] sm:$0xf]
        %v242 = vld [vmem:[%s226 + $0x30] sm:$0xf]
        %v243 = vld [vmem:[%s226 + $0x34] sm:$0xf]
        %v244 = vld [vmem:[%s226 + $0x38] sm:$0xf]
        %v245 = vld [vmem:[%s226 + $0x3c] sm:$0xf]
        %v246 = vld [vmem:[%s1] sm:$0xf]
        %v247 = vld [vmem:[%s1 + $0x4] sm:$0xf]
        %v248 = vld [vmem:[%s1 + $0x8] sm:$0xf]
        %v249 = vld [vmem:[%s1 + $0xc] sm:$0xf]
        %v250 = vld [vmem:[%s1 + $0x10] sm:$0xf]
        %v251 = vld [vmem:[%s1 + $0x14] sm:$0xf]
        %v252 = vld [vmem:[%s1 + $0x18] sm:$0xf]
        %v253 = vld [vmem:[%s1 + $0x1c] sm:$0xf]
        %v254 = vld [vmem:[%s1 + $0x20] sm:$0xf]
        %v255 = vld [vmem:[%s1 + $0x24] sm:$0xf]
        %v256 = vld [vmem:[%s1 + $0x28] sm:$0xf]
        %v257 = vld [vmem:[%s1 + $0x2c] sm:$0xf]
        %v258 = vld [vmem:[%s1 + $0x30] sm:$0xf]
        %v259 = vld [vmem:[%s1 + $0x34] sm:$0xf]
        %v260 = vld [vmem:[%s1 + $0x38] sm:$0xf]
        %v261 = vld [vmem:[%s1 + $0x3c] sm:$0xf]
        %v262 = vld [vmem:[%s1 + $0x40] sm:$0xf]
        %v263 = vld [vmem:[%s1 + $0x44] sm:$0xf]
        %v264 = vld [vmem:[%s1 + $0x48] sm:$0xf]
        %v265 = vld [vmem:[%s1 + $0x4c] sm:$0xf]
        %v266 = vld [vmem:[%s1 + $0x50] sm:$0xf]
        %v267 = vld [vmem:[%s1 + $0x54] sm:$0xf]
        %v268 = vld [vmem:[%s1 + $0x58] sm:$0xf]
        %v269 = vld [vmem:[%s1 + $0x5c] sm:$0xf]
        %v270 = vld [vmem:[%s1 + $0x60] sm:$0xf]
        %v271 = vld [vmem:[%s1 + $0x64] sm:$0xf]
        %v272 = vld [vmem:[%s1 + $0x68] sm:$0xf]
        %v273 = vld [vmem:[%s1 + $0x6c] sm:$0xf]
        %v274 = vld [vmem:[%s1 + $0x70] sm:$0xf]
        %v275 = vld [vmem:[%s1 + $0x74] sm:$0xf]
        %v276 = vld [vmem:[%s1 + $0x78] sm:$0xf]
        %v277 = vld [vmem:[%s1 + $0x7c] sm:$0xf]
        %v278 = vld [vmem:[%s1 + $0x80] sm:$0xf]
        %v279 = vld [vmem:[%s1 + $0x84] sm:$0xf]
        %v280 = vld [vmem:[%s1 + $0x88] sm:$0xf]
        %v281 = vld [vmem:[%s1 + $0x8c] sm:$0xf]
        %v282 = vld [vmem:[%s1 + $0x90] sm:$0xf]
        %v283 = vld [vmem:[%s1 + $0x94] sm:$0xf]
        %v284 = vld [vmem:[%s1 + $0x98] sm:$0xf]
        %v285 = vld [vmem:[%s1 + $0x9c] sm:$0xf]
        %v286 = vld [vmem:[%s1 + $0xa0] sm:$0xf]
        %v287 = vld [vmem:[%s1 + $0xa4] sm:$0xf]
        %v288 = vld [vmem:[%s1 + $0xa8] sm:$0xf]
        %v289 = vld [vmem:[%s1 + $0xac] sm:$0xf]
        %v290 = vld [vmem:[%s1 + $0xb0] sm:$0xf]
        %v291 = vld [vmem:[%s1 + $0xb4] sm:$0xf]
        %v292 = vld [vmem:[%s1 + $0xb8] sm:$0xf]
        %v293 = vld [vmem:[%s1 + $0xbc] sm:$0xf]
        %v294 = vld [vmem:[%s1 + $0xc0] sm:$0xf]
        %v295 = vld [vmem:[%s1 + $0xc4] sm:$0xf]
        %v296 = vld [vmem:[%s1 + $0xc8] sm:$0xf]
        %v297 = vld [vmem:[%s1 + $0xcc] sm:$0xf]
        %v298 = vld [vmem:[%s1 + $0xd0] sm:$0xf]
        %v299 = vld [vmem:[%s1 + $0xd4] sm:$0xf]
        %v300 = vld [vmem:[%s1 + $0xd8] sm:$0xf]
        %v301 = vld [vmem:[%s1 + $0xdc] sm:$0xf]
        %v302 = vld [vmem:[%s1 + $0xe0] sm:$0xf]
        %v303 = vld [vmem:[%s1 + $0xe4] sm:$0xf]
        %v304 = vld [vmem:[%s1 + $0xe8] sm:$0xf]
        %v305 = vld [vmem:[%s1 + $0xec] sm:$0xf]
        %v306 = vld [vmem:[%s1 + $0xf0] sm:$0xf]
        %v307 = vld [vmem:[%s1 + $0xf4] sm:$0xf]
        %v308 = vld [vmem:[%s1 + $0xf8] sm:$0xf]
        %v309 = vld [vmem:[%s1 + $0xfc] sm:$0xf]
        %v310 = vld [vmem:[%s1 + $0x100] sm:$0xf]
        %v311 = vld [vmem:[%s1 + $0x104] sm:$0xf]
        %v312 = vld [vmem:[%s1 + $0x108] sm:$0xf]
        %v313 = vld [vmem:[%s1 + $0x10c] sm:$0xf]
        %v314 = vld [vmem:[%s1 + $0x110] sm:$0xf]
        %v315 = vld [vmem:[%s1 + $0x114] sm:$0xf]
        %v316 = vld [vmem:[%s1 + $0x118] sm:$0xf]
        %v317 = vld [vmem:[%s1 + $0x11c] sm:$0xf]
        %v318 = vld [vmem:[%s1 + $0x120] sm:$0xf]
        %v319 = vld [vmem:[%s1 + $0x124] sm:$0xf]
        %v320 = vld [vmem:[%s1 + $0x128] sm:$0xf]
        %v321 = vld [vmem:[%s1 + $0x12c] sm:$0xf]
        %v322 = vld [vmem:[%s1 + $0x130] sm:$0xf]
        %v323 = vld [vmem:[%s1 + $0x134] sm:$0xf]
        %v324 = vld [vmem:[%s1 + $0x138] sm:$0xf]
        %v325 = vld [vmem:[%s1 + $0x13c] sm:$0xf]
        %v326 = vld [vmem:[%s1 + $0x140] sm:$0xf]
        %v327 = vld [vmem:[%s1 + $0x144] sm:$0xf]
        %v328 = vld [vmem:[%s1 + $0x148] sm:$0xf]
        %v329 = vld [vmem:[%s1 + $0x14c] sm:$0xf]
        %v330 = vld [vmem:[%s1 + $0x150] sm:$0xf]
        %v331 = vld [vmem:[%s1 + $0x154] sm:$0xf]
        %v332 = vld [vmem:[%s1 + $0x158] sm:$0xf]
        %v333 = vld [vmem:[%s1 + $0x15c] sm:$0xf]
        %v334 = vld [vmem:[%s1 + $0x160] sm:$0xf]
        %v335 = vld [vmem:[%s1 + $0x164] sm:$0xf]
        %v336 = vld [vmem:[%s1 + $0x168] sm:$0xf]
        %v337 = vld [vmem:[%s1 + $0x16c] sm:$0xf]
        %v338 = vld [vmem:[%s1 + $0x170] sm:$0xf]
        %v339 = vld [vmem:[%s1 + $0x174] sm:$0xf]
        %v340 = vld [vmem:[%s1 + $0x178] sm:$0xf]
        %v341 = vld [vmem:[%s1 + $0x17c] sm:$0xf]
        %v342 = vld [vmem:[%s1 + $0x180] sm:$0xf]
        %v343 = vld [vmem:[%s1 + $0x184] sm:$0xf]
        %v344 = vld [vmem:[%s1 + $0x188] sm:$0xf]
        %v345 = vld [vmem:[%s1 + $0x18c] sm:$0xf]
        %v346 = vld [vmem:[%s1 + $0x190] sm:$0xf]
        %v347 = vld [vmem:[%s1 + $0x194] sm:$0xf]
        %v348 = vld [vmem:[%s1 + $0x198] sm:$0xf]
        %v349 = vld [vmem:[%s1 + $0x19c] sm:$0xf]
        %v350 = vld [vmem:[%s1 + $0x1a0] sm:$0xf]
        %v351 = vld [vmem:[%s1 + $0x1a4] sm:$0xf]
        %v352 = vld [vmem:[%s1 + $0x1a8] sm:$0xf]
        %v353 = vld [vmem:[%s1 + $0x1ac] sm:$0xf]
        %v354 = vld [vmem:[%s1 + $0x1b0] sm:$0xf]
        %v355 = vld [vmem:[%s1 + $0x1b4] sm:$0xf]
        %v356 = vld [vmem:[%s1 + $0x1b8] sm:$0xf]
        %v357 = vld [vmem:[%s1 + $0x1bc] sm:$0xf]
        %v358 = vld [vmem:[%s1 + $0x1c0] sm:$0xf]
        %v359 = vld [vmem:[%s1 + $0x1c4] sm:$0xf]
        %v360 = vld [vmem:[%s1 + $0x1c8] sm:$0xf]
        %v361 = vld [vmem:[%s1 + $0x1cc] sm:$0xf]
        %v362 = vld [vmem:[%s1 + $0x1d0] sm:$0xf]
        %v363 = vld [vmem:[%s1 + $0x1d4] sm:$0xf]
        %v364 = vld [vmem:[%s1 + $0x1d8] sm:$0xf]
        %v365 = vld [vmem:[%s1 + $0x1dc] sm:$0xf]
        %v366 = vld [vmem:[%s1 + $0x1e0] sm:$0xf]
        %v367 = vld [vmem:[%s1 + $0x1e4] sm:$0xf]
        %v368 = vld [vmem:[%s1 + $0x1e8] sm:$0xf]
        %v369 = vld [vmem:[%s1 + $0x1ec] sm:$0xf]
        %v370 = vld [vmem:[%s1 + $0x1f0] sm:$0xf]
        %v371 = vld [vmem:[%s1 + $0x1f4] sm:$0xf]
        %v372 = vld [vmem:[%s1 + $0x1f8] sm:$0xf]
        %v373 = vld [vmem:[%s1 + $0x1fc] sm:$0xf]
        %v390 = vunpack.c.l.b16 %v230
        %v391 = vunpack.c.l.b16 %v231
        %v392 = vunpack.c.l.b16 %v232
        %v393 = vunpack.c.l.b16 %v233
        %v394 = vunpack.c.l.b16 %v234
        %v395 = vunpack.c.l.b16 %v235
        %v396 = vunpack.c.l.b16 %v236
        %v397 = vunpack.c.l.b16 %v237
        %v398 = vunpack.c.l.b16 %v238
        %v399 = vunpack.c.l.b16 %v239
        %v400 = vunpack.c.l.b16 %v240
        %v401 = vunpack.c.l.b16 %v241
        %v402 = vunpack.c.l.b16 %v242
        %v403 = vunpack.c.l.b16 %v243
        %v404 = vunpack.c.l.b16 %v244
        %v405 = vunpack.c.l.b16 %v245
        %v406 = vpack.c.b16 %v391, %v390
        %v407 = vpack.c.b16 %v393, %v392
        %v408 = vpack.c.b16 %v395, %v394
        %v409 = vpack.c.b16 %v397, %v396
        %v410 = vpack.c.b16 %v399, %v398
        %v411 = vpack.c.b16 %v401, %v400
        %v412 = vpack.c.b16 %v403, %v402
        %v413 = vpack.c.b16 %v405, %v404
        %v438 = vunpack.c.l.b16 %v246
        %v439 = vunpack.c.l.b16 %v247
        %v440 = vunpack.c.l.b16 %v248
        %v441 = vunpack.c.l.b16 %v249
        %v442 = vunpack.c.l.b16 %v250
        %v443 = vunpack.c.l.b16 %v251
        %v444 = vunpack.c.l.b16 %v252
        %v445 = vunpack.c.l.b16 %v253
        %v446 = vunpack.c.l.b16 %v254
        %v447 = vunpack.c.l.b16 %v255
        %v448 = vunpack.c.l.b16 %v256
        %v449 = vunpack.c.l.b16 %v257
        %v450 = vunpack.c.l.b16 %v258
        %v451 = vunpack.c.l.b16 %v259
        %v452 = vunpack.c.l.b16 %v260
        %v453 = vunpack.c.l.b16 %v261
        %v454 = vpack.c.b16 %v439, %v438
        %v455 = vpack.c.b16 %v441, %v440
        %v456 = vpack.c.b16 %v443, %v442
        %v457 = vpack.c.b16 %v445, %v444
        %v458 = vpack.c.b16 %v447, %v446
        %v459 = vpack.c.b16 %v449, %v448
        %v460 = vpack.c.b16 %v451, %v450
        %v461 = vpack.c.b16 %v453, %v452
        %470 = vmatprep.subr.bf16.mxu0 0
        %471 = vmatpush1.bf16.msra.mxu0 %v454
        %472 = vmatprep.subr.bf16.mxu0 0
        %473 = vmatpush1.bf16.msra.mxu0 %v455
        %474 = vmatprep.subr.bf16.mxu0 0
        %475 = vmatpush1.bf16.msra.mxu0 %v456
        %476 = vmatprep.subr.bf16.mxu0 0
        %477 = vmatpush1.bf16.msra.mxu0 %v457
        %478 = vmatprep.subr.bf16.mxu0 0
        %479 = vmatpush1.bf16.msra.mxu0 %v458
        %480 = vmatprep.subr.bf16.mxu0 0
        %481 = vmatpush1.bf16.msra.mxu0 %v459
        %482 = vmatprep.subr.bf16.mxu0 0
        %483 = vmatpush1.bf16.msra.mxu0 %v460
        %484 = vmatprep.subr.bf16.mxu0 0
        %485 = vmatpush1.bf16.msra.mxu0 %v461
        %486 = vmatprep.subr.bf16.mxu0 0
        %487 = vmatpush1.bf16.msra.mxu0 0
        %488 = vmatprep.subr.bf16.mxu0 0
        %489 = vmatpush1.bf16.msra.mxu0 0
        %490 = vmatprep.subr.bf16.mxu0 0
        %491 = vmatpush1.bf16.msra.mxu0 0
        %492 = vmatprep.subr.bf16.mxu0 0
        %493 = vmatpush1.bf16.msra.mxu0 0
        %494 = vmatprep.subr.bf16.mxu0 0
        %495 = vmatpush1.bf16.msra.mxu0 0
        %496 = vmatprep.subr.bf16.mxu0 0
        %497 = vmatpush1.bf16.msra.mxu0 0
        %498 = vmatprep.subr.bf16.mxu0 0
        %499 = vmatpush1.bf16.msra.mxu0 0
        %500 = vmatprep.subr.bf16.mxu0 0
        %501 = vmatpush1.bf16.msra.mxu0 0
        %502 = vmatprep.mubr.bf16.mxu0 0
        %503 = vmatmul.mubr.bf16.gmra.mrb[0].mxu0 %v406
        %v504 = vpop.f32.mrb[0].mxu0
        %v505 = vadd.f32 0.0, %v504
        %v506 = vpop.f32.mrb[0].mxu0
        %v507 = vpop.f32.mrb[0].mxu0
        %v508 = vadd.f32 0.0, %v507
        %v509 = vpop.f32.mrb[0].mxu0
        %510 = vmatprep.mubr.bf16.mxu0 0
        %511 = vmatmul.mubr.bf16.gmra.mrb[0].mxu0 %v407
        %v512 = vpop.f32.mrb[0].mxu0
        %v513 = vadd.f32 0.0, %v512
        %v514 = vpop.f32.mrb[0].mxu0
        %v515 = vpop.f32.mrb[0].mxu0
        %v516 = vadd.f32 0.0, %v515
        %v517 = vpop.f32.mrb[0].mxu0
        %518 = vmatprep.mubr.bf16.mxu0 0
        %519 = vmatmul.mubr.bf16.gmra.mrb[0].mxu0 %v408
        %v520 = vpop.f32.mrb[0].mxu0
        %v521 = vadd.f32 0.0, %v520
        %v522 = vpop.f32.mrb[0].mxu0
        %v523 = vpop.f32.mrb[0].mxu0
        %v524 = vadd.f32 0.0, %v523
        %v525 = vpop.f32.mrb[0].mxu0
        %526 = vmatprep.mubr.bf16.mxu0 0
        %527 = vmatmul.mubr.bf16.gmra.mrb[0].mxu0 %v409
        %v528 = vpop.f32.mrb[0].mxu0
        %v529 = vadd.f32 0.0, %v528
        %v530 = vpop.f32.mrb[0].mxu0
        %v531 = vpop.f32.mrb[0].mxu0
        %v532 = vadd.f32 0.0, %v531
        %v533 = vpop.f32.mrb[0].mxu0
        %534 = vmatprep.mubr.bf16.mxu0 0
        %535 = vmatmul.mubr.bf16.gmra.mrb[0].mxu0 %v410
        %v536 = vpop.f32.mrb[0].mxu0
        %v537 = vadd.f32 0.0, %v536
        %v538 = vpop.f32.mrb[0].mxu0
        %v539 = vpop.f32.mrb[0].mxu0
        %v540 = vadd.f32 0.0, %v539
        %v541 = vpop.f32.mrb[0].mxu0
        %542 = vmatprep.mubr.bf16.mxu0 0
        %543 = vmatmul.mubr.bf16.gmra.mrb[0].mxu0 %v411
        %v544 = vpop.f32.mrb[0].mxu0
        %v545 = vadd.f32 0.0, %v544
        %v546 = vpop.f32.mrb[0].mxu0
        %v547 = vpop.f32.mrb[0].mxu0
        %v548 = vadd.f32 0.0, %v547
        %v549 = vpop.f32.mrb[0].mxu0
        %550 = vmatprep.mubr.bf16.mxu0 0
        %551 = vmatmul.mubr.bf16.gmra.mrb[0].mxu0 %v412
        %v552 = vpop.f32.mrb[0].mxu0
        %v553 = vadd.f32 0.0, %v552
        %v554 = vpop.f32.mrb[0].mxu0
        %v555 = vpop.f32.mrb[0].mxu0
        %v556 = vadd.f32 0.0, %v555
        %v557 = vpop.f32.mrb[0].mxu0
        %558 = vmatprep.mubr.bf16.mxu0 0
        %559 = vmatmul.mubr.bf16.gmra.mrb[0].mxu0 %v413
        %v560 = vpop.f32.mrb[0].mxu0
        %v561 = vadd.f32 0.0, %v560
        %v562 = vpop.f32.mrb[0].mxu0
        %v563 = vpop.f32.mrb[0].mxu0
        %v564 = vadd.f32 0.0, %v563
        %v565 = vpop.f32.mrb[0].mxu0
        %566 = vdwg.mxu0
        %v583 = vunpack.c.l.b16 %v262
        %v584 = vunpack.c.l.b16 %v263
        %v585 = vunpack.c.l.b16 %v264
        %v586 = vunpack.c.l.b16 %v265
        %v587 = vunpack.c.l.b16 %v266
        %v588 = vunpack.c.l.b16 %v267
        %v589 = vunpack.c.l.b16 %v268
        %v590 = vunpack.c.l.b16 %v269
        %v591 = vunpack.c.l.b16 %v270
        %v592 = vunpack.c.l.b16 %v271
        %v593 = vunpack.c.l.b16 %v272
        %v594 = vunpack.c.l.b16 %v273
        %v595 = vunpack.c.l.b16 %v274
        %v596 = vunpack.c.l.b16 %v275
        %v597 = vunpack.c.l.b16 %v276
        %v598 = vunpack.c.l.b16 %v277
        %v599 = vpack.c.b16 %v584, %v583
        %v600 = vpack.c.b16 %v586, %v585
        %v601 = vpack.c.b16 %v588, %v587
        %v602 = vpack.c.b16 %v590, %v589
        %v603 = vpack.c.b16 %v592, %v591
        %v604 = vpack.c.b16 %v594, %v593
        %v605 = vpack.c.b16 %v596, %v595
        %v606 = vpack.c.b16 %v598, %v597
        %615 = vmatprep.subr.bf16.mxu0 0
        %616 = vmatpush1.bf16.msra.mxu0 %v599
        %617 = vmatprep.subr.bf16.mxu0 0
        %618 = vmatpush1.bf16.msra.mxu0 %v600
        %619 = vmatprep.subr.bf16.mxu0 0
        %620 = vmatpush1.bf16.msra.mxu0 %v601
        %621 = vmatprep.subr.bf16.mxu0 0
        %622 = vmatpush1.bf16.msra.mxu0 %v602
        %623 = vmatprep.subr.bf16.mxu0 0
        %624 = vmatpush1.bf16.msra.mxu0 %v603
        %625 = vmatprep.subr.bf16.mxu0 0
        %626 = vmatpush1.bf16.msra.mxu0 %v604
        %627 = vmatprep.subr.bf16.mxu0 0
        %628 = vmatpush1.bf16.msra.mxu0 %v605
        %629 = vmatprep.subr.bf16.mxu0 0
        %630 = vmatpush1.bf16.msra.mxu0 %v606
        %631 = vmatprep.subr.bf16.mxu0 0
        %632 = vmatpush1.bf16.msra.mxu0 0
        %633 = vmatprep.subr.bf16.mxu0 0
        %634 = vmatpush1.bf16.msra.mxu0 0
        %635 = vmatprep.subr.bf16.mxu0 0
        %636 = vmatpush1.bf16.msra.mxu0 0
        %637 = vmatprep.subr.bf16.mxu0 0
        %638 = vmatpush1.bf16.msra.mxu0 0
        %639 = vmatprep.subr.bf16.mxu0 0
        %640 = vmatpush1.bf16.msra.mxu0 0
        %641 = vmatprep.subr.bf16.mxu0 0
        %642 = vmatpush1.bf16.msra.mxu0 0
        %643 = vmatprep.subr.bf16.mxu0 0
        %644 = vmatpush1.bf16.msra.mxu0 0
        %645 = vmatprep.subr.bf16.mxu0 0
        %646 = vmatpush1.bf16.msra.mxu0 0
        %647 = vmatprep.mubr.bf16.mxu0 0
        %648 = vmatmul.mubr.bf16.gmra.mrb[0].mxu0 %v406
        %v649 = vpop.f32.mrb[0].mxu0
        %v650 = vadd.f32 0.0, %v649
        %v651 = vpop.f32.mrb[0].mxu0
        %v652 = vpop.f32.mrb[0].mxu0
        %v653 = vadd.f32 0.0, %v652
        %v654 = vpop.f32.mrb[0].mxu0
        %655 = vmatprep.mubr.bf16.mxu0 0
        %656 = vmatmul.mubr.bf16.gmra.mrb[0].mxu0 %v407
        %v657 = vpop.f32.mrb[0].mxu0
        %v658 = vadd.f32 0.0, %v657
        %v659 = vpop.f32.mrb[0].mxu0
        %v660 = vpop.f32.mrb[0].mxu0
        %v661 = vadd.f32 0.0, %v660
        %v662 = vpop.f32.mrb[0].mxu0
        %663 = vmatprep.mubr.bf16.mxu0 0
        %664 = vmatmul.mubr.bf16.gmra.mrb[0].mxu0 %v408
        %v665 = vpop.f32.mrb[0].mxu0
        %v666 = vadd.f32 0.0, %v665
        %v667 = vpop.f32.mrb[0].mxu0
        %v668 = vpop.f32.mrb[0].mxu0
        %v669 = vadd.f32 0.0, %v668
        %v670 = vpop.f32.mrb[0].mxu0
        %671 = vmatprep.mubr.bf16.mxu0 0
        %672 = vmatmul.mubr.bf16.gmra.mrb[0].mxu0 %v409
        %v673 = vpop.f32.mrb[0].mxu0
        %v674 = vadd.f32 0.0, %v673
        %v675 = vpop.f32.mrb[0].mxu0
        %v676 = vpop.f32.mrb[0].mxu0
        %v677 = vadd.f32 0.0, %v676
        %v678 = vpop.f32.mrb[0].mxu0
        %679 = vmatprep.mubr.bf16.mxu0 0
        %680 = vmatmul.mubr.bf16.gmra.mrb[0].mxu0 %v410
        %v681 = vpop.f32.mrb[0].mxu0
        %v682 = vadd.f32 0.0, %v681
        %v683 = vpop.f32.mrb[0].mxu0
        %v684 = vpop.f32.mrb[0].mxu0
        %v685 = vadd.f32 0.0, %v684
        %v686 = vpop.f32.mrb[0].mxu0
        %687 = vmatprep.mubr.bf16.mxu0 0
        %688 = vmatmul.mubr.bf16.gmra.mrb[0].mxu0 %v411
        %v689 = vpop.f32.mrb[0].mxu0
        %v690 = vadd.f32 0.0, %v689
        %v691 = vpop.f32.mrb[0].mxu0
        %v692 = vpop.f32.mrb[0].mxu0
        %v693 = vadd.f32 0.0, %v692
        %v694 = vpop.f32.mrb[0].mxu0
        %695 = vmatprep.mubr.bf16.mxu0 0
        %696 = vmatmul.mubr.bf16.gmra.mrb[0].mxu0 %v412
        %v697 = vpop.f32.mrb[0].mxu0
        %v698 = vadd.f32 0.0, %v697
        %v699 = vpop.f32.mrb[0].mxu0
        %v700 = vpop.f32.mrb[0].mxu0
        %v701 = vadd.f32 0.0, %v700
        %v702 = vpop.f32.mrb[0].mxu0
        %703 = vmatprep.mubr.bf16.mxu0 0
        %704 = vmatmul.mubr.bf16.gmra.mrb[0].mxu0 %v413
        %v705 = vpop.f32.mrb[0].mxu0
        %v706 = vadd.f32 0.0, %v705
        %v707 = vpop.f32.mrb[0].mxu0
        %v708 = vpop.f32.mrb[0].mxu0
        %v709 = vadd.f32 0.0, %v708
        %v710 = vpop.f32.mrb[0].mxu0
        %711 = vdwg.mxu0
        %v728 = vunpack.c.l.b16 %v278
        %v729 = vunpack.c.l.b16 %v279
        %v730 = vunpack.c.l.b16 %v280
        %v731 = vunpack.c.l.b16 %v281
        %v732 = vunpack.c.l.b16 %v282
        %v733 = vunpack.c.l.b16 %v283
        %v734 = vunpack.c.l.b16 %v284
        %v735 = vunpack.c.l.b16 %v285
        %v736 = vunpack.c.l.b16 %v286
        %v737 = vunpack.c.l.b16 %v287
        %v738 = vunpack.c.l.b16 %v288
        %v739 = vunpack.c.l.b16 %v289
        %v740 = vunpack.c.l.b16 %v290
        %v741 = vunpack.c.l.b16 %v291
        %v742 = vunpack.c.l.b16 %v292
        %v743 = vunpack.c.l.b16 %v293
        %v744 = vpack.c.b16 %v729, %v728
        %v745 = vpack.c.b16 %v731, %v730
        %v746 = vpack.c.b16 %v733, %v732
        %v747 = vpack.c.b16 %v735, %v734
        %v748 = vpack.c.b16 %v737, %v736
        %v749 = vpack.c.b16 %v739, %v738
        %v750 = vpack.c.b16 %v741, %v740
        %v751 = vpack.c.b16 %v743, %v742
        %760 = vmatprep.subr.bf16.mxu0 0
        %761 = vmatpush1.bf16.msra.mxu0 %v744
        %762 = vmatprep.subr.bf16.mxu0 0
        %763 = vmatpush1.bf16.msra.mxu0 %v745
        %764 = vmatprep.subr.bf16.mxu0 0
        %765 = vmatpush1.bf16.msra.mxu0 %v746
        %766 = vmatprep.subr.bf16.mxu0 0
        %767 = vmatpush1.bf16.msra.mxu0 %v747
        %768 = vmatprep.subr.bf16.mxu0 0
        %769 = vmatpush1.bf16.msra.mxu0 %v748
        %770 = vmatprep.subr.bf16.mxu0 0
        %771 = vmatpush1.bf16.msra.mxu0 %v749
        %772 = vmatprep.subr.bf16.mxu0 0
        %773 = vmatpush1.bf16.msra.mxu0 %v750
        %774 = vmatprep.subr.bf16.mxu0 0
        %775 = vmatpush1.bf16.msra.mxu0 %v751
        %776 = vmatprep.subr.bf16.mxu0 0
        %777 = vmatpush1.bf16.msra.mxu0 0
        %778 = vmatprep.subr.bf16.mxu0 0
        %779 = vmatpush1.bf16.msra.mxu0 0
        %780 = vmatprep.subr.bf16.mxu0 0
        %781 = vmatpush1.bf16.msra.mxu0 0
        %782 = vmatprep.subr.bf16.mxu0 0
        %783 = vmatpush1.bf16.msra.mxu0 0
        %784 = vmatprep.subr.bf16.mxu0 0
        %785 = vmatpush1.bf16.msra.mxu0 0
        %786 = vmatprep.subr.bf16.mxu0 0
        %787 = vmatpush1.bf16.msra.mxu0 0
        %788 = vmatprep.subr.bf16.mxu0 0
        %789 = vmatpush1.bf16.msra.mxu0 0
        %790 = vmatprep.subr.bf16.mxu0 0
        %791 = vmatpush1.bf16.msra.mxu0 0
        %792 = vmatprep.mubr.bf16.mxu0 0
        %793 = vmatmul.mubr.bf16.gmra.mrb[0].mxu0 %v406
        %v794 = vpop.f32.mrb[0].mxu0
        %v795 = vadd.f32 0.0, %v794
        %v796 = vpop.f32.mrb[0].mxu0
        %v797 = vpop.f32.mrb[0].mxu0
        %v798 = vadd.f32 0.0, %v797
        %v799 = vpop.f32.mrb[0].mxu0
        %800 = vmatprep.mubr.bf16.mxu0 0
        %801 = vmatmul.mubr.bf16.gmra.mrb[0].mxu0 %v407
        %v802 = vpop.f32.mrb[0].mxu0
        %v803 = vadd.f32 0.0, %v802
        %v804 = vpop.f32.mrb[0].mxu0
        %v805 = vpop.f32.mrb[0].mxu0
        %v806 = vadd.f32 0.0, %v805
        %v807 = vpop.f32.mrb[0].mxu0
        %808 = vmatprep.mubr.bf16.mxu0 0
        %809 = vmatmul.mubr.bf16.gmra.mrb[0].mxu0 %v408
        %v810 = vpop.f32.mrb[0].mxu0
        %v811 = vadd.f32 0.0, %v810
        %v812 = vpop.f32.mrb[0].mxu0
        %v813 = vpop.f32.mrb[0].mxu0
        %v814 = vadd.f32 0.0, %v813
        %v815 = vpop.f32.mrb[0].mxu0
        %816 = vmatprep.mubr.bf16.mxu0 0
        %817 = vmatmul.mubr.bf16.gmra.mrb[0].mxu0 %v409
        %v818 = vpop.f32.mrb[0].mxu0
        %v819 = vadd.f32 0.0, %v818
        %v820 = vpop.f32.mrb[0].mxu0
        %v821 = vpop.f32.mrb[0].mxu0
        %v822 = vadd.f32 0.0, %v821
        %v823 = vpop.f32.mrb[0].mxu0
        %824 = vmatprep.mubr.bf16.mxu0 0
        %825 = vmatmul.mubr.bf16.gmra.mrb[0].mxu0 %v410
        %v826 = vpop.f32.mrb[0].mxu0
        %v827 = vadd.f32 0.0, %v826
        %v828 = vpop.f32.mrb[0].mxu0
        %v829 = vpop.f32.mrb[0].mxu0
        %v830 = vadd.f32 0.0, %v829
        %v831 = vpop.f32.mrb[0].mxu0
        %832 = vmatprep.mubr.bf16.mxu0 0
        %833 = vmatmul.mubr.bf16.gmra.mrb[0].mxu0 %v411
        %v834 = vpop.f32.mrb[0].mxu0
        %v835 = vadd.f32 0.0, %v834
        %v836 = vpop.f32.mrb[0].mxu0
        %v837 = vpop.f32.mrb[0].mxu0
        %v838 = vadd.f32 0.0, %v837
        %v839 = vpop.f32.mrb[0].mxu0
        %840 = vmatprep.mubr.bf16.mxu0 0
        %841 = vmatmul.mubr.bf16.gmra.mrb[0].mxu0 %v412
        %v842 = vpop.f32.mrb[0].mxu0
        %v843 = vadd.f32 0.0, %v842
        %v844 = vpop.f32.mrb[0].mxu0
        %v845 = vpop.f32.mrb[0].mxu0
        %v846 = vadd.f32 0.0, %v845
        %v847 = vpop.f32.mrb[0].mxu0
        %848 = vmatprep.mubr.bf16.mxu0 0
        %849 = vmatmul.mubr.bf16.gmra.mrb[0].mxu0 %v413
        %v850 = vpop.f32.mrb[0].mxu0
        %v851 = vadd.f32 0.0, %v850
        %v852 = vpop.f32.mrb[0].mxu0
        %v853 = vpop.f32.mrb[0].mxu0
        %v854 = vadd.f32 0.0, %v853
        %v855 = vpop.f32.mrb[0].mxu0
        %856 = vdwg.mxu0
        %v873 = vunpack.c.l.b16 %v294
        %v874 = vunpack.c.l.b16 %v295
        %v875 = vunpack.c.l.b16 %v296
        %v876 = vunpack.c.l.b16 %v297
        %v877 = vunpack.c.l.b16 %v298
        %v878 = vunpack.c.l.b16 %v299
        %v879 = vunpack.c.l.b16 %v300
        %v880 = vunpack.c.l.b16 %v301
        %v881 = vunpack.c.l.b16 %v302
        %v882 = vunpack.c.l.b16 %v303
        %v883 = vunpack.c.l.b16 %v304
        %v884 = vunpack.c.l.b16 %v305
        %v885 = vunpack.c.l.b16 %v306
        %v886 = vunpack.c.l.b16 %v307
        %v887 = vunpack.c.l.b16 %v308
        %v888 = vunpack.c.l.b16 %v309
        %v889 = vpack.c.b16 %v874, %v873
        %v890 = vpack.c.b16 %v876, %v875
        %v891 = vpack.c.b16 %v878, %v877
        %v892 = vpack.c.b16 %v880, %v879
        %v893 = vpack.c.b16 %v882, %v881
        %v894 = vpack.c.b16 %v884, %v883
        %v895 = vpack.c.b16 %v886, %v885
        %v896 = vpack.c.b16 %v888, %v887
        %905 = vmatprep.subr.bf16.mxu0 0
        %906 = vmatpush1.bf16.msra.mxu0 %v889
        %907 = vmatprep.subr.bf16.mxu0 0
        %908 = vmatpush1.bf16.msra.mxu0 %v890
        %909 = vmatprep.subr.bf16.mxu0 0
        %910 = vmatpush1.bf16.msra.mxu0 %v891
        %911 = vmatprep.subr.bf16.mxu0 0
        %912 = vmatpush1.bf16.msra.mxu0 %v892
        %913 = vmatprep.subr.bf16.mxu0 0
        %914 = vmatpush1.bf16.msra.mxu0 %v893
        %915 = vmatprep.subr.bf16.mxu0 0
        %916 = vmatpush1.bf16.msra.mxu0 %v894
        %917 = vmatprep.subr.bf16.mxu0 0
        %918 = vmatpush1.bf16.msra.mxu0 %v895
        %919 = vmatprep.subr.bf16.mxu0 0
        %920 = vmatpush1.bf16.msra.mxu0 %v896
        %921 = vmatprep.subr.bf16.mxu0 0
        %922 = vmatpush1.bf16.msra.mxu0 0
        %923 = vmatprep.subr.bf16.mxu0 0
        %924 = vmatpush1.bf16.msra.mxu0 0
        %925 = vmatprep.subr.bf16.mxu0 0
        %926 = vmatpush1.bf16.msra.mxu0 0
        %927 = vmatprep.subr.bf16.mxu0 0
        %928 = vmatpush1.bf16.msra.mxu0 0
        %929 = vmatprep.subr.bf16.mxu0 0
        %930 = vmatpush1.bf16.msra.mxu0 0
        %931 = vmatprep.subr.bf16.mxu0 0
        %932 = vmatpush1.bf16.msra.mxu0 0
        %933 = vmatprep.subr.bf16.mxu0 0
        %934 = vmatpush1.bf16.msra.mxu0 0
        %935 = vmatprep.subr.bf16.mxu0 0
        %936 = vmatpush1.bf16.msra.mxu0 0
        %937 = vmatprep.mubr.bf16.mxu0 0
        %938 = vmatmul.mubr.bf16.gmra.mrb[0].mxu0 %v406
        %v939 = vpop.f32.mrb[0].mxu0
        %v940 = vadd.f32 0.0, %v939
        %v941 = vpop.f32.mrb[0].mxu0
        %v942 = vpop.f32.mrb[0].mxu0
        %v943 = vadd.f32 0.0, %v942
        %v944 = vpop.f32.mrb[0].mxu0
        %945 = vmatprep.mubr.bf16.mxu0 0
        %946 = vmatmul.mubr.bf16.gmra.mrb[0].mxu0 %v407
        %v947 = vpop.f32.mrb[0].mxu0
        %v948 = vadd.f32 0.0, %v947
        %v949 = vpop.f32.mrb[0].mxu0
        %v950 = vpop.f32.mrb[0].mxu0
        %v951 = vadd.f32 0.0, %v950
        %v952 = vpop.f32.mrb[0].mxu0
        %953 = vmatprep.mubr.bf16.mxu0 0
        %954 = vmatmul.mubr.bf16.gmra.mrb[0].mxu0 %v408
        %v955 = vpop.f32.mrb[0].mxu0
        %v956 = vadd.f32 0.0, %v955
        %v957 = vpop.f32.mrb[0].mxu0
        %v958 = vpop.f32.mrb[0].mxu0
        %v959 = vadd.f32 0.0, %v958
        %v960 = vpop.f32.mrb[0].mxu0
        %961 = vmatprep.mubr.bf16.mxu0 0
        %962 = vmatmul.mubr.bf16.gmra.mrb[0].mxu0 %v409
        %v963 = vpop.f32.mrb[0].mxu0
        %v964 = vadd.f32 0.0, %v963
        %v965 = vpop.f32.mrb[0].mxu0
        %v966 = vpop.f32.mrb[0].mxu0
        %v967 = vadd.f32 0.0, %v966
        %v968 = vpop.f32.mrb[0].mxu0
        %969 = vmatprep.mubr.bf16.mxu0 0
        %970 = vmatmul.mubr.bf16.gmra.mrb[0].mxu0 %v410
        %v971 = vpop.f32.mrb[0].mxu0
        %v972 = vadd.f32 0.0, %v971
        %v973 = vpop.f32.mrb[0].mxu0
        %v974 = vpop.f32.mrb[0].mxu0
        %v975 = vadd.f32 0.0, %v974
        %v976 = vpop.f32.mrb[0].mxu0
        %977 = vmatprep.mubr.bf16.mxu0 0
        %978 = vmatmul.mubr.bf16.gmra.mrb[0].mxu0 %v411
        %v979 = vpop.f32.mrb[0].mxu0
        %v980 = vadd.f32 0.0, %v979
        %v981 = vpop.f32.mrb[0].mxu0
        %v982 = vpop.f32.mrb[0].mxu0
        %v983 = vadd.f32 0.0, %v982
        %v984 = vpop.f32.mrb[0].mxu0
        %985 = vmatprep.mubr.bf16.mxu0 0
        %986 = vmatmul.mubr.bf16.gmra.mrb[0].mxu0 %v412
        %v987 = vpop.f32.mrb[0].mxu0
        %v988 = vadd.f32 0.0, %v987
        %v989 = vpop.f32.mrb[0].mxu0
        %v990 = vpop.f32.mrb[0].mxu0
        %v991 = vadd.f32 0.0, %v990
        %v992 = vpop.f32.mrb[0].mxu0
        %993 = vmatprep.mubr.bf16.mxu0 0
        %994 = vmatmul.mubr.bf16.gmra.mrb[0].mxu0 %v413
        %v995 = vpop.f32.mrb[0].mxu0
        %v996 = vadd.f32 0.0, %v995
        %v997 = vpop.f32.mrb[0].mxu0
        %v998 = vpop.f32.mrb[0].mxu0
        %v999 = vadd.f32 0.0, %v998
        %v1000 = vpop.f32.mrb[0].mxu0
        %1001 = vdwg.mxu0
        %v1018 = vunpack.c.l.b16 %v310
        %v1019 = vunpack.c.l.b16 %v311
        %v1020 = vunpack.c.l.b16 %v312
        %v1021 = vunpack.c.l.b16 %v313
        %v1022 = vunpack.c.l.b16 %v314
        %v1023 = vunpack.c.l.b16 %v315
        %v1024 = vunpack.c.l.b16 %v316
        %v1025 = vunpack.c.l.b16 %v317
        %v1026 = vunpack.c.l.b16 %v318
        %v1027 = vunpack.c.l.b16 %v319
        %v1028 = vunpack.c.l.b16 %v320
        %v1029 = vunpack.c.l.b16 %v321
        %v1030 = vunpack.c.l.b16 %v322
        %v1031 = vunpack.c.l.b16 %v323
        %v1032 = vunpack.c.l.b16 %v324
        %v1033 = vunpack.c.l.b16 %v325
        %v1034 = vpack.c.b16 %v1019, %v1018
        %v1035 = vpack.c.b16 %v1021, %v1020
        %v1036 = vpack.c.b16 %v1023, %v1022
        %v1037 = vpack.c.b16 %v1025, %v1024
        %v1038 = vpack.c.b16 %v1027, %v1026
        %v1039 = vpack.c.b16 %v1029, %v1028
        %v1040 = vpack.c.b16 %v1031, %v1030
        %v1041 = vpack.c.b16 %v1033, %v1032
        %1050 = vmatprep.subr.bf16.mxu0 0
        %1051 = vmatpush1.bf16.msra.mxu0 %v1034
        %1052 = vmatprep.subr.bf16.mxu0 0
        %1053 = vmatpush1.bf16.msra.mxu0 %v1035
        %1054 = vmatprep.subr.bf16.mxu0 0
        %1055 = vmatpush1.bf16.msra.mxu0 %v1036
        %1056 = vmatprep.subr.bf16.mxu0 0
        %1057 = vmatpush1.bf16.msra.mxu0 %v1037
        %1058 = vmatprep.subr.bf16.mxu0 0
        %1059 = vmatpush1.bf16.msra.mxu0 %v1038
        %1060 = vmatprep.subr.bf16.mxu0 0
        %1061 = vmatpush1.bf16.msra.mxu0 %v1039
        %1062 = vmatprep.subr.bf16.mxu0 0
        %1063 = vmatpush1.bf16.msra.mxu0 %v1040
        %1064 = vmatprep.subr.bf16.mxu0 0
        %1065 = vmatpush1.bf16.msra.mxu0 %v1041
        %1066 = vmatprep.subr.bf16.mxu0 0
        %1067 = vmatpush1.bf16.msra.mxu0 0
        %1068 = vmatprep.subr.bf16.mxu0 0
        %1069 = vmatpush1.bf16.msra.mxu0 0
        %1070 = vmatprep.subr.bf16.mxu0 0
        %1071 = vmatpush1.bf16.msra.mxu0 0
        %1072 = vmatprep.subr.bf16.mxu0 0
        %1073 = vmatpush1.bf16.msra.mxu0 0
        %1074 = vmatprep.subr.bf16.mxu0 0
        %1075 = vmatpush1.bf16.msra.mxu0 0
        %1076 = vmatprep.subr.bf16.mxu0 0
        %1077 = vmatpush1.bf16.msra.mxu0 0
        %1078 = vmatprep.subr.bf16.mxu0 0
        %1079 = vmatpush1.bf16.msra.mxu0 0
        %1080 = vmatprep.subr.bf16.mxu0 0
        %1081 = vmatpush1.bf16.msra.mxu0 0
        %1082 = vmatprep.mubr.bf16.mxu0 0
        %1083 = vmatmul.mubr.bf16.gmra.mrb[0].mxu0 %v406
        %v1084 = vpop.f32.mrb[0].mxu0
        %v1085 = vadd.f32 0.0, %v1084
        %v1086 = vpop.f32.mrb[0].mxu0
        %v1087 = vpop.f32.mrb[0].mxu0
        %v1088 = vadd.f32 0.0, %v1087
        %v1089 = vpop.f32.mrb[0].mxu0
        %1090 = vmatprep.mubr.bf16.mxu0 0
        %1091 = vmatmul.mubr.bf16.gmra.mrb[0].mxu0 %v407
        %v1092 = vpop.f32.mrb[0].mxu0
        %v1093 = vadd.f32 0.0, %v1092
        %v1094 = vpop.f32.mrb[0].mxu0
        %v1095 = vpop.f32.mrb[0].mxu0
        %v1096 = vadd.f32 0.0, %v1095
        %v1097 = vpop.f32.mrb[0].mxu0
        %1098 = vmatprep.mubr.bf16.mxu0 0
        %1099 = vmatmul.mubr.bf16.gmra.mrb[0].mxu0 %v408
        %v1100 = vpop.f32.mrb[0].mxu0
        %v1101 = vadd.f32 0.0, %v1100
        %v1102 = vpop.f32.mrb[0].mxu0
        %v1103 = vpop.f32.mrb[0].mxu0
        %v1104 = vadd.f32 0.0, %v1103
        %v1105 = vpop.f32.mrb[0].mxu0
        %1106 = vmatprep.mubr.bf16.mxu0 0
        %1107 = vmatmul.mubr.bf16.gmra.mrb[0].mxu0 %v409
        %v1108 = vpop.f32.mrb[0].mxu0
        %v1109 = vadd.f32 0.0, %v1108
        %v1110 = vpop.f32.mrb[0].mxu0
        %v1111 = vpop.f32.mrb[0].mxu0
        %v1112 = vadd.f32 0.0, %v1111
        %v1113 = vpop.f32.mrb[0].mxu0
        %1114 = vmatprep.mubr.bf16.mxu0 0
        %1115 = vmatmul.mubr.bf16.gmra.mrb[0].mxu0 %v410
        %v1116 = vpop.f32.mrb[0].mxu0
        %v1117 = vadd.f32 0.0, %v1116
        %v1118 = vpop.f32.mrb[0].mxu0
        %v1119 = vpop.f32.mrb[0].mxu0
        %v1120 = vadd.f32 0.0, %v1119
        %v1121 = vpop.f32.mrb[0].mxu0
        %1122 = vmatprep.mubr.bf16.mxu0 0
        %1123 = vmatmul.mubr.bf16.gmra.mrb[0].mxu0 %v411
        %v1124 = vpop.f32.mrb[0].mxu0
        %v1125 = vadd.f32 0.0, %v1124
        %v1126 = vpop.f32.mrb[0].mxu0
        %v1127 = vpop.f32.mrb[0].mxu0
        %v1128 = vadd.f32 0.0, %v1127
        %v1129 = vpop.f32.mrb[0].mxu0
        %1130 = vmatprep.mubr.bf16.mxu0 0
        %1131 = vmatmul.mubr.bf16.gmra.mrb[0].mxu0 %v412
        %v1132 = vpop.f32.mrb[0].mxu0
        %v1133 = vadd.f32 0.0, %v1132
        %v1134 = vpop.f32.mrb[0].mxu0
        %v1135 = vpop.f32.mrb[0].mxu0
        %v1136 = vadd.f32 0.0, %v1135
        %v1137 = vpop.f32.mrb[0].mxu0
        %1138 = vmatprep.mubr.bf16.mxu0 0
        %1139 = vmatmul.mubr.bf16.gmra.mrb[0].mxu0 %v413
        %v1140 = vpop.f32.mrb[0].mxu0
        %v1141 = vadd.f32 0.0, %v1140
        %v1142 = vpop.f32.mrb[0].mxu0
        %v1143 = vpop.f32.mrb[0].mxu0
        %v1144 = vadd.f32 0.0, %v1143
        %v1145 = vpop.f32.mrb[0].mxu0
        %1146 = vdwg.mxu0
        %v1163 = vunpack.c.l.b16 %v326
        %v1164 = vunpack.c.l.b16 %v327
        %v1165 = vunpack.c.l.b16 %v328
        %v1166 = vunpack.c.l.b16 %v329
        %v1167 = vunpack.c.l.b16 %v330
        %v1168 = vunpack.c.l.b16 %v331
        %v1169 = vunpack.c.l.b16 %v332
        %v1170 = vunpack.c.l.b16 %v333
        %v1171 = vunpack.c.l.b16 %v334
        %v1172 = vunpack.c.l.b16 %v335
        %v1173 = vunpack.c.l.b16 %v336
        %v1174 = vunpack.c.l.b16 %v337
        %v1175 = vunpack.c.l.b16 %v338
        %v1176 = vunpack.c.l.b16 %v339
        %v1177 = vunpack.c.l.b16 %v340
        %v1178 = vunpack.c.l.b16 %v341
        %v1179 = vpack.c.b16 %v1164, %v1163
        %v1180 = vpack.c.b16 %v1166, %v1165
        %v1181 = vpack.c.b16 %v1168, %v1167
        %v1182 = vpack.c.b16 %v1170, %v1169
        %v1183 = vpack.c.b16 %v1172, %v1171
        %v1184 = vpack.c.b16 %v1174, %v1173
        %v1185 = vpack.c.b16 %v1176, %v1175
        %v1186 = vpack.c.b16 %v1178, %v1177
        %1195 = vmatprep.subr.bf16.mxu0 0
        %1196 = vmatpush1.bf16.msra.mxu0 %v1179
        %1197 = vmatprep.subr.bf16.mxu0 0
        %1198 = vmatpush1.bf16.msra.mxu0 %v1180
        %1199 = vmatprep.subr.bf16.mxu0 0
        %1200 = vmatpush1.bf16.msra.mxu0 %v1181
        %1201 = vmatprep.subr.bf16.mxu0 0
        %1202 = vmatpush1.bf16.msra.mxu0 %v1182
        %1203 = vmatprep.subr.bf16.mxu0 0
        %1204 = vmatpush1.bf16.msra.mxu0 %v1183
        %1205 = vmatprep.subr.bf16.mxu0 0
        %1206 = vmatpush1.bf16.msra.mxu0 %v1184
        %1207 = vmatprep.subr.bf16.mxu0 0
        %1208 = vmatpush1.bf16.msra.mxu0 %v1185
        %1209 = vmatprep.subr.bf16.mxu0 0
        %1210 = vmatpush1.bf16.msra.mxu0 %v1186
        %1211 = vmatprep.subr.bf16.mxu0 0
        %1212 = vmatpush1.bf16.msra.mxu0 0
        %1213 = vmatprep.subr.bf16.mxu0 0
        %1214 = vmatpush1.bf16.msra.mxu0 0
        %1215 = vmatprep.subr.bf16.mxu0 0
        %1216 = vmatpush1.bf16.msra.mxu0 0
        %1217 = vmatprep.subr.bf16.mxu0 0
        %1218 = vmatpush1.bf16.msra.mxu0 0
        %1219 = vmatprep.subr.bf16.mxu0 0
        %1220 = vmatpush1.bf16.msra.mxu0 0
        %1221 = vmatprep.subr.bf16.mxu0 0
        %1222 = vmatpush1.bf16.msra.mxu0 0
        %1223 = vmatprep.subr.bf16.mxu0 0
        %1224 = vmatpush1.bf16.msra.mxu0 0
        %1225 = vmatprep.subr.bf16.mxu0 0
        %1226 = vmatpush1.bf16.msra.mxu0 0
        %1227 = vmatprep.mubr.bf16.mxu0 0
        %1228 = vmatmul.mubr.bf16.gmra.mrb[0].mxu0 %v406
        %v1229 = vpop.f32.mrb[0].mxu0
        %v1230 = vadd.f32 0.0, %v1229
        %v1231 = vpop.f32.mrb[0].mxu0
        %v1232 = vpop.f32.mrb[0].mxu0
        %v1233 = vadd.f32 0.0, %v1232
        %v1234 = vpop.f32.mrb[0].mxu0
        %1235 = vmatprep.mubr.bf16.mxu0 0
        %1236 = vmatmul.mubr.bf16.gmra.mrb[0].mxu0 %v407
        %v1237 = vpop.f32.mrb[0].mxu0
        %v1238 = vadd.f32 0.0, %v1237
        %v1239 = vpop.f32.mrb[0].mxu0
        %v1240 = vpop.f32.mrb[0].mxu0
        %v1241 = vadd.f32 0.0, %v1240
        %v1242 = vpop.f32.mrb[0].mxu0
        %1243 = vmatprep.mubr.bf16.mxu0 0
        %1244 = vmatmul.mubr.bf16.gmra.mrb[0].mxu0 %v408
        %v1245 = vpop.f32.mrb[0].mxu0
        %v1246 = vadd.f32 0.0, %v1245
        %v1247 = vpop.f32.mrb[0].mxu0
        %v1248 = vpop.f32.mrb[0].mxu0
        %v1249 = vadd.f32 0.0, %v1248
        %v1250 = vpop.f32.mrb[0].mxu0
        %1251 = vmatprep.mubr.bf16.mxu0 0
        %1252 = vmatmul.mubr.bf16.gmra.mrb[0].mxu0 %v409
        %v1253 = vpop.f32.mrb[0].mxu0
        %v1254 = vadd.f32 0.0, %v1253
        %v1255 = vpop.f32.mrb[0].mxu0
        %v1256 = vpop.f32.mrb[0].mxu0
        %v1257 = vadd.f32 0.0, %v1256
        %v1258 = vpop.f32.mrb[0].mxu0
        %1259 = vmatprep.mubr.bf16.mxu0 0
        %1260 = vmatmul.mubr.bf16.gmra.mrb[0].mxu0 %v410
        %v1261 = vpop.f32.mrb[0].mxu0
        %v1262 = vadd.f32 0.0, %v1261
        %v1263 = vpop.f32.mrb[0].mxu0
        %v1264 = vpop.f32.mrb[0].mxu0
        %v1265 = vadd.f32 0.0, %v1264
        %v1266 = vpop.f32.mrb[0].mxu0
        %1267 = vmatprep.mubr.bf16.mxu0 0
        %1268 = vmatmul.mubr.bf16.gmra.mrb[0].mxu0 %v411
        %v1269 = vpop.f32.mrb[0].mxu0
        %v1270 = vadd.f32 0.0, %v1269
        %v1271 = vpop.f32.mrb[0].mxu0
        %v1272 = vpop.f32.mrb[0].mxu0
        %v1273 = vadd.f32 0.0, %v1272
        %v1274 = vpop.f32.mrb[0].mxu0
        %1275 = vmatprep.mubr.bf16.mxu0 0
        %1276 = vmatmul.mubr.bf16.gmra.mrb[0].mxu0 %v412
        %v1277 = vpop.f32.mrb[0].mxu0
        %v1278 = vadd.f32 0.0, %v1277
        %v1279 = vpop.f32.mrb[0].mxu0
        %v1280 = vpop.f32.mrb[0].mxu0
        %v1281 = vadd.f32 0.0, %v1280
        %v1282 = vpop.f32.mrb[0].mxu0
        %1283 = vmatprep.mubr.bf16.mxu0 0
        %1284 = vmatmul.mubr.bf16.gmra.mrb[0].mxu0 %v413
        %v1285 = vpop.f32.mrb[0].mxu0
        %v1286 = vadd.f32 0.0, %v1285
        %v1287 = vpop.f32.mrb[0].mxu0
        %v1288 = vpop.f32.mrb[0].mxu0
        %v1289 = vadd.f32 0.0, %v1288
        %v1290 = vpop.f32.mrb[0].mxu0
        %1291 = vdwg.mxu0
        %v1308 = vunpack.c.l.b16 %v342
        %v1309 = vunpack.c.l.b16 %v343
        %v1310 = vunpack.c.l.b16 %v344
        %v1311 = vunpack.c.l.b16 %v345
        %v1312 = vunpack.c.l.b16 %v346
        %v1313 = vunpack.c.l.b16 %v347
        %v1314 = vunpack.c.l.b16 %v348
        %v1315 = vunpack.c.l.b16 %v349
        %v1316 = vunpack.c.l.b16 %v350
        %v1317 = vunpack.c.l.b16 %v351
        %v1318 = vunpack.c.l.b16 %v352
        %v1319 = vunpack.c.l.b16 %v353
        %v1320 = vunpack.c.l.b16 %v354
        %v1321 = vunpack.c.l.b16 %v355
        %v1322 = vunpack.c.l.b16 %v356
        %v1323 = vunpack.c.l.b16 %v357
        %v1324 = vpack.c.b16 %v1309, %v1308
        %v1325 = vpack.c.b16 %v1311, %v1310
        %v1326 = vpack.c.b16 %v1313, %v1312
        %v1327 = vpack.c.b16 %v1315, %v1314
        %v1328 = vpack.c.b16 %v1317, %v1316
        %v1329 = vpack.c.b16 %v1319, %v1318
        %v1330 = vpack.c.b16 %v1321, %v1320
        %v1331 = vpack.c.b16 %v1323, %v1322
        %1340 = vmatprep.subr.bf16.mxu0 0
        %1341 = vmatpush1.bf16.msra.mxu0 %v1324
        %1342 = vmatprep.subr.bf16.mxu0 0
        %1343 = vmatpush1.bf16.msra.mxu0 %v1325
        %1344 = vmatprep.subr.bf16.mxu0 0
        %1345 = vmatpush1.bf16.msra.mxu0 %v1326
        %1346 = vmatprep.subr.bf16.mxu0 0
        %1347 = vmatpush1.bf16.msra.mxu0 %v1327
        %1348 = vmatprep.subr.bf16.mxu0 0
        %1349 = vmatpush1.bf16.msra.mxu0 %v1328
        %1350 = vmatprep.subr.bf16.mxu0 0
        %1351 = vmatpush1.bf16.msra.mxu0 %v1329
        %1352 = vmatprep.subr.bf16.mxu0 0
        %1353 = vmatpush1.bf16.msra.mxu0 %v1330
        %1354 = vmatprep.subr.bf16.mxu0 0
        %1355 = vmatpush1.bf16.msra.mxu0 %v1331
        %1356 = vmatprep.subr.bf16.mxu0 0
        %1357 = vmatpush1.bf16.msra.mxu0 0
        %1358 = vmatprep.subr.bf16.mxu0 0
        %1359 = vmatpush1.bf16.msra.mxu0 0
        %1360 = vmatprep.subr.bf16.mxu0 0
        %1361 = vmatpush1.bf16.msra.mxu0 0
        %1362 = vmatprep.subr.bf16.mxu0 0
        %1363 = vmatpush1.bf16.msra.mxu0 0
        %1364 = vmatprep.subr.bf16.mxu0 0
        %1365 = vmatpush1.bf16.msra.mxu0 0
        %1366 = vmatprep.subr.bf16.mxu0 0
        %1367 = vmatpush1.bf16.msra.mxu0 0
        %1368 = vmatprep.subr.bf16.mxu0 0
        %1369 = vmatpush1.bf16.msra.mxu0 0
        %1370 = vmatprep.subr.bf16.mxu0 0
        %1371 = vmatpush1.bf16.msra.mxu0 0
        %1372 = vmatprep.mubr.bf16.mxu0 0
        %1373 = vmatmul.mubr.bf16.gmra.mrb[0].mxu0 %v406
        %v1374 = vpop.f32.mrb[0].mxu0
        %v1375 = vadd.f32 0.0, %v1374
        %v1376 = vpop.f32.mrb[0].mxu0
        %v1377 = vpop.f32.mrb[0].mxu0
        %v1378 = vadd.f32 0.0, %v1377
        %v1379 = vpop.f32.mrb[0].mxu0
        %1380 = vmatprep.mubr.bf16.mxu0 0
        %1381 = vmatmul.mubr.bf16.gmra.mrb[0].mxu0 %v407
        %v1382 = vpop.f32.mrb[0].mxu0
        %v1383 = vadd.f32 0.0, %v1382
        %v1384 = vpop.f32.mrb[0].mxu0
        %v1385 = vpop.f32.mrb[0].mxu0
        %v1386 = vadd.f32 0.0, %v1385
        %v1387 = vpop.f32.mrb[0].mxu0
        %1388 = vmatprep.mubr.bf16.mxu0 0
        %1389 = vmatmul.mubr.bf16.gmra.mrb[0].mxu0 %v408
        %v1390 = vpop.f32.mrb[0].mxu0
        %v1391 = vadd.f32 0.0, %v1390
        %v1392 = vpop.f32.mrb[0].mxu0
        %v1393 = vpop.f32.mrb[0].mxu0
        %v1394 = vadd.f32 0.0, %v1393
        %v1395 = vpop.f32.mrb[0].mxu0
        %1396 = vmatprep.mubr.bf16.mxu0 0
        %1397 = vmatmul.mubr.bf16.gmra.mrb[0].mxu0 %v409
        %v1398 = vpop.f32.mrb[0].mxu0
        %v1399 = vadd.f32 0.0, %v1398
        %v1400 = vpop.f32.mrb[0].mxu0
        %v1401 = vpop.f32.mrb[0].mxu0
        %v1402 = vadd.f32 0.0, %v1401
        %v1403 = vpop.f32.mrb[0].mxu0
        %1404 = vmatprep.mubr.bf16.mxu0 0
        %1405 = vmatmul.mubr.bf16.gmra.mrb[0].mxu0 %v410
        %v1406 = vpop.f32.mrb[0].mxu0
        %v1407 = vadd.f32 0.0, %v1406
        %v1408 = vpop.f32.mrb[0].mxu0
        %v1409 = vpop.f32.mrb[0].mxu0
        %v1410 = vadd.f32 0.0, %v1409
        %v1411 = vpop.f32.mrb[0].mxu0
        %1412 = vmatprep.mubr.bf16.mxu0 0
        %1413 = vmatmul.mubr.bf16.gmra.mrb[0].mxu0 %v411
        %v1414 = vpop.f32.mrb[0].mxu0
        %v1415 = vadd.f32 0.0, %v1414
        %v1416 = vpop.f32.mrb[0].mxu0
        %v1417 = vpop.f32.mrb[0].mxu0
        %v1418 = vadd.f32 0.0, %v1417
        %v1419 = vpop.f32.mrb[0].mxu0
        %1420 = vmatprep.mubr.bf16.mxu0 0
        %1421 = vmatmul.mubr.bf16.gmra.mrb[0].mxu0 %v412
        %v1422 = vpop.f32.mrb[0].mxu0
        %v1423 = vadd.f32 0.0, %v1422
        %v1424 = vpop.f32.mrb[0].mxu0
        %v1425 = vpop.f32.mrb[0].mxu0
        %v1426 = vadd.f32 0.0, %v1425
        %v1427 = vpop.f32.mrb[0].mxu0
        %1428 = vmatprep.mubr.bf16.mxu0 0
        %1429 = vmatmul.mubr.bf16.gmra.mrb[0].mxu0 %v413
        %v1430 = vpop.f32.mrb[0].mxu0
        %v1431 = vadd.f32 0.0, %v1430
        %v1432 = vpop.f32.mrb[0].mxu0
        %v1433 = vpop.f32.mrb[0].mxu0
        %v1434 = vadd.f32 0.0, %v1433
        %v1435 = vpop.f32.mrb[0].mxu0
        %1436 = vdwg.mxu0
        %v1453 = vunpack.c.l.b16 %v358
        %v1454 = vunpack.c.l.b16 %v359
        %v1455 = vunpack.c.l.b16 %v360
        %v1456 = vunpack.c.l.b16 %v361
        %v1457 = vunpack.c.l.b16 %v362
        %v1458 = vunpack.c.l.b16 %v363
        %v1459 = vunpack.c.l.b16 %v364
        %v1460 = vunpack.c.l.b16 %v365
        %v1461 = vunpack.c.l.b16 %v366
        %v1462 = vunpack.c.l.b16 %v367
        %v1463 = vunpack.c.l.b16 %v368
        %v1464 = vunpack.c.l.b16 %v369
        %v1465 = vunpack.c.l.b16 %v370
        %v1466 = vunpack.c.l.b16 %v371
        %v1467 = vunpack.c.l.b16 %v372
        %v1468 = vunpack.c.l.b16 %v373
        %v1469 = vpack.c.b16 %v1454, %v1453
        %v1470 = vpack.c.b16 %v1456, %v1455
        %v1471 = vpack.c.b16 %v1458, %v1457
        %v1472 = vpack.c.b16 %v1460, %v1459
        %v1473 = vpack.c.b16 %v1462, %v1461
        %v1474 = vpack.c.b16 %v1464, %v1463
        %v1475 = vpack.c.b16 %v1466, %v1465
        %v1476 = vpack.c.b16 %v1468, %v1467
        %1485 = vmatprep.subr.bf16.mxu0 0
        %1486 = vmatpush1.bf16.msra.mxu0 %v1469
        %1487 = vmatprep.subr.bf16.mxu0 0
        %1488 = vmatpush1.bf16.msra.mxu0 %v1470
        %1489 = vmatprep.subr.bf16.mxu0 0
        %1490 = vmatpush1.bf16.msra.mxu0 %v1471
        %1491 = vmatprep.subr.bf16.mxu0 0
        %1492 = vmatpush1.bf16.msra.mxu0 %v1472
        %1493 = vmatprep.subr.bf16.mxu0 0
        %1494 = vmatpush1.bf16.msra.mxu0 %v1473
        %1495 = vmatprep.subr.bf16.mxu0 0
        %1496 = vmatpush1.bf16.msra.mxu0 %v1474
        %1497 = vmatprep.subr.bf16.mxu0 0
        %1498 = vmatpush1.bf16.msra.mxu0 %v1475
        %1499 = vmatprep.subr.bf16.mxu0 0
        %1500 = vmatpush1.bf16.msra.mxu0 %v1476
        %1501 = vmatprep.subr.bf16.mxu0 0
        %1502 = vmatpush1.bf16.msra.mxu0 0
        %1503 = vmatprep.subr.bf16.mxu0 0
        %1504 = vmatpush1.bf16.msra.mxu0 0
        %1505 = vmatprep.subr.bf16.mxu0 0
        %1506 = vmatpush1.bf16.msra.mxu0 0
        %1507 = vmatprep.subr.bf16.mxu0 0
        %1508 = vmatpush1.bf16.msra.mxu0 0
        %1509 = vmatprep.subr.bf16.mxu0 0
        %1510 = vmatpush1.bf16.msra.mxu0 0
        %1511 = vmatprep.subr.bf16.mxu0 0
        %1512 = vmatpush1.bf16.msra.mxu0 0
        %1513 = vmatprep.subr.bf16.mxu0 0
        %1514 = vmatpush1.bf16.msra.mxu0 0
        %1515 = vmatprep.subr.bf16.mxu0 0
        %1516 = vmatpush1.bf16.msra.mxu0 0
        %1517 = vmatprep.mubr.bf16.mxu0 0
        %1518 = vmatmul.mubr.bf16.gmra.mrb[0].mxu0 %v406
        %v1519 = vpop.f32.mrb[0].mxu0
        %v1520 = vadd.f32 0.0, %v1519
        %v1521 = vpop.f32.mrb[0].mxu0
        %v1522 = vpop.f32.mrb[0].mxu0
        %v1523 = vadd.f32 0.0, %v1522
        %v1524 = vpop.f32.mrb[0].mxu0
        %1525 = vmatprep.mubr.bf16.mxu0 0
        %1526 = vmatmul.mubr.bf16.gmra.mrb[0].mxu0 %v407
        %v1527 = vpop.f32.mrb[0].mxu0
        %v1528 = vadd.f32 0.0, %v1527
        %v1529 = vpop.f32.mrb[0].mxu0
        %v1530 = vpop.f32.mrb[0].mxu0
        %v1531 = vadd.f32 0.0, %v1530
        %v1532 = vpop.f32.mrb[0].mxu0
        %1533 = vmatprep.mubr.bf16.mxu0 0
        %1534 = vmatmul.mubr.bf16.gmra.mrb[0].mxu0 %v408
        %v1535 = vpop.f32.mrb[0].mxu0
        %v1536 = vadd.f32 0.0, %v1535
        %v1537 = vpop.f32.mrb[0].mxu0
        %v1538 = vpop.f32.mrb[0].mxu0
        %v1539 = vadd.f32 0.0, %v1538
        %v1540 = vpop.f32.mrb[0].mxu0
        %1541 = vmatprep.mubr.bf16.mxu0 0
        %1542 = vmatmul.mubr.bf16.gmra.mrb[0].mxu0 %v409
        %v1543 = vpop.f32.mrb[0].mxu0
        %v1544 = vadd.f32 0.0, %v1543
        %v1545 = vpop.f32.mrb[0].mxu0
        %v1546 = vpop.f32.mrb[0].mxu0
        %v1547 = vadd.f32 0.0, %v1546
        %v1548 = vpop.f32.mrb[0].mxu0
        %1549 = vmatprep.mubr.bf16.mxu0 0
        %1550 = vmatmul.mubr.bf16.gmra.mrb[0].mxu0 %v410
        %v1551 = vpop.f32.mrb[0].mxu0
        %v1552 = vadd.f32 0.0, %v1551
        %v1553 = vpop.f32.mrb[0].mxu0
        %v1554 = vpop.f32.mrb[0].mxu0
        %v1555 = vadd.f32 0.0, %v1554
        %v1556 = vpop.f32.mrb[0].mxu0
        %1557 = vmatprep.mubr.bf16.mxu0 0
        %1558 = vmatmul.mubr.bf16.gmra.mrb[0].mxu0 %v411
        %v1559 = vpop.f32.mrb[0].mxu0
        %v1560 = vadd.f32 0.0, %v1559
        %v1561 = vpop.f32.mrb[0].mxu0
        %v1562 = vpop.f32.mrb[0].mxu0
        %v1563 = vadd.f32 0.0, %v1562
        %v1564 = vpop.f32.mrb[0].mxu0
        %1565 = vmatprep.mubr.bf16.mxu0 0
        %1566 = vmatmul.mubr.bf16.gmra.mrb[0].mxu0 %v412
        %v1567 = vpop.f32.mrb[0].mxu0
        %v1568 = vadd.f32 0.0, %v1567
        %v1569 = vpop.f32.mrb[0].mxu0
        %v1570 = vpop.f32.mrb[0].mxu0
        %v1571 = vadd.f32 0.0, %v1570
        %v1572 = vpop.f32.mrb[0].mxu0
        %1573 = vmatprep.mubr.bf16.mxu0 0
        %1574 = vmatmul.mubr.bf16.gmra.mrb[0].mxu0 %v413
        %v1575 = vpop.f32.mrb[0].mxu0
        %v1576 = vadd.f32 0.0, %v1575
        %v1577 = vpop.f32.mrb[0].mxu0
        %v1578 = vpop.f32.mrb[0].mxu0
        %v1579 = vadd.f32 0.0, %v1578
        %v1580 = vpop.f32.mrb[0].mxu0
        %1581 = vdwg.mxu0
        %v1582 = vpack.c.bf16 %v508, %v505
        %v1583 = vpack.c.bf16 %v516, %v513
        %v1584 = vpack.c.bf16 %v524, %v521
        %v1585 = vpack.c.bf16 %v532, %v529
        %v1586 = vpack.c.bf16 %v540, %v537
        %v1587 = vpack.c.bf16 %v548, %v545
        %v1588 = vpack.c.bf16 %v556, %v553
        %v1589 = vpack.c.bf16 %v564, %v561
        %v1590 = vpack.c.bf16 %v653, %v650
        %v1591 = vpack.c.bf16 %v661, %v658
        %v1592 = vpack.c.bf16 %v669, %v666
        %v1593 = vpack.c.bf16 %v677, %v674
        %v1594 = vpack.c.bf16 %v685, %v682
        %v1595 = vpack.c.bf16 %v693, %v690
        %v1596 = vpack.c.bf16 %v701, %v698
        %v1597 = vpack.c.bf16 %v709, %v706
        %v1598 = vpack.c.bf16 %v798, %v795
        %v1599 = vpack.c.bf16 %v806, %v803
        %v1600 = vpack.c.bf16 %v814, %v811
        %v1601 = vpack.c.bf16 %v822, %v819
        %v1602 = vpack.c.bf16 %v830, %v827
        %v1603 = vpack.c.bf16 %v838, %v835
        %v1604 = vpack.c.bf16 %v846, %v843
        %v1605 = vpack.c.bf16 %v854, %v851
        %v1606 = vpack.c.bf16 %v943, %v940
        %v1607 = vpack.c.bf16 %v951, %v948
        %v1608 = vpack.c.bf16 %v959, %v956
        %v1609 = vpack.c.bf16 %v967, %v964
        %v1610 = vpack.c.bf16 %v975, %v972
        %v1611 = vpack.c.bf16 %v983, %v980
        %v1612 = vpack.c.bf16 %v991, %v988
        %v1613 = vpack.c.bf16 %v999, %v996
        %v1614 = vpack.c.bf16 %v1088, %v1085
        %v1615 = vpack.c.bf16 %v1096, %v1093
        %v1616 = vpack.c.bf16 %v1104, %v1101
        %v1617 = vpack.c.bf16 %v1112, %v1109
        %v1618 = vpack.c.bf16 %v1120, %v1117
        %v1619 = vpack.c.bf16 %v1128, %v1125
        %v1620 = vpack.c.bf16 %v1136, %v1133
        %v1621 = vpack.c.bf16 %v1144, %v1141
        %v1622 = vpack.c.bf16 %v1233, %v1230
        %v1623 = vpack.c.bf16 %v1241, %v1238
        %v1624 = vpack.c.bf16 %v1249, %v1246
        %v1625 = vpack.c.bf16 %v1257, %v1254
        %v1626 = vpack.c.bf16 %v1265, %v1262
        %v1627 = vpack.c.bf16 %v1273, %v1270
        %v1628 = vpack.c.bf16 %v1281, %v1278
        %v1629 = vpack.c.bf16 %v1289, %v1286
        %v1630 = vpack.c.bf16 %v1378, %v1375
        %v1631 = vpack.c.bf16 %v1386, %v1383
        %v1632 = vpack.c.bf16 %v1394, %v1391
        %v1633 = vpack.c.bf16 %v1402, %v1399
        %v1634 = vpack.c.bf16 %v1410, %v1407
        %v1635 = vpack.c.bf16 %v1418, %v1415
        %v1636 = vpack.c.bf16 %v1426, %v1423
        %v1637 = vpack.c.bf16 %v1434, %v1431
        %v1638 = vpack.c.bf16 %v1523, %v1520
        %v1639 = vpack.c.bf16 %v1531, %v1528
        %v1640 = vpack.c.bf16 %v1539, %v1536
        %v1641 = vpack.c.bf16 %v1547, %v1544
        %v1642 = vpack.c.bf16 %v1555, %v1552
        %v1643 = vpack.c.bf16 %v1563, %v1560
        %v1644 = vpack.c.bf16 %v1571, %v1568
        %v1645 = vpack.c.bf16 %v1579, %v1576
        %v1646 = vld [vmem:[%s2] sm:$0xf]
        %v1647 = vld [vmem:[%s2 + $0x4] sm:$0xf]
        %v1648 = vld [vmem:[%s2 + $0x8] sm:$0xf]
        %v1649 = vld [vmem:[%s2 + $0xc] sm:$0xf]
        %v1650 = vld [vmem:[%s2 + $0x10] sm:$0xf]
        %v1651 = vld [vmem:[%s2 + $0x14] sm:$0xf]
        %v1652 = vld [vmem:[%s2 + $0x18] sm:$0xf]
        %v1653 = vld [vmem:[%s2 + $0x1c] sm:$0xf]
        %v1654 = vld [vmem:[%s2 + $0x20] sm:$0xf]
        %v1655 = vld [vmem:[%s2 + $0x24] sm:$0xf]
        %v1656 = vld [vmem:[%s2 + $0x28] sm:$0xf]
        %v1657 = vld [vmem:[%s2 + $0x2c] sm:$0xf]
        %v1658 = vld [vmem:[%s2 + $0x30] sm:$0xf]
        %v1659 = vld [vmem:[%s2 + $0x34] sm:$0xf]
        %v1660 = vld [vmem:[%s2 + $0x38] sm:$0xf]
        %v1661 = vld [vmem:[%s2 + $0x3c] sm:$0xf]
        %v1662 = vld [vmem:[%s2 + $0x40] sm:$0xf]
        %v1663 = vld [vmem:[%s2 + $0x44] sm:$0xf]
        %v1664 = vld [vmem:[%s2 + $0x48] sm:$0xf]
        %v1665 = vld [vmem:[%s2 + $0x4c] sm:$0xf]
        %v1666 = vld [vmem:[%s2 + $0x50] sm:$0xf]
        %v1667 = vld [vmem:[%s2 + $0x54] sm:$0xf]
        %v1668 = vld [vmem:[%s2 + $0x58] sm:$0xf]
        %v1669 = vld [vmem:[%s2 + $0x5c] sm:$0xf]
        %v1670 = vld [vmem:[%s2 + $0x60] sm:$0xf]
        %v1671 = vld [vmem:[%s2 + $0x64] sm:$0xf]
        %v1672 = vld [vmem:[%s2 + $0x68] sm:$0xf]
        %v1673 = vld [vmem:[%s2 + $0x6c] sm:$0xf]
        %v1674 = vld [vmem:[%s2 + $0x70] sm:$0xf]
        %v1675 = vld [vmem:[%s2 + $0x74] sm:$0xf]
        %v1676 = vld [vmem:[%s2 + $0x78] sm:$0xf]
        %v1677 = vld [vmem:[%s2 + $0x7c] sm:$0xf]
        %v1678 = vld [vmem:[%s2 + $0x80] sm:$0xf]
        %v1679 = vld [vmem:[%s2 + $0x84] sm:$0xf]
        %v1680 = vld [vmem:[%s2 + $0x88] sm:$0xf]
        %v1681 = vld [vmem:[%s2 + $0x8c] sm:$0xf]
        %v1682 = vld [vmem:[%s2 + $0x90] sm:$0xf]
        %v1683 = vld [vmem:[%s2 + $0x94] sm:$0xf]
        %v1684 = vld [vmem:[%s2 + $0x98] sm:$0xf]
        %v1685 = vld [vmem:[%s2 + $0x9c] sm:$0xf]
        %v1686 = vld [vmem:[%s2 + $0xa0] sm:$0xf]
        %v1687 = vld [vmem:[%s2 + $0xa4] sm:$0xf]
        %v1688 = vld [vmem:[%s2 + $0xa8] sm:$0xf]
        %v1689 = vld [vmem:[%s2 + $0xac] sm:$0xf]
        %v1690 = vld [vmem:[%s2 + $0xb0] sm:$0xf]
        %v1691 = vld [vmem:[%s2 + $0xb4] sm:$0xf]
        %v1692 = vld [vmem:[%s2 + $0xb8] sm:$0xf]
        %v1693 = vld [vmem:[%s2 + $0xbc] sm:$0xf]
        %v1694 = vld [vmem:[%s2 + $0xc0] sm:$0xf]
        %v1695 = vld [vmem:[%s2 + $0xc4] sm:$0xf]
        %v1696 = vld [vmem:[%s2 + $0xc8] sm:$0xf]
        %v1697 = vld [vmem:[%s2 + $0xcc] sm:$0xf]
        %v1698 = vld [vmem:[%s2 + $0xd0] sm:$0xf]
        %v1699 = vld [vmem:[%s2 + $0xd4] sm:$0xf]
        %v1700 = vld [vmem:[%s2 + $0xd8] sm:$0xf]
        %v1701 = vld [vmem:[%s2 + $0xdc] sm:$0xf]
        %v1702 = vld [vmem:[%s2 + $0xe0] sm:$0xf]
        %v1703 = vld [vmem:[%s2 + $0xe4] sm:$0xf]
        %v1704 = vld [vmem:[%s2 + $0xe8] sm:$0xf]
        %v1705 = vld [vmem:[%s2 + $0xec] sm:$0xf]
        %v1706 = vld [vmem:[%s2 + $0xf0] sm:$0xf]
        %v1707 = vld [vmem:[%s2 + $0xf4] sm:$0xf]
        %v1708 = vld [vmem:[%s2 + $0xf8] sm:$0xf]
        %v1709 = vld [vmem:[%s2 + $0xfc] sm:$0xf]
        %v1710 = vld [vmem:[%s2 + $0x100] sm:$0xf]
        %v1711 = vld [vmem:[%s2 + $0x104] sm:$0xf]
        %v1712 = vld [vmem:[%s2 + $0x108] sm:$0xf]
        %v1713 = vld [vmem:[%s2 + $0x10c] sm:$0xf]
        %v1714 = vld [vmem:[%s2 + $0x110] sm:$0xf]
        %v1715 = vld [vmem:[%s2 + $0x114] sm:$0xf]
        %v1716 = vld [vmem:[%s2 + $0x118] sm:$0xf]
        %v1717 = vld [vmem:[%s2 + $0x11c] sm:$0xf]
        %v1718 = vld [vmem:[%s2 + $0x120] sm:$0xf]
        %v1719 = vld [vmem:[%s2 + $0x124] sm:$0xf]
        %v1720 = vld [vmem:[%s2 + $0x128] sm:$0xf]
        %v1721 = vld [vmem:[%s2 + $0x12c] sm:$0xf]
        %v1722 = vld [vmem:[%s2 + $0x130] sm:$0xf]
        %v1723 = vld [vmem:[%s2 + $0x134] sm:$0xf]
        %v1724 = vld [vmem:[%s2 + $0x138] sm:$0xf]
        %v1725 = vld [vmem:[%s2 + $0x13c] sm:$0xf]
        %v1726 = vld [vmem:[%s2 + $0x140] sm:$0xf]
        %v1727 = vld [vmem:[%s2 + $0x144] sm:$0xf]
        %v1728 = vld [vmem:[%s2 + $0x148] sm:$0xf]
        %v1729 = vld [vmem:[%s2 + $0x14c] sm:$0xf]
        %v1730 = vld [vmem:[%s2 + $0x150] sm:$0xf]
        %v1731 = vld [vmem:[%s2 + $0x154] sm:$0xf]
        %v1732 = vld [vmem:[%s2 + $0x158] sm:$0xf]
        %v1733 = vld [vmem:[%s2 + $0x15c] sm:$0xf]
        %v1734 = vld [vmem:[%s2 + $0x160] sm:$0xf]
        %v1735 = vld [vmem:[%s2 + $0x164] sm:$0xf]
        %v1736 = vld [vmem:[%s2 + $0x168] sm:$0xf]
        %v1737 = vld [vmem:[%s2 + $0x16c] sm:$0xf]
        %v1738 = vld [vmem:[%s2 + $0x170] sm:$0xf]
        %v1739 = vld [vmem:[%s2 + $0x174] sm:$0xf]
        %v1740 = vld [vmem:[%s2 + $0x178] sm:$0xf]
        %v1741 = vld [vmem:[%s2 + $0x17c] sm:$0xf]
        %v1742 = vld [vmem:[%s2 + $0x180] sm:$0xf]
        %v1743 = vld [vmem:[%s2 + $0x184] sm:$0xf]
        %v1744 = vld [vmem:[%s2 + $0x188] sm:$0xf]
        %v1745 = vld [vmem:[%s2 + $0x18c] sm:$0xf]
        %v1746 = vld [vmem:[%s2 + $0x190] sm:$0xf]
        %v1747 = vld [vmem:[%s2 + $0x194] sm:$0xf]
        %v1748 = vld [vmem:[%s2 + $0x198] sm:$0xf]
        %v1749 = vld [vmem:[%s2 + $0x19c] sm:$0xf]
        %v1750 = vld [vmem:[%s2 + $0x1a0] sm:$0xf]
        %v1751 = vld [vmem:[%s2 + $0x1a4] sm:$0xf]
        %v1752 = vld [vmem:[%s2 + $0x1a8] sm:$0xf]
        %v1753 = vld [vmem:[%s2 + $0x1ac] sm:$0xf]
        %v1754 = vld [vmem:[%s2 + $0x1b0] sm:$0xf]
        %v1755 = vld [vmem:[%s2 + $0x1b4] sm:$0xf]
        %v1756 = vld [vmem:[%s2 + $0x1b8] sm:$0xf]
        %v1757 = vld [vmem:[%s2 + $0x1bc] sm:$0xf]
        %v1758 = vld [vmem:[%s2 + $0x1c0] sm:$0xf]
        %v1759 = vld [vmem:[%s2 + $0x1c4] sm:$0xf]
        %v1760 = vld [vmem:[%s2 + $0x1c8] sm:$0xf]
        %v1761 = vld [vmem:[%s2 + $0x1cc] sm:$0xf]
        %v1762 = vld [vmem:[%s2 + $0x1d0] sm:$0xf]
        %v1763 = vld [vmem:[%s2 + $0x1d4] sm:$0xf]
        %v1764 = vld [vmem:[%s2 + $0x1d8] sm:$0xf]
        %v1765 = vld [vmem:[%s2 + $0x1dc] sm:$0xf]
        %v1766 = vld [vmem:[%s2 + $0x1e0] sm:$0xf]
        %v1767 = vld [vmem:[%s2 + $0x1e4] sm:$0xf]
        %v1768 = vld [vmem:[%s2 + $0x1e8] sm:$0xf]
        %v1769 = vld [vmem:[%s2 + $0x1ec] sm:$0xf]
        %v1770 = vld [vmem:[%s2 + $0x1f0] sm:$0xf]
        %v1771 = vld [vmem:[%s2 + $0x1f4] sm:$0xf]
        %v1772 = vld [vmem:[%s2 + $0x1f8] sm:$0xf]
        %v1773 = vld [vmem:[%s2 + $0x1fc] sm:$0xf]
        %v1790 = vunpack.c.l.b16 %v1646
        %v1791 = vunpack.c.l.b16 %v1647
        %v1792 = vunpack.c.l.b16 %v1648
        %v1793 = vunpack.c.l.b16 %v1649
        %v1794 = vunpack.c.l.b16 %v1650
        %v1795 = vunpack.c.l.b16 %v1651
        %v1796 = vunpack.c.l.b16 %v1652
        %v1797 = vunpack.c.l.b16 %v1653
        %v1798 = vunpack.c.l.b16 %v1654
        %v1799 = vunpack.c.l.b16 %v1655
        %v1800 = vunpack.c.l.b16 %v1656
        %v1801 = vunpack.c.l.b16 %v1657
        %v1802 = vunpack.c.l.b16 %v1658
        %v1803 = vunpack.c.l.b16 %v1659
        %v1804 = vunpack.c.l.b16 %v1660
        %v1805 = vunpack.c.l.b16 %v1661
        %v1806 = vpack.c.b16 %v1791, %v1790
        %v1807 = vpack.c.b16 %v1793, %v1792
        %v1808 = vpack.c.b16 %v1795, %v1794
        %v1809 = vpack.c.b16 %v1797, %v1796
        %v1810 = vpack.c.b16 %v1799, %v1798
        %v1811 = vpack.c.b16 %v1801, %v1800
        %v1812 = vpack.c.b16 %v1803, %v1802
        %v1813 = vpack.c.b16 %v1805, %v1804
        %1822 = vmatprep.subr.bf16.mxu0 0
        %1823 = vmatpush1.bf16.msra.mxu0 %v1806
        %1824 = vmatprep.subr.bf16.mxu0 0
        %1825 = vmatpush1.bf16.msra.mxu0 %v1807
        %1826 = vmatprep.subr.bf16.mxu0 0
        %1827 = vmatpush1.bf16.msra.mxu0 %v1808
        %1828 = vmatprep.subr.bf16.mxu0 0
        %1829 = vmatpush1.bf16.msra.mxu0 %v1809
        %1830 = vmatprep.subr.bf16.mxu0 0
        %1831 = vmatpush1.bf16.msra.mxu0 %v1810
        %1832 = vmatprep.subr.bf16.mxu0 0
        %1833 = vmatpush1.bf16.msra.mxu0 %v1811
        %1834 = vmatprep.subr.bf16.mxu0 0
        %1835 = vmatpush1.bf16.msra.mxu0 %v1812
        %1836 = vmatprep.subr.bf16.mxu0 0
        %1837 = vmatpush1.bf16.msra.mxu0 %v1813
        %1838 = vmatprep.subr.bf16.mxu0 0
        %1839 = vmatpush1.bf16.msra.mxu0 0
        %1840 = vmatprep.subr.bf16.mxu0 0
        %1841 = vmatpush1.bf16.msra.mxu0 0
        %1842 = vmatprep.subr.bf16.mxu0 0
        %1843 = vmatpush1.bf16.msra.mxu0 0
        %1844 = vmatprep.subr.bf16.mxu0 0
        %1845 = vmatpush1.bf16.msra.mxu0 0
        %1846 = vmatprep.subr.bf16.mxu0 0
        %1847 = vmatpush1.bf16.msra.mxu0 0
        %1848 = vmatprep.subr.bf16.mxu0 0
        %1849 = vmatpush1.bf16.msra.mxu0 0
        %1850 = vmatprep.subr.bf16.mxu0 0
        %1851 = vmatpush1.bf16.msra.mxu0 0
        %1852 = vmatprep.subr.bf16.mxu0 0
        %1853 = vmatpush1.bf16.msra.mxu0 0
        %1854 = vmatprep.mubr.bf16.mxu0 0
        %1855 = vmatmul.mubr.bf16.gmra.mrb[0].mxu0 %v406
        %v1856 = vpop.f32.mrb[0].mxu0
        %v1857 = vadd.f32 0.0, %v1856
        %v1858 = vpop.f32.mrb[0].mxu0
        %v1859 = vpop.f32.mrb[0].mxu0
        %v1860 = vadd.f32 0.0, %v1859
        %v1861 = vpop.f32.mrb[0].mxu0
        %1862 = vmatprep.mubr.bf16.mxu0 0
        %1863 = vmatmul.mubr.bf16.gmra.mrb[0].mxu0 %v407
        %v1864 = vpop.f32.mrb[0].mxu0
        %v1865 = vadd.f32 0.0, %v1864
        %v1866 = vpop.f32.mrb[0].mxu0
        %v1867 = vpop.f32.mrb[0].mxu0
        %v1868 = vadd.f32 0.0, %v1867
        %v1869 = vpop.f32.mrb[0].mxu0
        %1870 = vmatprep.mubr.bf16.mxu0 0
        %1871 = vmatmul.mubr.bf16.gmra.mrb[0].mxu0 %v408
        %v1872 = vpop.f32.mrb[0].mxu0
        %v1873 = vadd.f32 0.0, %v1872
        %v1874 = vpop.f32.mrb[0].mxu0
        %v1875 = vpop.f32.mrb[0].mxu0
        %v1876 = vadd.f32 0.0, %v1875
        %v1877 = vpop.f32.mrb[0].mxu0
        %1878 = vmatprep.mubr.bf16.mxu0 0
        %1879 = vmatmul.mubr.bf16.gmra.mrb[0].mxu0 %v409
        %v1880 = vpop.f32.mrb[0].mxu0
        %v1881 = vadd.f32 0.0, %v1880
        %v1882 = vpop.f32.mrb[0].mxu0
        %v1883 = vpop.f32.mrb[0].mxu0
        %v1884 = vadd.f32 0.0, %v1883
        %v1885 = vpop.f32.mrb[0].mxu0
        %1886 = vmatprep.mubr.bf16.mxu0 0
        %1887 = vmatmul.mubr.bf16.gmra.mrb[0].mxu0 %v410
        %v1888 = vpop.f32.mrb[0].mxu0
        %v1889 = vadd.f32 0.0, %v1888
        %v1890 = vpop.f32.mrb[0].mxu0
        %v1891 = vpop.f32.mrb[0].mxu0
        %v1892 = vadd.f32 0.0, %v1891
        %v1893 = vpop.f32.mrb[0].mxu0
        %1894 = vmatprep.mubr.bf16.mxu0 0
        %1895 = vmatmul.mubr.bf16.gmra.mrb[0].mxu0 %v411
        %v1896 = vpop.f32.mrb[0].mxu0
        %v1897 = vadd.f32 0.0, %v1896
        %v1898 = vpop.f32.mrb[0].mxu0
        %v1899 = vpop.f32.mrb[0].mxu0
        %v1900 = vadd.f32 0.0, %v1899
        %v1901 = vpop.f32.mrb[0].mxu0
        %1902 = vmatprep.mubr.bf16.mxu0 0
        %1903 = vmatmul.mubr.bf16.gmra.mrb[0].mxu0 %v412
        %v1904 = vpop.f32.mrb[0].mxu0
        %v1905 = vadd.f32 0.0, %v1904
        %v1906 = vpop.f32.mrb[0].mxu0
        %v1907 = vpop.f32.mrb[0].mxu0
        %v1908 = vadd.f32 0.0, %v1907
        %v1909 = vpop.f32.mrb[0].mxu0
        %1910 = vmatprep.mubr.bf16.mxu0 0
        %1911 = vmatmul.mubr.bf16.gmra.mrb[0].mxu0 %v413
        %v1912 = vpop.f32.mrb[0].mxu0
        %v1913 = vadd.f32 0.0, %v1912
        %v1914 = vpop.f32.mrb[0].mxu0
        %v1915 = vpop.f32.mrb[0].mxu0
        %v1916 = vadd.f32 0.0, %v1915
        %v1917 = vpop.f32.mrb[0].mxu0
        %1918 = vdwg.mxu0
        %v1935 = vunpack.c.l.b16 %v1662
        %v1936 = vunpack.c.l.b16 %v1663
        %v1937 = vunpack.c.l.b16 %v1664
        %v1938 = vunpack.c.l.b16 %v1665
        %v1939 = vunpack.c.l.b16 %v1666
        %v1940 = vunpack.c.l.b16 %v1667
        %v1941 = vunpack.c.l.b16 %v1668
        %v1942 = vunpack.c.l.b16 %v1669
        %v1943 = vunpack.c.l.b16 %v1670
        %v1944 = vunpack.c.l.b16 %v1671
        %v1945 = vunpack.c.l.b16 %v1672
        %v1946 = vunpack.c.l.b16 %v1673
        %v1947 = vunpack.c.l.b16 %v1674
        %v1948 = vunpack.c.l.b16 %v1675
        %v1949 = vunpack.c.l.b16 %v1676
        %v1950 = vunpack.c.l.b16 %v1677
        %v1951 = vpack.c.b16 %v1936, %v1935
        %v1952 = vpack.c.b16 %v1938, %v1937
        %v1953 = vpack.c.b16 %v1940, %v1939
        %v1954 = vpack.c.b16 %v1942, %v1941
        %v1955 = vpack.c.b16 %v1944, %v1943
        %v1956 = vpack.c.b16 %v1946, %v1945
        %v1957 = vpack.c.b16 %v1948, %v1947
        %v1958 = vpack.c.b16 %v1950, %v1949
        %1967 = vmatprep.subr.bf16.mxu0 0
        %1968 = vmatpush1.bf16.msra.mxu0 %v1951
        %1969 = vmatprep.subr.bf16.mxu0 0
        %1970 = vmatpush1.bf16.msra.mxu0 %v1952
        %1971 = vmatprep.subr.bf16.mxu0 0
        %1972 = vmatpush1.bf16.msra.mxu0 %v1953
        %1973 = vmatprep.subr.bf16.mxu0 0
        %1974 = vmatpush1.bf16.msra.mxu0 %v1954
        %1975 = vmatprep.subr.bf16.mxu0 0
        %1976 = vmatpush1.bf16.msra.mxu0 %v1955
        %1977 = vmatprep.subr.bf16.mxu0 0
        %1978 = vmatpush1.bf16.msra.mxu0 %v1956
        %1979 = vmatprep.subr.bf16.mxu0 0
        %1980 = vmatpush1.bf16.msra.mxu0 %v1957
        %1981 = vmatprep.subr.bf16.mxu0 0
        %1982 = vmatpush1.bf16.msra.mxu0 %v1958
        %1983 = vmatprep.subr.bf16.mxu0 0
        %1984 = vmatpush1.bf16.msra.mxu0 0
        %1985 = vmatprep.subr.bf16.mxu0 0
        %1986 = vmatpush1.bf16.msra.mxu0 0
        %1987 = vmatprep.subr.bf16.mxu0 0
        %1988 = vmatpush1.bf16.msra.mxu0 0
        %1989 = vmatprep.subr.bf16.mxu0 0
        %1990 = vmatpush1.bf16.msra.mxu0 0
        %1991 = vmatprep.subr.bf16.mxu0 0
        %1992 = vmatpush1.bf16.msra.mxu0 0
        %1993 = vmatprep.subr.bf16.mxu0 0
        %1994 = vmatpush1.bf16.msra.mxu0 0
        %1995 = vmatprep.subr.bf16.mxu0 0
        %1996 = vmatpush1.bf16.msra.mxu0 0
        %1997 = vmatprep.subr.bf16.mxu0 0
        %1998 = vmatpush1.bf16.msra.mxu0 0
        %1999 = vmatprep.mubr.bf16.mxu0 0
        %2000 = vmatmul.mubr.bf16.gmra.mrb[0].mxu0 %v406
        %v2001 = vpop.f32.mrb[0].mxu0
        %v2002 = vadd.f32 0.0, %v2001
        %v2003 = vpop.f32.mrb[0].mxu0
        %v2004 = vpop.f32.mrb[0].mxu0
        %v2005 = vadd.f32 0.0, %v2004
        %v2006 = vpop.f32.mrb[0].mxu0
        %2007 = vmatprep.mubr.bf16.mxu0 0
        %2008 = vmatmul.mubr.bf16.gmra.mrb[0].mxu0 %v407
        %v2009 = vpop.f32.mrb[0].mxu0
        %v2010 = vadd.f32 0.0, %v2009
        %v2011 = vpop.f32.mrb[0].mxu0
        %v2012 = vpop.f32.mrb[0].mxu0
        %v2013 = vadd.f32 0.0, %v2012
        %v2014 = vpop.f32.mrb[0].mxu0
        %2015 = vmatprep.mubr.bf16.mxu0 0
        %2016 = vmatmul.mubr.bf16.gmra.mrb[0].mxu0 %v408
        %v2017 = vpop.f32.mrb[0].mxu0
        %v2018 = vadd.f32 0.0, %v2017
        %v2019 = vpop.f32.mrb[0].mxu0
        %v2020 = vpop.f32.mrb[0].mxu0
        %v2021 = vadd.f32 0.0, %v2020
        %v2022 = vpop.f32.mrb[0].mxu0
        %2023 = vmatprep.mubr.bf16.mxu0 0
        %2024 = vmatmul.mubr.bf16.gmra.mrb[0].mxu0 %v409
        %v2025 = vpop.f32.mrb[0].mxu0
        %v2026 = vadd.f32 0.0, %v2025
        %v2027 = vpop.f32.mrb[0].mxu0
        %v2028 = vpop.f32.mrb[0].mxu0
        %v2029 = vadd.f32 0.0, %v2028
        %v2030 = vpop.f32.mrb[0].mxu0
        %2031 = vmatprep.mubr.bf16.mxu0 0
        %2032 = vmatmul.mubr.bf16.gmra.mrb[0].mxu0 %v410
        %v2033 = vpop.f32.mrb[0].mxu0
        %v2034 = vadd.f32 0.0, %v2033
        %v2035 = vpop.f32.mrb[0].mxu0
        %v2036 = vpop.f32.mrb[0].mxu0
        %v2037 = vadd.f32 0.0, %v2036
        %v2038 = vpop.f32.mrb[0].mxu0
        %2039 = vmatprep.mubr.bf16.mxu0 0
        %2040 = vmatmul.mubr.bf16.gmra.mrb[0].mxu0 %v411
        %v2041 = vpop.f32.mrb[0].mxu0
        %v2042 = vadd.f32 0.0, %v2041
        %v2043 = vpop.f32.mrb[0].mxu0
        %v2044 = vpop.f32.mrb[0].mxu0
        %v2045 = vadd.f32 0.0, %v2044
        %v2046 = vpop.f32.mrb[0].mxu0
        %2047 = vmatprep.mubr.bf16.mxu0 0
        %2048 = vmatmul.mubr.bf16.gmra.mrb[0].mxu0 %v412
        %v2049 = vpop.f32.mrb[0].mxu0
        %v2050 = vadd.f32 0.0, %v2049
        %v2051 = vpop.f32.mrb[0].mxu0
        %v2052 = vpop.f32.mrb[0].mxu0
        %v2053 = vadd.f32 0.0, %v2052
        %v2054 = vpop.f32.mrb[0].mxu0
        %2055 = vmatprep.mubr.bf16.mxu0 0
        %2056 = vmatmul.mubr.bf16.gmra.mrb[0].mxu0 %v413
        %v2057 = vpop.f32.mrb[0].mxu0
        %v2058 = vadd.f32 0.0, %v2057
        %v2059 = vpop.f32.mrb[0].mxu0
        %v2060 = vpop.f32.mrb[0].mxu0
        %v2061 = vadd.f32 0.0, %v2060
        %v2062 = vpop.f32.mrb[0].mxu0
        %2063 = vdwg.mxu0
        %v2080 = vunpack.c.l.b16 %v1678
        %v2081 = vunpack.c.l.b16 %v1679
        %v2082 = vunpack.c.l.b16 %v1680
        %v2083 = vunpack.c.l.b16 %v1681
        %v2084 = vunpack.c.l.b16 %v1682
        %v2085 = vunpack.c.l.b16 %v1683
        %v2086 = vunpack.c.l.b16 %v1684
        %v2087 = vunpack.c.l.b16 %v1685
        %v2088 = vunpack.c.l.b16 %v1686
        %v2089 = vunpack.c.l.b16 %v1687
        %v2090 = vunpack.c.l.b16 %v1688
        %v2091 = vunpack.c.l.b16 %v1689
        %v2092 = vunpack.c.l.b16 %v1690
        %v2093 = vunpack.c.l.b16 %v1691
        %v2094 = vunpack.c.l.b16 %v1692
        %v2095 = vunpack.c.l.b16 %v1693
        %v2096 = vpack.c.b16 %v2081, %v2080
        %v2097 = vpack.c.b16 %v2083, %v2082
        %v2098 = vpack.c.b16 %v2085, %v2084
        %v2099 = vpack.c.b16 %v2087, %v2086
        %v2100 = vpack.c.b16 %v2089, %v2088
        %v2101 = vpack.c.b16 %v2091, %v2090
        %v2102 = vpack.c.b16 %v2093, %v2092
        %v2103 = vpack.c.b16 %v2095, %v2094
        %2112 = vmatprep.subr.bf16.mxu0 0
        %2113 = vmatpush1.bf16.msra.mxu0 %v2096
        %2114 = vmatprep.subr.bf16.mxu0 0
        %2115 = vmatpush1.bf16.msra.mxu0 %v2097
        %2116 = vmatprep.subr.bf16.mxu0 0
        %2117 = vmatpush1.bf16.msra.mxu0 %v2098
        %2118 = vmatprep.subr.bf16.mxu0 0
        %2119 = vmatpush1.bf16.msra.mxu0 %v2099
        %2120 = vmatprep.subr.bf16.mxu0 0
        %2121 = vmatpush1.bf16.msra.mxu0 %v2100
        %2122 = vmatprep.subr.bf16.mxu0 0
        %2123 = vmatpush1.bf16.msra.mxu0 %v2101
        %2124 = vmatprep.subr.bf16.mxu0 0
        %2125 = vmatpush1.bf16.msra.mxu0 %v2102
        %2126 = vmatprep.subr.bf16.mxu0 0
        %2127 = vmatpush1.bf16.msra.mxu0 %v2103
        %2128 = vmatprep.subr.bf16.mxu0 0
        %2129 = vmatpush1.bf16.msra.mxu0 0
        %2130 = vmatprep.subr.bf16.mxu0 0
        %2131 = vmatpush1.bf16.msra.mxu0 0
        %2132 = vmatprep.subr.bf16.mxu0 0
        %2133 = vmatpush1.bf16.msra.mxu0 0
        %2134 = vmatprep.subr.bf16.mxu0 0
        %2135 = vmatpush1.bf16.msra.mxu0 0
        %2136 = vmatprep.subr.bf16.mxu0 0
        %2137 = vmatpush1.bf16.msra.mxu0 0
        %2138 = vmatprep.subr.bf16.mxu0 0
        %2139 = vmatpush1.bf16.msra.mxu0 0
        %2140 = vmatprep.subr.bf16.mxu0 0
        %2141 = vmatpush1.bf16.msra.mxu0 0
        %2142 = vmatprep.subr.bf16.mxu0 0
        %2143 = vmatpush1.bf16.msra.mxu0 0
        %2144 = vmatprep.mubr.bf16.mxu0 0
        %2145 = vmatmul.mubr.bf16.gmra.mrb[0].mxu0 %v406
        %v2146 = vpop.f32.mrb[0].mxu0
        %v2147 = vadd.f32 0.0, %v2146
        %v2148 = vpop.f32.mrb[0].mxu0
        %v2149 = vpop.f32.mrb[0].mxu0
        %v2150 = vadd.f32 0.0, %v2149
        %v2151 = vpop.f32.mrb[0].mxu0
        %2152 = vmatprep.mubr.bf16.mxu0 0
        %2153 = vmatmul.mubr.bf16.gmra.mrb[0].mxu0 %v407
        %v2154 = vpop.f32.mrb[0].mxu0
        %v2155 = vadd.f32 0.0, %v2154
        %v2156 = vpop.f32.mrb[0].mxu0
        %v2157 = vpop.f32.mrb[0].mxu0
        %v2158 = vadd.f32 0.0, %v2157
        %v2159 = vpop.f32.mrb[0].mxu0
        %2160 = vmatprep.mubr.bf16.mxu0 0
        %2161 = vmatmul.mubr.bf16.gmra.mrb[0].mxu0 %v408
        %v2162 = vpop.f32.mrb[0].mxu0
        %v2163 = vadd.f32 0.0, %v2162
        %v2164 = vpop.f32.mrb[0].mxu0
        %v2165 = vpop.f32.mrb[0].mxu0
        %v2166 = vadd.f32 0.0, %v2165
        %v2167 = vpop.f32.mrb[0].mxu0
        %2168 = vmatprep.mubr.bf16.mxu0 0
        %2169 = vmatmul.mubr.bf16.gmra.mrb[0].mxu0 %v409
        %v2170 = vpop.f32.mrb[0].mxu0
        %v2171 = vadd.f32 0.0, %v2170
        %v2172 = vpop.f32.mrb[0].mxu0
        %v2173 = vpop.f32.mrb[0].mxu0
        %v2174 = vadd.f32 0.0, %v2173
        %v2175 = vpop.f32.mrb[0].mxu0
        %2176 = vmatprep.mubr.bf16.mxu0 0
        %2177 = vmatmul.mubr.bf16.gmra.mrb[0].mxu0 %v410
        %v2178 = vpop.f32.mrb[0].mxu0
        %v2179 = vadd.f32 0.0, %v2178
        %v2180 = vpop.f32.mrb[0].mxu0
        %v2181 = vpop.f32.mrb[0].mxu0
        %v2182 = vadd.f32 0.0, %v2181
        %v2183 = vpop.f32.mrb[0].mxu0
        %2184 = vmatprep.mubr.bf16.mxu0 0
        %2185 = vmatmul.mubr.bf16.gmra.mrb[0].mxu0 %v411
        %v2186 = vpop.f32.mrb[0].mxu0
        %v2187 = vadd.f32 0.0, %v2186
        %v2188 = vpop.f32.mrb[0].mxu0
        %v2189 = vpop.f32.mrb[0].mxu0
        %v2190 = vadd.f32 0.0, %v2189
        %v2191 = vpop.f32.mrb[0].mxu0
        %2192 = vmatprep.mubr.bf16.mxu0 0
        %2193 = vmatmul.mubr.bf16.gmra.mrb[0].mxu0 %v412
        %v2194 = vpop.f32.mrb[0].mxu0
        %v2195 = vadd.f32 0.0, %v2194
        %v2196 = vpop.f32.mrb[0].mxu0
        %v2197 = vpop.f32.mrb[0].mxu0
        %v2198 = vadd.f32 0.0, %v2197
        %v2199 = vpop.f32.mrb[0].mxu0
        %2200 = vmatprep.mubr.bf16.mxu0 0
        %2201 = vmatmul.mubr.bf16.gmra.mrb[0].mxu0 %v413
        %v2202 = vpop.f32.mrb[0].mxu0
        %v2203 = vadd.f32 0.0, %v2202
        %v2204 = vpop.f32.mrb[0].mxu0
        %v2205 = vpop.f32.mrb[0].mxu0
        %v2206 = vadd.f32 0.0, %v2205
        %v2207 = vpop.f32.mrb[0].mxu0
        %2208 = vdwg.mxu0
        %v2225 = vunpack.c.l.b16 %v1694
        %v2226 = vunpack.c.l.b16 %v1695
        %v2227 = vunpack.c.l.b16 %v1696
        %v2228 = vunpack.c.l.b16 %v1697
        %v2229 = vunpack.c.l.b16 %v1698
        %v2230 = vunpack.c.l.b16 %v1699
        %v2231 = vunpack.c.l.b16 %v1700
        %v2232 = vunpack.c.l.b16 %v1701
        %v2233 = vunpack.c.l.b16 %v1702
        %v2234 = vunpack.c.l.b16 %v1703
        %v2235 = vunpack.c.l.b16 %v1704
        %v2236 = vunpack.c.l.b16 %v1705
        %v2237 = vunpack.c.l.b16 %v1706
        %v2238 = vunpack.c.l.b16 %v1707
        %v2239 = vunpack.c.l.b16 %v1708
        %v2240 = vunpack.c.l.b16 %v1709
        %v2241 = vpack.c.b16 %v2226, %v2225
        %v2242 = vpack.c.b16 %v2228, %v2227
        %v2243 = vpack.c.b16 %v2230, %v2229
        %v2244 = vpack.c.b16 %v2232, %v2231
        %v2245 = vpack.c.b16 %v2234, %v2233
        %v2246 = vpack.c.b16 %v2236, %v2235
        %v2247 = vpack.c.b16 %v2238, %v2237
        %v2248 = vpack.c.b16 %v2240, %v2239
        %2257 = vmatprep.subr.bf16.mxu0 0
        %2258 = vmatpush1.bf16.msra.mxu0 %v2241
        %2259 = vmatprep.subr.bf16.mxu0 0
        %2260 = vmatpush1.bf16.msra.mxu0 %v2242
        %2261 = vmatprep.subr.bf16.mxu0 0
        %2262 = vmatpush1.bf16.msra.mxu0 %v2243
        %2263 = vmatprep.subr.bf16.mxu0 0
        %2264 = vmatpush1.bf16.msra.mxu0 %v2244
        %2265 = vmatprep.subr.bf16.mxu0 0
        %2266 = vmatpush1.bf16.msra.mxu0 %v2245
        %2267 = vmatprep.subr.bf16.mxu0 0
        %2268 = vmatpush1.bf16.msra.mxu0 %v2246
        %2269 = vmatprep.subr.bf16.mxu0 0
        %2270 = vmatpush1.bf16.msra.mxu0 %v2247
        %2271 = vmatprep.subr.bf16.mxu0 0
        %2272 = vmatpush1.bf16.msra.mxu0 %v2248
        %2273 = vmatprep.subr.bf16.mxu0 0
        %2274 = vmatpush1.bf16.msra.mxu0 0
        %2275 = vmatprep.subr.bf16.mxu0 0
        %2276 = vmatpush1.bf16.msra.mxu0 0
        %2277 = vmatprep.subr.bf16.mxu0 0
        %2278 = vmatpush1.bf16.msra.mxu0 0
        %2279 = vmatprep.subr.bf16.mxu0 0
        %2280 = vmatpush1.bf16.msra.mxu0 0
        %2281 = vmatprep.subr.bf16.mxu0 0
        %2282 = vmatpush1.bf16.msra.mxu0 0
        %2283 = vmatprep.subr.bf16.mxu0 0
        %2284 = vmatpush1.bf16.msra.mxu0 0
        %2285 = vmatprep.subr.bf16.mxu0 0
        %2286 = vmatpush1.bf16.msra.mxu0 0
        %2287 = vmatprep.subr.bf16.mxu0 0
        %2288 = vmatpush1.bf16.msra.mxu0 0
        %2289 = vmatprep.mubr.bf16.mxu0 0
        %2290 = vmatmul.mubr.bf16.gmra.mrb[0].mxu0 %v406
        %v2291 = vpop.f32.mrb[0].mxu0
        %v2292 = vadd.f32 0.0, %v2291
        %v2293 = vpop.f32.mrb[0].mxu0
        %v2294 = vpop.f32.mrb[0].mxu0
        %v2295 = vadd.f32 0.0, %v2294
        %v2296 = vpop.f32.mrb[0].mxu0
        %2297 = vmatprep.mubr.bf16.mxu0 0
        %2298 = vmatmul.mubr.bf16.gmra.mrb[0].mxu0 %v407
        %v2299 = vpop.f32.mrb[0].mxu0
        %v2300 = vadd.f32 0.0, %v2299
        %v2301 = vpop.f32.mrb[0].mxu0
        %v2302 = vpop.f32.mrb[0].mxu0
        %v2303 = vadd.f32 0.0, %v2302
        %v2304 = vpop.f32.mrb[0].mxu0
        %2305 = vmatprep.mubr.bf16.mxu0 0
        %2306 = vmatmul.mubr.bf16.gmra.mrb[0].mxu0 %v408
        %v2307 = vpop.f32.mrb[0].mxu0
        %v2308 = vadd.f32 0.0, %v2307
        %v2309 = vpop.f32.mrb[0].mxu0
        %v2310 = vpop.f32.mrb[0].mxu0
        %v2311 = vadd.f32 0.0, %v2310
        %v2312 = vpop.f32.mrb[0].mxu0
        %2313 = vmatprep.mubr.bf16.mxu0 0
        %2314 = vmatmul.mubr.bf16.gmra.mrb[0].mxu0 %v409
        %v2315 = vpop.f32.mrb[0].mxu0
        %v2316 = vadd.f32 0.0, %v2315
        %v2317 = vpop.f32.mrb[0].mxu0
        %v2318 = vpop.f32.mrb[0].mxu0
        %v2319 = vadd.f32 0.0, %v2318
        %v2320 = vpop.f32.mrb[0].mxu0
        %2321 = vmatprep.mubr.bf16.mxu0 0
        %2322 = vmatmul.mubr.bf16.gmra.mrb[0].mxu0 %v410
        %v2323 = vpop.f32.mrb[0].mxu0
        %v2324 = vadd.f32 0.0, %v2323
        %v2325 = vpop.f32.mrb[0].mxu0
        %v2326 = vpop.f32.mrb[0].mxu0
        %v2327 = vadd.f32 0.0, %v2326
        %v2328 = vpop.f32.mrb[0].mxu0
        %2329 = vmatprep.mubr.bf16.mxu0 0
        %2330 = vmatmul.mubr.bf16.gmra.mrb[0].mxu0 %v411
        %v2331 = vpop.f32.mrb[0].mxu0
        %v2332 = vadd.f32 0.0, %v2331
        %v2333 = vpop.f32.mrb[0].mxu0
        %v2334 = vpop.f32.mrb[0].mxu0
        %v2335 = vadd.f32 0.0, %v2334
        %v2336 = vpop.f32.mrb[0].mxu0
        %2337 = vmatprep.mubr.bf16.mxu0 0
        %2338 = vmatmul.mubr.bf16.gmra.mrb[0].mxu0 %v412
        %v2339 = vpop.f32.mrb[0].mxu0
        %v2340 = vadd.f32 0.0, %v2339
        %v2341 = vpop.f32.mrb[0].mxu0
        %v2342 = vpop.f32.mrb[0].mxu0
        %v2343 = vadd.f32 0.0, %v2342
        %v2344 = vpop.f32.mrb[0].mxu0
        %2345 = vmatprep.mubr.bf16.mxu0 0
        %2346 = vmatmul.mubr.bf16.gmra.mrb[0].mxu0 %v413
        %v2347 = vpop.f32.mrb[0].mxu0
        %v2348 = vadd.f32 0.0, %v2347
        %v2349 = vpop.f32.mrb[0].mxu0
        %v2350 = vpop.f32.mrb[0].mxu0
        %v2351 = vadd.f32 0.0, %v2350
        %v2352 = vpop.f32.mrb[0].mxu0
        %2353 = vdwg.mxu0
        %v2370 = vunpack.c.l.b16 %v1710
        %v2371 = vunpack.c.l.b16 %v1711
        %v2372 = vunpack.c.l.b16 %v1712
        %v2373 = vunpack.c.l.b16 %v1713
        %v2374 = vunpack.c.l.b16 %v1714
        %v2375 = vunpack.c.l.b16 %v1715
        %v2376 = vunpack.c.l.b16 %v1716
        %v2377 = vunpack.c.l.b16 %v1717
        %v2378 = vunpack.c.l.b16 %v1718
        %v2379 = vunpack.c.l.b16 %v1719
        %v2380 = vunpack.c.l.b16 %v1720
        %v2381 = vunpack.c.l.b16 %v1721
        %v2382 = vunpack.c.l.b16 %v1722
        %v2383 = vunpack.c.l.b16 %v1723
        %v2384 = vunpack.c.l.b16 %v1724
        %v2385 = vunpack.c.l.b16 %v1725
        %v2386 = vpack.c.b16 %v2371, %v2370
        %v2387 = vpack.c.b16 %v2373, %v2372
        %v2388 = vpack.c.b16 %v2375, %v2374
        %v2389 = vpack.c.b16 %v2377, %v2376
        %v2390 = vpack.c.b16 %v2379, %v2378
        %v2391 = vpack.c.b16 %v2381, %v2380
        %v2392 = vpack.c.b16 %v2383, %v2382
        %v2393 = vpack.c.b16 %v2385, %v2384
        %2402 = vmatprep.subr.bf16.mxu0 0
        %2403 = vmatpush1.bf16.msra.mxu0 %v2386
        %2404 = vmatprep.subr.bf16.mxu0 0
        %2405 = vmatpush1.bf16.msra.mxu0 %v2387
        %2406 = vmatprep.subr.bf16.mxu0 0
        %2407 = vmatpush1.bf16.msra.mxu0 %v2388
        %2408 = vmatprep.subr.bf16.mxu0 0
        %2409 = vmatpush1.bf16.msra.mxu0 %v2389
        %2410 = vmatprep.subr.bf16.mxu0 0
        %2411 = vmatpush1.bf16.msra.mxu0 %v2390
        %2412 = vmatprep.subr.bf16.mxu0 0
        %2413 = vmatpush1.bf16.msra.mxu0 %v2391
        %2414 = vmatprep.subr.bf16.mxu0 0
        %2415 = vmatpush1.bf16.msra.mxu0 %v2392
        %2416 = vmatprep.subr.bf16.mxu0 0
        %2417 = vmatpush1.bf16.msra.mxu0 %v2393
        %2418 = vmatprep.subr.bf16.mxu0 0
        %2419 = vmatpush1.bf16.msra.mxu0 0
        %2420 = vmatprep.subr.bf16.mxu0 0
        %2421 = vmatpush1.bf16.msra.mxu0 0
        %2422 = vmatprep.subr.bf16.mxu0 0
        %2423 = vmatpush1.bf16.msra.mxu0 0
        %2424 = vmatprep.subr.bf16.mxu0 0
        %2425 = vmatpush1.bf16.msra.mxu0 0
        %2426 = vmatprep.subr.bf16.mxu0 0
        %2427 = vmatpush1.bf16.msra.mxu0 0
        %2428 = vmatprep.subr.bf16.mxu0 0
        %2429 = vmatpush1.bf16.msra.mxu0 0
        %2430 = vmatprep.subr.bf16.mxu0 0
        %2431 = vmatpush1.bf16.msra.mxu0 0
        %2432 = vmatprep.subr.bf16.mxu0 0
        %2433 = vmatpush1.bf16.msra.mxu0 0
        %2434 = vmatprep.mubr.bf16.mxu0 0
        %2435 = vmatmul.mubr.bf16.gmra.mrb[0].mxu0 %v406
        %v2436 = vpop.f32.mrb[0].mxu0
        %v2437 = vadd.f32 0.0, %v2436
        %v2438 = vpop.f32.mrb[0].mxu0
        %v2439 = vpop.f32.mrb[0].mxu0
        %v2440 = vadd.f32 0.0, %v2439
        %v2441 = vpop.f32.mrb[0].mxu0
        %2442 = vmatprep.mubr.bf16.mxu0 0
        %2443 = vmatmul.mubr.bf16.gmra.mrb[0].mxu0 %v407
        %v2444 = vpop.f32.mrb[0].mxu0
        %v2445 = vadd.f32 0.0, %v2444
        %v2446 = vpop.f32.mrb[0].mxu0
        %v2447 = vpop.f32.mrb[0].mxu0
        %v2448 = vadd.f32 0.0, %v2447
        %v2449 = vpop.f32.mrb[0].mxu0
        %2450 = vmatprep.mubr.bf16.mxu0 0
        %2451 = vmatmul.mubr.bf16.gmra.mrb[0].mxu0 %v408
        %v2452 = vpop.f32.mrb[0].mxu0
        %v2453 = vadd.f32 0.0, %v2452
        %v2454 = vpop.f32.mrb[0].mxu0
        %v2455 = vpop.f32.mrb[0].mxu0
        %v2456 = vadd.f32 0.0, %v2455
        %v2457 = vpop.f32.mrb[0].mxu0
        %2458 = vmatprep.mubr.bf16.mxu0 0
        %2459 = vmatmul.mubr.bf16.gmra.mrb[0].mxu0 %v409
        %v2460 = vpop.f32.mrb[0].mxu0
        %v2461 = vadd.f32 0.0, %v2460
        %v2462 = vpop.f32.mrb[0].mxu0
        %v2463 = vpop.f32.mrb[0].mxu0
        %v2464 = vadd.f32 0.0, %v2463
        %v2465 = vpop.f32.mrb[0].mxu0
        %2466 = vmatprep.mubr.bf16.mxu0 0
        %2467 = vmatmul.mubr.bf16.gmra.mrb[0].mxu0 %v410
        %v2468 = vpop.f32.mrb[0].mxu0
        %v2469 = vadd.f32 0.0, %v2468
        %v2470 = vpop.f32.mrb[0].mxu0
        %v2471 = vpop.f32.mrb[0].mxu0
        %v2472 = vadd.f32 0.0, %v2471
        %v2473 = vpop.f32.mrb[0].mxu0
        %2474 = vmatprep.mubr.bf16.mxu0 0
        %2475 = vmatmul.mubr.bf16.gmra.mrb[0].mxu0 %v411
        %v2476 = vpop.f32.mrb[0].mxu0
        %v2477 = vadd.f32 0.0, %v2476
        %v2478 = vpop.f32.mrb[0].mxu0
        %v2479 = vpop.f32.mrb[0].mxu0
        %v2480 = vadd.f32 0.0, %v2479
        %v2481 = vpop.f32.mrb[0].mxu0
        %2482 = vmatprep.mubr.bf16.mxu0 0
        %2483 = vmatmul.mubr.bf16.gmra.mrb[0].mxu0 %v412
        %v2484 = vpop.f32.mrb[0].mxu0
        %v2485 = vadd.f32 0.0, %v2484
        %v2486 = vpop.f32.mrb[0].mxu0
        %v2487 = vpop.f32.mrb[0].mxu0
        %v2488 = vadd.f32 0.0, %v2487
        %v2489 = vpop.f32.mrb[0].mxu0
        %2490 = vmatprep.mubr.bf16.mxu0 0
        %2491 = vmatmul.mubr.bf16.gmra.mrb[0].mxu0 %v413
        %v2492 = vpop.f32.mrb[0].mxu0
        %v2493 = vadd.f32 0.0, %v2492
        %v2494 = vpop.f32.mrb[0].mxu0
        %v2495 = vpop.f32.mrb[0].mxu0
        %v2496 = vadd.f32 0.0, %v2495
        %v2497 = vpop.f32.mrb[0].mxu0
        %2498 = vdwg.mxu0
        %v2515 = vunpack.c.l.b16 %v1726
        %v2516 = vunpack.c.l.b16 %v1727
        %v2517 = vunpack.c.l.b16 %v1728
        %v2518 = vunpack.c.l.b16 %v1729
        %v2519 = vunpack.c.l.b16 %v1730
        %v2520 = vunpack.c.l.b16 %v1731
        %v2521 = vunpack.c.l.b16 %v1732
        %v2522 = vunpack.c.l.b16 %v1733
        %v2523 = vunpack.c.l.b16 %v1734
        %v2524 = vunpack.c.l.b16 %v1735
        %v2525 = vunpack.c.l.b16 %v1736
        %v2526 = vunpack.c.l.b16 %v1737
        %v2527 = vunpack.c.l.b16 %v1738
        %v2528 = vunpack.c.l.b16 %v1739
        %v2529 = vunpack.c.l.b16 %v1740
        %v2530 = vunpack.c.l.b16 %v1741
        %v2531 = vpack.c.b16 %v2516, %v2515
        %v2532 = vpack.c.b16 %v2518, %v2517
        %v2533 = vpack.c.b16 %v2520, %v2519
        %v2534 = vpack.c.b16 %v2522, %v2521
        %v2535 = vpack.c.b16 %v2524, %v2523
        %v2536 = vpack.c.b16 %v2526, %v2525
        %v2537 = vpack.c.b16 %v2528, %v2527
        %v2538 = vpack.c.b16 %v2530, %v2529
        %2547 = vmatprep.subr.bf16.mxu0 0
        %2548 = vmatpush1.bf16.msra.mxu0 %v2531
        %2549 = vmatprep.subr.bf16.mxu0 0
        %2550 = vmatpush1.bf16.msra.mxu0 %v2532
        %2551 = vmatprep.subr.bf16.mxu0 0
        %2552 = vmatpush1.bf16.msra.mxu0 %v2533
        %2553 = vmatprep.subr.bf16.mxu0 0
        %2554 = vmatpush1.bf16.msra.mxu0 %v2534
        %2555 = vmatprep.subr.bf16.mxu0 0
        %2556 = vmatpush1.bf16.msra.mxu0 %v2535
        %2557 = vmatprep.subr.bf16.mxu0 0
        %2558 = vmatpush1.bf16.msra.mxu0 %v2536
        %2559 = vmatprep.subr.bf16.mxu0 0
        %2560 = vmatpush1.bf16.msra.mxu0 %v2537
        %2561 = vmatprep.subr.bf16.mxu0 0
        %2562 = vmatpush1.bf16.msra.mxu0 %v2538
        %2563 = vmatprep.subr.bf16.mxu0 0
        %2564 = vmatpush1.bf16.msra.mxu0 0
        %2565 = vmatprep.subr.bf16.mxu0 0
        %2566 = vmatpush1.bf16.msra.mxu0 0
        %2567 = vmatprep.subr.bf16.mxu0 0
        %2568 = vmatpush1.bf16.msra.mxu0 0
        %2569 = vmatprep.subr.bf16.mxu0 0
        %2570 = vmatpush1.bf16.msra.mxu0 0
        %2571 = vmatprep.subr.bf16.mxu0 0
        %2572 = vmatpush1.bf16.msra.mxu0 0
        %2573 = vmatprep.subr.bf16.mxu0 0
        %2574 = vmatpush1.bf16.msra.mxu0 0
        %2575 = vmatprep.subr.bf16.mxu0 0
        %2576 = vmatpush1.bf16.msra.mxu0 0
        %2577 = vmatprep.subr.bf16.mxu0 0
        %2578 = vmatpush1.bf16.msra.mxu0 0
        %2579 = vmatprep.mubr.bf16.mxu0 0
        %2580 = vmatmul.mubr.bf16.gmra.mrb[0].mxu0 %v406
        %v2581 = vpop.f32.mrb[0].mxu0
        %v2582 = vadd.f32 0.0, %v2581
        %v2583 = vpop.f32.mrb[0].mxu0
        %v2584 = vpop.f32.mrb[0].mxu0
        %v2585 = vadd.f32 0.0, %v2584
        %v2586 = vpop.f32.mrb[0].mxu0
        %2587 = vmatprep.mubr.bf16.mxu0 0
        %2588 = vmatmul.mubr.bf16.gmra.mrb[0].mxu0 %v407
        %v2589 = vpop.f32.mrb[0].mxu0
        %v2590 = vadd.f32 0.0, %v2589
        %v2591 = vpop.f32.mrb[0].mxu0
        %v2592 = vpop.f32.mrb[0].mxu0
        %v2593 = vadd.f32 0.0, %v2592
        %v2594 = vpop.f32.mrb[0].mxu0
        %2595 = vmatprep.mubr.bf16.mxu0 0
        %2596 = vmatmul.mubr.bf16.gmra.mrb[0].mxu0 %v408
        %v2597 = vpop.f32.mrb[0].mxu0
        %v2598 = vadd.f32 0.0, %v2597
        %v2599 = vpop.f32.mrb[0].mxu0
        %v2600 = vpop.f32.mrb[0].mxu0
        %v2601 = vadd.f32 0.0, %v2600
        %v2602 = vpop.f32.mrb[0].mxu0
        %2603 = vmatprep.mubr.bf16.mxu0 0
        %2604 = vmatmul.mubr.bf16.gmra.mrb[0].mxu0 %v409
        %v2605 = vpop.f32.mrb[0].mxu0
        %v2606 = vadd.f32 0.0, %v2605
        %v2607 = vpop.f32.mrb[0].mxu0
        %v2608 = vpop.f32.mrb[0].mxu0
        %v2609 = vadd.f32 0.0, %v2608
        %v2610 = vpop.f32.mrb[0].mxu0
        %2611 = vmatprep.mubr.bf16.mxu0 0
        %2612 = vmatmul.mubr.bf16.gmra.mrb[0].mxu0 %v410
        %v2613 = vpop.f32.mrb[0].mxu0
        %v2614 = vadd.f32 0.0, %v2613
        %v2615 = vpop.f32.mrb[0].mxu0
        %v2616 = vpop.f32.mrb[0].mxu0
        %v2617 = vadd.f32 0.0, %v2616
        %v2618 = vpop.f32.mrb[0].mxu0
        %2619 = vmatprep.mubr.bf16.mxu0 0
        %2620 = vmatmul.mubr.bf16.gmra.mrb[0].mxu0 %v411
        %v2621 = vpop.f32.mrb[0].mxu0
        %v2622 = vadd.f32 0.0, %v2621
        %v2623 = vpop.f32.mrb[0].mxu0
        %v2624 = vpop.f32.mrb[0].mxu0
        %v2625 = vadd.f32 0.0, %v2624
        %v2626 = vpop.f32.mrb[0].mxu0
        %2627 = vmatprep.mubr.bf16.mxu0 0
        %2628 = vmatmul.mubr.bf16.gmra.mrb[0].mxu0 %v412
        %v2629 = vpop.f32.mrb[0].mxu0
        %v2630 = vadd.f32 0.0, %v2629
        %v2631 = vpop.f32.mrb[0].mxu0
        %v2632 = vpop.f32.mrb[0].mxu0
        %v2633 = vadd.f32 0.0, %v2632
        %v2634 = vpop.f32.mrb[0].mxu0
        %2635 = vmatprep.mubr.bf16.mxu0 0
        %2636 = vmatmul.mubr.bf16.gmra.mrb[0].mxu0 %v413
        %v2637 = vpop.f32.mrb[0].mxu0
        %v2638 = vadd.f32 0.0, %v2637
        %v2639 = vpop.f32.mrb[0].mxu0
        %v2640 = vpop.f32.mrb[0].mxu0
        %v2641 = vadd.f32 0.0, %v2640
        %v2642 = vpop.f32.mrb[0].mxu0
        %2643 = vdwg.mxu0
        %v2660 = vunpack.c.l.b16 %v1742
        %v2661 = vunpack.c.l.b16 %v1743
        %v2662 = vunpack.c.l.b16 %v1744
        %v2663 = vunpack.c.l.b16 %v1745
        %v2664 = vunpack.c.l.b16 %v1746
        %v2665 = vunpack.c.l.b16 %v1747
        %v2666 = vunpack.c.l.b16 %v1748
        %v2667 = vunpack.c.l.b16 %v1749
        %v2668 = vunpack.c.l.b16 %v1750
        %v2669 = vunpack.c.l.b16 %v1751
        %v2670 = vunpack.c.l.b16 %v1752
        %v2671 = vunpack.c.l.b16 %v1753
        %v2672 = vunpack.c.l.b16 %v1754
        %v2673 = vunpack.c.l.b16 %v1755
        %v2674 = vunpack.c.l.b16 %v1756
        %v2675 = vunpack.c.l.b16 %v1757
        %v2676 = vpack.c.b16 %v2661, %v2660
        %v2677 = vpack.c.b16 %v2663, %v2662
        %v2678 = vpack.c.b16 %v2665, %v2664
        %v2679 = vpack.c.b16 %v2667, %v2666
        %v2680 = vpack.c.b16 %v2669, %v2668
        %v2681 = vpack.c.b16 %v2671, %v2670
        %v2682 = vpack.c.b16 %v2673, %v2672
        %v2683 = vpack.c.b16 %v2675, %v2674
        %2692 = vmatprep.subr.bf16.mxu0 0
        %2693 = vmatpush1.bf16.msra.mxu0 %v2676
        %2694 = vmatprep.subr.bf16.mxu0 0
        %2695 = vmatpush1.bf16.msra.mxu0 %v2677
        %2696 = vmatprep.subr.bf16.mxu0 0
        %2697 = vmatpush1.bf16.msra.mxu0 %v2678
        %2698 = vmatprep.subr.bf16.mxu0 0
        %2699 = vmatpush1.bf16.msra.mxu0 %v2679
        %2700 = vmatprep.subr.bf16.mxu0 0
        %2701 = vmatpush1.bf16.msra.mxu0 %v2680
        %2702 = vmatprep.subr.bf16.mxu0 0
        %2703 = vmatpush1.bf16.msra.mxu0 %v2681
        %2704 = vmatprep.subr.bf16.mxu0 0
        %2705 = vmatpush1.bf16.msra.mxu0 %v2682
        %2706 = vmatprep.subr.bf16.mxu0 0
        %2707 = vmatpush1.bf16.msra.mxu0 %v2683
        %2708 = vmatprep.subr.bf16.mxu0 0
        %2709 = vmatpush1.bf16.msra.mxu0 0
        %2710 = vmatprep.subr.bf16.mxu0 0
        %2711 = vmatpush1.bf16.msra.mxu0 0
        %2712 = vmatprep.subr.bf16.mxu0 0
        %2713 = vmatpush1.bf16.msra.mxu0 0
        %2714 = vmatprep.subr.bf16.mxu0 0
        %2715 = vmatpush1.bf16.msra.mxu0 0
        %2716 = vmatprep.subr.bf16.mxu0 0
        %2717 = vmatpush1.bf16.msra.mxu0 0
        %2718 = vmatprep.subr.bf16.mxu0 0
        %2719 = vmatpush1.bf16.msra.mxu0 0
        %2720 = vmatprep.subr.bf16.mxu0 0
        %2721 = vmatpush1.bf16.msra.mxu0 0
        %2722 = vmatprep.subr.bf16.mxu0 0
        %2723 = vmatpush1.bf16.msra.mxu0 0
        %2724 = vmatprep.mubr.bf16.mxu0 0
        %2725 = vmatmul.mubr.bf16.gmra.mrb[0].mxu0 %v406
        %v2726 = vpop.f32.mrb[0].mxu0
        %v2727 = vadd.f32 0.0, %v2726
        %v2728 = vpop.f32.mrb[0].mxu0
        %v2729 = vpop.f32.mrb[0].mxu0
        %v2730 = vadd.f32 0.0, %v2729
        %v2731 = vpop.f32.mrb[0].mxu0
        %2732 = vmatprep.mubr.bf16.mxu0 0
        %2733 = vmatmul.mubr.bf16.gmra.mrb[0].mxu0 %v407
        %v2734 = vpop.f32.mrb[0].mxu0
        %v2735 = vadd.f32 0.0, %v2734
        %v2736 = vpop.f32.mrb[0].mxu0
        %v2737 = vpop.f32.mrb[0].mxu0
        %v2738 = vadd.f32 0.0, %v2737
        %v2739 = vpop.f32.mrb[0].mxu0
        %2740 = vmatprep.mubr.bf16.mxu0 0
        %2741 = vmatmul.mubr.bf16.gmra.mrb[0].mxu0 %v408
        %v2742 = vpop.f32.mrb[0].mxu0
        %v2743 = vadd.f32 0.0, %v2742
        %v2744 = vpop.f32.mrb[0].mxu0
        %v2745 = vpop.f32.mrb[0].mxu0
        %v2746 = vadd.f32 0.0, %v2745
        %v2747 = vpop.f32.mrb[0].mxu0
        %2748 = vmatprep.mubr.bf16.mxu0 0
        %2749 = vmatmul.mubr.bf16.gmra.mrb[0].mxu0 %v409
        %v2750 = vpop.f32.mrb[0].mxu0
        %v2751 = vadd.f32 0.0, %v2750
        %v2752 = vpop.f32.mrb[0].mxu0
        %v2753 = vpop.f32.mrb[0].mxu0
        %v2754 = vadd.f32 0.0, %v2753
        %v2755 = vpop.f32.mrb[0].mxu0
        %2756 = vmatprep.mubr.bf16.mxu0 0
        %2757 = vmatmul.mubr.bf16.gmra.mrb[0].mxu0 %v410
        %v2758 = vpop.f32.mrb[0].mxu0
        %v2759 = vadd.f32 0.0, %v2758
        %v2760 = vpop.f32.mrb[0].mxu0
        %v2761 = vpop.f32.mrb[0].mxu0
        %v2762 = vadd.f32 0.0, %v2761
        %v2763 = vpop.f32.mrb[0].mxu0
        %2764 = vmatprep.mubr.bf16.mxu0 0
        %2765 = vmatmul.mubr.bf16.gmra.mrb[0].mxu0 %v411
        %v2766 = vpop.f32.mrb[0].mxu0
        %v2767 = vadd.f32 0.0, %v2766
        %v2768 = vpop.f32.mrb[0].mxu0
        %v2769 = vpop.f32.mrb[0].mxu0
        %v2770 = vadd.f32 0.0, %v2769
        %v2771 = vpop.f32.mrb[0].mxu0
        %2772 = vmatprep.mubr.bf16.mxu0 0
        %2773 = vmatmul.mubr.bf16.gmra.mrb[0].mxu0 %v412
        %v2774 = vpop.f32.mrb[0].mxu0
        %v2775 = vadd.f32 0.0, %v2774
        %v2776 = vpop.f32.mrb[0].mxu0
        %v2777 = vpop.f32.mrb[0].mxu0
        %v2778 = vadd.f32 0.0, %v2777
        %v2779 = vpop.f32.mrb[0].mxu0
        %2780 = vmatprep.mubr.bf16.mxu0 0
        %2781 = vmatmul.mubr.bf16.gmra.mrb[0].mxu0 %v413
        %v2782 = vpop.f32.mrb[0].mxu0
        %v2783 = vadd.f32 0.0, %v2782
        %v2784 = vpop.f32.mrb[0].mxu0
        %v2785 = vpop.f32.mrb[0].mxu0
        %v2786 = vadd.f32 0.0, %v2785
        %v2787 = vpop.f32.mrb[0].mxu0
        %2788 = vdwg.mxu0
        %v2805 = vunpack.c.l.b16 %v1758
        %v2806 = vunpack.c.l.b16 %v1759
        %v2807 = vunpack.c.l.b16 %v1760
        %v2808 = vunpack.c.l.b16 %v1761
        %v2809 = vunpack.c.l.b16 %v1762
        %v2810 = vunpack.c.l.b16 %v1763
        %v2811 = vunpack.c.l.b16 %v1764
        %v2812 = vunpack.c.l.b16 %v1765
        %v2813 = vunpack.c.l.b16 %v1766
        %v2814 = vunpack.c.l.b16 %v1767
        %v2815 = vunpack.c.l.b16 %v1768
        %v2816 = vunpack.c.l.b16 %v1769
        %v2817 = vunpack.c.l.b16 %v1770
        %v2818 = vunpack.c.l.b16 %v1771
        %v2819 = vunpack.c.l.b16 %v1772
        %v2820 = vunpack.c.l.b16 %v1773
        %v2821 = vpack.c.b16 %v2806, %v2805
        %v2822 = vpack.c.b16 %v2808, %v2807
        %v2823 = vpack.c.b16 %v2810, %v2809
        %v2824 = vpack.c.b16 %v2812, %v2811
        %v2825 = vpack.c.b16 %v2814, %v2813
        %v2826 = vpack.c.b16 %v2816, %v2815
        %v2827 = vpack.c.b16 %v2818, %v2817
        %v2828 = vpack.c.b16 %v2820, %v2819
        %2837 = vmatprep.subr.bf16.mxu0 0
        %2838 = vmatpush1.bf16.msra.mxu0 %v2821
        %2839 = vmatprep.subr.bf16.mxu0 0
        %2840 = vmatpush1.bf16.msra.mxu0 %v2822
        %2841 = vmatprep.subr.bf16.mxu0 0
        %2842 = vmatpush1.bf16.msra.mxu0 %v2823
        %2843 = vmatprep.subr.bf16.mxu0 0
        %2844 = vmatpush1.bf16.msra.mxu0 %v2824
        %2845 = vmatprep.subr.bf16.mxu0 0
        %2846 = vmatpush1.bf16.msra.mxu0 %v2825
        %2847 = vmatprep.subr.bf16.mxu0 0
        %2848 = vmatpush1.bf16.msra.mxu0 %v2826
        %2849 = vmatprep.subr.bf16.mxu0 0
        %2850 = vmatpush1.bf16.msra.mxu0 %v2827
        %2851 = vmatprep.subr.bf16.mxu0 0
        %2852 = vmatpush1.bf16.msra.mxu0 %v2828
        %2853 = vmatprep.subr.bf16.mxu0 0
        %2854 = vmatpush1.bf16.msra.mxu0 0
        %2855 = vmatprep.subr.bf16.mxu0 0
        %2856 = vmatpush1.bf16.msra.mxu0 0
        %2857 = vmatprep.subr.bf16.mxu0 0
        %2858 = vmatpush1.bf16.msra.mxu0 0
        %2859 = vmatprep.subr.bf16.mxu0 0
        %2860 = vmatpush1.bf16.msra.mxu0 0
        %2861 = vmatprep.subr.bf16.mxu0 0
        %2862 = vmatpush1.bf16.msra.mxu0 0
        %2863 = vmatprep.subr.bf16.mxu0 0
        %2864 = vmatpush1.bf16.msra.mxu0 0
        %2865 = vmatprep.subr.bf16.mxu0 0
        %2866 = vmatpush1.bf16.msra.mxu0 0
        %2867 = vmatprep.subr.bf16.mxu0 0
        %2868 = vmatpush1.bf16.msra.mxu0 0
        %2869 = vmatprep.mubr.bf16.mxu0 0
        %2870 = vmatmul.mubr.bf16.gmra.mrb[0].mxu0 %v406
        %v2871 = vpop.f32.mrb[0].mxu0
        %v2872 = vadd.f32 0.0, %v2871
        %v2873 = vpop.f32.mrb[0].mxu0
        %v2874 = vpop.f32.mrb[0].mxu0
        %v2875 = vadd.f32 0.0, %v2874
        %v2876 = vpop.f32.mrb[0].mxu0
        %2877 = vmatprep.mubr.bf16.mxu0 0
        %2878 = vmatmul.mubr.bf16.gmra.mrb[0].mxu0 %v407
        %v2879 = vpop.f32.mrb[0].mxu0
        %v2880 = vadd.f32 0.0, %v2879
        %v2881 = vpop.f32.mrb[0].mxu0
        %v2882 = vpop.f32.mrb[0].mxu0
        %v2883 = vadd.f32 0.0, %v2882
        %v2884 = vpop.f32.mrb[0].mxu0
        %2885 = vmatprep.mubr.bf16.mxu0 0
        %2886 = vmatmul.mubr.bf16.gmra.mrb[0].mxu0 %v408
        %v2887 = vpop.f32.mrb[0].mxu0
        %v2888 = vadd.f32 0.0, %v2887
        %v2889 = vpop.f32.mrb[0].mxu0
        %v2890 = vpop.f32.mrb[0].mxu0
        %v2891 = vadd.f32 0.0, %v2890
        %v2892 = vpop.f32.mrb[0].mxu0
        %2893 = vmatprep.mubr.bf16.mxu0 0
        %2894 = vmatmul.mubr.bf16.gmra.mrb[0].mxu0 %v409
        %v2895 = vpop.f32.mrb[0].mxu0
        %v2896 = vadd.f32 0.0, %v2895
        %v2897 = vpop.f32.mrb[0].mxu0
        %v2898 = vpop.f32.mrb[0].mxu0
        %v2899 = vadd.f32 0.0, %v2898
        %v2900 = vpop.f32.mrb[0].mxu0
        %2901 = vmatprep.mubr.bf16.mxu0 0
        %2902 = vmatmul.mubr.bf16.gmra.mrb[0].mxu0 %v410
        %v2903 = vpop.f32.mrb[0].mxu0
        %v2904 = vadd.f32 0.0, %v2903
        %v2905 = vpop.f32.mrb[0].mxu0
        %v2906 = vpop.f32.mrb[0].mxu0
        %v2907 = vadd.f32 0.0, %v2906
        %v2908 = vpop.f32.mrb[0].mxu0
        %2909 = vmatprep.mubr.bf16.mxu0 0
        %2910 = vmatmul.mubr.bf16.gmra.mrb[0].mxu0 %v411
        %v2911 = vpop.f32.mrb[0].mxu0
        %v2912 = vadd.f32 0.0, %v2911
        %v2913 = vpop.f32.mrb[0].mxu0
        %v2914 = vpop.f32.mrb[0].mxu0
        %v2915 = vadd.f32 0.0, %v2914
        %v2916 = vpop.f32.mrb[0].mxu0
        %2917 = vmatprep.mubr.bf16.mxu0 0
        %2918 = vmatmul.mubr.bf16.gmra.mrb[0].mxu0 %v412
        %v2919 = vpop.f32.mrb[0].mxu0
        %v2920 = vadd.f32 0.0, %v2919
        %v2921 = vpop.f32.mrb[0].mxu0
        %v2922 = vpop.f32.mrb[0].mxu0
        %v2923 = vadd.f32 0.0, %v2922
        %v2924 = vpop.f32.mrb[0].mxu0
        %2925 = vmatprep.mubr.bf16.mxu0 0
        %2926 = vmatmul.mubr.bf16.gmra.mrb[0].mxu0 %v413
        %v2927 = vpop.f32.mrb[0].mxu0
        %v2928 = vadd.f32 0.0, %v2927
        %v2929 = vpop.f32.mrb[0].mxu0
        %v2930 = vpop.f32.mrb[0].mxu0
        %v2931 = vadd.f32 0.0, %v2930
        %v2932 = vpop.f32.mrb[0].mxu0
        %2933 = vdwg.mxu0
        %v2934 = vpack.c.bf16 %v1860, %v1857
        %v2935 = vpack.c.bf16 %v1868, %v1865
        %v2936 = vpack.c.bf16 %v1876, %v1873
        %v2937 = vpack.c.bf16 %v1884, %v1881
        %v2938 = vpack.c.bf16 %v1892, %v1889
        %v2939 = vpack.c.bf16 %v1900, %v1897
        %v2940 = vpack.c.bf16 %v1908, %v1905
        %v2941 = vpack.c.bf16 %v1916, %v1913
        %v2942 = vpack.c.bf16 %v2005, %v2002
        %v2943 = vpack.c.bf16 %v2013, %v2010
        %v2944 = vpack.c.bf16 %v2021, %v2018
        %v2945 = vpack.c.bf16 %v2029, %v2026
        %v2946 = vpack.c.bf16 %v2037, %v2034
        %v2947 = vpack.c.bf16 %v2045, %v2042
        %v2948 = vpack.c.bf16 %v2053, %v2050
        %v2949 = vpack.c.bf16 %v2061, %v2058
        %v2950 = vpack.c.bf16 %v2150, %v2147
        %v2951 = vpack.c.bf16 %v2158, %v2155
        %v2952 = vpack.c.bf16 %v2166, %v2163
        %v2953 = vpack.c.bf16 %v2174, %v2171
        %v2954 = vpack.c.bf16 %v2182, %v2179
        %v2955 = vpack.c.bf16 %v2190, %v2187
        %v2956 = vpack.c.bf16 %v2198, %v2195
        %v2957 = vpack.c.bf16 %v2206, %v2203
        %v2958 = vpack.c.bf16 %v2295, %v2292
        %v2959 = vpack.c.bf16 %v2303, %v2300
        %v2960 = vpack.c.bf16 %v2311, %v2308
        %v2961 = vpack.c.bf16 %v2319, %v2316
        %v2962 = vpack.c.bf16 %v2327, %v2324
        %v2963 = vpack.c.bf16 %v2335, %v2332
        %v2964 = vpack.c.bf16 %v2343, %v2340
        %v2965 = vpack.c.bf16 %v2351, %v2348
        %v2966 = vpack.c.bf16 %v2440, %v2437
        %v2967 = vpack.c.bf16 %v2448, %v2445
        %v2968 = vpack.c.bf16 %v2456, %v2453
        %v2969 = vpack.c.bf16 %v2464, %v2461
        %v2970 = vpack.c.bf16 %v2472, %v2469
        %v2971 = vpack.c.bf16 %v2480, %v2477
        %v2972 = vpack.c.bf16 %v2488, %v2485
        %v2973 = vpack.c.bf16 %v2496, %v2493
        %v2974 = vpack.c.bf16 %v2585, %v2582
        %v2975 = vpack.c.bf16 %v2593, %v2590
        %v2976 = vpack.c.bf16 %v2601, %v2598
        %v2977 = vpack.c.bf16 %v2609, %v2606
        %v2978 = vpack.c.bf16 %v2617, %v2614
        %v2979 = vpack.c.bf16 %v2625, %v2622
        %v2980 = vpack.c.bf16 %v2633, %v2630
        %v2981 = vpack.c.bf16 %v2641, %v2638
        %v2982 = vpack.c.bf16 %v2730, %v2727
        %v2983 = vpack.c.bf16 %v2738, %v2735
        %v2984 = vpack.c.bf16 %v2746, %v2743
        %v2985 = vpack.c.bf16 %v2754, %v2751
        %v2986 = vpack.c.bf16 %v2762, %v2759
        %v2987 = vpack.c.bf16 %v2770, %v2767
        %v2988 = vpack.c.bf16 %v2778, %v2775
        %v2989 = vpack.c.bf16 %v2786, %v2783
        %v2990 = vpack.c.bf16 %v2875, %v2872
        %v2991 = vpack.c.bf16 %v2883, %v2880
        %v2992 = vpack.c.bf16 %v2891, %v2888
        %v2993 = vpack.c.bf16 %v2899, %v2896
        %v2994 = vpack.c.bf16 %v2907, %v2904
        %v2995 = vpack.c.bf16 %v2915, %v2912
        %v2996 = vpack.c.bf16 %v2923, %v2920
        %v2997 = vpack.c.bf16 %v2931, %v2928
        %v2998 = vld [vmem:[%s3] sm:$0xf]
        %v2999 = vld [vmem:[%s3 + $0x4] sm:$0xf]
        %v3000 = vld [vmem:[%s3 + $0x8] sm:$0xf]
        %v3001 = vld [vmem:[%s3 + $0xc] sm:$0xf]
        %v3002 = vld [vmem:[%s3 + $0x10] sm:$0xf]
        %v3003 = vld [vmem:[%s3 + $0x14] sm:$0xf]
        %v3004 = vld [vmem:[%s3 + $0x18] sm:$0xf]
        %v3005 = vld [vmem:[%s3 + $0x1c] sm:$0xf]
        %v3006 = vld [vmem:[%s3 + $0x20] sm:$0xf]
        %v3007 = vld [vmem:[%s3 + $0x24] sm:$0xf]
        %v3008 = vld [vmem:[%s3 + $0x28] sm:$0xf]
        %v3009 = vld [vmem:[%s3 + $0x2c] sm:$0xf]
        %v3010 = vld [vmem:[%s3 + $0x30] sm:$0xf]
        %v3011 = vld [vmem:[%s3 + $0x34] sm:$0xf]
        %v3012 = vld [vmem:[%s3 + $0x38] sm:$0xf]
        %v3013 = vld [vmem:[%s3 + $0x3c] sm:$0xf]
        %v3014 = vld [vmem:[%s3 + $0x40] sm:$0xf]
        %v3015 = vld [vmem:[%s3 + $0x44] sm:$0xf]
        %v3016 = vld [vmem:[%s3 + $0x48] sm:$0xf]
        %v3017 = vld [vmem:[%s3 + $0x4c] sm:$0xf]
        %v3018 = vld [vmem:[%s3 + $0x50] sm:$0xf]
        %v3019 = vld [vmem:[%s3 + $0x54] sm:$0xf]
        %v3020 = vld [vmem:[%s3 + $0x58] sm:$0xf]
        %v3021 = vld [vmem:[%s3 + $0x5c] sm:$0xf]
        %v3022 = vld [vmem:[%s3 + $0x60] sm:$0xf]
        %v3023 = vld [vmem:[%s3 + $0x64] sm:$0xf]
        %v3024 = vld [vmem:[%s3 + $0x68] sm:$0xf]
        %v3025 = vld [vmem:[%s3 + $0x6c] sm:$0xf]
        %v3026 = vld [vmem:[%s3 + $0x70] sm:$0xf]
        %v3027 = vld [vmem:[%s3 + $0x74] sm:$0xf]
        %v3028 = vld [vmem:[%s3 + $0x78] sm:$0xf]
        %v3029 = vld [vmem:[%s3 + $0x7c] sm:$0xf]
        %v3030 = vld [vmem:[%s3 + $0x80] sm:$0xf]
        %v3031 = vld [vmem:[%s3 + $0x84] sm:$0xf]
        %v3032 = vld [vmem:[%s3 + $0x88] sm:$0xf]
        %v3033 = vld [vmem:[%s3 + $0x8c] sm:$0xf]
        %v3034 = vld [vmem:[%s3 + $0x90] sm:$0xf]
        %v3035 = vld [vmem:[%s3 + $0x94] sm:$0xf]
        %v3036 = vld [vmem:[%s3 + $0x98] sm:$0xf]
        %v3037 = vld [vmem:[%s3 + $0x9c] sm:$0xf]
        %v3038 = vld [vmem:[%s3 + $0xa0] sm:$0xf]
        %v3039 = vld [vmem:[%s3 + $0xa4] sm:$0xf]
        %v3040 = vld [vmem:[%s3 + $0xa8] sm:$0xf]
        %v3041 = vld [vmem:[%s3 + $0xac] sm:$0xf]
        %v3042 = vld [vmem:[%s3 + $0xb0] sm:$0xf]
        %v3043 = vld [vmem:[%s3 + $0xb4] sm:$0xf]
        %v3044 = vld [vmem:[%s3 + $0xb8] sm:$0xf]
        %v3045 = vld [vmem:[%s3 + $0xbc] sm:$0xf]
        %v3046 = vld [vmem:[%s3 + $0xc0] sm:$0xf]
        %v3047 = vld [vmem:[%s3 + $0xc4] sm:$0xf]
        %v3048 = vld [vmem:[%s3 + $0xc8] sm:$0xf]
        %v3049 = vld [vmem:[%s3 + $0xcc] sm:$0xf]
        %v3050 = vld [vmem:[%s3 + $0xd0] sm:$0xf]
        %v3051 = vld [vmem:[%s3 + $0xd4] sm:$0xf]
        %v3052 = vld [vmem:[%s3 + $0xd8] sm:$0xf]
        %v3053 = vld [vmem:[%s3 + $0xdc] sm:$0xf]
        %v3054 = vld [vmem:[%s3 + $0xe0] sm:$0xf]
        %v3055 = vld [vmem:[%s3 + $0xe4] sm:$0xf]
        %v3056 = vld [vmem:[%s3 + $0xe8] sm:$0xf]
        %v3057 = vld [vmem:[%s3 + $0xec] sm:$0xf]
        %v3058 = vld [vmem:[%s3 + $0xf0] sm:$0xf]
        %v3059 = vld [vmem:[%s3 + $0xf4] sm:$0xf]
        %v3060 = vld [vmem:[%s3 + $0xf8] sm:$0xf]
        %v3061 = vld [vmem:[%s3 + $0xfc] sm:$0xf]
        %v3062 = vld [vmem:[%s3 + $0x100] sm:$0xf]
        %v3063 = vld [vmem:[%s3 + $0x104] sm:$0xf]
        %v3064 = vld [vmem:[%s3 + $0x108] sm:$0xf]
        %v3065 = vld [vmem:[%s3 + $0x10c] sm:$0xf]
        %v3066 = vld [vmem:[%s3 + $0x110] sm:$0xf]
        %v3067 = vld [vmem:[%s3 + $0x114] sm:$0xf]
        %v3068 = vld [vmem:[%s3 + $0x118] sm:$0xf]
        %v3069 = vld [vmem:[%s3 + $0x11c] sm:$0xf]
        %v3070 = vld [vmem:[%s3 + $0x120] sm:$0xf]
        %v3071 = vld [vmem:[%s3 + $0x124] sm:$0xf]
        %v3072 = vld [vmem:[%s3 + $0x128] sm:$0xf]
        %v3073 = vld [vmem:[%s3 + $0x12c] sm:$0xf]
        %v3074 = vld [vmem:[%s3 + $0x130] sm:$0xf]
        %v3075 = vld [vmem:[%s3 + $0x134] sm:$0xf]
        %v3076 = vld [vmem:[%s3 + $0x138] sm:$0xf]
        %v3077 = vld [vmem:[%s3 + $0x13c] sm:$0xf]
        %v3078 = vld [vmem:[%s3 + $0x140] sm:$0xf]
        %v3079 = vld [vmem:[%s3 + $0x144] sm:$0xf]
        %v3080 = vld [vmem:[%s3 + $0x148] sm:$0xf]
        %v3081 = vld [vmem:[%s3 + $0x14c] sm:$0xf]
        %v3082 = vld [vmem:[%s3 + $0x150] sm:$0xf]
        %v3083 = vld [vmem:[%s3 + $0x154] sm:$0xf]
        %v3084 = vld [vmem:[%s3 + $0x158] sm:$0xf]
        %v3085 = vld [vmem:[%s3 + $0x15c] sm:$0xf]
        %v3086 = vld [vmem:[%s3 + $0x160] sm:$0xf]
        %v3087 = vld [vmem:[%s3 + $0x164] sm:$0xf]
        %v3088 = vld [vmem:[%s3 + $0x168] sm:$0xf]
        %v3089 = vld [vmem:[%s3 + $0x16c] sm:$0xf]
        %v3090 = vld [vmem:[%s3 + $0x170] sm:$0xf]
        %v3091 = vld [vmem:[%s3 + $0x174] sm:$0xf]
        %v3092 = vld [vmem:[%s3 + $0x178] sm:$0xf]
        %v3093 = vld [vmem:[%s3 + $0x17c] sm:$0xf]
        %v3094 = vld [vmem:[%s3 + $0x180] sm:$0xf]
        %v3095 = vld [vmem:[%s3 + $0x184] sm:$0xf]
        %v3096 = vld [vmem:[%s3 + $0x188] sm:$0xf]
        %v3097 = vld [vmem:[%s3 + $0x18c] sm:$0xf]
        %v3098 = vld [vmem:[%s3 + $0x190] sm:$0xf]
        %v3099 = vld [vmem:[%s3 + $0x194] sm:$0xf]
        %v3100 = vld [vmem:[%s3 + $0x198] sm:$0xf]
        %v3101 = vld [vmem:[%s3 + $0x19c] sm:$0xf]
        %v3102 = vld [vmem:[%s3 + $0x1a0] sm:$0xf]
        %v3103 = vld [vmem:[%s3 + $0x1a4] sm:$0xf]
        %v3104 = vld [vmem:[%s3 + $0x1a8] sm:$0xf]
        %v3105 = vld [vmem:[%s3 + $0x1ac] sm:$0xf]
        %v3106 = vld [vmem:[%s3 + $0x1b0] sm:$0xf]
        %v3107 = vld [vmem:[%s3 + $0x1b4] sm:$0xf]
        %v3108 = vld [vmem:[%s3 + $0x1b8] sm:$0xf]
        %v3109 = vld [vmem:[%s3 + $0x1bc] sm:$0xf]
        %v3110 = vld [vmem:[%s3 + $0x1c0] sm:$0xf]
        %v3111 = vld [vmem:[%s3 + $0x1c4] sm:$0xf]
        %v3112 = vld [vmem:[%s3 + $0x1c8] sm:$0xf]
        %v3113 = vld [vmem:[%s3 + $0x1cc] sm:$0xf]
        %v3114 = vld [vmem:[%s3 + $0x1d0] sm:$0xf]
        %v3115 = vld [vmem:[%s3 + $0x1d4] sm:$0xf]
        %v3116 = vld [vmem:[%s3 + $0x1d8] sm:$0xf]
        %v3117 = vld [vmem:[%s3 + $0x1dc] sm:$0xf]
        %v3118 = vld [vmem:[%s3 + $0x1e0] sm:$0xf]
        %v3119 = vld [vmem:[%s3 + $0x1e4] sm:$0xf]
        %v3120 = vld [vmem:[%s3 + $0x1e8] sm:$0xf]
        %v3121 = vld [vmem:[%s3 + $0x1ec] sm:$0xf]
        %v3122 = vld [vmem:[%s3 + $0x1f0] sm:$0xf]
        %v3123 = vld [vmem:[%s3 + $0x1f4] sm:$0xf]
        %v3124 = vld [vmem:[%s3 + $0x1f8] sm:$0xf]
        %v3125 = vld [vmem:[%s3 + $0x1fc] sm:$0xf]
        %v3142 = vunpack.c.l.b16 %v2998
        %v3143 = vunpack.c.l.b16 %v2999
        %v3144 = vunpack.c.l.b16 %v3000
        %v3145 = vunpack.c.l.b16 %v3001
        %v3146 = vunpack.c.l.b16 %v3002
        %v3147 = vunpack.c.l.b16 %v3003
        %v3148 = vunpack.c.l.b16 %v3004
        %v3149 = vunpack.c.l.b16 %v3005
        %v3150 = vunpack.c.l.b16 %v3006
        %v3151 = vunpack.c.l.b16 %v3007
        %v3152 = vunpack.c.l.b16 %v3008
        %v3153 = vunpack.c.l.b16 %v3009
        %v3154 = vunpack.c.l.b16 %v3010
        %v3155 = vunpack.c.l.b16 %v3011
        %v3156 = vunpack.c.l.b16 %v3012
        %v3157 = vunpack.c.l.b16 %v3013
        %v3158 = vpack.c.b16 %v3143, %v3142
        %v3159 = vpack.c.b16 %v3145, %v3144
        %v3160 = vpack.c.b16 %v3147, %v3146
        %v3161 = vpack.c.b16 %v3149, %v3148
        %v3162 = vpack.c.b16 %v3151, %v3150
        %v3163 = vpack.c.b16 %v3153, %v3152
        %v3164 = vpack.c.b16 %v3155, %v3154
        %v3165 = vpack.c.b16 %v3157, %v3156
        %3174 = vmatprep.subr.bf16.mxu0 0
        %3175 = vmatpush1.bf16.msra.mxu0 %v3158
        %3176 = vmatprep.subr.bf16.mxu0 0
        %3177 = vmatpush1.bf16.msra.mxu0 %v3159
        %3178 = vmatprep.subr.bf16.mxu0 0
        %3179 = vmatpush1.bf16.msra.mxu0 %v3160
        %3180 = vmatprep.subr.bf16.mxu0 0
        %3181 = vmatpush1.bf16.msra.mxu0 %v3161
        %3182 = vmatprep.subr.bf16.mxu0 0
        %3183 = vmatpush1.bf16.msra.mxu0 %v3162
        %3184 = vmatprep.subr.bf16.mxu0 0
        %3185 = vmatpush1.bf16.msra.mxu0 %v3163
        %3186 = vmatprep.subr.bf16.mxu0 0
        %3187 = vmatpush1.bf16.msra.mxu0 %v3164
        %3188 = vmatprep.subr.bf16.mxu0 0
        %3189 = vmatpush1.bf16.msra.mxu0 %v3165
        %3190 = vmatprep.subr.bf16.mxu0 0
        %3191 = vmatpush1.bf16.msra.mxu0 0
        %3192 = vmatprep.subr.bf16.mxu0 0
        %3193 = vmatpush1.bf16.msra.mxu0 0
        %3194 = vmatprep.subr.bf16.mxu0 0
        %3195 = vmatpush1.bf16.msra.mxu0 0
        %3196 = vmatprep.subr.bf16.mxu0 0
        %3197 = vmatpush1.bf16.msra.mxu0 0
        %3198 = vmatprep.subr.bf16.mxu0 0
        %3199 = vmatpush1.bf16.msra.mxu0 0
        %3200 = vmatprep.subr.bf16.mxu0 0
        %3201 = vmatpush1.bf16.msra.mxu0 0
        %3202 = vmatprep.subr.bf16.mxu0 0
        %3203 = vmatpush1.bf16.msra.mxu0 0
        %3204 = vmatprep.subr.bf16.mxu0 0
        %3205 = vmatpush1.bf16.msra.mxu0 0
        %3206 = vmatprep.mubr.bf16.mxu0 0
        %3207 = vmatmul.mubr.bf16.gmra.mrb[0].mxu0 %v406
        %v3208 = vpop.f32.mrb[0].mxu0
        %v3209 = vadd.f32 0.0, %v3208
        %v3210 = vpop.f32.mrb[0].mxu0
        %v3211 = vpop.f32.mrb[0].mxu0
        %v3212 = vadd.f32 0.0, %v3211
        %v3213 = vpop.f32.mrb[0].mxu0
        %3214 = vmatprep.mubr.bf16.mxu0 0
        %3215 = vmatmul.mubr.bf16.gmra.mrb[0].mxu0 %v407
        %v3216 = vpop.f32.mrb[0].mxu0
        %v3217 = vadd.f32 0.0, %v3216
        %v3218 = vpop.f32.mrb[0].mxu0
        %v3219 = vpop.f32.mrb[0].mxu0
        %v3220 = vadd.f32 0.0, %v3219
        %v3221 = vpop.f32.mrb[0].mxu0
        %3222 = vmatprep.mubr.bf16.mxu0 0
        %3223 = vmatmul.mubr.bf16.gmra.mrb[0].mxu0 %v408
        %v3224 = vpop.f32.mrb[0].mxu0
        %v3225 = vadd.f32 0.0, %v3224
        %v3226 = vpop.f32.mrb[0].mxu0
        %v3227 = vpop.f32.mrb[0].mxu0
        %v3228 = vadd.f32 0.0, %v3227
        %v3229 = vpop.f32.mrb[0].mxu0
        %3230 = vmatprep.mubr.bf16.mxu0 0
        %3231 = vmatmul.mubr.bf16.gmra.mrb[0].mxu0 %v409
        %v3232 = vpop.f32.mrb[0].mxu0
        %v3233 = vadd.f32 0.0, %v3232
        %v3234 = vpop.f32.mrb[0].mxu0
        %v3235 = vpop.f32.mrb[0].mxu0
        %v3236 = vadd.f32 0.0, %v3235
        %v3237 = vpop.f32.mrb[0].mxu0
        %3238 = vmatprep.mubr.bf16.mxu0 0
        %3239 = vmatmul.mubr.bf16.gmra.mrb[0].mxu0 %v410
        %v3240 = vpop.f32.mrb[0].mxu0
        %v3241 = vadd.f32 0.0, %v3240
        %v3242 = vpop.f32.mrb[0].mxu0
        %v3243 = vpop.f32.mrb[0].mxu0
        %v3244 = vadd.f32 0.0, %v3243
        %v3245 = vpop.f32.mrb[0].mxu0
        %3246 = vmatprep.mubr.bf16.mxu0 0
        %3247 = vmatmul.mubr.bf16.gmra.mrb[0].mxu0 %v411
        %v3248 = vpop.f32.mrb[0].mxu0
        %v3249 = vadd.f32 0.0, %v3248
        %v3250 = vpop.f32.mrb[0].mxu0
        %v3251 = vpop.f32.mrb[0].mxu0
        %v3252 = vadd.f32 0.0, %v3251
        %v3253 = vpop.f32.mrb[0].mxu0
        %3254 = vmatprep.mubr.bf16.mxu0 0
        %3255 = vmatmul.mubr.bf16.gmra.mrb[0].mxu0 %v412
        %v3256 = vpop.f32.mrb[0].mxu0
        %v3257 = vadd.f32 0.0, %v3256
        %v3258 = vpop.f32.mrb[0].mxu0
        %v3259 = vpop.f32.mrb[0].mxu0
        %v3260 = vadd.f32 0.0, %v3259
        %v3261 = vpop.f32.mrb[0].mxu0
        %3262 = vmatprep.mubr.bf16.mxu0 0
        %3263 = vmatmul.mubr.bf16.gmra.mrb[0].mxu0 %v413
        %v3264 = vpop.f32.mrb[0].mxu0
        %v3265 = vadd.f32 0.0, %v3264
        %v3266 = vpop.f32.mrb[0].mxu0
        %v3267 = vpop.f32.mrb[0].mxu0
        %v3268 = vadd.f32 0.0, %v3267
        %v3269 = vpop.f32.mrb[0].mxu0
        %3270 = vdwg.mxu0
        %v3287 = vunpack.c.l.b16 %v3014
        %v3288 = vunpack.c.l.b16 %v3015
        %v3289 = vunpack.c.l.b16 %v3016
        %v3290 = vunpack.c.l.b16 %v3017
        %v3291 = vunpack.c.l.b16 %v3018
        %v3292 = vunpack.c.l.b16 %v3019
        %v3293 = vunpack.c.l.b16 %v3020
        %v3294 = vunpack.c.l.b16 %v3021
        %v3295 = vunpack.c.l.b16 %v3022
        %v3296 = vunpack.c.l.b16 %v3023
        %v3297 = vunpack.c.l.b16 %v3024
        %v3298 = vunpack.c.l.b16 %v3025
        %v3299 = vunpack.c.l.b16 %v3026
        %v3300 = vunpack.c.l.b16 %v3027
        %v3301 = vunpack.c.l.b16 %v3028
        %v3302 = vunpack.c.l.b16 %v3029
        %v3303 = vpack.c.b16 %v3288, %v3287
        %v3304 = vpack.c.b16 %v3290, %v3289
        %v3305 = vpack.c.b16 %v3292, %v3291
        %v3306 = vpack.c.b16 %v3294, %v3293
        %v3307 = vpack.c.b16 %v3296, %v3295
        %v3308 = vpack.c.b16 %v3298, %v3297
        %v3309 = vpack.c.b16 %v3300, %v3299
        %v3310 = vpack.c.b16 %v3302, %v3301
        %3319 = vmatprep.subr.bf16.mxu0 0
        %3320 = vmatpush1.bf16.msra.mxu0 %v3303
        %3321 = vmatprep.subr.bf16.mxu0 0
        %3322 = vmatpush1.bf16.msra.mxu0 %v3304
        %3323 = vmatprep.subr.bf16.mxu0 0
        %3324 = vmatpush1.bf16.msra.mxu0 %v3305
        %3325 = vmatprep.subr.bf16.mxu0 0
        %3326 = vmatpush1.bf16.msra.mxu0 %v3306
        %3327 = vmatprep.subr.bf16.mxu0 0
        %3328 = vmatpush1.bf16.msra.mxu0 %v3307
        %3329 = vmatprep.subr.bf16.mxu0 0
        %3330 = vmatpush1.bf16.msra.mxu0 %v3308
        %3331 = vmatprep.subr.bf16.mxu0 0
        %3332 = vmatpush1.bf16.msra.mxu0 %v3309
        %3333 = vmatprep.subr.bf16.mxu0 0
        %3334 = vmatpush1.bf16.msra.mxu0 %v3310
        %3335 = vmatprep.subr.bf16.mxu0 0
        %3336 = vmatpush1.bf16.msra.mxu0 0
        %3337 = vmatprep.subr.bf16.mxu0 0
        %3338 = vmatpush1.bf16.msra.mxu0 0
        %3339 = vmatprep.subr.bf16.mxu0 0
        %3340 = vmatpush1.bf16.msra.mxu0 0
        %3341 = vmatprep.subr.bf16.mxu0 0
        %3342 = vmatpush1.bf16.msra.mxu0 0
        %3343 = vmatprep.subr.bf16.mxu0 0
        %3344 = vmatpush1.bf16.msra.mxu0 0
        %3345 = vmatprep.subr.bf16.mxu0 0
        %3346 = vmatpush1.bf16.msra.mxu0 0
        %3347 = vmatprep.subr.bf16.mxu0 0
        %3348 = vmatpush1.bf16.msra.mxu0 0
        %3349 = vmatprep.subr.bf16.mxu0 0
        %3350 = vmatpush1.bf16.msra.mxu0 0
        %3351 = vmatprep.mubr.bf16.mxu0 0
        %3352 = vmatmul.mubr.bf16.gmra.mrb[0].mxu0 %v406
        %v3353 = vpop.f32.mrb[0].mxu0
        %v3354 = vadd.f32 0.0, %v3353
        %v3355 = vpop.f32.mrb[0].mxu0
        %v3356 = vpop.f32.mrb[0].mxu0
        %v3357 = vadd.f32 0.0, %v3356
        %v3358 = vpop.f32.mrb[0].mxu0
        %3359 = vmatprep.mubr.bf16.mxu0 0
        %3360 = vmatmul.mubr.bf16.gmra.mrb[0].mxu0 %v407
        %v3361 = vpop.f32.mrb[0].mxu0
        %v3362 = vadd.f32 0.0, %v3361
        %v3363 = vpop.f32.mrb[0].mxu0
        %v3364 = vpop.f32.mrb[0].mxu0
        %v3365 = vadd.f32 0.0, %v3364
        %v3366 = vpop.f32.mrb[0].mxu0
        %3367 = vmatprep.mubr.bf16.mxu0 0
        %3368 = vmatmul.mubr.bf16.gmra.mrb[0].mxu0 %v408
        %v3369 = vpop.f32.mrb[0].mxu0
        %v3370 = vadd.f32 0.0, %v3369
        %v3371 = vpop.f32.mrb[0].mxu0
        %v3372 = vpop.f32.mrb[0].mxu0
        %v3373 = vadd.f32 0.0, %v3372
        %v3374 = vpop.f32.mrb[0].mxu0
        %3375 = vmatprep.mubr.bf16.mxu0 0
        %3376 = vmatmul.mubr.bf16.gmra.mrb[0].mxu0 %v409
        %v3377 = vpop.f32.mrb[0].mxu0
        %v3378 = vadd.f32 0.0, %v3377
        %v3379 = vpop.f32.mrb[0].mxu0
        %v3380 = vpop.f32.mrb[0].mxu0
        %v3381 = vadd.f32 0.0, %v3380
        %v3382 = vpop.f32.mrb[0].mxu0
        %3383 = vmatprep.mubr.bf16.mxu0 0
        %3384 = vmatmul.mubr.bf16.gmra.mrb[0].mxu0 %v410
        %v3385 = vpop.f32.mrb[0].mxu0
        %v3386 = vadd.f32 0.0, %v3385
        %v3387 = vpop.f32.mrb[0].mxu0
        %v3388 = vpop.f32.mrb[0].mxu0
        %v3389 = vadd.f32 0.0, %v3388
        %v3390 = vpop.f32.mrb[0].mxu0
        %3391 = vmatprep.mubr.bf16.mxu0 0
        %3392 = vmatmul.mubr.bf16.gmra.mrb[0].mxu0 %v411
        %v3393 = vpop.f32.mrb[0].mxu0
        %v3394 = vadd.f32 0.0, %v3393
        %v3395 = vpop.f32.mrb[0].mxu0
        %v3396 = vpop.f32.mrb[0].mxu0
        %v3397 = vadd.f32 0.0, %v3396
        %v3398 = vpop.f32.mrb[0].mxu0
        %3399 = vmatprep.mubr.bf16.mxu0 0
        %3400 = vmatmul.mubr.bf16.gmra.mrb[0].mxu0 %v412
        %v3401 = vpop.f32.mrb[0].mxu0
        %v3402 = vadd.f32 0.0, %v3401
        %v3403 = vpop.f32.mrb[0].mxu0
        %v3404 = vpop.f32.mrb[0].mxu0
        %v3405 = vadd.f32 0.0, %v3404
        %v3406 = vpop.f32.mrb[0].mxu0
        %3407 = vmatprep.mubr.bf16.mxu0 0
        %3408 = vmatmul.mubr.bf16.gmra.mrb[0].mxu0 %v413
        %v3409 = vpop.f32.mrb[0].mxu0
        %v3410 = vadd.f32 0.0, %v3409
        %v3411 = vpop.f32.mrb[0].mxu0
        %v3412 = vpop.f32.mrb[0].mxu0
        %v3413 = vadd.f32 0.0, %v3412
        %v3414 = vpop.f32.mrb[0].mxu0
        %3415 = vdwg.mxu0
        %v3432 = vunpack.c.l.b16 %v3030
        %v3433 = vunpack.c.l.b16 %v3031
        %v3434 = vunpack.c.l.b16 %v3032
        %v3435 = vunpack.c.l.b16 %v3033
        %v3436 = vunpack.c.l.b16 %v3034
        %v3437 = vunpack.c.l.b16 %v3035
        %v3438 = vunpack.c.l.b16 %v3036
        %v3439 = vunpack.c.l.b16 %v3037
        %v3440 = vunpack.c.l.b16 %v3038
        %v3441 = vunpack.c.l.b16 %v3039
        %v3442 = vunpack.c.l.b16 %v3040
        %v3443 = vunpack.c.l.b16 %v3041
        %v3444 = vunpack.c.l.b16 %v3042
        %v3445 = vunpack.c.l.b16 %v3043
        %v3446 = vunpack.c.l.b16 %v3044
        %v3447 = vunpack.c.l.b16 %v3045
        %v3448 = vpack.c.b16 %v3433, %v3432
        %v3449 = vpack.c.b16 %v3435, %v3434
        %v3450 = vpack.c.b16 %v3437, %v3436
        %v3451 = vpack.c.b16 %v3439, %v3438
        %v3452 = vpack.c.b16 %v3441, %v3440
        %v3453 = vpack.c.b16 %v3443, %v3442
        %v3454 = vpack.c.b16 %v3445, %v3444
        %v3455 = vpack.c.b16 %v3447, %v3446
        %3464 = vmatprep.subr.bf16.mxu0 0
        %3465 = vmatpush1.bf16.msra.mxu0 %v3448
        %3466 = vmatprep.subr.bf16.mxu0 0
        %3467 = vmatpush1.bf16.msra.mxu0 %v3449
        %3468 = vmatprep.subr.bf16.mxu0 0
        %3469 = vmatpush1.bf16.msra.mxu0 %v3450
        %3470 = vmatprep.subr.bf16.mxu0 0
        %3471 = vmatpush1.bf16.msra.mxu0 %v3451
        %3472 = vmatprep.subr.bf16.mxu0 0
        %3473 = vmatpush1.bf16.msra.mxu0 %v3452
        %3474 = vmatprep.subr.bf16.mxu0 0
        %3475 = vmatpush1.bf16.msra.mxu0 %v3453
        %3476 = vmatprep.subr.bf16.mxu0 0
        %3477 = vmatpush1.bf16.msra.mxu0 %v3454
        %3478 = vmatprep.subr.bf16.mxu0 0
        %3479 = vmatpush1.bf16.msra.mxu0 %v3455
        %3480 = vmatprep.subr.bf16.mxu0 0
        %3481 = vmatpush1.bf16.msra.mxu0 0
        %3482 = vmatprep.subr.bf16.mxu0 0
        %3483 = vmatpush1.bf16.msra.mxu0 0
        %3484 = vmatprep.subr.bf16.mxu0 0
        %3485 = vmatpush1.bf16.msra.mxu0 0
        %3486 = vmatprep.subr.bf16.mxu0 0
        %3487 = vmatpush1.bf16.msra.mxu0 0
        %3488 = vmatprep.subr.bf16.mxu0 0
        %3489 = vmatpush1.bf16.msra.mxu0 0
        %3490 = vmatprep.subr.bf16.mxu0 0
        %3491 = vmatpush1.bf16.msra.mxu0 0
        %3492 = vmatprep.subr.bf16.mxu0 0
        %3493 = vmatpush1.bf16.msra.mxu0 0
        %3494 = vmatprep.subr.bf16.mxu0 0
        %3495 = vmatpush1.bf16.msra.mxu0 0
        %3496 = vmatprep.mubr.bf16.mxu0 0
        %3497 = vmatmul.mubr.bf16.gmra.mrb[0].mxu0 %v406
        %v3498 = vpop.f32.mrb[0].mxu0
        %v3499 = vadd.f32 0.0, %v3498
        %v3500 = vpop.f32.mrb[0].mxu0
        %v3501 = vpop.f32.mrb[0].mxu0
        %v3502 = vadd.f32 0.0, %v3501
        %v3503 = vpop.f32.mrb[0].mxu0
        %3504 = vmatprep.mubr.bf16.mxu0 0
        %3505 = vmatmul.mubr.bf16.gmra.mrb[0].mxu0 %v407
        %v3506 = vpop.f32.mrb[0].mxu0
        %v3507 = vadd.f32 0.0, %v3506
        %v3508 = vpop.f32.mrb[0].mxu0
        %v3509 = vpop.f32.mrb[0].mxu0
        %v3510 = vadd.f32 0.0, %v3509
        %v3511 = vpop.f32.mrb[0].mxu0
        %3512 = vmatprep.mubr.bf16.mxu0 0
        %3513 = vmatmul.mubr.bf16.gmra.mrb[0].mxu0 %v408
        %v3514 = vpop.f32.mrb[0].mxu0
        %v3515 = vadd.f32 0.0, %v3514
        %v3516 = vpop.f32.mrb[0].mxu0
        %v3517 = vpop.f32.mrb[0].mxu0
        %v3518 = vadd.f32 0.0, %v3517
        %v3519 = vpop.f32.mrb[0].mxu0
        %3520 = vmatprep.mubr.bf16.mxu0 0
        %3521 = vmatmul.mubr.bf16.gmra.mrb[0].mxu0 %v409
        %v3522 = vpop.f32.mrb[0].mxu0
        %v3523 = vadd.f32 0.0, %v3522
        %v3524 = vpop.f32.mrb[0].mxu0
        %v3525 = vpop.f32.mrb[0].mxu0
        %v3526 = vadd.f32 0.0, %v3525
        %v3527 = vpop.f32.mrb[0].mxu0
        %3528 = vmatprep.mubr.bf16.mxu0 0
        %3529 = vmatmul.mubr.bf16.gmra.mrb[0].mxu0 %v410
        %v3530 = vpop.f32.mrb[0].mxu0
        %v3531 = vadd.f32 0.0, %v3530
        %v3532 = vpop.f32.mrb[0].mxu0
        %v3533 = vpop.f32.mrb[0].mxu0
        %v3534 = vadd.f32 0.0, %v3533
        %v3535 = vpop.f32.mrb[0].mxu0
        %3536 = vmatprep.mubr.bf16.mxu0 0
        %3537 = vmatmul.mubr.bf16.gmra.mrb[0].mxu0 %v411
        %v3538 = vpop.f32.mrb[0].mxu0
        %v3539 = vadd.f32 0.0, %v3538
        %v3540 = vpop.f32.mrb[0].mxu0
        %v3541 = vpop.f32.mrb[0].mxu0
        %v3542 = vadd.f32 0.0, %v3541
        %v3543 = vpop.f32.mrb[0].mxu0
        %3544 = vmatprep.mubr.bf16.mxu0 0
        %3545 = vmatmul.mubr.bf16.gmra.mrb[0].mxu0 %v412
        %v3546 = vpop.f32.mrb[0].mxu0
        %v3547 = vadd.f32 0.0, %v3546
        %v3548 = vpop.f32.mrb[0].mxu0
        %v3549 = vpop.f32.mrb[0].mxu0
        %v3550 = vadd.f32 0.0, %v3549
        %v3551 = vpop.f32.mrb[0].mxu0
        %3552 = vmatprep.mubr.bf16.mxu0 0
        %3553 = vmatmul.mubr.bf16.gmra.mrb[0].mxu0 %v413
        %v3554 = vpop.f32.mrb[0].mxu0
        %v3555 = vadd.f32 0.0, %v3554
        %v3556 = vpop.f32.mrb[0].mxu0
        %v3557 = vpop.f32.mrb[0].mxu0
        %v3558 = vadd.f32 0.0, %v3557
        %v3559 = vpop.f32.mrb[0].mxu0
        %3560 = vdwg.mxu0
        %v3577 = vunpack.c.l.b16 %v3046
        %v3578 = vunpack.c.l.b16 %v3047
        %v3579 = vunpack.c.l.b16 %v3048
        %v3580 = vunpack.c.l.b16 %v3049
        %v3581 = vunpack.c.l.b16 %v3050
        %v3582 = vunpack.c.l.b16 %v3051
        %v3583 = vunpack.c.l.b16 %v3052
        %v3584 = vunpack.c.l.b16 %v3053
        %v3585 = vunpack.c.l.b16 %v3054
        %v3586 = vunpack.c.l.b16 %v3055
        %v3587 = vunpack.c.l.b16 %v3056
        %v3588 = vunpack.c.l.b16 %v3057
        %v3589 = vunpack.c.l.b16 %v3058
        %v3590 = vunpack.c.l.b16 %v3059
        %v3591 = vunpack.c.l.b16 %v3060
        %v3592 = vunpack.c.l.b16 %v3061
        %v3593 = vpack.c.b16 %v3578, %v3577
        %v3594 = vpack.c.b16 %v3580, %v3579
        %v3595 = vpack.c.b16 %v3582, %v3581
        %v3596 = vpack.c.b16 %v3584, %v3583
        %v3597 = vpack.c.b16 %v3586, %v3585
        %v3598 = vpack.c.b16 %v3588, %v3587
        %v3599 = vpack.c.b16 %v3590, %v3589
        %v3600 = vpack.c.b16 %v3592, %v3591
        %3609 = vmatprep.subr.bf16.mxu0 0
        %3610 = vmatpush1.bf16.msra.mxu0 %v3593
        %3611 = vmatprep.subr.bf16.mxu0 0
        %3612 = vmatpush1.bf16.msra.mxu0 %v3594
        %3613 = vmatprep.subr.bf16.mxu0 0
        %3614 = vmatpush1.bf16.msra.mxu0 %v3595
        %3615 = vmatprep.subr.bf16.mxu0 0
        %3616 = vmatpush1.bf16.msra.mxu0 %v3596
        %3617 = vmatprep.subr.bf16.mxu0 0
        %3618 = vmatpush1.bf16.msra.mxu0 %v3597
        %3619 = vmatprep.subr.bf16.mxu0 0
        %3620 = vmatpush1.bf16.msra.mxu0 %v3598
        %3621 = vmatprep.subr.bf16.mxu0 0
        %3622 = vmatpush1.bf16.msra.mxu0 %v3599
        %3623 = vmatprep.subr.bf16.mxu0 0
        %3624 = vmatpush1.bf16.msra.mxu0 %v3600
        %3625 = vmatprep.subr.bf16.mxu0 0
        %3626 = vmatpush1.bf16.msra.mxu0 0
        %3627 = vmatprep.subr.bf16.mxu0 0
        %3628 = vmatpush1.bf16.msra.mxu0 0
        %3629 = vmatprep.subr.bf16.mxu0 0
        %3630 = vmatpush1.bf16.msra.mxu0 0
        %3631 = vmatprep.subr.bf16.mxu0 0
        %3632 = vmatpush1.bf16.msra.mxu0 0
        %3633 = vmatprep.subr.bf16.mxu0 0
        %3634 = vmatpush1.bf16.msra.mxu0 0
        %3635 = vmatprep.subr.bf16.mxu0 0
        %3636 = vmatpush1.bf16.msra.mxu0 0
        %3637 = vmatprep.subr.bf16.mxu0 0
        %3638 = vmatpush1.bf16.msra.mxu0 0
        %3639 = vmatprep.subr.bf16.mxu0 0
        %3640 = vmatpush1.bf16.msra.mxu0 0
        %3641 = vmatprep.mubr.bf16.mxu0 0
        %3642 = vmatmul.mubr.bf16.gmra.mrb[0].mxu0 %v406
        %v3643 = vpop.f32.mrb[0].mxu0
        %v3644 = vadd.f32 0.0, %v3643
        %v3645 = vpop.f32.mrb[0].mxu0
        %v3646 = vpop.f32.mrb[0].mxu0
        %v3647 = vadd.f32 0.0, %v3646
        %v3648 = vpop.f32.mrb[0].mxu0
        %3649 = vmatprep.mubr.bf16.mxu0 0
        %3650 = vmatmul.mubr.bf16.gmra.mrb[0].mxu0 %v407
        %v3651 = vpop.f32.mrb[0].mxu0
        %v3652 = vadd.f32 0.0, %v3651
        %v3653 = vpop.f32.mrb[0].mxu0
        %v3654 = vpop.f32.mrb[0].mxu0
        %v3655 = vadd.f32 0.0, %v3654
        %v3656 = vpop.f32.mrb[0].mxu0
        %3657 = vmatprep.mubr.bf16.mxu0 0
        %3658 = vmatmul.mubr.bf16.gmra.mrb[0].mxu0 %v408
        %v3659 = vpop.f32.mrb[0].mxu0
        %v3660 = vadd.f32 0.0, %v3659
        %v3661 = vpop.f32.mrb[0].mxu0
        %v3662 = vpop.f32.mrb[0].mxu0
        %v3663 = vadd.f32 0.0, %v3662
        %v3664 = vpop.f32.mrb[0].mxu0
        %3665 = vmatprep.mubr.bf16.mxu0 0
        %3666 = vmatmul.mubr.bf16.gmra.mrb[0].mxu0 %v409
        %v3667 = vpop.f32.mrb[0].mxu0
        %v3668 = vadd.f32 0.0, %v3667
        %v3669 = vpop.f32.mrb[0].mxu0
        %v3670 = vpop.f32.mrb[0].mxu0
        %v3671 = vadd.f32 0.0, %v3670
        %v3672 = vpop.f32.mrb[0].mxu0
        %3673 = vmatprep.mubr.bf16.mxu0 0
        %3674 = vmatmul.mubr.bf16.gmra.mrb[0].mxu0 %v410
        %v3675 = vpop.f32.mrb[0].mxu0
        %v3676 = vadd.f32 0.0, %v3675
        %v3677 = vpop.f32.mrb[0].mxu0
        %v3678 = vpop.f32.mrb[0].mxu0
        %v3679 = vadd.f32 0.0, %v3678
        %v3680 = vpop.f32.mrb[0].mxu0
        %3681 = vmatprep.mubr.bf16.mxu0 0
        %3682 = vmatmul.mubr.bf16.gmra.mrb[0].mxu0 %v411
        %v3683 = vpop.f32.mrb[0].mxu0
        %v3684 = vadd.f32 0.0, %v3683
        %v3685 = vpop.f32.mrb[0].mxu0
        %v3686 = vpop.f32.mrb[0].mxu0
        %v3687 = vadd.f32 0.0, %v3686
        %v3688 = vpop.f32.mrb[0].mxu0
        %3689 = vmatprep.mubr.bf16.mxu0 0
        %3690 = vmatmul.mubr.bf16.gmra.mrb[0].mxu0 %v412
        %v3691 = vpop.f32.mrb[0].mxu0
        %v3692 = vadd.f32 0.0, %v3691
        %v3693 = vpop.f32.mrb[0].mxu0
        %v3694 = vpop.f32.mrb[0].mxu0
        %v3695 = vadd.f32 0.0, %v3694
        %v3696 = vpop.f32.mrb[0].mxu0
        %3697 = vmatprep.mubr.bf16.mxu0 0
        %3698 = vmatmul.mubr.bf16.gmra.mrb[0].mxu0 %v413
        %v3699 = vpop.f32.mrb[0].mxu0
        %v3700 = vadd.f32 0.0, %v3699
        %v3701 = vpop.f32.mrb[0].mxu0
        %v3702 = vpop.f32.mrb[0].mxu0
        %v3703 = vadd.f32 0.0, %v3702
        %v3704 = vpop.f32.mrb[0].mxu0
        %3705 = vdwg.mxu0
        %v3722 = vunpack.c.l.b16 %v3062
        %v3723 = vunpack.c.l.b16 %v3063
        %v3724 = vunpack.c.l.b16 %v3064
        %v3725 = vunpack.c.l.b16 %v3065
        %v3726 = vunpack.c.l.b16 %v3066
        %v3727 = vunpack.c.l.b16 %v3067
        %v3728 = vunpack.c.l.b16 %v3068
        %v3729 = vunpack.c.l.b16 %v3069
        %v3730 = vunpack.c.l.b16 %v3070
        %v3731 = vunpack.c.l.b16 %v3071
        %v3732 = vunpack.c.l.b16 %v3072
        %v3733 = vunpack.c.l.b16 %v3073
        %v3734 = vunpack.c.l.b16 %v3074
        %v3735 = vunpack.c.l.b16 %v3075
        %v3736 = vunpack.c.l.b16 %v3076
        %v3737 = vunpack.c.l.b16 %v3077
        %v3738 = vpack.c.b16 %v3723, %v3722
        %v3739 = vpack.c.b16 %v3725, %v3724
        %v3740 = vpack.c.b16 %v3727, %v3726
        %v3741 = vpack.c.b16 %v3729, %v3728
        %v3742 = vpack.c.b16 %v3731, %v3730
        %v3743 = vpack.c.b16 %v3733, %v3732
        %v3744 = vpack.c.b16 %v3735, %v3734
        %v3745 = vpack.c.b16 %v3737, %v3736
        %3754 = vmatprep.subr.bf16.mxu0 0
        %3755 = vmatpush1.bf16.msra.mxu0 %v3738
        %3756 = vmatprep.subr.bf16.mxu0 0
        %3757 = vmatpush1.bf16.msra.mxu0 %v3739
        %3758 = vmatprep.subr.bf16.mxu0 0
        %3759 = vmatpush1.bf16.msra.mxu0 %v3740
        %3760 = vmatprep.subr.bf16.mxu0 0
        %3761 = vmatpush1.bf16.msra.mxu0 %v3741
        %3762 = vmatprep.subr.bf16.mxu0 0
        %3763 = vmatpush1.bf16.msra.mxu0 %v3742
        %3764 = vmatprep.subr.bf16.mxu0 0
        %3765 = vmatpush1.bf16.msra.mxu0 %v3743
        %3766 = vmatprep.subr.bf16.mxu0 0
        %3767 = vmatpush1.bf16.msra.mxu0 %v3744
        %3768 = vmatprep.subr.bf16.mxu0 0
        %3769 = vmatpush1.bf16.msra.mxu0 %v3745
        %3770 = vmatprep.subr.bf16.mxu0 0
        %3771 = vmatpush1.bf16.msra.mxu0 0
        %3772 = vmatprep.subr.bf16.mxu0 0
        %3773 = vmatpush1.bf16.msra.mxu0 0
        %3774 = vmatprep.subr.bf16.mxu0 0
        %3775 = vmatpush1.bf16.msra.mxu0 0
        %3776 = vmatprep.subr.bf16.mxu0 0
        %3777 = vmatpush1.bf16.msra.mxu0 0
        %3778 = vmatprep.subr.bf16.mxu0 0
        %3779 = vmatpush1.bf16.msra.mxu0 0
        %3780 = vmatprep.subr.bf16.mxu0 0
        %3781 = vmatpush1.bf16.msra.mxu0 0
        %3782 = vmatprep.subr.bf16.mxu0 0
        %3783 = vmatpush1.bf16.msra.mxu0 0
        %3784 = vmatprep.subr.bf16.mxu0 0
        %3785 = vmatpush1.bf16.msra.mxu0 0
        %3786 = vmatprep.mubr.bf16.mxu0 0
        %3787 = vmatmul.mubr.bf16.gmra.mrb[0].mxu0 %v406
        %v3788 = vpop.f32.mrb[0].mxu0
        %v3789 = vadd.f32 0.0, %v3788
        %v3790 = vpop.f32.mrb[0].mxu0
        %v3791 = vpop.f32.mrb[0].mxu0
        %v3792 = vadd.f32 0.0, %v3791
        %v3793 = vpop.f32.mrb[0].mxu0
        %3794 = vmatprep.mubr.bf16.mxu0 0
        %3795 = vmatmul.mubr.bf16.gmra.mrb[0].mxu0 %v407
        %v3796 = vpop.f32.mrb[0].mxu0
        %v3797 = vadd.f32 0.0, %v3796
        %v3798 = vpop.f32.mrb[0].mxu0
        %v3799 = vpop.f32.mrb[0].mxu0
        %v3800 = vadd.f32 0.0, %v3799
        %v3801 = vpop.f32.mrb[0].mxu0
        %3802 = vmatprep.mubr.bf16.mxu0 0
        %3803 = vmatmul.mubr.bf16.gmra.mrb[0].mxu0 %v408
        %v3804 = vpop.f32.mrb[0].mxu0
        %v3805 = vadd.f32 0.0, %v3804
        %v3806 = vpop.f32.mrb[0].mxu0
        %v3807 = vpop.f32.mrb[0].mxu0
        %v3808 = vadd.f32 0.0, %v3807
        %v3809 = vpop.f32.mrb[0].mxu0
        %3810 = vmatprep.mubr.bf16.mxu0 0
        %3811 = vmatmul.mubr.bf16.gmra.mrb[0].mxu0 %v409
        %v3812 = vpop.f32.mrb[0].mxu0
        %v3813 = vadd.f32 0.0, %v3812
        %v3814 = vpop.f32.mrb[0].mxu0
        %v3815 = vpop.f32.mrb[0].mxu0
        %v3816 = vadd.f32 0.0, %v3815
        %v3817 = vpop.f32.mrb[0].mxu0
        %3818 = vmatprep.mubr.bf16.mxu0 0
        %3819 = vmatmul.mubr.bf16.gmra.mrb[0].mxu0 %v410
        %v3820 = vpop.f32.mrb[0].mxu0
        %v3821 = vadd.f32 0.0, %v3820
        %v3822 = vpop.f32.mrb[0].mxu0
        %v3823 = vpop.f32.mrb[0].mxu0
        %v3824 = vadd.f32 0.0, %v3823
        %v3825 = vpop.f32.mrb[0].mxu0
        %3826 = vmatprep.mubr.bf16.mxu0 0
        %3827 = vmatmul.mubr.bf16.gmra.mrb[0].mxu0 %v411
        %v3828 = vpop.f32.mrb[0].mxu0
        %v3829 = vadd.f32 0.0, %v3828
        %v3830 = vpop.f32.mrb[0].mxu0
        %v3831 = vpop.f32.mrb[0].mxu0
        %v3832 = vadd.f32 0.0, %v3831
        %v3833 = vpop.f32.mrb[0].mxu0
        %3834 = vmatprep.mubr.bf16.mxu0 0
        %3835 = vmatmul.mubr.bf16.gmra.mrb[0].mxu0 %v412
        %v3836 = vpop.f32.mrb[0].mxu0
        %v3837 = vadd.f32 0.0, %v3836
        %v3838 = vpop.f32.mrb[0].mxu0
        %v3839 = vpop.f32.mrb[0].mxu0
        %v3840 = vadd.f32 0.0, %v3839
        %v3841 = vpop.f32.mrb[0].mxu0
        %3842 = vmatprep.mubr.bf16.mxu0 0
        %3843 = vmatmul.mubr.bf16.gmra.mrb[0].mxu0 %v413
        %v3844 = vpop.f32.mrb[0].mxu0
        %v3845 = vadd.f32 0.0, %v3844
        %v3846 = vpop.f32.mrb[0].mxu0
        %v3847 = vpop.f32.mrb[0].mxu0
        %v3848 = vadd.f32 0.0, %v3847
        %v3849 = vpop.f32.mrb[0].mxu0
        %3850 = vdwg.mxu0
        %v3867 = vunpack.c.l.b16 %v3078
        %v3868 = vunpack.c.l.b16 %v3079
        %v3869 = vunpack.c.l.b16 %v3080
        %v3870 = vunpack.c.l.b16 %v3081
        %v3871 = vunpack.c.l.b16 %v3082
        %v3872 = vunpack.c.l.b16 %v3083
        %v3873 = vunpack.c.l.b16 %v3084
        %v3874 = vunpack.c.l.b16 %v3085
        %v3875 = vunpack.c.l.b16 %v3086
        %v3876 = vunpack.c.l.b16 %v3087
        %v3877 = vunpack.c.l.b16 %v3088
        %v3878 = vunpack.c.l.b16 %v3089
        %v3879 = vunpack.c.l.b16 %v3090
        %v3880 = vunpack.c.l.b16 %v3091
        %v3881 = vunpack.c.l.b16 %v3092
        %v3882 = vunpack.c.l.b16 %v3093
        %v3883 = vpack.c.b16 %v3868, %v3867
        %v3884 = vpack.c.b16 %v3870, %v3869
        %v3885 = vpack.c.b16 %v3872, %v3871
        %v3886 = vpack.c.b16 %v3874, %v3873
        %v3887 = vpack.c.b16 %v3876, %v3875
        %v3888 = vpack.c.b16 %v3878, %v3877
        %v3889 = vpack.c.b16 %v3880, %v3879
        %v3890 = vpack.c.b16 %v3882, %v3881
        %3899 = vmatprep.subr.bf16.mxu0 0
        %3900 = vmatpush1.bf16.msra.mxu0 %v3883
        %3901 = vmatprep.subr.bf16.mxu0 0
        %3902 = vmatpush1.bf16.msra.mxu0 %v3884
        %3903 = vmatprep.subr.bf16.mxu0 0
        %3904 = vmatpush1.bf16.msra.mxu0 %v3885
        %3905 = vmatprep.subr.bf16.mxu0 0
        %3906 = vmatpush1.bf16.msra.mxu0 %v3886
        %3907 = vmatprep.subr.bf16.mxu0 0
        %3908 = vmatpush1.bf16.msra.mxu0 %v3887
        %3909 = vmatprep.subr.bf16.mxu0 0
        %3910 = vmatpush1.bf16.msra.mxu0 %v3888
        %3911 = vmatprep.subr.bf16.mxu0 0
        %3912 = vmatpush1.bf16.msra.mxu0 %v3889
        %3913 = vmatprep.subr.bf16.mxu0 0
        %3914 = vmatpush1.bf16.msra.mxu0 %v3890
        %3915 = vmatprep.subr.bf16.mxu0 0
        %3916 = vmatpush1.bf16.msra.mxu0 0
        %3917 = vmatprep.subr.bf16.mxu0 0
        %3918 = vmatpush1.bf16.msra.mxu0 0
        %3919 = vmatprep.subr.bf16.mxu0 0
        %3920 = vmatpush1.bf16.msra.mxu0 0
        %3921 = vmatprep.subr.bf16.mxu0 0
        %3922 = vmatpush1.bf16.msra.mxu0 0
        %3923 = vmatprep.subr.bf16.mxu0 0
        %3924 = vmatpush1.bf16.msra.mxu0 0
        %3925 = vmatprep.subr.bf16.mxu0 0
        %3926 = vmatpush1.bf16.msra.mxu0 0
        %3927 = vmatprep.subr.bf16.mxu0 0
        %3928 = vmatpush1.bf16.msra.mxu0 0
        %3929 = vmatprep.subr.bf16.mxu0 0
        %3930 = vmatpush1.bf16.msra.mxu0 0
        %3931 = vmatprep.mubr.bf16.mxu0 0
        %3932 = vmatmul.mubr.bf16.gmra.mrb[0].mxu0 %v406
        %v3933 = vpop.f32.mrb[0].mxu0
        %v3934 = vadd.f32 0.0, %v3933
        %v3935 = vpop.f32.mrb[0].mxu0
        %v3936 = vpop.f32.mrb[0].mxu0
        %v3937 = vadd.f32 0.0, %v3936
        %v3938 = vpop.f32.mrb[0].mxu0
        %3939 = vmatprep.mubr.bf16.mxu0 0
        %3940 = vmatmul.mubr.bf16.gmra.mrb[0].mxu0 %v407
        %v3941 = vpop.f32.mrb[0].mxu0
        %v3942 = vadd.f32 0.0, %v3941
        %v3943 = vpop.f32.mrb[0].mxu0
        %v3944 = vpop.f32.mrb[0].mxu0
        %v3945 = vadd.f32 0.0, %v3944
        %v3946 = vpop.f32.mrb[0].mxu0
        %3947 = vmatprep.mubr.bf16.mxu0 0
        %3948 = vmatmul.mubr.bf16.gmra.mrb[0].mxu0 %v408
        %v3949 = vpop.f32.mrb[0].mxu0
        %v3950 = vadd.f32 0.0, %v3949
        %v3951 = vpop.f32.mrb[0].mxu0
        %v3952 = vpop.f32.mrb[0].mxu0
        %v3953 = vadd.f32 0.0, %v3952
        %v3954 = vpop.f32.mrb[0].mxu0
        %3955 = vmatprep.mubr.bf16.mxu0 0
        %3956 = vmatmul.mubr.bf16.gmra.mrb[0].mxu0 %v409
        %v3957 = vpop.f32.mrb[0].mxu0
        %v3958 = vadd.f32 0.0, %v3957
        %v3959 = vpop.f32.mrb[0].mxu0
        %v3960 = vpop.f32.mrb[0].mxu0
        %v3961 = vadd.f32 0.0, %v3960
        %v3962 = vpop.f32.mrb[0].mxu0
        %3963 = vmatprep.mubr.bf16.mxu0 0
        %3964 = vmatmul.mubr.bf16.gmra.mrb[0].mxu0 %v410
        %v3965 = vpop.f32.mrb[0].mxu0
        %v3966 = vadd.f32 0.0, %v3965
        %v3967 = vpop.f32.mrb[0].mxu0
        %v3968 = vpop.f32.mrb[0].mxu0
        %v3969 = vadd.f32 0.0, %v3968
        %v3970 = vpop.f32.mrb[0].mxu0
        %3971 = vmatprep.mubr.bf16.mxu0 0
        %3972 = vmatmul.mubr.bf16.gmra.mrb[0].mxu0 %v411
        %v3973 = vpop.f32.mrb[0].mxu0
        %v3974 = vadd.f32 0.0, %v3973
        %v3975 = vpop.f32.mrb[0].mxu0
        %v3976 = vpop.f32.mrb[0].mxu0
        %v3977 = vadd.f32 0.0, %v3976
        %v3978 = vpop.f32.mrb[0].mxu0
        %3979 = vmatprep.mubr.bf16.mxu0 0
        %3980 = vmatmul.mubr.bf16.gmra.mrb[0].mxu0 %v412
        %v3981 = vpop.f32.mrb[0].mxu0
        %v3982 = vadd.f32 0.0, %v3981
        %v3983 = vpop.f32.mrb[0].mxu0
        %v3984 = vpop.f32.mrb[0].mxu0
        %v3985 = vadd.f32 0.0, %v3984
        %v3986 = vpop.f32.mrb[0].mxu0
        %3987 = vmatprep.mubr.bf16.mxu0 0
        %3988 = vmatmul.mubr.bf16.gmra.mrb[0].mxu0 %v413
        %v3989 = vpop.f32.mrb[0].mxu0
        %v3990 = vadd.f32 0.0, %v3989
        %v3991 = vpop.f32.mrb[0].mxu0
        %v3992 = vpop.f32.mrb[0].mxu0
        %v3993 = vadd.f32 0.0, %v3992
        %v3994 = vpop.f32.mrb[0].mxu0
        %3995 = vdwg.mxu0
        %v4012 = vunpack.c.l.b16 %v3094
        %v4013 = vunpack.c.l.b16 %v3095
        %v4014 = vunpack.c.l.b16 %v3096
        %v4015 = vunpack.c.l.b16 %v3097
        %v4016 = vunpack.c.l.b16 %v3098
        %v4017 = vunpack.c.l.b16 %v3099
        %v4018 = vunpack.c.l.b16 %v3100
        %v4019 = vunpack.c.l.b16 %v3101
        %v4020 = vunpack.c.l.b16 %v3102
        %v4021 = vunpack.c.l.b16 %v3103
        %v4022 = vunpack.c.l.b16 %v3104
        %v4023 = vunpack.c.l.b16 %v3105
        %v4024 = vunpack.c.l.b16 %v3106
        %v4025 = vunpack.c.l.b16 %v3107
        %v4026 = vunpack.c.l.b16 %v3108
        %v4027 = vunpack.c.l.b16 %v3109
        %v4028 = vpack.c.b16 %v4013, %v4012
        %v4029 = vpack.c.b16 %v4015, %v4014
        %v4030 = vpack.c.b16 %v4017, %v4016
        %v4031 = vpack.c.b16 %v4019, %v4018
        %v4032 = vpack.c.b16 %v4021, %v4020
        %v4033 = vpack.c.b16 %v4023, %v4022
        %v4034 = vpack.c.b16 %v4025, %v4024
        %v4035 = vpack.c.b16 %v4027, %v4026
        %4044 = vmatprep.subr.bf16.mxu0 0
        %4045 = vmatpush1.bf16.msra.mxu0 %v4028
        %4046 = vmatprep.subr.bf16.mxu0 0
        %4047 = vmatpush1.bf16.msra.mxu0 %v4029
        %4048 = vmatprep.subr.bf16.mxu0 0
        %4049 = vmatpush1.bf16.msra.mxu0 %v4030
        %4050 = vmatprep.subr.bf16.mxu0 0
        %4051 = vmatpush1.bf16.msra.mxu0 %v4031
        %4052 = vmatprep.subr.bf16.mxu0 0
        %4053 = vmatpush1.bf16.msra.mxu0 %v4032
        %4054 = vmatprep.subr.bf16.mxu0 0
        %4055 = vmatpush1.bf16.msra.mxu0 %v4033
        %4056 = vmatprep.subr.bf16.mxu0 0
        %4057 = vmatpush1.bf16.msra.mxu0 %v4034
        %4058 = vmatprep.subr.bf16.mxu0 0
        %4059 = vmatpush1.bf16.msra.mxu0 %v4035
        %4060 = vmatprep.subr.bf16.mxu0 0
        %4061 = vmatpush1.bf16.msra.mxu0 0
        %4062 = vmatprep.subr.bf16.mxu0 0
        %4063 = vmatpush1.bf16.msra.mxu0 0
        %4064 = vmatprep.subr.bf16.mxu0 0
        %4065 = vmatpush1.bf16.msra.mxu0 0
        %4066 = vmatprep.subr.bf16.mxu0 0
        %4067 = vmatpush1.bf16.msra.mxu0 0
        %4068 = vmatprep.subr.bf16.mxu0 0
        %4069 = vmatpush1.bf16.msra.mxu0 0
        %4070 = vmatprep.subr.bf16.mxu0 0
        %4071 = vmatpush1.bf16.msra.mxu0 0
        %4072 = vmatprep.subr.bf16.mxu0 0
        %4073 = vmatpush1.bf16.msra.mxu0 0
        %4074 = vmatprep.subr.bf16.mxu0 0
        %4075 = vmatpush1.bf16.msra.mxu0 0
        %4076 = vmatprep.mubr.bf16.mxu0 0
        %4077 = vmatmul.mubr.bf16.gmra.mrb[0].mxu0 %v406
        %v4078 = vpop.f32.mrb[0].mxu0
        %v4079 = vadd.f32 0.0, %v4078
        %v4080 = vpop.f32.mrb[0].mxu0
        %v4081 = vpop.f32.mrb[0].mxu0
        %v4082 = vadd.f32 0.0, %v4081
        %v4083 = vpop.f32.mrb[0].mxu0
        %4084 = vmatprep.mubr.bf16.mxu0 0
        %4085 = vmatmul.mubr.bf16.gmra.mrb[0].mxu0 %v407
        %v4086 = vpop.f32.mrb[0].mxu0
        %v4087 = vadd.f32 0.0, %v4086
        %v4088 = vpop.f32.mrb[0].mxu0
        %v4089 = vpop.f32.mrb[0].mxu0
        %v4090 = vadd.f32 0.0, %v4089
        %v4091 = vpop.f32.mrb[0].mxu0
        %4092 = vmatprep.mubr.bf16.mxu0 0
        %4093 = vmatmul.mubr.bf16.gmra.mrb[0].mxu0 %v408
        %v4094 = vpop.f32.mrb[0].mxu0
        %v4095 = vadd.f32 0.0, %v4094
        %v4096 = vpop.f32.mrb[0].mxu0
        %v4097 = vpop.f32.mrb[0].mxu0
        %v4098 = vadd.f32 0.0, %v4097
        %v4099 = vpop.f32.mrb[0].mxu0
        %4100 = vmatprep.mubr.bf16.mxu0 0
        %4101 = vmatmul.mubr.bf16.gmra.mrb[0].mxu0 %v409
        %v4102 = vpop.f32.mrb[0].mxu0
        %v4103 = vadd.f32 0.0, %v4102
        %v4104 = vpop.f32.mrb[0].mxu0
        %v4105 = vpop.f32.mrb[0].mxu0
        %v4106 = vadd.f32 0.0, %v4105
        %v4107 = vpop.f32.mrb[0].mxu0
        %4108 = vmatprep.mubr.bf16.mxu0 0
        %4109 = vmatmul.mubr.bf16.gmra.mrb[0].mxu0 %v410
        %v4110 = vpop.f32.mrb[0].mxu0
        %v4111 = vadd.f32 0.0, %v4110
        %v4112 = vpop.f32.mrb[0].mxu0
        %v4113 = vpop.f32.mrb[0].mxu0
        %v4114 = vadd.f32 0.0, %v4113
        %v4115 = vpop.f32.mrb[0].mxu0
        %4116 = vmatprep.mubr.bf16.mxu0 0
        %4117 = vmatmul.mubr.bf16.gmra.mrb[0].mxu0 %v411
        %v4118 = vpop.f32.mrb[0].mxu0
        %v4119 = vadd.f32 0.0, %v4118
        %v4120 = vpop.f32.mrb[0].mxu0
        %v4121 = vpop.f32.mrb[0].mxu0
        %v4122 = vadd.f32 0.0, %v4121
        %v4123 = vpop.f32.mrb[0].mxu0
        %4124 = vmatprep.mubr.bf16.mxu0 0
        %4125 = vmatmul.mubr.bf16.gmra.mrb[0].mxu0 %v412
        %v4126 = vpop.f32.mrb[0].mxu0
        %v4127 = vadd.f32 0.0, %v4126
        %v4128 = vpop.f32.mrb[0].mxu0
        %v4129 = vpop.f32.mrb[0].mxu0
        %v4130 = vadd.f32 0.0, %v4129
        %v4131 = vpop.f32.mrb[0].mxu0
        %4132 = vmatprep.mubr.bf16.mxu0 0
        %4133 = vmatmul.mubr.bf16.gmra.mrb[0].mxu0 %v413
        %v4134 = vpop.f32.mrb[0].mxu0
        %v4135 = vadd.f32 0.0, %v4134
        %v4136 = vpop.f32.mrb[0].mxu0
        %v4137 = vpop.f32.mrb[0].mxu0
        %v4138 = vadd.f32 0.0, %v4137
        %v4139 = vpop.f32.mrb[0].mxu0
        %4140 = vdwg.mxu0
        %v4157 = vunpack.c.l.b16 %v3110
        %v4158 = vunpack.c.l.b16 %v3111
        %v4159 = vunpack.c.l.b16 %v3112
        %v4160 = vunpack.c.l.b16 %v3113
        %v4161 = vunpack.c.l.b16 %v3114
        %v4162 = vunpack.c.l.b16 %v3115
        %v4163 = vunpack.c.l.b16 %v3116
        %v4164 = vunpack.c.l.b16 %v3117
        %v4165 = vunpack.c.l.b16 %v3118
        %v4166 = vunpack.c.l.b16 %v3119
        %v4167 = vunpack.c.l.b16 %v3120
        %v4168 = vunpack.c.l.b16 %v3121
        %v4169 = vunpack.c.l.b16 %v3122
        %v4170 = vunpack.c.l.b16 %v3123
        %v4171 = vunpack.c.l.b16 %v3124
        %v4172 = vunpack.c.l.b16 %v3125
        %v4173 = vpack.c.b16 %v4158, %v4157
        %v4174 = vpack.c.b16 %v4160, %v4159
        %v4175 = vpack.c.b16 %v4162, %v4161
        %v4176 = vpack.c.b16 %v4164, %v4163
        %v4177 = vpack.c.b16 %v4166, %v4165
        %v4178 = vpack.c.b16 %v4168, %v4167
        %v4179 = vpack.c.b16 %v4170, %v4169
        %v4180 = vpack.c.b16 %v4172, %v4171
        %4189 = vmatprep.subr.bf16.mxu0 0
        %4190 = vmatpush1.bf16.msra.mxu0 %v4173
        %4191 = vmatprep.subr.bf16.mxu0 0
        %4192 = vmatpush1.bf16.msra.mxu0 %v4174
        %4193 = vmatprep.subr.bf16.mxu0 0
        %4194 = vmatpush1.bf16.msra.mxu0 %v4175
        %4195 = vmatprep.subr.bf16.mxu0 0
        %4196 = vmatpush1.bf16.msra.mxu0 %v4176
        %4197 = vmatprep.subr.bf16.mxu0 0
        %4198 = vmatpush1.bf16.msra.mxu0 %v4177
        %4199 = vmatprep.subr.bf16.mxu0 0
        %4200 = vmatpush1.bf16.msra.mxu0 %v4178
        %4201 = vmatprep.subr.bf16.mxu0 0
        %4202 = vmatpush1.bf16.msra.mxu0 %v4179
        %4203 = vmatprep.subr.bf16.mxu0 0
        %4204 = vmatpush1.bf16.msra.mxu0 %v4180
        %4205 = vmatprep.subr.bf16.mxu0 0
        %4206 = vmatpush1.bf16.msra.mxu0 0
        %4207 = vmatprep.subr.bf16.mxu0 0
        %4208 = vmatpush1.bf16.msra.mxu0 0
        %4209 = vmatprep.subr.bf16.mxu0 0
        %4210 = vmatpush1.bf16.msra.mxu0 0
        %4211 = vmatprep.subr.bf16.mxu0 0
        %4212 = vmatpush1.bf16.msra.mxu0 0
        %4213 = vmatprep.subr.bf16.mxu0 0
        %4214 = vmatpush1.bf16.msra.mxu0 0
        %4215 = vmatprep.subr.bf16.mxu0 0
        %4216 = vmatpush1.bf16.msra.mxu0 0
        %4217 = vmatprep.subr.bf16.mxu0 0
        %4218 = vmatpush1.bf16.msra.mxu0 0
        %4219 = vmatprep.subr.bf16.mxu0 0
        %4220 = vmatpush1.bf16.msra.mxu0 0
        %4221 = vmatprep.mubr.bf16.mxu0 0
        %4222 = vmatmul.mubr.bf16.gmra.mrb[0].mxu0 %v406
        %v4223 = vpop.f32.mrb[0].mxu0
        %v4224 = vadd.f32 0.0, %v4223
        %v4225 = vpop.f32.mrb[0].mxu0
        %v4226 = vpop.f32.mrb[0].mxu0
        %v4227 = vadd.f32 0.0, %v4226
        %v4228 = vpop.f32.mrb[0].mxu0
        %4229 = vmatprep.mubr.bf16.mxu0 0
        %4230 = vmatmul.mubr.bf16.gmra.mrb[0].mxu0 %v407
        %v4231 = vpop.f32.mrb[0].mxu0
        %v4232 = vadd.f32 0.0, %v4231
        %v4233 = vpop.f32.mrb[0].mxu0
        %v4234 = vpop.f32.mrb[0].mxu0
        %v4235 = vadd.f32 0.0, %v4234
        %v4236 = vpop.f32.mrb[0].mxu0
        %4237 = vmatprep.mubr.bf16.mxu0 0
        %4238 = vmatmul.mubr.bf16.gmra.mrb[0].mxu0 %v408
        %v4239 = vpop.f32.mrb[0].mxu0
        %v4240 = vadd.f32 0.0, %v4239
        %v4241 = vpop.f32.mrb[0].mxu0
        %v4242 = vpop.f32.mrb[0].mxu0
        %v4243 = vadd.f32 0.0, %v4242
        %v4244 = vpop.f32.mrb[0].mxu0
        %4245 = vmatprep.mubr.bf16.mxu0 0
        %4246 = vmatmul.mubr.bf16.gmra.mrb[0].mxu0 %v409
        %v4247 = vpop.f32.mrb[0].mxu0
        %v4248 = vadd.f32 0.0, %v4247
        %v4249 = vpop.f32.mrb[0].mxu0
        %v4250 = vpop.f32.mrb[0].mxu0
        %v4251 = vadd.f32 0.0, %v4250
        %v4252 = vpop.f32.mrb[0].mxu0
        %4253 = vmatprep.mubr.bf16.mxu0 0
        %4254 = vmatmul.mubr.bf16.gmra.mrb[0].mxu0 %v410
        %v4255 = vpop.f32.mrb[0].mxu0
        %v4256 = vadd.f32 0.0, %v4255
        %v4257 = vpop.f32.mrb[0].mxu0
        %v4258 = vpop.f32.mrb[0].mxu0
        %v4259 = vadd.f32 0.0, %v4258
        %v4260 = vpop.f32.mrb[0].mxu0
        %4261 = vmatprep.mubr.bf16.mxu0 0
        %4262 = vmatmul.mubr.bf16.gmra.mrb[0].mxu0 %v411
        %v4263 = vpop.f32.mrb[0].mxu0
        %v4264 = vadd.f32 0.0, %v4263
        %v4265 = vpop.f32.mrb[0].mxu0
        %v4266 = vpop.f32.mrb[0].mxu0
        %v4267 = vadd.f32 0.0, %v4266
        %v4268 = vpop.f32.mrb[0].mxu0
        %4269 = vmatprep.mubr.bf16.mxu0 0
        %4270 = vmatmul.mubr.bf16.gmra.mrb[0].mxu0 %v412
        %v4271 = vpop.f32.mrb[0].mxu0
        %v4272 = vadd.f32 0.0, %v4271
        %v4273 = vpop.f32.mrb[0].mxu0
        %v4274 = vpop.f32.mrb[0].mxu0
        %v4275 = vadd.f32 0.0, %v4274
        %v4276 = vpop.f32.mrb[0].mxu0
        %4277 = vmatprep.mubr.bf16.mxu0 0
        %4278 = vmatmul.mubr.bf16.gmra.mrb[0].mxu0 %v413
        %v4279 = vpop.f32.mrb[0].mxu0
        %v4280 = vadd.f32 0.0, %v4279
        %v4281 = vpop.f32.mrb[0].mxu0
        %v4282 = vpop.f32.mrb[0].mxu0
        %v4283 = vadd.f32 0.0, %v4282
        %v4284 = vpop.f32.mrb[0].mxu0
        %4285 = vdwg.mxu0
        %v4286 = vpack.c.bf16 %v3212, %v3209
        %v4287 = vpack.c.bf16 %v3220, %v3217
        %v4288 = vpack.c.bf16 %v3228, %v3225
        %v4289 = vpack.c.bf16 %v3236, %v3233
        %v4290 = vpack.c.bf16 %v3244, %v3241
        %v4291 = vpack.c.bf16 %v3252, %v3249
        %v4292 = vpack.c.bf16 %v3260, %v3257
        %v4293 = vpack.c.bf16 %v3268, %v3265
        %v4294 = vpack.c.bf16 %v3357, %v3354
        %v4295 = vpack.c.bf16 %v3365, %v3362
        %v4296 = vpack.c.bf16 %v3373, %v3370
        %v4297 = vpack.c.bf16 %v3381, %v3378
        %v4298 = vpack.c.bf16 %v3389, %v3386
        %v4299 = vpack.c.bf16 %v3397, %v3394
        %v4300 = vpack.c.bf16 %v3405, %v3402
        %v4301 = vpack.c.bf16 %v3413, %v3410
        %v4302 = vpack.c.bf16 %v3502, %v3499
        %v4303 = vpack.c.bf16 %v3510, %v3507
        %v4304 = vpack.c.bf16 %v3518, %v3515
        %v4305 = vpack.c.bf16 %v3526, %v3523
        %v4306 = vpack.c.bf16 %v3534, %v3531
        %v4307 = vpack.c.bf16 %v3542, %v3539
        %v4308 = vpack.c.bf16 %v3550, %v3547
        %v4309 = vpack.c.bf16 %v3558, %v3555
        %v4310 = vpack.c.bf16 %v3647, %v3644
        %v4311 = vpack.c.bf16 %v3655, %v3652
        %v4312 = vpack.c.bf16 %v3663, %v3660
        %v4313 = vpack.c.bf16 %v3671, %v3668
        %v4314 = vpack.c.bf16 %v3679, %v3676
        %v4315 = vpack.c.bf16 %v3687, %v3684
        %v4316 = vpack.c.bf16 %v3695, %v3692
        %v4317 = vpack.c.bf16 %v3703, %v3700
        %v4318 = vpack.c.bf16 %v3792, %v3789
        %v4319 = vpack.c.bf16 %v3800, %v3797
        %v4320 = vpack.c.bf16 %v3808, %v3805
        %v4321 = vpack.c.bf16 %v3816, %v3813
        %v4322 = vpack.c.bf16 %v3824, %v3821
        %v4323 = vpack.c.bf16 %v3832, %v3829
        %v4324 = vpack.c.bf16 %v3840, %v3837
        %v4325 = vpack.c.bf16 %v3848, %v3845
        %v4326 = vpack.c.bf16 %v3937, %v3934
        %v4327 = vpack.c.bf16 %v3945, %v3942
        %v4328 = vpack.c.bf16 %v3953, %v3950
        %v4329 = vpack.c.bf16 %v3961, %v3958
        %v4330 = vpack.c.bf16 %v3969, %v3966
        %v4331 = vpack.c.bf16 %v3977, %v3974
        %v4332 = vpack.c.bf16 %v3985, %v3982
        %v4333 = vpack.c.bf16 %v3993, %v3990
        %v4334 = vpack.c.bf16 %v4082, %v4079
        %v4335 = vpack.c.bf16 %v4090, %v4087
        %v4336 = vpack.c.bf16 %v4098, %v4095
        %v4337 = vpack.c.bf16 %v4106, %v4103
        %v4338 = vpack.c.bf16 %v4114, %v4111
        %v4339 = vpack.c.bf16 %v4122, %v4119
        %v4340 = vpack.c.bf16 %v4130, %v4127
        %v4341 = vpack.c.bf16 %v4138, %v4135
        %v4342 = vpack.c.bf16 %v4227, %v4224
        %v4343 = vpack.c.bf16 %v4235, %v4232
        %v4344 = vpack.c.bf16 %v4243, %v4240
        %v4345 = vpack.c.bf16 %v4251, %v4248
        %v4346 = vpack.c.bf16 %v4259, %v4256
        %v4347 = vpack.c.bf16 %v4267, %v4264
        %v4348 = vpack.c.bf16 %v4275, %v4272
        %v4349 = vpack.c.bf16 %v4283, %v4280
        %vm4350 = vcmask 523264
        %v4352 = vsel %vm4350, %v1582, 0
        %v4355 = vsel %vm4350, %v1583, 0
        %v4358 = vsel %vm4350, %v1584, 0
        %v4361 = vsel %vm4350, %v1585, 0
        %v4364 = vsel %vm4350, %v2934, 0
        %v4367 = vsel %vm4350, %v2935, 0
        %v4370 = vsel %vm4350, %v2936, 0
        %v4373 = vsel %vm4350, %v2937, 0
        %4375 = vmatprep.subr.bf16.mxu0 0
        %4376 = vmatpush1.bf16.xpose.msra.mxu0 %v4364
        %4377 = vmatprep.subr.bf16.mxu0 0
        %4378 = vmatpush1.bf16.xpose.msra.mxu0 %v4367
        %4379 = vmatprep.subr.bf16.mxu0 0
        %4380 = vmatpush1.bf16.xpose.msra.mxu0 %v4370
        %4381 = vmatprep.subr.bf16.mxu0 0
        %4382 = vmatpush1.bf16.xpose.msra.mxu0 %v4373
        %4383 = vmatprep.subr.bf16.mxu0 0
        %4384 = vmatpush1.bf16.xpose.msra.mxu0 0
        %4385 = vmatprep.subr.bf16.mxu0 0
        %4386 = vmatpush1.bf16.xpose.msra.mxu0 0
        %4387 = vmatprep.subr.bf16.mxu0 0
        %4388 = vmatpush1.bf16.xpose.msra.mxu0 0
        %4389 = vmatprep.subr.bf16.mxu0 0
        %4390 = vmatpush1.bf16.xpose.msra.mxu0 0
        %4391 = vmatprep.subr.bf16.mxu0 0
        %4392 = vmatpush1.bf16.xpose.msra.mxu0 0
        %4393 = vmatprep.subr.bf16.mxu0 0
        %4394 = vmatpush1.bf16.xpose.msra.mxu0 0
        %4395 = vmatprep.subr.bf16.mxu0 0
        %4396 = vmatpush1.bf16.xpose.msra.mxu0 0
        %4397 = vmatprep.subr.bf16.mxu0 0
        %4398 = vmatpush1.bf16.xpose.msra.mxu0 0
        %4399 = vmatprep.subr.bf16.mxu0 0
        %4400 = vmatpush1.bf16.xpose.msra.mxu0 0
        %4401 = vmatprep.subr.bf16.mxu0 0
        %4402 = vmatpush1.bf16.xpose.msra.mxu0 0
        %4403 = vmatprep.subr.bf16.mxu0 0
        %4404 = vmatpush1.bf16.xpose.msra.mxu0 0
        %4405 = vmatprep.subr.bf16.mxu0 0
        %4406 = vmatpush1.bf16.xpose.msra.mxu0 0
        %4407 = vmatprep.mubr.bf16.mxu0 0
        %4408 = vmatmul.mubr.bf16.gmra.mrb[0].mxu0 %v4352
        %v4409 = vpop.f32.mrb[0].mxu0
        %v4410 = vadd.f32 0.0, %v4409
        %v4411 = vpop.f32.mrb[0].mxu0
        %v4412 = vpop.f32.mrb[0].mxu0
        %v4413 = vadd.f32 0.0, %v4412
        %v4414 = vpop.f32.mrb[0].mxu0
        %4415 = vmatprep.mubr.bf16.mxu0 0
        %4416 = vmatmul.mubr.bf16.gmra.mrb[0].mxu0 %v4355
        %v4417 = vpop.f32.mrb[0].mxu0
        %v4418 = vadd.f32 0.0, %v4417
        %v4419 = vpop.f32.mrb[0].mxu0
        %v4420 = vpop.f32.mrb[0].mxu0
        %v4421 = vadd.f32 0.0, %v4420
        %v4422 = vpop.f32.mrb[0].mxu0
        %4423 = vmatprep.mubr.bf16.mxu0 0
        %4424 = vmatmul.mubr.bf16.gmra.mrb[0].mxu0 %v4358
        %v4425 = vpop.f32.mrb[0].mxu0
        %v4426 = vadd.f32 0.0, %v4425
        %v4427 = vpop.f32.mrb[0].mxu0
        %v4428 = vpop.f32.mrb[0].mxu0
        %v4429 = vadd.f32 0.0, %v4428
        %v4430 = vpop.f32.mrb[0].mxu0
        %4431 = vmatprep.mubr.bf16.mxu0 0
        %4432 = vmatmul.mubr.bf16.gmra.mrb[0].mxu0 %v4361
        %v4433 = vpop.f32.mrb[0].mxu0
        %v4434 = vadd.f32 0.0, %v4433
        %v4435 = vpop.f32.mrb[0].mxu0
        %v4436 = vpop.f32.mrb[0].mxu0
        %v4437 = vadd.f32 0.0, %v4436
        %v4438 = vpop.f32.mrb[0].mxu0
        %4439 = vdwg.mxu0
        %v4441 = vsel %vm4350, %v1586, 0
        %v4444 = vsel %vm4350, %v1587, 0
        %v4447 = vsel %vm4350, %v1588, 0
        %v4450 = vsel %vm4350, %v1589, 0
        %v4453 = vsel %vm4350, %v2938, 0
        %v4456 = vsel %vm4350, %v2939, 0
        %v4459 = vsel %vm4350, %v2940, 0
        %v4462 = vsel %vm4350, %v2941, 0
        %4464 = vmatprep.subr.bf16.mxu0 0
        %4465 = vmatpush1.bf16.xpose.msra.mxu0 %v4453
        %4466 = vmatprep.subr.bf16.mxu0 0
        %4467 = vmatpush1.bf16.xpose.msra.mxu0 %v4456
        %4468 = vmatprep.subr.bf16.mxu0 0
        %4469 = vmatpush1.bf16.xpose.msra.mxu0 %v4459
        %4470 = vmatprep.subr.bf16.mxu0 0
        %4471 = vmatpush1.bf16.xpose.msra.mxu0 %v4462
        %4472 = vmatprep.subr.bf16.mxu0 0
        %4473 = vmatpush1.bf16.xpose.msra.mxu0 0
        %4474 = vmatprep.subr.bf16.mxu0 0
        %4475 = vmatpush1.bf16.xpose.msra.mxu0 0
        %4476 = vmatprep.subr.bf16.mxu0 0
        %4477 = vmatpush1.bf16.xpose.msra.mxu0 0
        %4478 = vmatprep.subr.bf16.mxu0 0
        %4479 = vmatpush1.bf16.xpose.msra.mxu0 0
        %4480 = vmatprep.subr.bf16.mxu0 0
        %4481 = vmatpush1.bf16.xpose.msra.mxu0 0
        %4482 = vmatprep.subr.bf16.mxu0 0
        %4483 = vmatpush1.bf16.xpose.msra.mxu0 0
        %4484 = vmatprep.subr.bf16.mxu0 0
        %4485 = vmatpush1.bf16.xpose.msra.mxu0 0
        %4486 = vmatprep.subr.bf16.mxu0 0
        %4487 = vmatpush1.bf16.xpose.msra.mxu0 0
        %4488 = vmatprep.subr.bf16.mxu0 0
        %4489 = vmatpush1.bf16.xpose.msra.mxu0 0
        %4490 = vmatprep.subr.bf16.mxu0 0
        %4491 = vmatpush1.bf16.xpose.msra.mxu0 0
        %4492 = vmatprep.subr.bf16.mxu0 0
        %4493 = vmatpush1.bf16.xpose.msra.mxu0 0
        %4494 = vmatprep.subr.bf16.mxu0 0
        %4495 = vmatpush1.bf16.xpose.msra.mxu0 0
        %4496 = vmatprep.mubr.bf16.mxu0 0
        %4497 = vmatmul.mubr.bf16.gmra.mrb[0].mxu0 %v4441
        %v4498 = vpop.f32.mrb[0].mxu0
        %v4499 = vadd.f32 0.0, %v4498
        %v4500 = vpop.f32.mrb[0].mxu0
        %v4501 = vpop.f32.mrb[0].mxu0
        %v4502 = vadd.f32 0.0, %v4501
        %v4503 = vpop.f32.mrb[0].mxu0
        %4504 = vmatprep.mubr.bf16.mxu0 0
        %4505 = vmatmul.mubr.bf16.gmra.mrb[0].mxu0 %v4444
        %v4506 = vpop.f32.mrb[0].mxu0
        %v4507 = vadd.f32 0.0, %v4506
        %v4508 = vpop.f32.mrb[0].mxu0
        %v4509 = vpop.f32.mrb[0].mxu0
        %v4510 = vadd.f32 0.0, %v4509
        %v4511 = vpop.f32.mrb[0].mxu0
        %4512 = vmatprep.mubr.bf16.mxu0 0
        %4513 = vmatmul.mubr.bf16.gmra.mrb[0].mxu0 %v4447
        %v4514 = vpop.f32.mrb[0].mxu0
        %v4515 = vadd.f32 0.0, %v4514
        %v4516 = vpop.f32.mrb[0].mxu0
        %v4517 = vpop.f32.mrb[0].mxu0
        %v4518 = vadd.f32 0.0, %v4517
        %v4519 = vpop.f32.mrb[0].mxu0
        %4520 = vmatprep.mubr.bf16.mxu0 0
        %4521 = vmatmul.mubr.bf16.gmra.mrb[0].mxu0 %v4450
        %v4522 = vpop.f32.mrb[0].mxu0
        %v4523 = vadd.f32 0.0, %v4522
        %v4524 = vpop.f32.mrb[0].mxu0
        %v4525 = vpop.f32.mrb[0].mxu0
        %v4526 = vadd.f32 0.0, %v4525
        %v4527 = vpop.f32.mrb[0].mxu0
        %4528 = vdwg.mxu0
        %v4530 = vsel %vm4350, %v1590, 0
        %v4533 = vsel %vm4350, %v1591, 0
        %v4536 = vsel %vm4350, %v1592, 0
        %v4539 = vsel %vm4350, %v1593, 0
        %v4542 = vsel %vm4350, %v2942, 0
        %v4545 = vsel %vm4350, %v2943, 0
        %v4548 = vsel %vm4350, %v2944, 0
        %v4551 = vsel %vm4350, %v2945, 0
        %4553 = vmatprep.subr.bf16.mxu0 0
        %4554 = vmatpush1.bf16.xpose.msra.mxu0 %v4542
        %4555 = vmatprep.subr.bf16.mxu0 0
        %4556 = vmatpush1.bf16.xpose.msra.mxu0 %v4545
        %4557 = vmatprep.subr.bf16.mxu0 0
        %4558 = vmatpush1.bf16.xpose.msra.mxu0 %v4548
        %4559 = vmatprep.subr.bf16.mxu0 0
        %4560 = vmatpush1.bf16.xpose.msra.mxu0 %v4551
        %4561 = vmatprep.subr.bf16.mxu0 0
        %4562 = vmatpush1.bf16.xpose.msra.mxu0 0
        %4563 = vmatprep.subr.bf16.mxu0 0
        %4564 = vmatpush1.bf16.xpose.msra.mxu0 0
        %4565 = vmatprep.subr.bf16.mxu0 0
        %4566 = vmatpush1.bf16.xpose.msra.mxu0 0
        %4567 = vmatprep.subr.bf16.mxu0 0
        %4568 = vmatpush1.bf16.xpose.msra.mxu0 0
        %4569 = vmatprep.subr.bf16.mxu0 0
        %4570 = vmatpush1.bf16.xpose.msra.mxu0 0
        %4571 = vmatprep.subr.bf16.mxu0 0
        %4572 = vmatpush1.bf16.xpose.msra.mxu0 0
        %4573 = vmatprep.subr.bf16.mxu0 0
        %4574 = vmatpush1.bf16.xpose.msra.mxu0 0
        %4575 = vmatprep.subr.bf16.mxu0 0
        %4576 = vmatpush1.bf16.xpose.msra.mxu0 0
        %4577 = vmatprep.subr.bf16.mxu0 0
        %4578 = vmatpush1.bf16.xpose.msra.mxu0 0
        %4579 = vmatprep.subr.bf16.mxu0 0
        %4580 = vmatpush1.bf16.xpose.msra.mxu0 0
        %4581 = vmatprep.subr.bf16.mxu0 0
        %4582 = vmatpush1.bf16.xpose.msra.mxu0 0
        %4583 = vmatprep.subr.bf16.mxu0 0
        %4584 = vmatpush1.bf16.xpose.msra.mxu0 0
        %4585 = vmatprep.mubr.bf16.mxu0 0
        %4586 = vmatmul.mubr.bf16.gmra.mrb[0].mxu0 %v4530
        %v4587 = vpop.f32.mrb[0].mxu0
        %v4588 = vadd.f32 0.0, %v4587
        %v4589 = vpop.f32.mrb[0].mxu0
        %v4590 = vpop.f32.mrb[0].mxu0
        %v4591 = vadd.f32 0.0, %v4590
        %v4592 = vpop.f32.mrb[0].mxu0
        %4593 = vmatprep.mubr.bf16.mxu0 0
        %4594 = vmatmul.mubr.bf16.gmra.mrb[0].mxu0 %v4533
        %v4595 = vpop.f32.mrb[0].mxu0
        %v4596 = vadd.f32 0.0, %v4595
        %v4597 = vpop.f32.mrb[0].mxu0
        %v4598 = vpop.f32.mrb[0].mxu0
        %v4599 = vadd.f32 0.0, %v4598
        %v4600 = vpop.f32.mrb[0].mxu0
        %4601 = vmatprep.mubr.bf16.mxu0 0
        %4602 = vmatmul.mubr.bf16.gmra.mrb[0].mxu0 %v4536
        %v4603 = vpop.f32.mrb[0].mxu0
        %v4604 = vadd.f32 0.0, %v4603
        %v4605 = vpop.f32.mrb[0].mxu0
        %v4606 = vpop.f32.mrb[0].mxu0
        %v4607 = vadd.f32 0.0, %v4606
        %v4608 = vpop.f32.mrb[0].mxu0
        %4609 = vmatprep.mubr.bf16.mxu0 0
        %4610 = vmatmul.mubr.bf16.gmra.mrb[0].mxu0 %v4539
        %v4611 = vpop.f32.mrb[0].mxu0
        %v4612 = vadd.f32 0.0, %v4611
        %v4613 = vpop.f32.mrb[0].mxu0
        %v4614 = vpop.f32.mrb[0].mxu0
        %v4615 = vadd.f32 0.0, %v4614
        %v4616 = vpop.f32.mrb[0].mxu0
        %4617 = vdwg.mxu0
        %v4619 = vsel %vm4350, %v1594, 0
        %v4622 = vsel %vm4350, %v1595, 0
        %v4625 = vsel %vm4350, %v1596, 0
        %v4628 = vsel %vm4350, %v1597, 0
        %v4631 = vsel %vm4350, %v2946, 0
        %v4634 = vsel %vm4350, %v2947, 0
        %v4637 = vsel %vm4350, %v2948, 0
        %v4640 = vsel %vm4350, %v2949, 0
        %4642 = vmatprep.subr.bf16.mxu0 0
        %4643 = vmatpush1.bf16.xpose.msra.mxu0 %v4631
        %4644 = vmatprep.subr.bf16.mxu0 0
        %4645 = vmatpush1.bf16.xpose.msra.mxu0 %v4634
        %4646 = vmatprep.subr.bf16.mxu0 0
        %4647 = vmatpush1.bf16.xpose.msra.mxu0 %v4637
        %4648 = vmatprep.subr.bf16.mxu0 0
        %4649 = vmatpush1.bf16.xpose.msra.mxu0 %v4640
        %4650 = vmatprep.subr.bf16.mxu0 0
        %4651 = vmatpush1.bf16.xpose.msra.mxu0 0
        %4652 = vmatprep.subr.bf16.mxu0 0
        %4653 = vmatpush1.bf16.xpose.msra.mxu0 0
        %4654 = vmatprep.subr.bf16.mxu0 0
        %4655 = vmatpush1.bf16.xpose.msra.mxu0 0
        %4656 = vmatprep.subr.bf16.mxu0 0
        %4657 = vmatpush1.bf16.xpose.msra.mxu0 0
        %4658 = vmatprep.subr.bf16.mxu0 0
        %4659 = vmatpush1.bf16.xpose.msra.mxu0 0
        %4660 = vmatprep.subr.bf16.mxu0 0
        %4661 = vmatpush1.bf16.xpose.msra.mxu0 0
        %4662 = vmatprep.subr.bf16.mxu0 0
        %4663 = vmatpush1.bf16.xpose.msra.mxu0 0
        %4664 = vmatprep.subr.bf16.mxu0 0
        %4665 = vmatpush1.bf16.xpose.msra.mxu0 0
        %4666 = vmatprep.subr.bf16.mxu0 0
        %4667 = vmatpush1.bf16.xpose.msra.mxu0 0
        %4668 = vmatprep.subr.bf16.mxu0 0
        %4669 = vmatpush1.bf16.xpose.msra.mxu0 0
        %4670 = vmatprep.subr.bf16.mxu0 0
        %4671 = vmatpush1.bf16.xpose.msra.mxu0 0
        %4672 = vmatprep.subr.bf16.mxu0 0
        %4673 = vmatpush1.bf16.xpose.msra.mxu0 0
        %4674 = vmatprep.mubr.bf16.mxu0 0
        %4675 = vmatmul.mubr.bf16.gmra.mrb[0].mxu0 %v4619
        %v4676 = vpop.f32.mrb[0].mxu0
        %v4677 = vadd.f32 0.0, %v4676
        %v4678 = vpop.f32.mrb[0].mxu0
        %v4679 = vpop.f32.mrb[0].mxu0
        %v4680 = vadd.f32 0.0, %v4679
        %v4681 = vpop.f32.mrb[0].mxu0
        %4682 = vmatprep.mubr.bf16.mxu0 0
        %4683 = vmatmul.mubr.bf16.gmra.mrb[0].mxu0 %v4622
        %v4684 = vpop.f32.mrb[0].mxu0
        %v4685 = vadd.f32 0.0, %v4684
        %v4686 = vpop.f32.mrb[0].mxu0
        %v4687 = vpop.f32.mrb[0].mxu0
        %v4688 = vadd.f32 0.0, %v4687
        %v4689 = vpop.f32.mrb[0].mxu0
        %4690 = vmatprep.mubr.bf16.mxu0 0
        %4691 = vmatmul.mubr.bf16.gmra.mrb[0].mxu0 %v4625
        %v4692 = vpop.f32.mrb[0].mxu0
        %v4693 = vadd.f32 0.0, %v4692
        %v4694 = vpop.f32.mrb[0].mxu0
        %v4695 = vpop.f32.mrb[0].mxu0
        %v4696 = vadd.f32 0.0, %v4695
        %v4697 = vpop.f32.mrb[0].mxu0
        %4698 = vmatprep.mubr.bf16.mxu0 0
        %4699 = vmatmul.mubr.bf16.gmra.mrb[0].mxu0 %v4628
        %v4700 = vpop.f32.mrb[0].mxu0
        %v4701 = vadd.f32 0.0, %v4700
        %v4702 = vpop.f32.mrb[0].mxu0
        %v4703 = vpop.f32.mrb[0].mxu0
        %v4704 = vadd.f32 0.0, %v4703
        %v4705 = vpop.f32.mrb[0].mxu0
        %4706 = vdwg.mxu0
        %v4708 = vsel %vm4350, %v1598, 0
        %v4711 = vsel %vm4350, %v1599, 0
        %v4714 = vsel %vm4350, %v1600, 0
        %v4717 = vsel %vm4350, %v1601, 0
        %v4720 = vsel %vm4350, %v2950, 0
        %v4723 = vsel %vm4350, %v2951, 0
        %v4726 = vsel %vm4350, %v2952, 0
        %v4729 = vsel %vm4350, %v2953, 0
        %4731 = vmatprep.subr.bf16.mxu0 0
        %4732 = vmatpush1.bf16.xpose.msra.mxu0 %v4720
        %4733 = vmatprep.subr.bf16.mxu0 0
        %4734 = vmatpush1.bf16.xpose.msra.mxu0 %v4723
        %4735 = vmatprep.subr.bf16.mxu0 0
        %4736 = vmatpush1.bf16.xpose.msra.mxu0 %v4726
        %4737 = vmatprep.subr.bf16.mxu0 0
        %4738 = vmatpush1.bf16.xpose.msra.mxu0 %v4729
        %4739 = vmatprep.subr.bf16.mxu0 0
        %4740 = vmatpush1.bf16.xpose.msra.mxu0 0
        %4741 = vmatprep.subr.bf16.mxu0 0
        %4742 = vmatpush1.bf16.xpose.msra.mxu0 0
        %4743 = vmatprep.subr.bf16.mxu0 0
        %4744 = vmatpush1.bf16.xpose.msra.mxu0 0
        %4745 = vmatprep.subr.bf16.mxu0 0
        %4746 = vmatpush1.bf16.xpose.msra.mxu0 0
        %4747 = vmatprep.subr.bf16.mxu0 0
        %4748 = vmatpush1.bf16.xpose.msra.mxu0 0
        %4749 = vmatprep.subr.bf16.mxu0 0
        %4750 = vmatpush1.bf16.xpose.msra.mxu0 0
        %4751 = vmatprep.subr.bf16.mxu0 0
        %4752 = vmatpush1.bf16.xpose.msra.mxu0 0
        %4753 = vmatprep.subr.bf16.mxu0 0
        %4754 = vmatpush1.bf16.xpose.msra.mxu0 0
        %4755 = vmatprep.subr.bf16.mxu0 0
        %4756 = vmatpush1.bf16.xpose.msra.mxu0 0
        %4757 = vmatprep.subr.bf16.mxu0 0
        %4758 = vmatpush1.bf16.xpose.msra.mxu0 0
        %4759 = vmatprep.subr.bf16.mxu0 0
        %4760 = vmatpush1.bf16.xpose.msra.mxu0 0
        %4761 = vmatprep.subr.bf16.mxu0 0
        %4762 = vmatpush1.bf16.xpose.msra.mxu0 0
        %4763 = vmatprep.mubr.bf16.mxu0 0
        %4764 = vmatmul.mubr.bf16.gmra.mrb[0].mxu0 %v4708
        %v4765 = vpop.f32.mrb[0].mxu0
        %v4766 = vadd.f32 0.0, %v4765
        %v4767 = vpop.f32.mrb[0].mxu0
        %v4768 = vpop.f32.mrb[0].mxu0
        %v4769 = vadd.f32 0.0, %v4768
        %v4770 = vpop.f32.mrb[0].mxu0
        %4771 = vmatprep.mubr.bf16.mxu0 0
        %4772 = vmatmul.mubr.bf16.gmra.mrb[0].mxu0 %v4711
        %v4773 = vpop.f32.mrb[0].mxu0
        %v4774 = vadd.f32 0.0, %v4773
        %v4775 = vpop.f32.mrb[0].mxu0
        %v4776 = vpop.f32.mrb[0].mxu0
        %v4777 = vadd.f32 0.0, %v4776
        %v4778 = vpop.f32.mrb[0].mxu0
        %4779 = vmatprep.mubr.bf16.mxu0 0
        %4780 = vmatmul.mubr.bf16.gmra.mrb[0].mxu0 %v4714
        %v4781 = vpop.f32.mrb[0].mxu0
        %v4782 = vadd.f32 0.0, %v4781
        %v4783 = vpop.f32.mrb[0].mxu0
        %v4784 = vpop.f32.mrb[0].mxu0
        %v4785 = vadd.f32 0.0, %v4784
        %v4786 = vpop.f32.mrb[0].mxu0
        %4787 = vmatprep.mubr.bf16.mxu0 0
        %4788 = vmatmul.mubr.bf16.gmra.mrb[0].mxu0 %v4717
        %v4789 = vpop.f32.mrb[0].mxu0
        %v4790 = vadd.f32 0.0, %v4789
        %v4791 = vpop.f32.mrb[0].mxu0
        %v4792 = vpop.f32.mrb[0].mxu0
        %v4793 = vadd.f32 0.0, %v4792
        %v4794 = vpop.f32.mrb[0].mxu0
        %4795 = vdwg.mxu0
        %v4797 = vsel %vm4350, %v1602, 0
        %v4800 = vsel %vm4350, %v1603, 0
        %v4803 = vsel %vm4350, %v1604, 0
        %v4806 = vsel %vm4350, %v1605, 0
        %v4809 = vsel %vm4350, %v2954, 0
        %v4812 = vsel %vm4350, %v2955, 0
        %v4815 = vsel %vm4350, %v2956, 0
        %v4818 = vsel %vm4350, %v2957, 0
        %4820 = vmatprep.subr.bf16.mxu0 0
        %4821 = vmatpush1.bf16.xpose.msra.mxu0 %v4809
        %4822 = vmatprep.subr.bf16.mxu0 0
        %4823 = vmatpush1.bf16.xpose.msra.mxu0 %v4812
        %4824 = vmatprep.subr.bf16.mxu0 0
        %4825 = vmatpush1.bf16.xpose.msra.mxu0 %v4815
        %4826 = vmatprep.subr.bf16.mxu0 0
        %4827 = vmatpush1.bf16.xpose.msra.mxu0 %v4818
        %4828 = vmatprep.subr.bf16.mxu0 0
        %4829 = vmatpush1.bf16.xpose.msra.mxu0 0
        %4830 = vmatprep.subr.bf16.mxu0 0
        %4831 = vmatpush1.bf16.xpose.msra.mxu0 0
        %4832 = vmatprep.subr.bf16.mxu0 0
        %4833 = vmatpush1.bf16.xpose.msra.mxu0 0
        %4834 = vmatprep.subr.bf16.mxu0 0
        %4835 = vmatpush1.bf16.xpose.msra.mxu0 0
        %4836 = vmatprep.subr.bf16.mxu0 0
        %4837 = vmatpush1.bf16.xpose.msra.mxu0 0
        %4838 = vmatprep.subr.bf16.mxu0 0
        %4839 = vmatpush1.bf16.xpose.msra.mxu0 0
        %4840 = vmatprep.subr.bf16.mxu0 0
        %4841 = vmatpush1.bf16.xpose.msra.mxu0 0
        %4842 = vmatprep.subr.bf16.mxu0 0
        %4843 = vmatpush1.bf16.xpose.msra.mxu0 0
        %4844 = vmatprep.subr.bf16.mxu0 0
        %4845 = vmatpush1.bf16.xpose.msra.mxu0 0
        %4846 = vmatprep.subr.bf16.mxu0 0
        %4847 = vmatpush1.bf16.xpose.msra.mxu0 0
        %4848 = vmatprep.subr.bf16.mxu0 0
        %4849 = vmatpush1.bf16.xpose.msra.mxu0 0
        %4850 = vmatprep.subr.bf16.mxu0 0
        %4851 = vmatpush1.bf16.xpose.msra.mxu0 0
        %4852 = vmatprep.mubr.bf16.mxu0 0
        %4853 = vmatmul.mubr.bf16.gmra.mrb[0].mxu0 %v4797
        %v4854 = vpop.f32.mrb[0].mxu0
        %v4855 = vadd.f32 0.0, %v4854
        %v4856 = vpop.f32.mrb[0].mxu0
        %v4857 = vpop.f32.mrb[0].mxu0
        %v4858 = vadd.f32 0.0, %v4857
        %v4859 = vpop.f32.mrb[0].mxu0
        %4860 = vmatprep.mubr.bf16.mxu0 0
        %4861 = vmatmul.mubr.bf16.gmra.mrb[0].mxu0 %v4800
        %v4862 = vpop.f32.mrb[0].mxu0
        %v4863 = vadd.f32 0.0, %v4862
        %v4864 = vpop.f32.mrb[0].mxu0
        %v4865 = vpop.f32.mrb[0].mxu0
        %v4866 = vadd.f32 0.0, %v4865
        %v4867 = vpop.f32.mrb[0].mxu0
        %4868 = vmatprep.mubr.bf16.mxu0 0
        %4869 = vmatmul.mubr.bf16.gmra.mrb[0].mxu0 %v4803
        %v4870 = vpop.f32.mrb[0].mxu0
        %v4871 = vadd.f32 0.0, %v4870
        %v4872 = vpop.f32.mrb[0].mxu0
        %v4873 = vpop.f32.mrb[0].mxu0
        %v4874 = vadd.f32 0.0, %v4873
        %v4875 = vpop.f32.mrb[0].mxu0
        %4876 = vmatprep.mubr.bf16.mxu0 0
        %4877 = vmatmul.mubr.bf16.gmra.mrb[0].mxu0 %v4806
        %v4878 = vpop.f32.mrb[0].mxu0
        %v4879 = vadd.f32 0.0, %v4878
        %v4880 = vpop.f32.mrb[0].mxu0
        %v4881 = vpop.f32.mrb[0].mxu0
        %v4882 = vadd.f32 0.0, %v4881
        %v4883 = vpop.f32.mrb[0].mxu0
        %4884 = vdwg.mxu0
        %v4886 = vsel %vm4350, %v1606, 0
        %v4889 = vsel %vm4350, %v1607, 0
        %v4892 = vsel %vm4350, %v1608, 0
        %v4895 = vsel %vm4350, %v1609, 0
        %v4898 = vsel %vm4350, %v2958, 0
        %v4901 = vsel %vm4350, %v2959, 0
        %v4904 = vsel %vm4350, %v2960, 0
        %v4907 = vsel %vm4350, %v2961, 0
        %4909 = vmatprep.subr.bf16.mxu0 0
        %4910 = vmatpush1.bf16.xpose.msra.mxu0 %v4898
        %4911 = vmatprep.subr.bf16.mxu0 0
        %4912 = vmatpush1.bf16.xpose.msra.mxu0 %v4901
        %4913 = vmatprep.subr.bf16.mxu0 0
        %4914 = vmatpush1.bf16.xpose.msra.mxu0 %v4904
        %4915 = vmatprep.subr.bf16.mxu0 0
        %4916 = vmatpush1.bf16.xpose.msra.mxu0 %v4907
        %4917 = vmatprep.subr.bf16.mxu0 0
        %4918 = vmatpush1.bf16.xpose.msra.mxu0 0
        %4919 = vmatprep.subr.bf16.mxu0 0
        %4920 = vmatpush1.bf16.xpose.msra.mxu0 0
        %4921 = vmatprep.subr.bf16.mxu0 0
        %4922 = vmatpush1.bf16.xpose.msra.mxu0 0
        %4923 = vmatprep.subr.bf16.mxu0 0
        %4924 = vmatpush1.bf16.xpose.msra.mxu0 0
        %4925 = vmatprep.subr.bf16.mxu0 0
        %4926 = vmatpush1.bf16.xpose.msra.mxu0 0
        %4927 = vmatprep.subr.bf16.mxu0 0
        %4928 = vmatpush1.bf16.xpose.msra.mxu0 0
        %4929 = vmatprep.subr.bf16.mxu0 0
        %4930 = vmatpush1.bf16.xpose.msra.mxu0 0
        %4931 = vmatprep.subr.bf16.mxu0 0
        %4932 = vmatpush1.bf16.xpose.msra.mxu0 0
        %4933 = vmatprep.subr.bf16.mxu0 0
        %4934 = vmatpush1.bf16.xpose.msra.mxu0 0
        %4935 = vmatprep.subr.bf16.mxu0 0
        %4936 = vmatpush1.bf16.xpose.msra.mxu0 0
        %4937 = vmatprep.subr.bf16.mxu0 0
        %4938 = vmatpush1.bf16.xpose.msra.mxu0 0
        %4939 = vmatprep.subr.bf16.mxu0 0
        %4940 = vmatpush1.bf16.xpose.msra.mxu0 0
        %4941 = vmatprep.mubr.bf16.mxu0 0
        %4942 = vmatmul.mubr.bf16.gmra.mrb[0].mxu0 %v4886
        %v4943 = vpop.f32.mrb[0].mxu0
        %v4944 = vadd.f32 0.0, %v4943
        %v4945 = vpop.f32.mrb[0].mxu0
        %v4946 = vpop.f32.mrb[0].mxu0
        %v4947 = vadd.f32 0.0, %v4946
        %v4948 = vpop.f32.mrb[0].mxu0
        %4949 = vmatprep.mubr.bf16.mxu0 0
        %4950 = vmatmul.mubr.bf16.gmra.mrb[0].mxu0 %v4889
        %v4951 = vpop.f32.mrb[0].mxu0
        %v4952 = vadd.f32 0.0, %v4951
        %v4953 = vpop.f32.mrb[0].mxu0
        %v4954 = vpop.f32.mrb[0].mxu0
        %v4955 = vadd.f32 0.0, %v4954
        %v4956 = vpop.f32.mrb[0].mxu0
        %4957 = vmatprep.mubr.bf16.mxu0 0
        %4958 = vmatmul.mubr.bf16.gmra.mrb[0].mxu0 %v4892
        %v4959 = vpop.f32.mrb[0].mxu0
        %v4960 = vadd.f32 0.0, %v4959
        %v4961 = vpop.f32.mrb[0].mxu0
        %v4962 = vpop.f32.mrb[0].mxu0
        %v4963 = vadd.f32 0.0, %v4962
        %v4964 = vpop.f32.mrb[0].mxu0
        %4965 = vmatprep.mubr.bf16.mxu0 0
        %4966 = vmatmul.mubr.bf16.gmra.mrb[0].mxu0 %v4895
        %v4967 = vpop.f32.mrb[0].mxu0
        %v4968 = vadd.f32 0.0, %v4967
        %v4969 = vpop.f32.mrb[0].mxu0
        %v4970 = vpop.f32.mrb[0].mxu0
        %v4971 = vadd.f32 0.0, %v4970
        %v4972 = vpop.f32.mrb[0].mxu0
        %4973 = vdwg.mxu0
        %v4975 = vsel %vm4350, %v1610, 0
        %v4978 = vsel %vm4350, %v1611, 0
        %v4981 = vsel %vm4350, %v1612, 0
        %v4984 = vsel %vm4350, %v1613, 0
        %v4987 = vsel %vm4350, %v2962, 0
        %v4990 = vsel %vm4350, %v2963, 0
        %v4993 = vsel %vm4350, %v2964, 0
        %v4996 = vsel %vm4350, %v2965, 0
        %4998 = vmatprep.subr.bf16.mxu0 0
        %4999 = vmatpush1.bf16.xpose.msra.mxu0 %v4987
        %5000 = vmatprep.subr.bf16.mxu0 0
        %5001 = vmatpush1.bf16.xpose.msra.mxu0 %v4990
        %5002 = vmatprep.subr.bf16.mxu0 0
        %5003 = vmatpush1.bf16.xpose.msra.mxu0 %v4993
        %5004 = vmatprep.subr.bf16.mxu0 0
        %5005 = vmatpush1.bf16.xpose.msra.mxu0 %v4996
        %5006 = vmatprep.subr.bf16.mxu0 0
        %5007 = vmatpush1.bf16.xpose.msra.mxu0 0
        %5008 = vmatprep.subr.bf16.mxu0 0
        %5009 = vmatpush1.bf16.xpose.msra.mxu0 0
        %5010 = vmatprep.subr.bf16.mxu0 0
        %5011 = vmatpush1.bf16.xpose.msra.mxu0 0
        %5012 = vmatprep.subr.bf16.mxu0 0
        %5013 = vmatpush1.bf16.xpose.msra.mxu0 0
        %5014 = vmatprep.subr.bf16.mxu0 0
        %5015 = vmatpush1.bf16.xpose.msra.mxu0 0
        %5016 = vmatprep.subr.bf16.mxu0 0
        %5017 = vmatpush1.bf16.xpose.msra.mxu0 0
        %5018 = vmatprep.subr.bf16.mxu0 0
        %5019 = vmatpush1.bf16.xpose.msra.mxu0 0
        %5020 = vmatprep.subr.bf16.mxu0 0
        %5021 = vmatpush1.bf16.xpose.msra.mxu0 0
        %5022 = vmatprep.subr.bf16.mxu0 0
        %5023 = vmatpush1.bf16.xpose.msra.mxu0 0
        %5024 = vmatprep.subr.bf16.mxu0 0
        %5025 = vmatpush1.bf16.xpose.msra.mxu0 0
        %5026 = vmatprep.subr.bf16.mxu0 0
        %5027 = vmatpush1.bf16.xpose.msra.mxu0 0
        %5028 = vmatprep.subr.bf16.mxu0 0
        %5029 = vmatpush1.bf16.xpose.msra.mxu0 0
        %5030 = vmatprep.mubr.bf16.mxu0 0
        %5031 = vmatmul.mubr.bf16.gmra.mrb[0].mxu0 %v4975
        %v5032 = vpop.f32.mrb[0].mxu0
        %v5033 = vadd.f32 0.0, %v5032
        %v5034 = vpop.f32.mrb[0].mxu0
        %v5035 = vpop.f32.mrb[0].mxu0
        %v5036 = vadd.f32 0.0, %v5035
        %v5037 = vpop.f32.mrb[0].mxu0
        %5038 = vmatprep.mubr.bf16.mxu0 0
        %5039 = vmatmul.mubr.bf16.gmra.mrb[0].mxu0 %v4978
        %v5040 = vpop.f32.mrb[0].mxu0
        %v5041 = vadd.f32 0.0, %v5040
        %v5042 = vpop.f32.mrb[0].mxu0
        %v5043 = vpop.f32.mrb[0].mxu0
        %v5044 = vadd.f32 0.0, %v5043
        %v5045 = vpop.f32.mrb[0].mxu0
        %5046 = vmatprep.mubr.bf16.mxu0 0
        %5047 = vmatmul.mubr.bf16.gmra.mrb[0].mxu0 %v4981
        %v5048 = vpop.f32.mrb[0].mxu0
        %v5049 = vadd.f32 0.0, %v5048
        %v5050 = vpop.f32.mrb[0].mxu0
        %v5051 = vpop.f32.mrb[0].mxu0
        %v5052 = vadd.f32 0.0, %v5051
        %v5053 = vpop.f32.mrb[0].mxu0
        %5054 = vmatprep.mubr.bf16.mxu0 0
        %5055 = vmatmul.mubr.bf16.gmra.mrb[0].mxu0 %v4984
        %v5056 = vpop.f32.mrb[0].mxu0
        %v5057 = vadd.f32 0.0, %v5056
        %v5058 = vpop.f32.mrb[0].mxu0
        %v5059 = vpop.f32.mrb[0].mxu0
        %v5060 = vadd.f32 0.0, %v5059
        %v5061 = vpop.f32.mrb[0].mxu0
        %5062 = vdwg.mxu0
        %v5064 = vsel %vm4350, %v1614, 0
        %v5067 = vsel %vm4350, %v1615, 0
        %v5070 = vsel %vm4350, %v1616, 0
        %v5073 = vsel %vm4350, %v1617, 0
        %v5076 = vsel %vm4350, %v2966, 0
        %v5079 = vsel %vm4350, %v2967, 0
        %v5082 = vsel %vm4350, %v2968, 0
        %v5085 = vsel %vm4350, %v2969, 0
        %5087 = vmatprep.subr.bf16.mxu0 0
        %5088 = vmatpush1.bf16.xpose.msra.mxu0 %v5076
        %5089 = vmatprep.subr.bf16.mxu0 0
        %5090 = vmatpush1.bf16.xpose.msra.mxu0 %v5079
        %5091 = vmatprep.subr.bf16.mxu0 0
        %5092 = vmatpush1.bf16.xpose.msra.mxu0 %v5082
        %5093 = vmatprep.subr.bf16.mxu0 0
        %5094 = vmatpush1.bf16.xpose.msra.mxu0 %v5085
        %5095 = vmatprep.subr.bf16.mxu0 0
        %5096 = vmatpush1.bf16.xpose.msra.mxu0 0
        %5097 = vmatprep.subr.bf16.mxu0 0
        %5098 = vmatpush1.bf16.xpose.msra.mxu0 0
        %5099 = vmatprep.subr.bf16.mxu0 0
        %5100 = vmatpush1.bf16.xpose.msra.mxu0 0
        %5101 = vmatprep.subr.bf16.mxu0 0
        %5102 = vmatpush1.bf16.xpose.msra.mxu0 0
        %5103 = vmatprep.subr.bf16.mxu0 0
        %5104 = vmatpush1.bf16.xpose.msra.mxu0 0
        %5105 = vmatprep.subr.bf16.mxu0 0
        %5106 = vmatpush1.bf16.xpose.msra.mxu0 0
        %5107 = vmatprep.subr.bf16.mxu0 0
        %5108 = vmatpush1.bf16.xpose.msra.mxu0 0
        %5109 = vmatprep.subr.bf16.mxu0 0
        %5110 = vmatpush1.bf16.xpose.msra.mxu0 0
        %5111 = vmatprep.subr.bf16.mxu0 0
        %5112 = vmatpush1.bf16.xpose.msra.mxu0 0
        %5113 = vmatprep.subr.bf16.mxu0 0
        %5114 = vmatpush1.bf16.xpose.msra.mxu0 0
        %5115 = vmatprep.subr.bf16.mxu0 0
        %5116 = vmatpush1.bf16.xpose.msra.mxu0 0
        %5117 = vmatprep.subr.bf16.mxu0 0
        %5118 = vmatpush1.bf16.xpose.msra.mxu0 0
        %5119 = vmatprep.mubr.bf16.mxu0 0
        %5120 = vmatmul.mubr.bf16.gmra.mrb[0].mxu0 %v5064
        %v5121 = vpop.f32.mrb[0].mxu0
        %v5122 = vadd.f32 0.0, %v5121
        %v5123 = vpop.f32.mrb[0].mxu0
        %v5124 = vpop.f32.mrb[0].mxu0
        %v5125 = vadd.f32 0.0, %v5124
        %v5126 = vpop.f32.mrb[0].mxu0
        %5127 = vmatprep.mubr.bf16.mxu0 0
        %5128 = vmatmul.mubr.bf16.gmra.mrb[0].mxu0 %v5067
        %v5129 = vpop.f32.mrb[0].mxu0
        %v5130 = vadd.f32 0.0, %v5129
        %v5131 = vpop.f32.mrb[0].mxu0
        %v5132 = vpop.f32.mrb[0].mxu0
        %v5133 = vadd.f32 0.0, %v5132
        %v5134 = vpop.f32.mrb[0].mxu0
        %5135 = vmatprep.mubr.bf16.mxu0 0
        %5136 = vmatmul.mubr.bf16.gmra.mrb[0].mxu0 %v5070
        %v5137 = vpop.f32.mrb[0].mxu0
        %v5138 = vadd.f32 0.0, %v5137
        %v5139 = vpop.f32.mrb[0].mxu0
        %v5140 = vpop.f32.mrb[0].mxu0
        %v5141 = vadd.f32 0.0, %v5140
        %v5142 = vpop.f32.mrb[0].mxu0
        %5143 = vmatprep.mubr.bf16.mxu0 0
        %5144 = vmatmul.mubr.bf16.gmra.mrb[0].mxu0 %v5073
        %v5145 = vpop.f32.mrb[0].mxu0
        %v5146 = vadd.f32 0.0, %v5145
        %v5147 = vpop.f32.mrb[0].mxu0
        %v5148 = vpop.f32.mrb[0].mxu0
        %v5149 = vadd.f32 0.0, %v5148
        %v5150 = vpop.f32.mrb[0].mxu0
        %5151 = vdwg.mxu0
        %v5153 = vsel %vm4350, %v1618, 0
        %v5156 = vsel %vm4350, %v1619, 0
        %v5159 = vsel %vm4350, %v1620, 0
        %v5162 = vsel %vm4350, %v1621, 0
        %v5165 = vsel %vm4350, %v2970, 0
        %v5168 = vsel %vm4350, %v2971, 0
        %v5171 = vsel %vm4350, %v2972, 0
        %v5174 = vsel %vm4350, %v2973, 0
        %5176 = vmatprep.subr.bf16.mxu0 0
        %5177 = vmatpush1.bf16.xpose.msra.mxu0 %v5165
        %5178 = vmatprep.subr.bf16.mxu0 0
        %5179 = vmatpush1.bf16.xpose.msra.mxu0 %v5168
        %5180 = vmatprep.subr.bf16.mxu0 0
        %5181 = vmatpush1.bf16.xpose.msra.mxu0 %v5171
        %5182 = vmatprep.subr.bf16.mxu0 0
        %5183 = vmatpush1.bf16.xpose.msra.mxu0 %v5174
        %5184 = vmatprep.subr.bf16.mxu0 0
        %5185 = vmatpush1.bf16.xpose.msra.mxu0 0
        %5186 = vmatprep.subr.bf16.mxu0 0
        %5187 = vmatpush1.bf16.xpose.msra.mxu0 0
        %5188 = vmatprep.subr.bf16.mxu0 0
        %5189 = vmatpush1.bf16.xpose.msra.mxu0 0
        %5190 = vmatprep.subr.bf16.mxu0 0
        %5191 = vmatpush1.bf16.xpose.msra.mxu0 0
        %5192 = vmatprep.subr.bf16.mxu0 0
        %5193 = vmatpush1.bf16.xpose.msra.mxu0 0
        %5194 = vmatprep.subr.bf16.mxu0 0
        %5195 = vmatpush1.bf16.xpose.msra.mxu0 0
        %5196 = vmatprep.subr.bf16.mxu0 0
        %5197 = vmatpush1.bf16.xpose.msra.mxu0 0
        %5198 = vmatprep.subr.bf16.mxu0 0
        %5199 = vmatpush1.bf16.xpose.msra.mxu0 0
        %5200 = vmatprep.subr.bf16.mxu0 0
        %5201 = vmatpush1.bf16.xpose.msra.mxu0 0
        %5202 = vmatprep.subr.bf16.mxu0 0
        %5203 = vmatpush1.bf16.xpose.msra.mxu0 0
        %5204 = vmatprep.subr.bf16.mxu0 0
        %5205 = vmatpush1.bf16.xpose.msra.mxu0 0
        %5206 = vmatprep.subr.bf16.mxu0 0
        %5207 = vmatpush1.bf16.xpose.msra.mxu0 0
        %5208 = vmatprep.mubr.bf16.mxu0 0
        %5209 = vmatmul.mubr.bf16.gmra.mrb[0].mxu0 %v5153
        %v5210 = vpop.f32.mrb[0].mxu0
        %v5211 = vadd.f32 0.0, %v5210
        %v5212 = vpop.f32.mrb[0].mxu0
        %v5213 = vpop.f32.mrb[0].mxu0
        %v5214 = vadd.f32 0.0, %v5213
        %v5215 = vpop.f32.mrb[0].mxu0
        %5216 = vmatprep.mubr.bf16.mxu0 0
        %5217 = vmatmul.mubr.bf16.gmra.mrb[0].mxu0 %v5156
        %v5218 = vpop.f32.mrb[0].mxu0
        %v5219 = vadd.f32 0.0, %v5218
        %v5220 = vpop.f32.mrb[0].mxu0
        %v5221 = vpop.f32.mrb[0].mxu0
        %v5222 = vadd.f32 0.0, %v5221
        %v5223 = vpop.f32.mrb[0].mxu0
        %5224 = vmatprep.mubr.bf16.mxu0 0
        %5225 = vmatmul.mubr.bf16.gmra.mrb[0].mxu0 %v5159
        %v5226 = vpop.f32.mrb[0].mxu0
        %v5227 = vadd.f32 0.0, %v5226
        %v5228 = vpop.f32.mrb[0].mxu0
        %v5229 = vpop.f32.mrb[0].mxu0
        %v5230 = vadd.f32 0.0, %v5229
        %v5231 = vpop.f32.mrb[0].mxu0
        %5232 = vmatprep.mubr.bf16.mxu0 0
        %5233 = vmatmul.mubr.bf16.gmra.mrb[0].mxu0 %v5162
        %v5234 = vpop.f32.mrb[0].mxu0
        %v5235 = vadd.f32 0.0, %v5234
        %v5236 = vpop.f32.mrb[0].mxu0
        %v5237 = vpop.f32.mrb[0].mxu0
        %v5238 = vadd.f32 0.0, %v5237
        %v5239 = vpop.f32.mrb[0].mxu0
        %5240 = vdwg.mxu0
        %v5242 = vsel %vm4350, %v1622, 0
        %v5245 = vsel %vm4350, %v1623, 0
        %v5248 = vsel %vm4350, %v1624, 0
        %v5251 = vsel %vm4350, %v1625, 0
        %v5254 = vsel %vm4350, %v2974, 0
        %v5257 = vsel %vm4350, %v2975, 0
        %v5260 = vsel %vm4350, %v2976, 0
        %v5263 = vsel %vm4350, %v2977, 0
        %5265 = vmatprep.subr.bf16.mxu0 0
        %5266 = vmatpush1.bf16.xpose.msra.mxu0 %v5254
        %5267 = vmatprep.subr.bf16.mxu0 0
        %5268 = vmatpush1.bf16.xpose.msra.mxu0 %v5257
        %5269 = vmatprep.subr.bf16.mxu0 0
        %5270 = vmatpush1.bf16.xpose.msra.mxu0 %v5260
        %5271 = vmatprep.subr.bf16.mxu0 0
        %5272 = vmatpush1.bf16.xpose.msra.mxu0 %v5263
        %5273 = vmatprep.subr.bf16.mxu0 0
        %5274 = vmatpush1.bf16.xpose.msra.mxu0 0
        %5275 = vmatprep.subr.bf16.mxu0 0
        %5276 = vmatpush1.bf16.xpose.msra.mxu0 0
        %5277 = vmatprep.subr.bf16.mxu0 0
        %5278 = vmatpush1.bf16.xpose.msra.mxu0 0
        %5279 = vmatprep.subr.bf16.mxu0 0
        %5280 = vmatpush1.bf16.xpose.msra.mxu0 0
        %5281 = vmatprep.subr.bf16.mxu0 0
        %5282 = vmatpush1.bf16.xpose.msra.mxu0 0
        %5283 = vmatprep.subr.bf16.mxu0 0
        %5284 = vmatpush1.bf16.xpose.msra.mxu0 0
        %5285 = vmatprep.subr.bf16.mxu0 0
        %5286 = vmatpush1.bf16.xpose.msra.mxu0 0
        %5287 = vmatprep.subr.bf16.mxu0 0
        %5288 = vmatpush1.bf16.xpose.msra.mxu0 0
        %5289 = vmatprep.subr.bf16.mxu0 0
        %5290 = vmatpush1.bf16.xpose.msra.mxu0 0
        %5291 = vmatprep.subr.bf16.mxu0 0
        %5292 = vmatpush1.bf16.xpose.msra.mxu0 0
        %5293 = vmatprep.subr.bf16.mxu0 0
        %5294 = vmatpush1.bf16.xpose.msra.mxu0 0
        %5295 = vmatprep.subr.bf16.mxu0 0
        %5296 = vmatpush1.bf16.xpose.msra.mxu0 0
        %5297 = vmatprep.mubr.bf16.mxu0 0
        %5298 = vmatmul.mubr.bf16.gmra.mrb[0].mxu0 %v5242
        %v5299 = vpop.f32.mrb[0].mxu0
        %v5300 = vadd.f32 0.0, %v5299
        %v5301 = vpop.f32.mrb[0].mxu0
        %v5302 = vpop.f32.mrb[0].mxu0
        %v5303 = vadd.f32 0.0, %v5302
        %v5304 = vpop.f32.mrb[0].mxu0
        %5305 = vmatprep.mubr.bf16.mxu0 0
        %5306 = vmatmul.mubr.bf16.gmra.mrb[0].mxu0 %v5245
        %v5307 = vpop.f32.mrb[0].mxu0
        %v5308 = vadd.f32 0.0, %v5307
        %v5309 = vpop.f32.mrb[0].mxu0
        %v5310 = vpop.f32.mrb[0].mxu0
        %v5311 = vadd.f32 0.0, %v5310
        %v5312 = vpop.f32.mrb[0].mxu0
        %5313 = vmatprep.mubr.bf16.mxu0 0
        %5314 = vmatmul.mubr.bf16.gmra.mrb[0].mxu0 %v5248
        %v5315 = vpop.f32.mrb[0].mxu0
        %v5316 = vadd.f32 0.0, %v5315
        %v5317 = vpop.f32.mrb[0].mxu0
        %v5318 = vpop.f32.mrb[0].mxu0
        %v5319 = vadd.f32 0.0, %v5318
        %v5320 = vpop.f32.mrb[0].mxu0
        %5321 = vmatprep.mubr.bf16.mxu0 0
        %5322 = vmatmul.mubr.bf16.gmra.mrb[0].mxu0 %v5251
        %v5323 = vpop.f32.mrb[0].mxu0
        %v5324 = vadd.f32 0.0, %v5323
        %v5325 = vpop.f32.mrb[0].mxu0
        %v5326 = vpop.f32.mrb[0].mxu0
        %v5327 = vadd.f32 0.0, %v5326
        %v5328 = vpop.f32.mrb[0].mxu0
        %5329 = vdwg.mxu0
        %v5331 = vsel %vm4350, %v1626, 0
        %v5334 = vsel %vm4350, %v1627, 0
        %v5337 = vsel %vm4350, %v1628, 0
        %v5340 = vsel %vm4350, %v1629, 0
        %v5343 = vsel %vm4350, %v2978, 0
        %v5346 = vsel %vm4350, %v2979, 0
        %v5349 = vsel %vm4350, %v2980, 0
        %v5352 = vsel %vm4350, %v2981, 0
        %5354 = vmatprep.subr.bf16.mxu0 0
        %5355 = vmatpush1.bf16.xpose.msra.mxu0 %v5343
        %5356 = vmatprep.subr.bf16.mxu0 0
        %5357 = vmatpush1.bf16.xpose.msra.mxu0 %v5346
        %5358 = vmatprep.subr.bf16.mxu0 0
        %5359 = vmatpush1.bf16.xpose.msra.mxu0 %v5349
        %5360 = vmatprep.subr.bf16.mxu0 0
        %5361 = vmatpush1.bf16.xpose.msra.mxu0 %v5352
        %5362 = vmatprep.subr.bf16.mxu0 0
        %5363 = vmatpush1.bf16.xpose.msra.mxu0 0
        %5364 = vmatprep.subr.bf16.mxu0 0
        %5365 = vmatpush1.bf16.xpose.msra.mxu0 0
        %5366 = vmatprep.subr.bf16.mxu0 0
        %5367 = vmatpush1.bf16.xpose.msra.mxu0 0
        %5368 = vmatprep.subr.bf16.mxu0 0
        %5369 = vmatpush1.bf16.xpose.msra.mxu0 0
        %5370 = vmatprep.subr.bf16.mxu0 0
        %5371 = vmatpush1.bf16.xpose.msra.mxu0 0
        %5372 = vmatprep.subr.bf16.mxu0 0
        %5373 = vmatpush1.bf16.xpose.msra.mxu0 0
        %5374 = vmatprep.subr.bf16.mxu0 0
        %5375 = vmatpush1.bf16.xpose.msra.mxu0 0
        %5376 = vmatprep.subr.bf16.mxu0 0
        %5377 = vmatpush1.bf16.xpose.msra.mxu0 0
        %5378 = vmatprep.subr.bf16.mxu0 0
        %5379 = vmatpush1.bf16.xpose.msra.mxu0 0
        %5380 = vmatprep.subr.bf16.mxu0 0
        %5381 = vmatpush1.bf16.xpose.msra.mxu0 0
        %5382 = vmatprep.subr.bf16.mxu0 0
        %5383 = vmatpush1.bf16.xpose.msra.mxu0 0
        %5384 = vmatprep.subr.bf16.mxu0 0
        %5385 = vmatpush1.bf16.xpose.msra.mxu0 0
        %5386 = vmatprep.mubr.bf16.mxu0 0
        %5387 = vmatmul.mubr.bf16.gmra.mrb[0].mxu0 %v5331
        %v5388 = vpop.f32.mrb[0].mxu0
        %v5389 = vadd.f32 0.0, %v5388
        %v5390 = vpop.f32.mrb[0].mxu0
        %v5391 = vpop.f32.mrb[0].mxu0
        %v5392 = vadd.f32 0.0, %v5391
        %v5393 = vpop.f32.mrb[0].mxu0
        %5394 = vmatprep.mubr.bf16.mxu0 0
        %5395 = vmatmul.mubr.bf16.gmra.mrb[0].mxu0 %v5334
        %v5396 = vpop.f32.mrb[0].mxu0
        %v5397 = vadd.f32 0.0, %v5396
        %v5398 = vpop.f32.mrb[0].mxu0
        %v5399 = vpop.f32.mrb[0].mxu0
        %v5400 = vadd.f32 0.0, %v5399
        %v5401 = vpop.f32.mrb[0].mxu0
        %5402 = vmatprep.mubr.bf16.mxu0 0
        %5403 = vmatmul.mubr.bf16.gmra.mrb[0].mxu0 %v5337
        %v5404 = vpop.f32.mrb[0].mxu0
        %v5405 = vadd.f32 0.0, %v5404
        %v5406 = vpop.f32.mrb[0].mxu0
        %v5407 = vpop.f32.mrb[0].mxu0
        %v5408 = vadd.f32 0.0, %v5407
        %v5409 = vpop.f32.mrb[0].mxu0
        %5410 = vmatprep.mubr.bf16.mxu0 0
        %5411 = vmatmul.mubr.bf16.gmra.mrb[0].mxu0 %v5340
        %v5412 = vpop.f32.mrb[0].mxu0
        %v5413 = vadd.f32 0.0, %v5412
        %v5414 = vpop.f32.mrb[0].mxu0
        %v5415 = vpop.f32.mrb[0].mxu0
        %v5416 = vadd.f32 0.0, %v5415
        %v5417 = vpop.f32.mrb[0].mxu0
        %5418 = vdwg.mxu0
        %v5420 = vsel %vm4350, %v1630, 0
        %v5423 = vsel %vm4350, %v1631, 0
        %v5426 = vsel %vm4350, %v1632, 0
        %v5429 = vsel %vm4350, %v1633, 0
        %v5432 = vsel %vm4350, %v2982, 0
        %v5435 = vsel %vm4350, %v2983, 0
        %v5438 = vsel %vm4350, %v2984, 0
        %v5441 = vsel %vm4350, %v2985, 0
        %5443 = vmatprep.subr.bf16.mxu0 0
        %5444 = vmatpush1.bf16.xpose.msra.mxu0 %v5432
        %5445 = vmatprep.subr.bf16.mxu0 0
        %5446 = vmatpush1.bf16.xpose.msra.mxu0 %v5435
        %5447 = vmatprep.subr.bf16.mxu0 0
        %5448 = vmatpush1.bf16.xpose.msra.mxu0 %v5438
        %5449 = vmatprep.subr.bf16.mxu0 0
        %5450 = vmatpush1.bf16.xpose.msra.mxu0 %v5441
        %5451 = vmatprep.subr.bf16.mxu0 0
        %5452 = vmatpush1.bf16.xpose.msra.mxu0 0
        %5453 = vmatprep.subr.bf16.mxu0 0
        %5454 = vmatpush1.bf16.xpose.msra.mxu0 0
        %5455 = vmatprep.subr.bf16.mxu0 0
        %5456 = vmatpush1.bf16.xpose.msra.mxu0 0
        %5457 = vmatprep.subr.bf16.mxu0 0
        %5458 = vmatpush1.bf16.xpose.msra.mxu0 0
        %5459 = vmatprep.subr.bf16.mxu0 0
        %5460 = vmatpush1.bf16.xpose.msra.mxu0 0
        %5461 = vmatprep.subr.bf16.mxu0 0
        %5462 = vmatpush1.bf16.xpose.msra.mxu0 0
        %5463 = vmatprep.subr.bf16.mxu0 0
        %5464 = vmatpush1.bf16.xpose.msra.mxu0 0
        %5465 = vmatprep.subr.bf16.mxu0 0
        %5466 = vmatpush1.bf16.xpose.msra.mxu0 0
        %5467 = vmatprep.subr.bf16.mxu0 0
        %5468 = vmatpush1.bf16.xpose.msra.mxu0 0
        %5469 = vmatprep.subr.bf16.mxu0 0
        %5470 = vmatpush1.bf16.xpose.msra.mxu0 0
        %5471 = vmatprep.subr.bf16.mxu0 0
        %5472 = vmatpush1.bf16.xpose.msra.mxu0 0
        %5473 = vmatprep.subr.bf16.mxu0 0
        %5474 = vmatpush1.bf16.xpose.msra.mxu0 0
        %5475 = vmatprep.mubr.bf16.mxu0 0
        %5476 = vmatmul.mubr.bf16.gmra.mrb[0].mxu0 %v5420
        %v5477 = vpop.f32.mrb[0].mxu0
        %v5478 = vadd.f32 0.0, %v5477
        %v5479 = vpop.f32.mrb[0].mxu0
        %v5480 = vpop.f32.mrb[0].mxu0
        %v5481 = vadd.f32 0.0, %v5480
        %v5482 = vpop.f32.mrb[0].mxu0
        %5483 = vmatprep.mubr.bf16.mxu0 0
        %5484 = vmatmul.mubr.bf16.gmra.mrb[0].mxu0 %v5423
        %v5485 = vpop.f32.mrb[0].mxu0
        %v5486 = vadd.f32 0.0, %v5485
        %v5487 = vpop.f32.mrb[0].mxu0
        %v5488 = vpop.f32.mrb[0].mxu0
        %v5489 = vadd.f32 0.0, %v5488
        %v5490 = vpop.f32.mrb[0].mxu0
        %5491 = vmatprep.mubr.bf16.mxu0 0
        %5492 = vmatmul.mubr.bf16.gmra.mrb[0].mxu0 %v5426
        %v5493 = vpop.f32.mrb[0].mxu0
        %v5494 = vadd.f32 0.0, %v5493
        %v5495 = vpop.f32.mrb[0].mxu0
        %v5496 = vpop.f32.mrb[0].mxu0
        %v5497 = vadd.f32 0.0, %v5496
        %v5498 = vpop.f32.mrb[0].mxu0
        %5499 = vmatprep.mubr.bf16.mxu0 0
        %5500 = vmatmul.mubr.bf16.gmra.mrb[0].mxu0 %v5429
        %v5501 = vpop.f32.mrb[0].mxu0
        %v5502 = vadd.f32 0.0, %v5501
        %v5503 = vpop.f32.mrb[0].mxu0
        %v5504 = vpop.f32.mrb[0].mxu0
        %v5505 = vadd.f32 0.0, %v5504
        %v5506 = vpop.f32.mrb[0].mxu0
        %5507 = vdwg.mxu0
        %v5509 = vsel %vm4350, %v1634, 0
        %v5512 = vsel %vm4350, %v1635, 0
        %v5515 = vsel %vm4350, %v1636, 0
        %v5518 = vsel %vm4350, %v1637, 0
        %v5521 = vsel %vm4350, %v2986, 0
        %v5524 = vsel %vm4350, %v2987, 0
        %v5527 = vsel %vm4350, %v2988, 0
        %v5530 = vsel %vm4350, %v2989, 0
        %5532 = vmatprep.subr.bf16.mxu0 0
        %5533 = vmatpush1.bf16.xpose.msra.mxu0 %v5521
        %5534 = vmatprep.subr.bf16.mxu0 0
        %5535 = vmatpush1.bf16.xpose.msra.mxu0 %v5524
        %5536 = vmatprep.subr.bf16.mxu0 0
        %5537 = vmatpush1.bf16.xpose.msra.mxu0 %v5527
        %5538 = vmatprep.subr.bf16.mxu0 0
        %5539 = vmatpush1.bf16.xpose.msra.mxu0 %v5530
        %5540 = vmatprep.subr.bf16.mxu0 0
        %5541 = vmatpush1.bf16.xpose.msra.mxu0 0
        %5542 = vmatprep.subr.bf16.mxu0 0
        %5543 = vmatpush1.bf16.xpose.msra.mxu0 0
        %5544 = vmatprep.subr.bf16.mxu0 0
        %5545 = vmatpush1.bf16.xpose.msra.mxu0 0
        %5546 = vmatprep.subr.bf16.mxu0 0
        %5547 = vmatpush1.bf16.xpose.msra.mxu0 0
        %5548 = vmatprep.subr.bf16.mxu0 0
        %5549 = vmatpush1.bf16.xpose.msra.mxu0 0
        %5550 = vmatprep.subr.bf16.mxu0 0
        %5551 = vmatpush1.bf16.xpose.msra.mxu0 0
        %5552 = vmatprep.subr.bf16.mxu0 0
        %5553 = vmatpush1.bf16.xpose.msra.mxu0 0
        %5554 = vmatprep.subr.bf16.mxu0 0
        %5555 = vmatpush1.bf16.xpose.msra.mxu0 0
        %5556 = vmatprep.subr.bf16.mxu0 0
        %5557 = vmatpush1.bf16.xpose.msra.mxu0 0
        %5558 = vmatprep.subr.bf16.mxu0 0
        %5559 = vmatpush1.bf16.xpose.msra.mxu0 0
        %5560 = vmatprep.subr.bf16.mxu0 0
        %5561 = vmatpush1.bf16.xpose.msra.mxu0 0
        %5562 = vmatprep.subr.bf16.mxu0 0
        %5563 = vmatpush1.bf16.xpose.msra.mxu0 0
        %5564 = vmatprep.mubr.bf16.mxu0 0
        %5565 = vmatmul.mubr.bf16.gmra.mrb[0].mxu0 %v5509
        %v5566 = vpop.f32.mrb[0].mxu0
        %v5567 = vadd.f32 0.0, %v5566
        %v5568 = vpop.f32.mrb[0].mxu0
        %v5569 = vpop.f32.mrb[0].mxu0
        %v5570 = vadd.f32 0.0, %v5569
        %v5571 = vpop.f32.mrb[0].mxu0
        %5572 = vmatprep.mubr.bf16.mxu0 0
        %5573 = vmatmul.mubr.bf16.gmra.mrb[0].mxu0 %v5512
        %v5574 = vpop.f32.mrb[0].mxu0
        %v5575 = vadd.f32 0.0, %v5574
        %v5576 = vpop.f32.mrb[0].mxu0
        %v5577 = vpop.f32.mrb[0].mxu0
        %v5578 = vadd.f32 0.0, %v5577
        %v5579 = vpop.f32.mrb[0].mxu0
        %5580 = vmatprep.mubr.bf16.mxu0 0
        %5581 = vmatmul.mubr.bf16.gmra.mrb[0].mxu0 %v5515
        %v5582 = vpop.f32.mrb[0].mxu0
        %v5583 = vadd.f32 0.0, %v5582
        %v5584 = vpop.f32.mrb[0].mxu0
        %v5585 = vpop.f32.mrb[0].mxu0
        %v5586 = vadd.f32 0.0, %v5585
        %v5587 = vpop.f32.mrb[0].mxu0
        %5588 = vmatprep.mubr.bf16.mxu0 0
        %5589 = vmatmul.mubr.bf16.gmra.mrb[0].mxu0 %v5518
        %v5590 = vpop.f32.mrb[0].mxu0
        %v5591 = vadd.f32 0.0, %v5590
        %v5592 = vpop.f32.mrb[0].mxu0
        %v5593 = vpop.f32.mrb[0].mxu0
        %v5594 = vadd.f32 0.0, %v5593
        %v5595 = vpop.f32.mrb[0].mxu0
        %5596 = vdwg.mxu0
        %v5598 = vsel %vm4350, %v1638, 0
        %v5601 = vsel %vm4350, %v1639, 0
        %v5604 = vsel %vm4350, %v1640, 0
        %v5607 = vsel %vm4350, %v1641, 0
        %v5610 = vsel %vm4350, %v2990, 0
        %v5613 = vsel %vm4350, %v2991, 0
        %v5616 = vsel %vm4350, %v2992, 0
        %v5619 = vsel %vm4350, %v2993, 0
        %5621 = vmatprep.subr.bf16.mxu0 0
        %5622 = vmatpush1.bf16.xpose.msra.mxu0 %v5610
        %5623 = vmatprep.subr.bf16.mxu0 0
        %5624 = vmatpush1.bf16.xpose.msra.mxu0 %v5613
        %5625 = vmatprep.subr.bf16.mxu0 0
        %5626 = vmatpush1.bf16.xpose.msra.mxu0 %v5616
        %5627 = vmatprep.subr.bf16.mxu0 0
        %5628 = vmatpush1.bf16.xpose.msra.mxu0 %v5619
        %5629 = vmatprep.subr.bf16.mxu0 0
        %5630 = vmatpush1.bf16.xpose.msra.mxu0 0
        %5631 = vmatprep.subr.bf16.mxu0 0
        %5632 = vmatpush1.bf16.xpose.msra.mxu0 0
        %5633 = vmatprep.subr.bf16.mxu0 0
        %5634 = vmatpush1.bf16.xpose.msra.mxu0 0
        %5635 = vmatprep.subr.bf16.mxu0 0
        %5636 = vmatpush1.bf16.xpose.msra.mxu0 0
        %5637 = vmatprep.subr.bf16.mxu0 0
        %5638 = vmatpush1.bf16.xpose.msra.mxu0 0
        %5639 = vmatprep.subr.bf16.mxu0 0
        %5640 = vmatpush1.bf16.xpose.msra.mxu0 0
        %5641 = vmatprep.subr.bf16.mxu0 0
        %5642 = vmatpush1.bf16.xpose.msra.mxu0 0
        %5643 = vmatprep.subr.bf16.mxu0 0
        %5644 = vmatpush1.bf16.xpose.msra.mxu0 0
        %5645 = vmatprep.subr.bf16.mxu0 0
        %5646 = vmatpush1.bf16.xpose.msra.mxu0 0
        %5647 = vmatprep.subr.bf16.mxu0 0
        %5648 = vmatpush1.bf16.xpose.msra.mxu0 0
        %5649 = vmatprep.subr.bf16.mxu0 0
        %5650 = vmatpush1.bf16.xpose.msra.mxu0 0
        %5651 = vmatprep.subr.bf16.mxu0 0
        %5652 = vmatpush1.bf16.xpose.msra.mxu0 0
        %5653 = vmatprep.mubr.bf16.mxu0 0
        %5654 = vmatmul.mubr.bf16.gmra.mrb[0].mxu0 %v5598
        %v5655 = vpop.f32.mrb[0].mxu0
        %v5656 = vadd.f32 0.0, %v5655
        %v5657 = vpop.f32.mrb[0].mxu0
        %v5658 = vpop.f32.mrb[0].mxu0
        %v5659 = vadd.f32 0.0, %v5658
        %v5660 = vpop.f32.mrb[0].mxu0
        %5661 = vmatprep.mubr.bf16.mxu0 0
        %5662 = vmatmul.mubr.bf16.gmra.mrb[0].mxu0 %v5601
        %v5663 = vpop.f32.mrb[0].mxu0
        %v5664 = vadd.f32 0.0, %v5663
        %v5665 = vpop.f32.mrb[0].mxu0
        %v5666 = vpop.f32.mrb[0].mxu0
        %v5667 = vadd.f32 0.0, %v5666
        %v5668 = vpop.f32.mrb[0].mxu0
        %5669 = vmatprep.mubr.bf16.mxu0 0
        %5670 = vmatmul.mubr.bf16.gmra.mrb[0].mxu0 %v5604
        %v5671 = vpop.f32.mrb[0].mxu0
        %v5672 = vadd.f32 0.0, %v5671
        %v5673 = vpop.f32.mrb[0].mxu0
        %v5674 = vpop.f32.mrb[0].mxu0
        %v5675 = vadd.f32 0.0, %v5674
        %v5676 = vpop.f32.mrb[0].mxu0
        %5677 = vmatprep.mubr.bf16.mxu0 0
        %5678 = vmatmul.mubr.bf16.gmra.mrb[0].mxu0 %v5607
        %v5679 = vpop.f32.mrb[0].mxu0
        %v5680 = vadd.f32 0.0, %v5679
        %v5681 = vpop.f32.mrb[0].mxu0
        %v5682 = vpop.f32.mrb[0].mxu0
        %v5683 = vadd.f32 0.0, %v5682
        %v5684 = vpop.f32.mrb[0].mxu0
        %5685 = vdwg.mxu0
        %v5687 = vsel %vm4350, %v1642, 0
        %v5690 = vsel %vm4350, %v1643, 0
        %v5693 = vsel %vm4350, %v1644, 0
        %v5696 = vsel %vm4350, %v1645, 0
        %v5699 = vsel %vm4350, %v2994, 0
        %v5702 = vsel %vm4350, %v2995, 0
        %v5705 = vsel %vm4350, %v2996, 0
        %v5708 = vsel %vm4350, %v2997, 0
        %5710 = vmatprep.subr.bf16.mxu0 0
        %5711 = vmatpush1.bf16.xpose.msra.mxu0 %v5699
        %5712 = vmatprep.subr.bf16.mxu0 0
        %5713 = vmatpush1.bf16.xpose.msra.mxu0 %v5702
        %5714 = vmatprep.subr.bf16.mxu0 0
        %5715 = vmatpush1.bf16.xpose.msra.mxu0 %v5705
        %5716 = vmatprep.subr.bf16.mxu0 0
        %5717 = vmatpush1.bf16.xpose.msra.mxu0 %v5708
        %5718 = vmatprep.subr.bf16.mxu0 0
        %5719 = vmatpush1.bf16.xpose.msra.mxu0 0
        %5720 = vmatprep.subr.bf16.mxu0 0
        %5721 = vmatpush1.bf16.xpose.msra.mxu0 0
        %5722 = vmatprep.subr.bf16.mxu0 0
        %5723 = vmatpush1.bf16.xpose.msra.mxu0 0
        %5724 = vmatprep.subr.bf16.mxu0 0
        %5725 = vmatpush1.bf16.xpose.msra.mxu0 0
        %5726 = vmatprep.subr.bf16.mxu0 0
        %5727 = vmatpush1.bf16.xpose.msra.mxu0 0
        %5728 = vmatprep.subr.bf16.mxu0 0
        %5729 = vmatpush1.bf16.xpose.msra.mxu0 0
        %5730 = vmatprep.subr.bf16.mxu0 0
        %5731 = vmatpush1.bf16.xpose.msra.mxu0 0
        %5732 = vmatprep.subr.bf16.mxu0 0
        %5733 = vmatpush1.bf16.xpose.msra.mxu0 0
        %5734 = vmatprep.subr.bf16.mxu0 0
        %5735 = vmatpush1.bf16.xpose.msra.mxu0 0
        %5736 = vmatprep.subr.bf16.mxu0 0
        %5737 = vmatpush1.bf16.xpose.msra.mxu0 0
        %5738 = vmatprep.subr.bf16.mxu0 0
        %5739 = vmatpush1.bf16.xpose.msra.mxu0 0
        %5740 = vmatprep.subr.bf16.mxu0 0
        %5741 = vmatpush1.bf16.xpose.msra.mxu0 0
        %5742 = vmatprep.mubr.bf16.mxu0 0
        %5743 = vmatmul.mubr.bf16.gmra.mrb[0].mxu0 %v5687
        %v5744 = vpop.f32.mrb[0].mxu0
        %v5745 = vadd.f32 0.0, %v5744
        %v5746 = vpop.f32.mrb[0].mxu0
        %v5747 = vpop.f32.mrb[0].mxu0
        %v5748 = vadd.f32 0.0, %v5747
        %v5749 = vpop.f32.mrb[0].mxu0
        %5750 = vmatprep.mubr.bf16.mxu0 0
        %5751 = vmatmul.mubr.bf16.gmra.mrb[0].mxu0 %v5690
        %v5752 = vpop.f32.mrb[0].mxu0
        %v5753 = vadd.f32 0.0, %v5752
        %v5754 = vpop.f32.mrb[0].mxu0
        %v5755 = vpop.f32.mrb[0].mxu0
        %v5756 = vadd.f32 0.0, %v5755
        %v5757 = vpop.f32.mrb[0].mxu0
        %5758 = vmatprep.mubr.bf16.mxu0 0
        %5759 = vmatmul.mubr.bf16.gmra.mrb[0].mxu0 %v5693
        %v5760 = vpop.f32.mrb[0].mxu0
        %v5761 = vadd.f32 0.0, %v5760
        %v5762 = vpop.f32.mrb[0].mxu0
        %v5763 = vpop.f32.mrb[0].mxu0
        %v5764 = vadd.f32 0.0, %v5763
        %v5765 = vpop.f32.mrb[0].mxu0
        %5766 = vmatprep.mubr.bf16.mxu0 0
        %5767 = vmatmul.mubr.bf16.gmra.mrb[0].mxu0 %v5696
        %v5768 = vpop.f32.mrb[0].mxu0
        %v5769 = vadd.f32 0.0, %v5768
        %v5770 = vpop.f32.mrb[0].mxu0
        %v5771 = vpop.f32.mrb[0].mxu0
        %v5772 = vadd.f32 0.0, %v5771
        %v5773 = vpop.f32.mrb[0].mxu0
        %5774 = vdwg.mxu0
        %v5775 = vsel %vm4350, %v4410, -inf
        %5776 = vmax.xlane.f32.xlu0 %v5775
        %v5777 = vpop.xlane.xlu0 %5776
        %v5778 = vsel %vm4350, %v4413, -inf
        %5779 = vmax.xlane.f32.xlu0 %v5778
        %v5780 = vpop.xlane.xlu0 %5779
        %v5781 = vsel %vm4350, %v4418, -inf
        %5782 = vmax.xlane.f32.xlu0 %v5781
        %v5783 = vpop.xlane.xlu0 %5782
        %v5784 = vsel %vm4350, %v4421, -inf
        %5785 = vmax.xlane.f32.xlu0 %v5784
        %v5786 = vpop.xlane.xlu0 %5785
        %v5787 = vsel %vm4350, %v4426, -inf
        %5788 = vmax.xlane.f32.xlu0 %v5787
        %v5789 = vpop.xlane.xlu0 %5788
        %v5790 = vsel %vm4350, %v4429, -inf
        %5791 = vmax.xlane.f32.xlu0 %v5790
        %v5792 = vpop.xlane.xlu0 %5791
        %v5793 = vsel %vm4350, %v4434, -inf
        %5794 = vmax.xlane.f32.xlu0 %v5793
        %v5795 = vpop.xlane.xlu0 %5794
        %v5796 = vsel %vm4350, %v4437, -inf
        %5797 = vmax.xlane.f32.xlu0 %v5796
        %v5798 = vpop.xlane.xlu0 %5797
        %v5799 = vsel %vm4350, %v4499, -inf
        %5800 = vmax.xlane.f32.xlu0 %v5799
        %v5801 = vpop.xlane.xlu0 %5800
        %v5802 = vsel %vm4350, %v4502, -inf
        %5803 = vmax.xlane.f32.xlu0 %v5802
        %v5804 = vpop.xlane.xlu0 %5803
        %v5805 = vsel %vm4350, %v4507, -inf
        %5806 = vmax.xlane.f32.xlu0 %v5805
        %v5807 = vpop.xlane.xlu0 %5806
        %v5808 = vsel %vm4350, %v4510, -inf
        %5809 = vmax.xlane.f32.xlu0 %v5808
        %v5810 = vpop.xlane.xlu0 %5809
        %v5811 = vsel %vm4350, %v4515, -inf
        %5812 = vmax.xlane.f32.xlu0 %v5811
        %v5813 = vpop.xlane.xlu0 %5812
        %v5814 = vsel %vm4350, %v4518, -inf
        %5815 = vmax.xlane.f32.xlu0 %v5814
        %v5816 = vpop.xlane.xlu0 %5815
        %v5817 = vsel %vm4350, %v4523, -inf
        %5818 = vmax.xlane.f32.xlu0 %v5817
        %v5819 = vpop.xlane.xlu0 %5818
        %v5820 = vsel %vm4350, %v4526, -inf
        %5821 = vmax.xlane.f32.xlu0 %v5820
        %v5822 = vpop.xlane.xlu0 %5821
        %v5823 = vsel %vm4350, %v4588, -inf
        %5824 = vmax.xlane.f32.xlu0 %v5823
        %v5825 = vpop.xlane.xlu0 %5824
        %v5826 = vsel %vm4350, %v4591, -inf
        %5827 = vmax.xlane.f32.xlu0 %v5826
        %v5828 = vpop.xlane.xlu0 %5827
        %v5829 = vsel %vm4350, %v4596, -inf
        %5830 = vmax.xlane.f32.xlu0 %v5829
        %v5831 = vpop.xlane.xlu0 %5830
        %v5832 = vsel %vm4350, %v4599, -inf
        %5833 = vmax.xlane.f32.xlu0 %v5832
        %v5834 = vpop.xlane.xlu0 %5833
        %v5835 = vsel %vm4350, %v4604, -inf
        %5836 = vmax.xlane.f32.xlu0 %v5835
        %v5837 = vpop.xlane.xlu0 %5836
        %v5838 = vsel %vm4350, %v4607, -inf
        %5839 = vmax.xlane.f32.xlu0 %v5838
        %v5840 = vpop.xlane.xlu0 %5839
        %v5841 = vsel %vm4350, %v4612, -inf
        %5842 = vmax.xlane.f32.xlu0 %v5841
        %v5843 = vpop.xlane.xlu0 %5842
        %v5844 = vsel %vm4350, %v4615, -inf
        %5845 = vmax.xlane.f32.xlu0 %v5844
        %v5846 = vpop.xlane.xlu0 %5845
        %v5847 = vsel %vm4350, %v4677, -inf
        %5848 = vmax.xlane.f32.xlu0 %v5847
        %v5849 = vpop.xlane.xlu0 %5848
        %v5850 = vsel %vm4350, %v4680, -inf
        %5851 = vmax.xlane.f32.xlu0 %v5850
        %v5852 = vpop.xlane.xlu0 %5851
        %v5853 = vsel %vm4350, %v4685, -inf
        %5854 = vmax.xlane.f32.xlu0 %v5853
        %v5855 = vpop.xlane.xlu0 %5854
        %v5856 = vsel %vm4350, %v4688, -inf
        %5857 = vmax.xlane.f32.xlu0 %v5856
        %v5858 = vpop.xlane.xlu0 %5857
        %v5859 = vsel %vm4350, %v4693, -inf
        %5860 = vmax.xlane.f32.xlu0 %v5859
        %v5861 = vpop.xlane.xlu0 %5860
        %v5862 = vsel %vm4350, %v4696, -inf
        %5863 = vmax.xlane.f32.xlu0 %v5862
        %v5864 = vpop.xlane.xlu0 %5863
        %v5865 = vsel %vm4350, %v4701, -inf
        %5866 = vmax.xlane.f32.xlu0 %v5865
        %v5867 = vpop.xlane.xlu0 %5866
        %v5868 = vsel %vm4350, %v4704, -inf
        %5869 = vmax.xlane.f32.xlu0 %v5868
        %v5870 = vpop.xlane.xlu0 %5869
        %v5871 = vsel %vm4350, %v4766, -inf
        %5872 = vmax.xlane.f32.xlu0 %v5871
        %v5873 = vpop.xlane.xlu0 %5872
        %v5874 = vsel %vm4350, %v4769, -inf
        %5875 = vmax.xlane.f32.xlu0 %v5874
        %v5876 = vpop.xlane.xlu0 %5875
        %v5877 = vsel %vm4350, %v4774, -inf
        %5878 = vmax.xlane.f32.xlu0 %v5877
        %v5879 = vpop.xlane.xlu0 %5878
        %v5880 = vsel %vm4350, %v4777, -inf
        %5881 = vmax.xlane.f32.xlu0 %v5880
        %v5882 = vpop.xlane.xlu0 %5881
        %v5883 = vsel %vm4350, %v4782, -inf
        %5884 = vmax.xlane.f32.xlu0 %v5883
        %v5885 = vpop.xlane.xlu0 %5884
        %v5886 = vsel %vm4350, %v4785, -inf
        %5887 = vmax.xlane.f32.xlu0 %v5886
        %v5888 = vpop.xlane.xlu0 %5887
        %v5889 = vsel %vm4350, %v4790, -inf
        %5890 = vmax.xlane.f32.xlu0 %v5889
        %v5891 = vpop.xlane.xlu0 %5890
        %v5892 = vsel %vm4350, %v4793, -inf
        %5893 = vmax.xlane.f32.xlu0 %v5892
        %v5894 = vpop.xlane.xlu0 %5893
        %v5895 = vsel %vm4350, %v4855, -inf
        %5896 = vmax.xlane.f32.xlu0 %v5895
        %v5897 = vpop.xlane.xlu0 %5896
        %v5898 = vsel %vm4350, %v4858, -inf
        %5899 = vmax.xlane.f32.xlu0 %v5898
        %v5900 = vpop.xlane.xlu0 %5899
        %v5901 = vsel %vm4350, %v4863, -inf
        %5902 = vmax.xlane.f32.xlu0 %v5901
        %v5903 = vpop.xlane.xlu0 %5902
        %v5904 = vsel %vm4350, %v4866, -inf
        %5905 = vmax.xlane.f32.xlu0 %v5904
        %v5906 = vpop.xlane.xlu0 %5905
        %v5907 = vsel %vm4350, %v4871, -inf
        %5908 = vmax.xlane.f32.xlu0 %v5907
        %v5909 = vpop.xlane.xlu0 %5908
        %v5910 = vsel %vm4350, %v4874, -inf
        %5911 = vmax.xlane.f32.xlu0 %v5910
        %v5912 = vpop.xlane.xlu0 %5911
        %v5913 = vsel %vm4350, %v4879, -inf
        %5914 = vmax.xlane.f32.xlu0 %v5913
        %v5915 = vpop.xlane.xlu0 %5914
        %v5916 = vsel %vm4350, %v4882, -inf
        %5917 = vmax.xlane.f32.xlu0 %v5916
        %v5918 = vpop.xlane.xlu0 %5917
        %v5919 = vsel %vm4350, %v4944, -inf
        %5920 = vmax.xlane.f32.xlu0 %v5919
        %v5921 = vpop.xlane.xlu0 %5920
        %v5922 = vsel %vm4350, %v4947, -inf
        %5923 = vmax.xlane.f32.xlu0 %v5922
        %v5924 = vpop.xlane.xlu0 %5923
        %v5925 = vsel %vm4350, %v4952, -inf
        %5926 = vmax.xlane.f32.xlu0 %v5925
        %v5927 = vpop.xlane.xlu0 %5926
        %v5928 = vsel %vm4350, %v4955, -inf
        %5929 = vmax.xlane.f32.xlu0 %v5928
        %v5930 = vpop.xlane.xlu0 %5929
        %v5931 = vsel %vm4350, %v4960, -inf
        %5932 = vmax.xlane.f32.xlu0 %v5931
        %v5933 = vpop.xlane.xlu0 %5932
        %v5934 = vsel %vm4350, %v4963, -inf
        %5935 = vmax.xlane.f32.xlu0 %v5934
        %v5936 = vpop.xlane.xlu0 %5935
        %v5937 = vsel %vm4350, %v4968, -inf
        %5938 = vmax.xlane.f32.xlu0 %v5937
        %v5939 = vpop.xlane.xlu0 %5938
        %v5940 = vsel %vm4350, %v4971, -inf
        %5941 = vmax.xlane.f32.xlu0 %v5940
        %v5942 = vpop.xlane.xlu0 %5941
        %v5943 = vsel %vm4350, %v5033, -inf
        %5944 = vmax.xlane.f32.xlu0 %v5943
        %v5945 = vpop.xlane.xlu0 %5944
        %v5946 = vsel %vm4350, %v5036, -inf
        %5947 = vmax.xlane.f32.xlu0 %v5946
        %v5948 = vpop.xlane.xlu0 %5947
        %v5949 = vsel %vm4350, %v5041, -inf
        %5950 = vmax.xlane.f32.xlu0 %v5949
        %v5951 = vpop.xlane.xlu0 %5950
        %v5952 = vsel %vm4350, %v5044, -inf
        %5953 = vmax.xlane.f32.xlu0 %v5952
        %v5954 = vpop.xlane.xlu0 %5953
        %v5955 = vsel %vm4350, %v5049, -inf
        %5956 = vmax.xlane.f32.xlu0 %v5955
        %v5957 = vpop.xlane.xlu0 %5956
        %v5958 = vsel %vm4350, %v5052, -inf
        %5959 = vmax.xlane.f32.xlu0 %v5958
        %v5960 = vpop.xlane.xlu0 %5959
        %v5961 = vsel %vm4350, %v5057, -inf
        %5962 = vmax.xlane.f32.xlu0 %v5961
        %v5963 = vpop.xlane.xlu0 %5962
        %v5964 = vsel %vm4350, %v5060, -inf
        %5965 = vmax.xlane.f32.xlu0 %v5964
        %v5966 = vpop.xlane.xlu0 %5965
        %v5967 = vsel %vm4350, %v5122, -inf
        %5968 = vmax.xlane.f32.xlu0 %v5967
        %v5969 = vpop.xlane.xlu0 %5968
        %v5970 = vsel %vm4350, %v5125, -inf
        %5971 = vmax.xlane.f32.xlu0 %v5970
        %v5972 = vpop.xlane.xlu0 %5971
        %v5973 = vsel %vm4350, %v5130, -inf
        %5974 = vmax.xlane.f32.xlu0 %v5973
        %v5975 = vpop.xlane.xlu0 %5974
        %v5976 = vsel %vm4350, %v5133, -inf
        %5977 = vmax.xlane.f32.xlu0 %v5976
        %v5978 = vpop.xlane.xlu0 %5977
        %v5979 = vsel %vm4350, %v5138, -inf
        %5980 = vmax.xlane.f32.xlu0 %v5979
        %v5981 = vpop.xlane.xlu0 %5980
        %v5982 = vsel %vm4350, %v5141, -inf
        %5983 = vmax.xlane.f32.xlu0 %v5982
        %v5984 = vpop.xlane.xlu0 %5983
        %v5985 = vsel %vm4350, %v5146, -inf
        %5986 = vmax.xlane.f32.xlu0 %v5985
        %v5987 = vpop.xlane.xlu0 %5986
        %v5988 = vsel %vm4350, %v5149, -inf
        %5989 = vmax.xlane.f32.xlu0 %v5988
        %v5990 = vpop.xlane.xlu0 %5989
        %v5991 = vsel %vm4350, %v5211, -inf
        %5992 = vmax.xlane.f32.xlu0 %v5991
        %v5993 = vpop.xlane.xlu0 %5992
        %v5994 = vsel %vm4350, %v5214, -inf
        %5995 = vmax.xlane.f32.xlu0 %v5994
        %v5996 = vpop.xlane.xlu0 %5995
        %v5997 = vsel %vm4350, %v5219, -inf
        %5998 = vmax.xlane.f32.xlu0 %v5997
        %v5999 = vpop.xlane.xlu0 %5998
        %v6000 = vsel %vm4350, %v5222, -inf
        %6001 = vmax.xlane.f32.xlu0 %v6000
        %v6002 = vpop.xlane.xlu0 %6001
        %v6003 = vsel %vm4350, %v5227, -inf
        %6004 = vmax.xlane.f32.xlu0 %v6003
        %v6005 = vpop.xlane.xlu0 %6004
        %v6006 = vsel %vm4350, %v5230, -inf
        %6007 = vmax.xlane.f32.xlu0 %v6006
        %v6008 = vpop.xlane.xlu0 %6007
        %v6009 = vsel %vm4350, %v5235, -inf
        %6010 = vmax.xlane.f32.xlu0 %v6009
        %v6011 = vpop.xlane.xlu0 %6010
        %v6012 = vsel %vm4350, %v5238, -inf
        %6013 = vmax.xlane.f32.xlu0 %v6012
        %v6014 = vpop.xlane.xlu0 %6013
        %v6015 = vsel %vm4350, %v5300, -inf
        %6016 = vmax.xlane.f32.xlu0 %v6015
        %v6017 = vpop.xlane.xlu0 %6016
        %v6018 = vsel %vm4350, %v5303, -inf
        %6019 = vmax.xlane.f32.xlu0 %v6018
        %v6020 = vpop.xlane.xlu0 %6019
        %v6021 = vsel %vm4350, %v5308, -inf
        %6022 = vmax.xlane.f32.xlu0 %v6021
        %v6023 = vpop.xlane.xlu0 %6022
        %v6024 = vsel %vm4350, %v5311, -inf
        %6025 = vmax.xlane.f32.xlu0 %v6024
        %v6026 = vpop.xlane.xlu0 %6025
        %v6027 = vsel %vm4350, %v5316, -inf
        %6028 = vmax.xlane.f32.xlu0 %v6027
        %v6029 = vpop.xlane.xlu0 %6028
        %v6030 = vsel %vm4350, %v5319, -inf
        %6031 = vmax.xlane.f32.xlu0 %v6030
        %v6032 = vpop.xlane.xlu0 %6031
        %v6033 = vsel %vm4350, %v5324, -inf
        %6034 = vmax.xlane.f32.xlu0 %v6033
        %v6035 = vpop.xlane.xlu0 %6034
        %v6036 = vsel %vm4350, %v5327, -inf
        %6037 = vmax.xlane.f32.xlu0 %v6036
        %v6038 = vpop.xlane.xlu0 %6037
        %v6039 = vsel %vm4350, %v5389, -inf
        %6040 = vmax.xlane.f32.xlu0 %v6039
        %v6041 = vpop.xlane.xlu0 %6040
        %v6042 = vsel %vm4350, %v5392, -inf
        %6043 = vmax.xlane.f32.xlu0 %v6042
        %v6044 = vpop.xlane.xlu0 %6043
        %v6045 = vsel %vm4350, %v5397, -inf
        %6046 = vmax.xlane.f32.xlu0 %v6045
        %v6047 = vpop.xlane.xlu0 %6046
        %v6048 = vsel %vm4350, %v5400, -inf
        %6049 = vmax.xlane.f32.xlu0 %v6048
        %v6050 = vpop.xlane.xlu0 %6049
        %v6051 = vsel %vm4350, %v5405, -inf
        %6052 = vmax.xlane.f32.xlu0 %v6051
        %v6053 = vpop.xlane.xlu0 %6052
        %v6054 = vsel %vm4350, %v5408, -inf
        %6055 = vmax.xlane.f32.xlu0 %v6054
        %v6056 = vpop.xlane.xlu0 %6055
        %v6057 = vsel %vm4350, %v5413, -inf
        %6058 = vmax.xlane.f32.xlu0 %v6057
        %v6059 = vpop.xlane.xlu0 %6058
        %v6060 = vsel %vm4350, %v5416, -inf
        %6061 = vmax.xlane.f32.xlu0 %v6060
        %v6062 = vpop.xlane.xlu0 %6061
        %v6063 = vsel %vm4350, %v5478, -inf
        %6064 = vmax.xlane.f32.xlu0 %v6063
        %v6065 = vpop.xlane.xlu0 %6064
        %v6066 = vsel %vm4350, %v5481, -inf
        %6067 = vmax.xlane.f32.xlu0 %v6066
        %v6068 = vpop.xlane.xlu0 %6067
        %v6069 = vsel %vm4350, %v5486, -inf
        %6070 = vmax.xlane.f32.xlu0 %v6069
        %v6071 = vpop.xlane.xlu0 %6070
        %v6072 = vsel %vm4350, %v5489, -inf
        %6073 = vmax.xlane.f32.xlu0 %v6072
        %v6074 = vpop.xlane.xlu0 %6073
        %v6075 = vsel %vm4350, %v5494, -inf
        %6076 = vmax.xlane.f32.xlu0 %v6075
        %v6077 = vpop.xlane.xlu0 %6076
        %v6078 = vsel %vm4350, %v5497, -inf
        %6079 = vmax.xlane.f32.xlu0 %v6078
        %v6080 = vpop.xlane.xlu0 %6079
        %v6081 = vsel %vm4350, %v5502, -inf
        %6082 = vmax.xlane.f32.xlu0 %v6081
        %v6083 = vpop.xlane.xlu0 %6082
        %v6084 = vsel %vm4350, %v5505, -inf
        %6085 = vmax.xlane.f32.xlu0 %v6084
        %v6086 = vpop.xlane.xlu0 %6085
        %v6087 = vsel %vm4350, %v5567, -inf
        %6088 = vmax.xlane.f32.xlu0 %v6087
        %v6089 = vpop.xlane.xlu0 %6088
        %v6090 = vsel %vm4350, %v5570, -inf
        %6091 = vmax.xlane.f32.xlu0 %v6090
        %v6092 = vpop.xlane.xlu0 %6091
        %v6093 = vsel %vm4350, %v5575, -inf
        %6094 = vmax.xlane.f32.xlu0 %v6093
        %v6095 = vpop.xlane.xlu0 %6094
        %v6096 = vsel %vm4350, %v5578, -inf
        %6097 = vmax.xlane.f32.xlu0 %v6096
        %v6098 = vpop.xlane.xlu0 %6097
        %v6099 = vsel %vm4350, %v5583, -inf
        %6100 = vmax.xlane.f32.xlu0 %v6099
        %v6101 = vpop.xlane.xlu0 %6100
        %v6102 = vsel %vm4350, %v5586, -inf
        %6103 = vmax.xlane.f32.xlu0 %v6102
        %v6104 = vpop.xlane.xlu0 %6103
        %v6105 = vsel %vm4350, %v5591, -inf
        %6106 = vmax.xlane.f32.xlu0 %v6105
        %v6107 = vpop.xlane.xlu0 %6106
        %v6108 = vsel %vm4350, %v5594, -inf
        %6109 = vmax.xlane.f32.xlu0 %v6108
        %v6110 = vpop.xlane.xlu0 %6109
        %v6111 = vsel %vm4350, %v5656, -inf
        %6112 = vmax.xlane.f32.xlu0 %v6111
        %v6113 = vpop.xlane.xlu0 %6112
        %v6114 = vsel %vm4350, %v5659, -inf
        %6115 = vmax.xlane.f32.xlu0 %v6114
        %v6116 = vpop.xlane.xlu0 %6115
        %v6117 = vsel %vm4350, %v5664, -inf
        %6118 = vmax.xlane.f32.xlu0 %v6117
        %v6119 = vpop.xlane.xlu0 %6118
        %v6120 = vsel %vm4350, %v5667, -inf
        %6121 = vmax.xlane.f32.xlu0 %v6120
        %v6122 = vpop.xlane.xlu0 %6121
        %v6123 = vsel %vm4350, %v5672, -inf
        %6124 = vmax.xlane.f32.xlu0 %v6123
        %v6125 = vpop.xlane.xlu0 %6124
        %v6126 = vsel %vm4350, %v5675, -inf
        %6127 = vmax.xlane.f32.xlu0 %v6126
        %v6128 = vpop.xlane.xlu0 %6127
        %v6129 = vsel %vm4350, %v5680, -inf
        %6130 = vmax.xlane.f32.xlu0 %v6129
        %v6131 = vpop.xlane.xlu0 %6130
        %v6132 = vsel %vm4350, %v5683, -inf
        %6133 = vmax.xlane.f32.xlu0 %v6132
        %v6134 = vpop.xlane.xlu0 %6133
        %v6135 = vsel %vm4350, %v5745, -inf
        %6136 = vmax.xlane.f32.xlu0 %v6135
        %v6137 = vpop.xlane.xlu0 %6136
        %v6138 = vsel %vm4350, %v5748, -inf
        %6139 = vmax.xlane.f32.xlu0 %v6138
        %v6140 = vpop.xlane.xlu0 %6139
        %v6141 = vsel %vm4350, %v5753, -inf
        %6142 = vmax.xlane.f32.xlu0 %v6141
        %v6143 = vpop.xlane.xlu0 %6142
        %v6144 = vsel %vm4350, %v5756, -inf
        %6145 = vmax.xlane.f32.xlu0 %v6144
        %v6146 = vpop.xlane.xlu0 %6145
        %v6147 = vsel %vm4350, %v5761, -inf
        %6148 = vmax.xlane.f32.xlu0 %v6147
        %v6149 = vpop.xlane.xlu0 %6148
        %v6150 = vsel %vm4350, %v5764, -inf
        %6151 = vmax.xlane.f32.xlu0 %v6150
        %v6152 = vpop.xlane.xlu0 %6151
        %v6153 = vsel %vm4350, %v5769, -inf
        %6154 = vmax.xlane.f32.xlu0 %v6153
        %v6155 = vpop.xlane.xlu0 %6154
        %v6156 = vsel %vm4350, %v5772, -inf
        %6157 = vmax.xlane.f32.xlu0 %v6156
        %v6158 = vpop.xlane.xlu0 %6157
        %v6159 = vsub.f32 %v4410, %v5777
        %v6160 = vsub.f32 %v4413, %v5780
        %v6161 = vsub.f32 %v4418, %v5783
        %v6162 = vsub.f32 %v4421, %v5786
        %v6163 = vsub.f32 %v4426, %v5789
        %v6164 = vsub.f32 %v4429, %v5792
        %v6165 = vsub.f32 %v4434, %v5795
        %v6166 = vsub.f32 %v4437, %v5798
        %v6167 = vsub.f32 %v4499, %v5801
        %v6168 = vsub.f32 %v4502, %v5804
        %v6169 = vsub.f32 %v4507, %v5807
        %v6170 = vsub.f32 %v4510, %v5810
        %v6171 = vsub.f32 %v4515, %v5813
        %v6172 = vsub.f32 %v4518, %v5816
        %v6173 = vsub.f32 %v4523, %v5819
        %v6174 = vsub.f32 %v4526, %v5822
        %v6175 = vsub.f32 %v4588, %v5825
        %v6176 = vsub.f32 %v4591, %v5828
        %v6177 = vsub.f32 %v4596, %v5831
        %v6178 = vsub.f32 %v4599, %v5834
        %v6179 = vsub.f32 %v4604, %v5837
        %v6180 = vsub.f32 %v4607, %v5840
        %v6181 = vsub.f32 %v4612, %v5843
        %v6182 = vsub.f32 %v4615, %v5846
        %v6183 = vsub.f32 %v4677, %v5849
        %v6184 = vsub.f32 %v4680, %v5852
        %v6185 = vsub.f32 %v4685, %v5855
        %v6186 = vsub.f32 %v4688, %v5858
        %v6187 = vsub.f32 %v4693, %v5861
        %v6188 = vsub.f32 %v4696, %v5864
        %v6189 = vsub.f32 %v4701, %v5867
        %v6190 = vsub.f32 %v4704, %v5870
        %v6191 = vsub.f32 %v4766, %v5873
        %v6192 = vsub.f32 %v4769, %v5876
        %v6193 = vsub.f32 %v4774, %v5879
        %v6194 = vsub.f32 %v4777, %v5882
        %v6195 = vsub.f32 %v4782, %v5885
        %v6196 = vsub.f32 %v4785, %v5888
        %v6197 = vsub.f32 %v4790, %v5891
        %v6198 = vsub.f32 %v4793, %v5894
        %v6199 = vsub.f32 %v4855, %v5897
        %v6200 = vsub.f32 %v4858, %v5900
        %v6201 = vsub.f32 %v4863, %v5903
        %v6202 = vsub.f32 %v4866, %v5906
        %v6203 = vsub.f32 %v4871, %v5909
        %v6204 = vsub.f32 %v4874, %v5912
        %v6205 = vsub.f32 %v4879, %v5915
        %v6206 = vsub.f32 %v4882, %v5918
        %v6207 = vsub.f32 %v4944, %v5921
        %v6208 = vsub.f32 %v4947, %v5924
        %v6209 = vsub.f32 %v4952, %v5927
        %v6210 = vsub.f32 %v4955, %v5930
        %v6211 = vsub.f32 %v4960, %v5933
        %v6212 = vsub.f32 %v4963, %v5936
        %v6213 = vsub.f32 %v4968, %v5939
        %v6214 = vsub.f32 %v4971, %v5942
        %v6215 = vsub.f32 %v5033, %v5945
        %v6216 = vsub.f32 %v5036, %v5948
        %v6217 = vsub.f32 %v5041, %v5951
        %v6218 = vsub.f32 %v5044, %v5954
        %v6219 = vsub.f32 %v5049, %v5957
        %v6220 = vsub.f32 %v5052, %v5960
        %v6221 = vsub.f32 %v5057, %v5963
        %v6222 = vsub.f32 %v5060, %v5966
        %v6223 = vsub.f32 %v5122, %v5969
        %v6224 = vsub.f32 %v5125, %v5972
        %v6225 = vsub.f32 %v5130, %v5975
        %v6226 = vsub.f32 %v5133, %v5978
        %v6227 = vsub.f32 %v5138, %v5981
        %v6228 = vsub.f32 %v5141, %v5984
        %v6229 = vsub.f32 %v5146, %v5987
        %v6230 = vsub.f32 %v5149, %v5990
        %v6231 = vsub.f32 %v5211, %v5993
        %v6232 = vsub.f32 %v5214, %v5996
        %v6233 = vsub.f32 %v5219, %v5999
        %v6234 = vsub.f32 %v5222, %v6002
        %v6235 = vsub.f32 %v5227, %v6005
        %v6236 = vsub.f32 %v5230, %v6008
        %v6237 = vsub.f32 %v5235, %v6011
        %v6238 = vsub.f32 %v5238, %v6014
        %v6239 = vsub.f32 %v5300, %v6017
        %v6240 = vsub.f32 %v5303, %v6020
        %v6241 = vsub.f32 %v5308, %v6023
        %v6242 = vsub.f32 %v5311, %v6026
        %v6243 = vsub.f32 %v5316, %v6029
        %v6244 = vsub.f32 %v5319, %v6032
        %v6245 = vsub.f32 %v5324, %v6035
        %v6246 = vsub.f32 %v5327, %v6038
        %v6247 = vsub.f32 %v5389, %v6041
        %v6248 = vsub.f32 %v5392, %v6044
        %v6249 = vsub.f32 %v5397, %v6047
        %v6250 = vsub.f32 %v5400, %v6050
        %v6251 = vsub.f32 %v5405, %v6053
        %v6252 = vsub.f32 %v5408, %v6056
        %v6253 = vsub.f32 %v5413, %v6059
        %v6254 = vsub.f32 %v5416, %v6062
        %v6255 = vsub.f32 %v5478, %v6065
        %v6256 = vsub.f32 %v5481, %v6068
        %v6257 = vsub.f32 %v5486, %v6071
        %v6258 = vsub.f32 %v5489, %v6074
        %v6259 = vsub.f32 %v5494, %v6077
        %v6260 = vsub.f32 %v5497, %v6080
        %v6261 = vsub.f32 %v5502, %v6083
        %v6262 = vsub.f32 %v5505, %v6086
        %v6263 = vsub.f32 %v5567, %v6089
        %v6264 = vsub.f32 %v5570, %v6092
        %v6265 = vsub.f32 %v5575, %v6095
        %v6266 = vsub.f32 %v5578, %v6098
        %v6267 = vsub.f32 %v5583, %v6101
        %v6268 = vsub.f32 %v5586, %v6104
        %v6269 = vsub.f32 %v5591, %v6107
        %v6270 = vsub.f32 %v5594, %v6110
        %v6271 = vsub.f32 %v5656, %v6113
        %v6272 = vsub.f32 %v5659, %v6116
        %v6273 = vsub.f32 %v5664, %v6119
        %v6274 = vsub.f32 %v5667, %v6122
        %v6275 = vsub.f32 %v5672, %v6125
        %v6276 = vsub.f32 %v5675, %v6128
        %v6277 = vsub.f32 %v5680, %v6131
        %v6278 = vsub.f32 %v5683, %v6134
        %v6279 = vsub.f32 %v5745, %v6137
        %v6280 = vsub.f32 %v5748, %v6140
        %v6281 = vsub.f32 %v5753, %v6143
        %v6282 = vsub.f32 %v5756, %v6146
        %v6283 = vsub.f32 %v5761, %v6149
        %v6284 = vsub.f32 %v5764, %v6152
        %v6285 = vsub.f32 %v5769, %v6155
        %v6286 = vsub.f32 %v5772, %v6158
        %v6287 = vmul.f32 %v6159, 1.442695
        %v6288 = vpow.pop %v6287
        %v6289 = vmul.f32 %v6160, 1.442695
        %v6290 = vpow.pop %v6289
        %v6291 = vmul.f32 %v6161, 1.442695
        %v6292 = vpow.pop %v6291
        %v6293 = vmul.f32 %v6162, 1.442695
        %v6294 = vpow.pop %v6293
        %v6295 = vmul.f32 %v6163, 1.442695
        %v6296 = vpow.pop %v6295
        %v6297 = vmul.f32 %v6164, 1.442695
        %v6298 = vpow.pop %v6297
        %v6299 = vmul.f32 %v6165, 1.442695
        %v6300 = vpow.pop %v6299
        %v6301 = vmul.f32 %v6166, 1.442695
        %v6302 = vpow.pop %v6301
        %v6303 = vmul.f32 %v6167, 1.442695
        %v6304 = vpow.pop %v6303
        %v6305 = vmul.f32 %v6168, 1.442695
        %v6306 = vpow.pop %v6305
        %v6307 = vmul.f32 %v6169, 1.442695
        %v6308 = vpow.pop %v6307
        %v6309 = vmul.f32 %v6170, 1.442695
        %v6310 = vpow.pop %v6309
        %v6311 = vmul.f32 %v6171, 1.442695
        %v6312 = vpow.pop %v6311
        %v6313 = vmul.f32 %v6172, 1.442695
        %v6314 = vpow.pop %v6313
        %v6315 = vmul.f32 %v6173, 1.442695
        %v6316 = vpow.pop %v6315
        %v6317 = vmul.f32 %v6174, 1.442695
        %v6318 = vpow.pop %v6317
        %v6319 = vmul.f32 %v6175, 1.442695
        %v6320 = vpow.pop %v6319
        %v6321 = vmul.f32 %v6176, 1.442695
        %v6322 = vpow.pop %v6321
        %v6323 = vmul.f32 %v6177, 1.442695
        %v6324 = vpow.pop %v6323
        %v6325 = vmul.f32 %v6178, 1.442695
        %v6326 = vpow.pop %v6325
        %v6327 = vmul.f32 %v6179, 1.442695
        %v6328 = vpow.pop %v6327
        %v6329 = vmul.f32 %v6180, 1.442695
        %v6330 = vpow.pop %v6329
        %v6331 = vmul.f32 %v6181, 1.442695
        %v6332 = vpow.pop %v6331
        %v6333 = vmul.f32 %v6182, 1.442695
        %v6334 = vpow.pop %v6333
        %v6335 = vmul.f32 %v6183, 1.442695
        %v6336 = vpow.pop %v6335
        %v6337 = vmul.f32 %v6184, 1.442695
        %v6338 = vpow.pop %v6337
        %v6339 = vmul.f32 %v6185, 1.442695
        %v6340 = vpow.pop %v6339
        %v6341 = vmul.f32 %v6186, 1.442695
        %v6342 = vpow.pop %v6341
        %v6343 = vmul.f32 %v6187, 1.442695
        %v6344 = vpow.pop %v6343
        %v6345 = vmul.f32 %v6188, 1.442695
        %v6346 = vpow.pop %v6345
        %v6347 = vmul.f32 %v6189, 1.442695
        %v6348 = vpow.pop %v6347
        %v6349 = vmul.f32 %v6190, 1.442695
        %v6350 = vpow.pop %v6349
        %v6351 = vmul.f32 %v6191, 1.442695
        %v6352 = vpow.pop %v6351
        %v6353 = vmul.f32 %v6192, 1.442695
        %v6354 = vpow.pop %v6353
        %v6355 = vmul.f32 %v6193, 1.442695
        %v6356 = vpow.pop %v6355
        %v6357 = vmul.f32 %v6194, 1.442695
        %v6358 = vpow.pop %v6357
        %v6359 = vmul.f32 %v6195, 1.442695
        %v6360 = vpow.pop %v6359
        %v6361 = vmul.f32 %v6196, 1.442695
        %v6362 = vpow.pop %v6361
        %v6363 = vmul.f32 %v6197, 1.442695
        %v6364 = vpow.pop %v6363
        %v6365 = vmul.f32 %v6198, 1.442695
        %v6366 = vpow.pop %v6365
        %v6367 = vmul.f32 %v6199, 1.442695
        %v6368 = vpow.pop %v6367
        %v6369 = vmul.f32 %v6200, 1.442695
        %v6370 = vpow.pop %v6369
        %v6371 = vmul.f32 %v6201, 1.442695
        %v6372 = vpow.pop %v6371
        %v6373 = vmul.f32 %v6202, 1.442695
        %v6374 = vpow.pop %v6373
        %v6375 = vmul.f32 %v6203, 1.442695
        %v6376 = vpow.pop %v6375
        %v6377 = vmul.f32 %v6204, 1.442695
        %v6378 = vpow.pop %v6377
        %v6379 = vmul.f32 %v6205, 1.442695
        %v6380 = vpow.pop %v6379
        %v6381 = vmul.f32 %v6206, 1.442695
        %v6382 = vpow.pop %v6381
        %v6383 = vmul.f32 %v6207, 1.442695
        %v6384 = vpow.pop %v6383
        %v6385 = vmul.f32 %v6208, 1.442695
        %v6386 = vpow.pop %v6385
        %v6387 = vmul.f32 %v6209, 1.442695
        %v6388 = vpow.pop %v6387
        %v6389 = vmul.f32 %v6210, 1.442695
        %v6390 = vpow.pop %v6389
        %v6391 = vmul.f32 %v6211, 1.442695
        %v6392 = vpow.pop %v6391
        %v6393 = vmul.f32 %v6212, 1.442695
        %v6394 = vpow.pop %v6393
        %v6395 = vmul.f32 %v6213, 1.442695
        %v6396 = vpow.pop %v6395
        %v6397 = vmul.f32 %v6214, 1.442695
        %v6398 = vpow.pop %v6397
        %v6399 = vmul.f32 %v6215, 1.442695
        %v6400 = vpow.pop %v6399
        %v6401 = vmul.f32 %v6216, 1.442695
        %v6402 = vpow.pop %v6401
        %v6403 = vmul.f32 %v6217, 1.442695
        %v6404 = vpow.pop %v6403
        %v6405 = vmul.f32 %v6218, 1.442695
        %v6406 = vpow.pop %v6405
        %v6407 = vmul.f32 %v6219, 1.442695
        %v6408 = vpow.pop %v6407
        %v6409 = vmul.f32 %v6220, 1.442695
        %v6410 = vpow.pop %v6409
        %v6411 = vmul.f32 %v6221, 1.442695
        %v6412 = vpow.pop %v6411
        %v6413 = vmul.f32 %v6222, 1.442695
        %v6414 = vpow.pop %v6413
        %v6415 = vmul.f32 %v6223, 1.442695
        %v6416 = vpow.pop %v6415
        %v6417 = vmul.f32 %v6224, 1.442695
        %v6418 = vpow.pop %v6417
        %v6419 = vmul.f32 %v6225, 1.442695
        %v6420 = vpow.pop %v6419
        %v6421 = vmul.f32 %v6226, 1.442695
        %v6422 = vpow.pop %v6421
        %v6423 = vmul.f32 %v6227, 1.442695
        %v6424 = vpow.pop %v6423
        %v6425 = vmul.f32 %v6228, 1.442695
        %v6426 = vpow.pop %v6425
        %v6427 = vmul.f32 %v6229, 1.442695
        %v6428 = vpow.pop %v6427
        %v6429 = vmul.f32 %v6230, 1.442695
        %v6430 = vpow.pop %v6429
        %v6431 = vmul.f32 %v6231, 1.442695
        %v6432 = vpow.pop %v6431
        %v6433 = vmul.f32 %v6232, 1.442695
        %v6434 = vpow.pop %v6433
        %v6435 = vmul.f32 %v6233, 1.442695
        %v6436 = vpow.pop %v6435
        %v6437 = vmul.f32 %v6234, 1.442695
        %v6438 = vpow.pop %v6437
        %v6439 = vmul.f32 %v6235, 1.442695
        %v6440 = vpow.pop %v6439
        %v6441 = vmul.f32 %v6236, 1.442695
        %v6442 = vpow.pop %v6441
        %v6443 = vmul.f32 %v6237, 1.442695
        %v6444 = vpow.pop %v6443
        %v6445 = vmul.f32 %v6238, 1.442695
        %v6446 = vpow.pop %v6445
        %v6447 = vmul.f32 %v6239, 1.442695
        %v6448 = vpow.pop %v6447
        %v6449 = vmul.f32 %v6240, 1.442695
        %v6450 = vpow.pop %v6449
        %v6451 = vmul.f32 %v6241, 1.442695
        %v6452 = vpow.pop %v6451
        %v6453 = vmul.f32 %v6242, 1.442695
        %v6454 = vpow.pop %v6453
        %v6455 = vmul.f32 %v6243, 1.442695
        %v6456 = vpow.pop %v6455
        %v6457 = vmul.f32 %v6244, 1.442695
        %v6458 = vpow.pop %v6457
        %v6459 = vmul.f32 %v6245, 1.442695
        %v6460 = vpow.pop %v6459
        %v6461 = vmul.f32 %v6246, 1.442695
        %v6462 = vpow.pop %v6461
        %v6463 = vmul.f32 %v6247, 1.442695
        %v6464 = vpow.pop %v6463
        %v6465 = vmul.f32 %v6248, 1.442695
        %v6466 = vpow.pop %v6465
        %v6467 = vmul.f32 %v6249, 1.442695
        %v6468 = vpow.pop %v6467
        %v6469 = vmul.f32 %v6250, 1.442695
        %v6470 = vpow.pop %v6469
        %v6471 = vmul.f32 %v6251, 1.442695
        %v6472 = vpow.pop %v6471
        %v6473 = vmul.f32 %v6252, 1.442695
        %v6474 = vpow.pop %v6473
        %v6475 = vmul.f32 %v6253, 1.442695
        %v6476 = vpow.pop %v6475
        %v6477 = vmul.f32 %v6254, 1.442695
        %v6478 = vpow.pop %v6477
        %v6479 = vmul.f32 %v6255, 1.442695
        %v6480 = vpow.pop %v6479
        %v6481 = vmul.f32 %v6256, 1.442695
        %v6482 = vpow.pop %v6481
        %v6483 = vmul.f32 %v6257, 1.442695
        %v6484 = vpow.pop %v6483
        %v6485 = vmul.f32 %v6258, 1.442695
        %v6486 = vpow.pop %v6485
        %v6487 = vmul.f32 %v6259, 1.442695
        %v6488 = vpow.pop %v6487
        %v6489 = vmul.f32 %v6260, 1.442695
        %v6490 = vpow.pop %v6489
        %v6491 = vmul.f32 %v6261, 1.442695
        %v6492 = vpow.pop %v6491
        %v6493 = vmul.f32 %v6262, 1.442695
        %v6494 = vpow.pop %v6493
        %v6495 = vmul.f32 %v6263, 1.442695
        %v6496 = vpow.pop %v6495
        %v6497 = vmul.f32 %v6264, 1.442695
        %v6498 = vpow.pop %v6497
        %v6499 = vmul.f32 %v6265, 1.442695
        %v6500 = vpow.pop %v6499
        %v6501 = vmul.f32 %v6266, 1.442695
        %v6502 = vpow.pop %v6501
        %v6503 = vmul.f32 %v6267, 1.442695
        %v6504 = vpow.pop %v6503
        %v6505 = vmul.f32 %v6268, 1.442695
        %v6506 = vpow.pop %v6505
        %v6507 = vmul.f32 %v6269, 1.442695
        %v6508 = vpow.pop %v6507
        %v6509 = vmul.f32 %v6270, 1.442695
        %v6510 = vpow.pop %v6509
        %v6511 = vmul.f32 %v6271, 1.442695
        %v6512 = vpow.pop %v6511
        %v6513 = vmul.f32 %v6272, 1.442695
        %v6514 = vpow.pop %v6513
        %v6515 = vmul.f32 %v6273, 1.442695
        %v6516 = vpow.pop %v6515
        %v6517 = vmul.f32 %v6274, 1.442695
        %v6518 = vpow.pop %v6517
        %v6519 = vmul.f32 %v6275, 1.442695
        %v6520 = vpow.pop %v6519
        %v6521 = vmul.f32 %v6276, 1.442695
        %v6522 = vpow.pop %v6521
        %v6523 = vmul.f32 %v6277, 1.442695
        %v6524 = vpow.pop %v6523
        %v6525 = vmul.f32 %v6278, 1.442695
        %v6526 = vpow.pop %v6525
        %v6527 = vmul.f32 %v6279, 1.442695
        %v6528 = vpow.pop %v6527
        %v6529 = vmul.f32 %v6280, 1.442695
        %v6530 = vpow.pop %v6529
        %v6531 = vmul.f32 %v6281, 1.442695
        %v6532 = vpow.pop %v6531
        %v6533 = vmul.f32 %v6282, 1.442695
        %v6534 = vpow.pop %v6533
        %v6535 = vmul.f32 %v6283, 1.442695
        %v6536 = vpow.pop %v6535
        %v6537 = vmul.f32 %v6284, 1.442695
        %v6538 = vpow.pop %v6537
        %v6539 = vmul.f32 %v6285, 1.442695
        %v6540 = vpow.pop %v6539
        %v6541 = vmul.f32 %v6286, 1.442695
        %v6542 = vpow.pop %v6541
        %v6543 = vsel %vm4350, %v6288, 0.0
        %6544 = vadd.xlane.f32.xlu0 %v6543
        %v6545 = vpop.xlane.xlu0 %6544
        %v6546 = vsel %vm4350, %v6290, 0.0
        %6547 = vadd.xlane.f32.xlu0 %v6546
        %v6548 = vpop.xlane.xlu0 %6547
        %v6549 = vsel %vm4350, %v6292, 0.0
        %6550 = vadd.xlane.f32.xlu0 %v6549
        %v6551 = vpop.xlane.xlu0 %6550
        %v6552 = vsel %vm4350, %v6294, 0.0
        %6553 = vadd.xlane.f32.xlu0 %v6552
        %v6554 = vpop.xlane.xlu0 %6553
        %v6555 = vsel %vm4350, %v6296, 0.0
        %6556 = vadd.xlane.f32.xlu0 %v6555
        %v6557 = vpop.xlane.xlu0 %6556
        %v6558 = vsel %vm4350, %v6298, 0.0
        %6559 = vadd.xlane.f32.xlu0 %v6558
        %v6560 = vpop.xlane.xlu0 %6559
        %v6561 = vsel %vm4350, %v6300, 0.0
        %6562 = vadd.xlane.f32.xlu0 %v6561
        %v6563 = vpop.xlane.xlu0 %6562
        %v6564 = vsel %vm4350, %v6302, 0.0
        %6565 = vadd.xlane.f32.xlu0 %v6564
        %v6566 = vpop.xlane.xlu0 %6565
        %v6567 = vsel %vm4350, %v6304, 0.0
        %6568 = vadd.xlane.f32.xlu0 %v6567
        %v6569 = vpop.xlane.xlu0 %6568
        %v6570 = vsel %vm4350, %v6306, 0.0
        %6571 = vadd.xlane.f32.xlu0 %v6570
        %v6572 = vpop.xlane.xlu0 %6571
        %v6573 = vsel %vm4350, %v6308, 0.0
        %6574 = vadd.xlane.f32.xlu0 %v6573
        %v6575 = vpop.xlane.xlu0 %6574
        %v6576 = vsel %vm4350, %v6310, 0.0
        %6577 = vadd.xlane.f32.xlu0 %v6576
        %v6578 = vpop.xlane.xlu0 %6577
        %v6579 = vsel %vm4350, %v6312, 0.0
        %6580 = vadd.xlane.f32.xlu0 %v6579
        %v6581 = vpop.xlane.xlu0 %6580
        %v6582 = vsel %vm4350, %v6314, 0.0
        %6583 = vadd.xlane.f32.xlu0 %v6582
        %v6584 = vpop.xlane.xlu0 %6583
        %v6585 = vsel %vm4350, %v6316, 0.0
        %6586 = vadd.xlane.f32.xlu0 %v6585
        %v6587 = vpop.xlane.xlu0 %6586
        %v6588 = vsel %vm4350, %v6318, 0.0
        %6589 = vadd.xlane.f32.xlu0 %v6588
        %v6590 = vpop.xlane.xlu0 %6589
        %v6591 = vsel %vm4350, %v6320, 0.0
        %6592 = vadd.xlane.f32.xlu0 %v6591
        %v6593 = vpop.xlane.xlu0 %6592
        %v6594 = vsel %vm4350, %v6322, 0.0
        %6595 = vadd.xlane.f32.xlu0 %v6594
        %v6596 = vpop.xlane.xlu0 %6595
        %v6597 = vsel %vm4350, %v6324, 0.0
        %6598 = vadd.xlane.f32.xlu0 %v6597
        %v6599 = vpop.xlane.xlu0 %6598
        %v6600 = vsel %vm4350, %v6326, 0.0
        %6601 = vadd.xlane.f32.xlu0 %v6600
        %v6602 = vpop.xlane.xlu0 %6601
        %v6603 = vsel %vm4350, %v6328, 0.0
        %6604 = vadd.xlane.f32.xlu0 %v6603
        %v6605 = vpop.xlane.xlu0 %6604
        %v6606 = vsel %vm4350, %v6330, 0.0
        %6607 = vadd.xlane.f32.xlu0 %v6606
        %v6608 = vpop.xlane.xlu0 %6607
        %v6609 = vsel %vm4350, %v6332, 0.0
        %6610 = vadd.xlane.f32.xlu0 %v6609
        %v6611 = vpop.xlane.xlu0 %6610
        %v6612 = vsel %vm4350, %v6334, 0.0
        %6613 = vadd.xlane.f32.xlu0 %v6612
        %v6614 = vpop.xlane.xlu0 %6613
        %v6615 = vsel %vm4350, %v6336, 0.0
        %6616 = vadd.xlane.f32.xlu0 %v6615
        %v6617 = vpop.xlane.xlu0 %6616
        %v6618 = vsel %vm4350, %v6338, 0.0
        %6619 = vadd.xlane.f32.xlu0 %v6618
        %v6620 = vpop.xlane.xlu0 %6619
        %v6621 = vsel %vm4350, %v6340, 0.0
        %6622 = vadd.xlane.f32.xlu0 %v6621
        %v6623 = vpop.xlane.xlu0 %6622
        %v6624 = vsel %vm4350, %v6342, 0.0
        %6625 = vadd.xlane.f32.xlu0 %v6624
        %v6626 = vpop.xlane.xlu0 %6625
        %v6627 = vsel %vm4350, %v6344, 0.0
        %6628 = vadd.xlane.f32.xlu0 %v6627
        %v6629 = vpop.xlane.xlu0 %6628
        %v6630 = vsel %vm4350, %v6346, 0.0
        %6631 = vadd.xlane.f32.xlu0 %v6630
        %v6632 = vpop.xlane.xlu0 %6631
        %v6633 = vsel %vm4350, %v6348, 0.0
        %6634 = vadd.xlane.f32.xlu0 %v6633
        %v6635 = vpop.xlane.xlu0 %6634
        %v6636 = vsel %vm4350, %v6350, 0.0
        %6637 = vadd.xlane.f32.xlu0 %v6636
        %v6638 = vpop.xlane.xlu0 %6637
        %v6639 = vsel %vm4350, %v6352, 0.0
        %6640 = vadd.xlane.f32.xlu0 %v6639
        %v6641 = vpop.xlane.xlu0 %6640
        %v6642 = vsel %vm4350, %v6354, 0.0
        %6643 = vadd.xlane.f32.xlu0 %v6642
        %v6644 = vpop.xlane.xlu0 %6643
        %v6645 = vsel %vm4350, %v6356, 0.0
        %6646 = vadd.xlane.f32.xlu0 %v6645
        %v6647 = vpop.xlane.xlu0 %6646
        %v6648 = vsel %vm4350, %v6358, 0.0
        %6649 = vadd.xlane.f32.xlu0 %v6648
        %v6650 = vpop.xlane.xlu0 %6649
        %v6651 = vsel %vm4350, %v6360, 0.0
        %6652 = vadd.xlane.f32.xlu0 %v6651
        %v6653 = vpop.xlane.xlu0 %6652
        %v6654 = vsel %vm4350, %v6362, 0.0
        %6655 = vadd.xlane.f32.xlu0 %v6654
        %v6656 = vpop.xlane.xlu0 %6655
        %v6657 = vsel %vm4350, %v6364, 0.0
        %6658 = vadd.xlane.f32.xlu0 %v6657
        %v6659 = vpop.xlane.xlu0 %6658
        %v6660 = vsel %vm4350, %v6366, 0.0
        %6661 = vadd.xlane.f32.xlu0 %v6660
        %v6662 = vpop.xlane.xlu0 %6661
        %v6663 = vsel %vm4350, %v6368, 0.0
        %6664 = vadd.xlane.f32.xlu0 %v6663
        %v6665 = vpop.xlane.xlu0 %6664
        %v6666 = vsel %vm4350, %v6370, 0.0
        %6667 = vadd.xlane.f32.xlu0 %v6666
        %v6668 = vpop.xlane.xlu0 %6667
        %v6669 = vsel %vm4350, %v6372, 0.0
        %6670 = vadd.xlane.f32.xlu0 %v6669
        %v6671 = vpop.xlane.xlu0 %6670
        %v6672 = vsel %vm4350, %v6374, 0.0
        %6673 = vadd.xlane.f32.xlu0 %v6672
        %v6674 = vpop.xlane.xlu0 %6673
        %v6675 = vsel %vm4350, %v6376, 0.0
        %6676 = vadd.xlane.f32.xlu0 %v6675
        %v6677 = vpop.xlane.xlu0 %6676
        %v6678 = vsel %vm4350, %v6378, 0.0
        %6679 = vadd.xlane.f32.xlu0 %v6678
        %v6680 = vpop.xlane.xlu0 %6679
        %v6681 = vsel %vm4350, %v6380, 0.0
        %6682 = vadd.xlane.f32.xlu0 %v6681
        %v6683 = vpop.xlane.xlu0 %6682
        %v6684 = vsel %vm4350, %v6382, 0.0
        %6685 = vadd.xlane.f32.xlu0 %v6684
        %v6686 = vpop.xlane.xlu0 %6685
        %v6687 = vsel %vm4350, %v6384, 0.0
        %6688 = vadd.xlane.f32.xlu0 %v6687
        %v6689 = vpop.xlane.xlu0 %6688
        %v6690 = vsel %vm4350, %v6386, 0.0
        %6691 = vadd.xlane.f32.xlu0 %v6690
        %v6692 = vpop.xlane.xlu0 %6691
        %v6693 = vsel %vm4350, %v6388, 0.0
        %6694 = vadd.xlane.f32.xlu0 %v6693
        %v6695 = vpop.xlane.xlu0 %6694
        %v6696 = vsel %vm4350, %v6390, 0.0
        %6697 = vadd.xlane.f32.xlu0 %v6696
        %v6698 = vpop.xlane.xlu0 %6697
        %v6699 = vsel %vm4350, %v6392, 0.0
        %6700 = vadd.xlane.f32.xlu0 %v6699
        %v6701 = vpop.xlane.xlu0 %6700
        %v6702 = vsel %vm4350, %v6394, 0.0
        %6703 = vadd.xlane.f32.xlu0 %v6702
        %v6704 = vpop.xlane.xlu0 %6703
        %v6705 = vsel %vm4350, %v6396, 0.0
        %6706 = vadd.xlane.f32.xlu0 %v6705
        %v6707 = vpop.xlane.xlu0 %6706
        %v6708 = vsel %vm4350, %v6398, 0.0
        %6709 = vadd.xlane.f32.xlu0 %v6708
        %v6710 = vpop.xlane.xlu0 %6709
        %v6711 = vsel %vm4350, %v6400, 0.0
        %6712 = vadd.xlane.f32.xlu0 %v6711
        %v6713 = vpop.xlane.xlu0 %6712
        %v6714 = vsel %vm4350, %v6402, 0.0
        %6715 = vadd.xlane.f32.xlu0 %v6714
        %v6716 = vpop.xlane.xlu0 %6715
        %v6717 = vsel %vm4350, %v6404, 0.0
        %6718 = vadd.xlane.f32.xlu0 %v6717
        %v6719 = vpop.xlane.xlu0 %6718
        %v6720 = vsel %vm4350, %v6406, 0.0
        %6721 = vadd.xlane.f32.xlu0 %v6720
        %v6722 = vpop.xlane.xlu0 %6721
        %v6723 = vsel %vm4350, %v6408, 0.0
        %6724 = vadd.xlane.f32.xlu0 %v6723
        %v6725 = vpop.xlane.xlu0 %6724
        %v6726 = vsel %vm4350, %v6410, 0.0
        %6727 = vadd.xlane.f32.xlu0 %v6726
        %v6728 = vpop.xlane.xlu0 %6727
        %v6729 = vsel %vm4350, %v6412, 0.0
        %6730 = vadd.xlane.f32.xlu0 %v6729
        %v6731 = vpop.xlane.xlu0 %6730
        %v6732 = vsel %vm4350, %v6414, 0.0
        %6733 = vadd.xlane.f32.xlu0 %v6732
        %v6734 = vpop.xlane.xlu0 %6733
        %v6735 = vsel %vm4350, %v6416, 0.0
        %6736 = vadd.xlane.f32.xlu0 %v6735
        %v6737 = vpop.xlane.xlu0 %6736
        %v6738 = vsel %vm4350, %v6418, 0.0
        %6739 = vadd.xlane.f32.xlu0 %v6738
        %v6740 = vpop.xlane.xlu0 %6739
        %v6741 = vsel %vm4350, %v6420, 0.0
        %6742 = vadd.xlane.f32.xlu0 %v6741
        %v6743 = vpop.xlane.xlu0 %6742
        %v6744 = vsel %vm4350, %v6422, 0.0
        %6745 = vadd.xlane.f32.xlu0 %v6744
        %v6746 = vpop.xlane.xlu0 %6745
        %v6747 = vsel %vm4350, %v6424, 0.0
        %6748 = vadd.xlane.f32.xlu0 %v6747
        %v6749 = vpop.xlane.xlu0 %6748
        %v6750 = vsel %vm4350, %v6426, 0.0
        %6751 = vadd.xlane.f32.xlu0 %v6750
        %v6752 = vpop.xlane.xlu0 %6751
        %v6753 = vsel %vm4350, %v6428, 0.0
        %6754 = vadd.xlane.f32.xlu0 %v6753
        %v6755 = vpop.xlane.xlu0 %6754
        %v6756 = vsel %vm4350, %v6430, 0.0
        %6757 = vadd.xlane.f32.xlu0 %v6756
        %v6758 = vpop.xlane.xlu0 %6757
        %v6759 = vsel %vm4350, %v6432, 0.0
        %6760 = vadd.xlane.f32.xlu0 %v6759
        %v6761 = vpop.xlane.xlu0 %6760
        %v6762 = vsel %vm4350, %v6434, 0.0
        %6763 = vadd.xlane.f32.xlu0 %v6762
        %v6764 = vpop.xlane.xlu0 %6763
        %v6765 = vsel %vm4350, %v6436, 0.0
        %6766 = vadd.xlane.f32.xlu0 %v6765
        %v6767 = vpop.xlane.xlu0 %6766
        %v6768 = vsel %vm4350, %v6438, 0.0
        %6769 = vadd.xlane.f32.xlu0 %v6768
        %v6770 = vpop.xlane.xlu0 %6769
        %v6771 = vsel %vm4350, %v6440, 0.0
        %6772 = vadd.xlane.f32.xlu0 %v6771
        %v6773 = vpop.xlane.xlu0 %6772
        %v6774 = vsel %vm4350, %v6442, 0.0
        %6775 = vadd.xlane.f32.xlu0 %v6774
        %v6776 = vpop.xlane.xlu0 %6775
        %v6777 = vsel %vm4350, %v6444, 0.0
        %6778 = vadd.xlane.f32.xlu0 %v6777
        %v6779 = vpop.xlane.xlu0 %6778
        %v6780 = vsel %vm4350, %v6446, 0.0
        %6781 = vadd.xlane.f32.xlu0 %v6780
        %v6782 = vpop.xlane.xlu0 %6781
        %v6783 = vsel %vm4350, %v6448, 0.0
        %6784 = vadd.xlane.f32.xlu0 %v6783
        %v6785 = vpop.xlane.xlu0 %6784
        %v6786 = vsel %vm4350, %v6450, 0.0
        %6787 = vadd.xlane.f32.xlu0 %v6786
        %v6788 = vpop.xlane.xlu0 %6787
        %v6789 = vsel %vm4350, %v6452, 0.0
        %6790 = vadd.xlane.f32.xlu0 %v6789
        %v6791 = vpop.xlane.xlu0 %6790
        %v6792 = vsel %vm4350, %v6454, 0.0
        %6793 = vadd.xlane.f32.xlu0 %v6792
        %v6794 = vpop.xlane.xlu0 %6793
        %v6795 = vsel %vm4350, %v6456, 0.0
        %6796 = vadd.xlane.f32.xlu0 %v6795
        %v6797 = vpop.xlane.xlu0 %6796
        %v6798 = vsel %vm4350, %v6458, 0.0
        %6799 = vadd.xlane.f32.xlu0 %v6798
        %v6800 = vpop.xlane.xlu0 %6799
        %v6801 = vsel %vm4350, %v6460, 0.0
        %6802 = vadd.xlane.f32.xlu0 %v6801
        %v6803 = vpop.xlane.xlu0 %6802
        %v6804 = vsel %vm4350, %v6462, 0.0
        %6805 = vadd.xlane.f32.xlu0 %v6804
        %v6806 = vpop.xlane.xlu0 %6805
        %v6807 = vsel %vm4350, %v6464, 0.0
        %6808 = vadd.xlane.f32.xlu0 %v6807
        %v6809 = vpop.xlane.xlu0 %6808
        %v6810 = vsel %vm4350, %v6466, 0.0
        %6811 = vadd.xlane.f32.xlu0 %v6810
        %v6812 = vpop.xlane.xlu0 %6811
        %v6813 = vsel %vm4350, %v6468, 0.0
        %6814 = vadd.xlane.f32.xlu0 %v6813
        %v6815 = vpop.xlane.xlu0 %6814
        %v6816 = vsel %vm4350, %v6470, 0.0
        %6817 = vadd.xlane.f32.xlu0 %v6816
        %v6818 = vpop.xlane.xlu0 %6817
        %v6819 = vsel %vm4350, %v6472, 0.0
        %6820 = vadd.xlane.f32.xlu0 %v6819
        %v6821 = vpop.xlane.xlu0 %6820
        %v6822 = vsel %vm4350, %v6474, 0.0
        %6823 = vadd.xlane.f32.xlu0 %v6822
        %v6824 = vpop.xlane.xlu0 %6823
        %v6825 = vsel %vm4350, %v6476, 0.0
        %6826 = vadd.xlane.f32.xlu0 %v6825
        %v6827 = vpop.xlane.xlu0 %6826
        %v6828 = vsel %vm4350, %v6478, 0.0
        %6829 = vadd.xlane.f32.xlu0 %v6828
        %v6830 = vpop.xlane.xlu0 %6829
        %v6831 = vsel %vm4350, %v6480, 0.0
        %6832 = vadd.xlane.f32.xlu0 %v6831
        %v6833 = vpop.xlane.xlu0 %6832
        %v6834 = vsel %vm4350, %v6482, 0.0
        %6835 = vadd.xlane.f32.xlu0 %v6834
        %v6836 = vpop.xlane.xlu0 %6835
        %v6837 = vsel %vm4350, %v6484, 0.0
        %6838 = vadd.xlane.f32.xlu0 %v6837
        %v6839 = vpop.xlane.xlu0 %6838
        %v6840 = vsel %vm4350, %v6486, 0.0
        %6841 = vadd.xlane.f32.xlu0 %v6840
        %v6842 = vpop.xlane.xlu0 %6841
        %v6843 = vsel %vm4350, %v6488, 0.0
        %6844 = vadd.xlane.f32.xlu0 %v6843
        %v6845 = vpop.xlane.xlu0 %6844
        %v6846 = vsel %vm4350, %v6490, 0.0
        %6847 = vadd.xlane.f32.xlu0 %v6846
        %v6848 = vpop.xlane.xlu0 %6847
        %v6849 = vsel %vm4350, %v6492, 0.0
        %6850 = vadd.xlane.f32.xlu0 %v6849
        %v6851 = vpop.xlane.xlu0 %6850
        %v6852 = vsel %vm4350, %v6494, 0.0
        %6853 = vadd.xlane.f32.xlu0 %v6852
        %v6854 = vpop.xlane.xlu0 %6853
        %v6855 = vsel %vm4350, %v6496, 0.0
        %6856 = vadd.xlane.f32.xlu0 %v6855
        %v6857 = vpop.xlane.xlu0 %6856
        %v6858 = vsel %vm4350, %v6498, 0.0
        %6859 = vadd.xlane.f32.xlu0 %v6858
        %v6860 = vpop.xlane.xlu0 %6859
        %v6861 = vsel %vm4350, %v6500, 0.0
        %6862 = vadd.xlane.f32.xlu0 %v6861
        %v6863 = vpop.xlane.xlu0 %6862
        %v6864 = vsel %vm4350, %v6502, 0.0
        %6865 = vadd.xlane.f32.xlu0 %v6864
        %v6866 = vpop.xlane.xlu0 %6865
        %v6867 = vsel %vm4350, %v6504, 0.0
        %6868 = vadd.xlane.f32.xlu0 %v6867
        %v6869 = vpop.xlane.xlu0 %6868
        %v6870 = vsel %vm4350, %v6506, 0.0
        %6871 = vadd.xlane.f32.xlu0 %v6870
        %v6872 = vpop.xlane.xlu0 %6871
        %v6873 = vsel %vm4350, %v6508, 0.0
        %6874 = vadd.xlane.f32.xlu0 %v6873
        %v6875 = vpop.xlane.xlu0 %6874
        %v6876 = vsel %vm4350, %v6510, 0.0
        %6877 = vadd.xlane.f32.xlu0 %v6876
        %v6878 = vpop.xlane.xlu0 %6877
        %v6879 = vsel %vm4350, %v6512, 0.0
        %6880 = vadd.xlane.f32.xlu0 %v6879
        %v6881 = vpop.xlane.xlu0 %6880
        %v6882 = vsel %vm4350, %v6514, 0.0
        %6883 = vadd.xlane.f32.xlu0 %v6882
        %v6884 = vpop.xlane.xlu0 %6883
        %v6885 = vsel %vm4350, %v6516, 0.0
        %6886 = vadd.xlane.f32.xlu0 %v6885
        %v6887 = vpop.xlane.xlu0 %6886
        %v6888 = vsel %vm4350, %v6518, 0.0
        %6889 = vadd.xlane.f32.xlu0 %v6888
        %v6890 = vpop.xlane.xlu0 %6889
        %v6891 = vsel %vm4350, %v6520, 0.0
        %6892 = vadd.xlane.f32.xlu0 %v6891
        %v6893 = vpop.xlane.xlu0 %6892
        %v6894 = vsel %vm4350, %v6522, 0.0
        %6895 = vadd.xlane.f32.xlu0 %v6894
        %v6896 = vpop.xlane.xlu0 %6895
        %v6897 = vsel %vm4350, %v6524, 0.0
        %6898 = vadd.xlane.f32.xlu0 %v6897
        %v6899 = vpop.xlane.xlu0 %6898
        %v6900 = vsel %vm4350, %v6526, 0.0
        %6901 = vadd.xlane.f32.xlu0 %v6900
        %v6902 = vpop.xlane.xlu0 %6901
        %v6903 = vsel %vm4350, %v6528, 0.0
        %6904 = vadd.xlane.f32.xlu0 %v6903
        %v6905 = vpop.xlane.xlu0 %6904
        %v6906 = vsel %vm4350, %v6530, 0.0
        %6907 = vadd.xlane.f32.xlu0 %v6906
        %v6908 = vpop.xlane.xlu0 %6907
        %v6909 = vsel %vm4350, %v6532, 0.0
        %6910 = vadd.xlane.f32.xlu0 %v6909
        %v6911 = vpop.xlane.xlu0 %6910
        %v6912 = vsel %vm4350, %v6534, 0.0
        %6913 = vadd.xlane.f32.xlu0 %v6912
        %v6914 = vpop.xlane.xlu0 %6913
        %v6915 = vsel %vm4350, %v6536, 0.0
        %6916 = vadd.xlane.f32.xlu0 %v6915
        %v6917 = vpop.xlane.xlu0 %6916
        %v6918 = vsel %vm4350, %v6538, 0.0
        %6919 = vadd.xlane.f32.xlu0 %v6918
        %v6920 = vpop.xlane.xlu0 %6919
        %v6921 = vsel %vm4350, %v6540, 0.0
        %6922 = vadd.xlane.f32.xlu0 %v6921
        %v6923 = vpop.xlane.xlu0 %6922
        %v6924 = vsel %vm4350, %v6542, 0.0
        %6925 = vadd.xlane.f32.xlu0 %v6924
        %v6926 = vpop.xlane.xlu0 %6925
        %v6927 = vpack.c.bf16 %v6290, %v6288
        %v6928 = vpack.c.bf16 %v6294, %v6292
        %v6929 = vpack.c.bf16 %v6298, %v6296
        %v6930 = vpack.c.bf16 %v6302, %v6300
        %v6931 = vpack.c.bf16 %v6306, %v6304
        %v6932 = vpack.c.bf16 %v6310, %v6308
        %v6933 = vpack.c.bf16 %v6314, %v6312
        %v6934 = vpack.c.bf16 %v6318, %v6316
        %v6935 = vpack.c.bf16 %v6322, %v6320
        %v6936 = vpack.c.bf16 %v6326, %v6324
        %v6937 = vpack.c.bf16 %v6330, %v6328
        %v6938 = vpack.c.bf16 %v6334, %v6332
        %v6939 = vpack.c.bf16 %v6338, %v6336
        %v6940 = vpack.c.bf16 %v6342, %v6340
        %v6941 = vpack.c.bf16 %v6346, %v6344
        %v6942 = vpack.c.bf16 %v6350, %v6348
        %v6943 = vpack.c.bf16 %v6354, %v6352
        %v6944 = vpack.c.bf16 %v6358, %v6356
        %v6945 = vpack.c.bf16 %v6362, %v6360
        %v6946 = vpack.c.bf16 %v6366, %v6364
        %v6947 = vpack.c.bf16 %v6370, %v6368
        %v6948 = vpack.c.bf16 %v6374, %v6372
        %v6949 = vpack.c.bf16 %v6378, %v6376
        %v6950 = vpack.c.bf16 %v6382, %v6380
        %v6951 = vpack.c.bf16 %v6386, %v6384
        %v6952 = vpack.c.bf16 %v6390, %v6388
        %v6953 = vpack.c.bf16 %v6394, %v6392
        %v6954 = vpack.c.bf16 %v6398, %v6396
        %v6955 = vpack.c.bf16 %v6402, %v6400
        %v6956 = vpack.c.bf16 %v6406, %v6404
        %v6957 = vpack.c.bf16 %v6410, %v6408
        %v6958 = vpack.c.bf16 %v6414, %v6412
        %v6959 = vpack.c.bf16 %v6418, %v6416
        %v6960 = vpack.c.bf16 %v6422, %v6420
        %v6961 = vpack.c.bf16 %v6426, %v6424
        %v6962 = vpack.c.bf16 %v6430, %v6428
        %v6963 = vpack.c.bf16 %v6434, %v6432
        %v6964 = vpack.c.bf16 %v6438, %v6436
        %v6965 = vpack.c.bf16 %v6442, %v6440
        %v6966 = vpack.c.bf16 %v6446, %v6444
        %v6967 = vpack.c.bf16 %v6450, %v6448
        %v6968 = vpack.c.bf16 %v6454, %v6452
        %v6969 = vpack.c.bf16 %v6458, %v6456
        %v6970 = vpack.c.bf16 %v6462, %v6460
        %v6971 = vpack.c.bf16 %v6466, %v6464
        %v6972 = vpack.c.bf16 %v6470, %v6468
        %v6973 = vpack.c.bf16 %v6474, %v6472
        %v6974 = vpack.c.bf16 %v6478, %v6476
        %v6975 = vpack.c.bf16 %v6482, %v6480
        %v6976 = vpack.c.bf16 %v6486, %v6484
        %v6977 = vpack.c.bf16 %v6490, %v6488
        %v6978 = vpack.c.bf16 %v6494, %v6492
        %v6979 = vpack.c.bf16 %v6498, %v6496
        %v6980 = vpack.c.bf16 %v6502, %v6500
        %v6981 = vpack.c.bf16 %v6506, %v6504
        %v6982 = vpack.c.bf16 %v6510, %v6508
        %v6983 = vpack.c.bf16 %v6514, %v6512
        %v6984 = vpack.c.bf16 %v6518, %v6516
        %v6985 = vpack.c.bf16 %v6522, %v6520
        %v6986 = vpack.c.bf16 %v6526, %v6524
        %v6987 = vpack.c.bf16 %v6530, %v6528
        %v6988 = vpack.c.bf16 %v6534, %v6532
        %v6989 = vpack.c.bf16 %v6538, %v6536
        %v6990 = vpack.c.bf16 %v6542, %v6540
        %v6992 = vsel %vm4350, %v6927, 0
        %v6995 = vsel %vm4350, %v6928, 0
        %v6998 = vsel %vm4350, %v6929, 0
        %v7001 = vsel %vm4350, %v6930, 0
        %7003 = vmatprep.subr.bf16.mxu0 0
        %7004 = vmatpush1.bf16.msra.mxu0 %v4286
        %7005 = vmatprep.subr.bf16.mxu0 0
        %7006 = vmatpush1.bf16.msra.mxu0 %v4287
        %7007 = vmatprep.subr.bf16.mxu0 0
        %7008 = vmatpush1.bf16.msra.mxu0 %v4288
        %7009 = vmatprep.subr.bf16.mxu0 0
        %7010 = vmatpush1.bf16.msra.mxu0 %v4289
        %7011 = vmatprep.subr.bf16.mxu0 0
        %7012 = vmatpush1.bf16.msra.mxu0 0
        %7013 = vmatprep.subr.bf16.mxu0 0
        %7014 = vmatpush1.bf16.msra.mxu0 0
        %7015 = vmatprep.subr.bf16.mxu0 0
        %7016 = vmatpush1.bf16.msra.mxu0 0
        %7017 = vmatprep.subr.bf16.mxu0 0
        %7018 = vmatpush1.bf16.msra.mxu0 0
        %7019 = vmatprep.subr.bf16.mxu0 0
        %7020 = vmatpush1.bf16.msra.mxu0 0
        %7021 = vmatprep.subr.bf16.mxu0 0
        %7022 = vmatpush1.bf16.msra.mxu0 0
        %7023 = vmatprep.subr.bf16.mxu0 0
        %7024 = vmatpush1.bf16.msra.mxu0 0
        %7025 = vmatprep.subr.bf16.mxu0 0
        %7026 = vmatpush1.bf16.msra.mxu0 0
        %7027 = vmatprep.subr.bf16.mxu0 0
        %7028 = vmatpush1.bf16.msra.mxu0 0
        %7029 = vmatprep.subr.bf16.mxu0 0
        %7030 = vmatpush1.bf16.msra.mxu0 0
        %7031 = vmatprep.subr.bf16.mxu0 0
        %7032 = vmatpush1.bf16.msra.mxu0 0
        %7033 = vmatprep.subr.bf16.mxu0 0
        %7034 = vmatpush1.bf16.msra.mxu0 0
        %7035 = vmatprep.mubr.bf16.mxu0 0
        %7036 = vmatmul.mubr.bf16.gmra.mrb[0].mxu0 %v6992
        %v7037 = vpop.f32.mrb[0].mxu0
        %v7038 = vadd.f32 0.0, %v7037
        %v7039 = vpop.f32.mrb[0].mxu0
        %v7040 = vpop.f32.mrb[0].mxu0
        %v7041 = vadd.f32 0.0, %v7040
        %v7042 = vpop.f32.mrb[0].mxu0
        %7043 = vmatprep.mubr.bf16.mxu0 0
        %7044 = vmatmul.mubr.bf16.gmra.mrb[0].mxu0 %v6995
        %v7045 = vpop.f32.mrb[0].mxu0
        %v7046 = vadd.f32 0.0, %v7045
        %v7047 = vpop.f32.mrb[0].mxu0
        %v7048 = vpop.f32.mrb[0].mxu0
        %v7049 = vadd.f32 0.0, %v7048
        %v7050 = vpop.f32.mrb[0].mxu0
        %7051 = vmatprep.mubr.bf16.mxu0 0
        %7052 = vmatmul.mubr.bf16.gmra.mrb[0].mxu0 %v6998
        %v7053 = vpop.f32.mrb[0].mxu0
        %v7054 = vadd.f32 0.0, %v7053
        %v7055 = vpop.f32.mrb[0].mxu0
        %v7056 = vpop.f32.mrb[0].mxu0
        %v7057 = vadd.f32 0.0, %v7056
        %v7058 = vpop.f32.mrb[0].mxu0
        %7059 = vmatprep.mubr.bf16.mxu0 0
        %7060 = vmatmul.mubr.bf16.gmra.mrb[0].mxu0 %v7001
        %v7061 = vpop.f32.mrb[0].mxu0
        %v7062 = vadd.f32 0.0, %v7061
        %v7063 = vpop.f32.mrb[0].mxu0
        %v7064 = vpop.f32.mrb[0].mxu0
        %v7065 = vadd.f32 0.0, %v7064
        %v7066 = vpop.f32.mrb[0].mxu0
        %7067 = vdwg.mxu0
        %v7069 = vsel %vm4350, %v6931, 0
        %v7072 = vsel %vm4350, %v6932, 0
        %v7075 = vsel %vm4350, %v6933, 0
        %v7078 = vsel %vm4350, %v6934, 0
        %7080 = vmatprep.subr.bf16.mxu0 0
        %7081 = vmatpush1.bf16.msra.mxu0 %v4290
        %7082 = vmatprep.subr.bf16.mxu0 0
        %7083 = vmatpush1.bf16.msra.mxu0 %v4291
        %7084 = vmatprep.subr.bf16.mxu0 0
        %7085 = vmatpush1.bf16.msra.mxu0 %v4292
        %7086 = vmatprep.subr.bf16.mxu0 0
        %7087 = vmatpush1.bf16.msra.mxu0 %v4293
        %7088 = vmatprep.subr.bf16.mxu0 0
        %7089 = vmatpush1.bf16.msra.mxu0 0
        %7090 = vmatprep.subr.bf16.mxu0 0
        %7091 = vmatpush1.bf16.msra.mxu0 0
        %7092 = vmatprep.subr.bf16.mxu0 0
        %7093 = vmatpush1.bf16.msra.mxu0 0
        %7094 = vmatprep.subr.bf16.mxu0 0
        %7095 = vmatpush1.bf16.msra.mxu0 0
        %7096 = vmatprep.subr.bf16.mxu0 0
        %7097 = vmatpush1.bf16.msra.mxu0 0
        %7098 = vmatprep.subr.bf16.mxu0 0
        %7099 = vmatpush1.bf16.msra.mxu0 0
        %7100 = vmatprep.subr.bf16.mxu0 0
        %7101 = vmatpush1.bf16.msra.mxu0 0
        %7102 = vmatprep.subr.bf16.mxu0 0
        %7103 = vmatpush1.bf16.msra.mxu0 0
        %7104 = vmatprep.subr.bf16.mxu0 0
        %7105 = vmatpush1.bf16.msra.mxu0 0
        %7106 = vmatprep.subr.bf16.mxu0 0
        %7107 = vmatpush1.bf16.msra.mxu0 0
        %7108 = vmatprep.subr.bf16.mxu0 0
        %7109 = vmatpush1.bf16.msra.mxu0 0
        %7110 = vmatprep.subr.bf16.mxu0 0
        %7111 = vmatpush1.bf16.msra.mxu0 0
        %7112 = vmatprep.mubr.bf16.mxu0 0
        %7113 = vmatmul.mubr.bf16.gmra.mrb[0].mxu0 %v7069
        %v7114 = vpop.f32.mrb[0].mxu0
        %v7115 = vadd.f32 0.0, %v7114
        %v7116 = vpop.f32.mrb[0].mxu0
        %v7117 = vpop.f32.mrb[0].mxu0
        %v7118 = vadd.f32 0.0, %v7117
        %v7119 = vpop.f32.mrb[0].mxu0
        %7120 = vmatprep.mubr.bf16.mxu0 0
        %7121 = vmatmul.mubr.bf16.gmra.mrb[0].mxu0 %v7072
        %v7122 = vpop.f32.mrb[0].mxu0
        %v7123 = vadd.f32 0.0, %v7122
        %v7124 = vpop.f32.mrb[0].mxu0
        %v7125 = vpop.f32.mrb[0].mxu0
        %v7126 = vadd.f32 0.0, %v7125
        %v7127 = vpop.f32.mrb[0].mxu0
        %7128 = vmatprep.mubr.bf16.mxu0 0
        %7129 = vmatmul.mubr.bf16.gmra.mrb[0].mxu0 %v7075
        %v7130 = vpop.f32.mrb[0].mxu0
        %v7131 = vadd.f32 0.0, %v7130
        %v7132 = vpop.f32.mrb[0].mxu0
        %v7133 = vpop.f32.mrb[0].mxu0
        %v7134 = vadd.f32 0.0, %v7133
        %v7135 = vpop.f32.mrb[0].mxu0
        %7136 = vmatprep.mubr.bf16.mxu0 0
        %7137 = vmatmul.mubr.bf16.gmra.mrb[0].mxu0 %v7078
        %v7138 = vpop.f32.mrb[0].mxu0
        %v7139 = vadd.f32 0.0, %v7138
        %v7140 = vpop.f32.mrb[0].mxu0
        %v7141 = vpop.f32.mrb[0].mxu0
        %v7142 = vadd.f32 0.0, %v7141
        %v7143 = vpop.f32.mrb[0].mxu0
        %7144 = vdwg.mxu0
        %v7146 = vsel %vm4350, %v6935, 0
        %v7149 = vsel %vm4350, %v6936, 0
        %v7152 = vsel %vm4350, %v6937, 0
        %v7155 = vsel %vm4350, %v6938, 0
        %7157 = vmatprep.subr.bf16.mxu0 0
        %7158 = vmatpush1.bf16.msra.mxu0 %v4294
        %7159 = vmatprep.subr.bf16.mxu0 0
        %7160 = vmatpush1.bf16.msra.mxu0 %v4295
        %7161 = vmatprep.subr.bf16.mxu0 0
        %7162 = vmatpush1.bf16.msra.mxu0 %v4296
        %7163 = vmatprep.subr.bf16.mxu0 0
        %7164 = vmatpush1.bf16.msra.mxu0 %v4297
        %7165 = vmatprep.subr.bf16.mxu0 0
        %7166 = vmatpush1.bf16.msra.mxu0 0
        %7167 = vmatprep.subr.bf16.mxu0 0
        %7168 = vmatpush1.bf16.msra.mxu0 0
        %7169 = vmatprep.subr.bf16.mxu0 0
        %7170 = vmatpush1.bf16.msra.mxu0 0
        %7171 = vmatprep.subr.bf16.mxu0 0
        %7172 = vmatpush1.bf16.msra.mxu0 0
        %7173 = vmatprep.subr.bf16.mxu0 0
        %7174 = vmatpush1.bf16.msra.mxu0 0
        %7175 = vmatprep.subr.bf16.mxu0 0
        %7176 = vmatpush1.bf16.msra.mxu0 0
        %7177 = vmatprep.subr.bf16.mxu0 0
        %7178 = vmatpush1.bf16.msra.mxu0 0
        %7179 = vmatprep.subr.bf16.mxu0 0
        %7180 = vmatpush1.bf16.msra.mxu0 0
        %7181 = vmatprep.subr.bf16.mxu0 0
        %7182 = vmatpush1.bf16.msra.mxu0 0
        %7183 = vmatprep.subr.bf16.mxu0 0
        %7184 = vmatpush1.bf16.msra.mxu0 0
        %7185 = vmatprep.subr.bf16.mxu0 0
        %7186 = vmatpush1.bf16.msra.mxu0 0
        %7187 = vmatprep.subr.bf16.mxu0 0
        %7188 = vmatpush1.bf16.msra.mxu0 0
        %7189 = vmatprep.mubr.bf16.mxu0 0
        %7190 = vmatmul.mubr.bf16.gmra.mrb[0].mxu0 %v7146
        %v7191 = vpop.f32.mrb[0].mxu0
        %v7192 = vadd.f32 0.0, %v7191
        %v7193 = vpop.f32.mrb[0].mxu0
        %v7194 = vpop.f32.mrb[0].mxu0
        %v7195 = vadd.f32 0.0, %v7194
        %v7196 = vpop.f32.mrb[0].mxu0
        %7197 = vmatprep.mubr.bf16.mxu0 0
        %7198 = vmatmul.mubr.bf16.gmra.mrb[0].mxu0 %v7149
        %v7199 = vpop.f32.mrb[0].mxu0
        %v7200 = vadd.f32 0.0, %v7199
        %v7201 = vpop.f32.mrb[0].mxu0
        %v7202 = vpop.f32.mrb[0].mxu0
        %v7203 = vadd.f32 0.0, %v7202
        %v7204 = vpop.f32.mrb[0].mxu0
        %7205 = vmatprep.mubr.bf16.mxu0 0
        %7206 = vmatmul.mubr.bf16.gmra.mrb[0].mxu0 %v7152
        %v7207 = vpop.f32.mrb[0].mxu0
        %v7208 = vadd.f32 0.0, %v7207
        %v7209 = vpop.f32.mrb[0].mxu0
        %v7210 = vpop.f32.mrb[0].mxu0
        %v7211 = vadd.f32 0.0, %v7210
        %v7212 = vpop.f32.mrb[0].mxu0
        %7213 = vmatprep.mubr.bf16.mxu0 0
        %7214 = vmatmul.mubr.bf16.gmra.mrb[0].mxu0 %v7155
        %v7215 = vpop.f32.mrb[0].mxu0
        %v7216 = vadd.f32 0.0, %v7215
        %v7217 = vpop.f32.mrb[0].mxu0
        %v7218 = vpop.f32.mrb[0].mxu0
        %v7219 = vadd.f32 0.0, %v7218
        %v7220 = vpop.f32.mrb[0].mxu0
        %7221 = vdwg.mxu0
        %v7223 = vsel %vm4350, %v6939, 0
        %v7226 = vsel %vm4350, %v6940, 0
        %v7229 = vsel %vm4350, %v6941, 0
        %v7232 = vsel %vm4350, %v6942, 0
        %7234 = vmatprep.subr.bf16.mxu0 0
        %7235 = vmatpush1.bf16.msra.mxu0 %v4298
        %7236 = vmatprep.subr.bf16.mxu0 0
        %7237 = vmatpush1.bf16.msra.mxu0 %v4299
        %7238 = vmatprep.subr.bf16.mxu0 0
        %7239 = vmatpush1.bf16.msra.mxu0 %v4300
        %7240 = vmatprep.subr.bf16.mxu0 0
        %7241 = vmatpush1.bf16.msra.mxu0 %v4301
        %7242 = vmatprep.subr.bf16.mxu0 0
        %7243 = vmatpush1.bf16.msra.mxu0 0
        %7244 = vmatprep.subr.bf16.mxu0 0
        %7245 = vmatpush1.bf16.msra.mxu0 0
        %7246 = vmatprep.subr.bf16.mxu0 0
        %7247 = vmatpush1.bf16.msra.mxu0 0
        %7248 = vmatprep.subr.bf16.mxu0 0
        %7249 = vmatpush1.bf16.msra.mxu0 0
        %7250 = vmatprep.subr.bf16.mxu0 0
        %7251 = vmatpush1.bf16.msra.mxu0 0
        %7252 = vmatprep.subr.bf16.mxu0 0
        %7253 = vmatpush1.bf16.msra.mxu0 0
        %7254 = vmatprep.subr.bf16.mxu0 0
        %7255 = vmatpush1.bf16.msra.mxu0 0
        %7256 = vmatprep.subr.bf16.mxu0 0
        %7257 = vmatpush1.bf16.msra.mxu0 0
        %7258 = vmatprep.subr.bf16.mxu0 0
        %7259 = vmatpush1.bf16.msra.mxu0 0
        %7260 = vmatprep.subr.bf16.mxu0 0
        %7261 = vmatpush1.bf16.msra.mxu0 0
        %7262 = vmatprep.subr.bf16.mxu0 0
        %7263 = vmatpush1.bf16.msra.mxu0 0
        %7264 = vmatprep.subr.bf16.mxu0 0
        %7265 = vmatpush1.bf16.msra.mxu0 0
        %7266 = vmatprep.mubr.bf16.mxu0 0
        %7267 = vmatmul.mubr.bf16.gmra.mrb[0].mxu0 %v7223
        %v7268 = vpop.f32.mrb[0].mxu0
        %v7269 = vadd.f32 0.0, %v7268
        %v7270 = vpop.f32.mrb[0].mxu0
        %v7271 = vpop.f32.mrb[0].mxu0
        %v7272 = vadd.f32 0.0, %v7271
        %v7273 = vpop.f32.mrb[0].mxu0
        %7274 = vmatprep.mubr.bf16.mxu0 0
        %7275 = vmatmul.mubr.bf16.gmra.mrb[0].mxu0 %v7226
        %v7276 = vpop.f32.mrb[0].mxu0
        %v7277 = vadd.f32 0.0, %v7276
        %v7278 = vpop.f32.mrb[0].mxu0
        %v7279 = vpop.f32.mrb[0].mxu0
        %v7280 = vadd.f32 0.0, %v7279
        %v7281 = vpop.f32.mrb[0].mxu0
        %7282 = vmatprep.mubr.bf16.mxu0 0
        %7283 = vmatmul.mubr.bf16.gmra.mrb[0].mxu0 %v7229
        %v7284 = vpop.f32.mrb[0].mxu0
        %v7285 = vadd.f32 0.0, %v7284
        %v7286 = vpop.f32.mrb[0].mxu0
        %v7287 = vpop.f32.mrb[0].mxu0
        %v7288 = vadd.f32 0.0, %v7287
        %v7289 = vpop.f32.mrb[0].mxu0
        %7290 = vmatprep.mubr.bf16.mxu0 0
        %7291 = vmatmul.mubr.bf16.gmra.mrb[0].mxu0 %v7232
        %v7292 = vpop.f32.mrb[0].mxu0
        %v7293 = vadd.f32 0.0, %v7292
        %v7294 = vpop.f32.mrb[0].mxu0
        %v7295 = vpop.f32.mrb[0].mxu0
        %v7296 = vadd.f32 0.0, %v7295
        %v7297 = vpop.f32.mrb[0].mxu0
        %7298 = vdwg.mxu0
        %v7300 = vsel %vm4350, %v6943, 0
        %v7303 = vsel %vm4350, %v6944, 0
        %v7306 = vsel %vm4350, %v6945, 0
        %v7309 = vsel %vm4350, %v6946, 0
        %7311 = vmatprep.subr.bf16.mxu0 0
        %7312 = vmatpush1.bf16.msra.mxu0 %v4302
        %7313 = vmatprep.subr.bf16.mxu0 0
        %7314 = vmatpush1.bf16.msra.mxu0 %v4303
        %7315 = vmatprep.subr.bf16.mxu0 0
        %7316 = vmatpush1.bf16.msra.mxu0 %v4304
        %7317 = vmatprep.subr.bf16.mxu0 0
        %7318 = vmatpush1.bf16.msra.mxu0 %v4305
        %7319 = vmatprep.subr.bf16.mxu0 0
        %7320 = vmatpush1.bf16.msra.mxu0 0
        %7321 = vmatprep.subr.bf16.mxu0 0
        %7322 = vmatpush1.bf16.msra.mxu0 0
        %7323 = vmatprep.subr.bf16.mxu0 0
        %7324 = vmatpush1.bf16.msra.mxu0 0
        %7325 = vmatprep.subr.bf16.mxu0 0
        %7326 = vmatpush1.bf16.msra.mxu0 0
        %7327 = vmatprep.subr.bf16.mxu0 0
        %7328 = vmatpush1.bf16.msra.mxu0 0
        %7329 = vmatprep.subr.bf16.mxu0 0
        %7330 = vmatpush1.bf16.msra.mxu0 0
        %7331 = vmatprep.subr.bf16.mxu0 0
        %7332 = vmatpush1.bf16.msra.mxu0 0
        %7333 = vmatprep.subr.bf16.mxu0 0
        %7334 = vmatpush1.bf16.msra.mxu0 0
        %7335 = vmatprep.subr.bf16.mxu0 0
        %7336 = vmatpush1.bf16.msra.mxu0 0
        %7337 = vmatprep.subr.bf16.mxu0 0
        %7338 = vmatpush1.bf16.msra.mxu0 0
        %7339 = vmatprep.subr.bf16.mxu0 0
        %7340 = vmatpush1.bf16.msra.mxu0 0
        %7341 = vmatprep.subr.bf16.mxu0 0
        %7342 = vmatpush1.bf16.msra.mxu0 0
        %7343 = vmatprep.mubr.bf16.mxu0 0
        %7344 = vmatmul.mubr.bf16.gmra.mrb[0].mxu0 %v7300
        %v7345 = vpop.f32.mrb[0].mxu0
        %v7346 = vadd.f32 0.0, %v7345
        %v7347 = vpop.f32.mrb[0].mxu0
        %v7348 = vpop.f32.mrb[0].mxu0
        %v7349 = vadd.f32 0.0, %v7348
        %v7350 = vpop.f32.mrb[0].mxu0
        %7351 = vmatprep.mubr.bf16.mxu0 0
        %7352 = vmatmul.mubr.bf16.gmra.mrb[0].mxu0 %v7303
        %v7353 = vpop.f32.mrb[0].mxu0
        %v7354 = vadd.f32 0.0, %v7353
        %v7355 = vpop.f32.mrb[0].mxu0
        %v7356 = vpop.f32.mrb[0].mxu0
        %v7357 = vadd.f32 0.0, %v7356
        %v7358 = vpop.f32.mrb[0].mxu0
        %7359 = vmatprep.mubr.bf16.mxu0 0
        %7360 = vmatmul.mubr.bf16.gmra.mrb[0].mxu0 %v7306
        %v7361 = vpop.f32.mrb[0].mxu0
        %v7362 = vadd.f32 0.0, %v7361
        %v7363 = vpop.f32.mrb[0].mxu0
        %v7364 = vpop.f32.mrb[0].mxu0
        %v7365 = vadd.f32 0.0, %v7364
        %v7366 = vpop.f32.mrb[0].mxu0
        %7367 = vmatprep.mubr.bf16.mxu0 0
        %7368 = vmatmul.mubr.bf16.gmra.mrb[0].mxu0 %v7309
        %v7369 = vpop.f32.mrb[0].mxu0
        %v7370 = vadd.f32 0.0, %v7369
        %v7371 = vpop.f32.mrb[0].mxu0
        %v7372 = vpop.f32.mrb[0].mxu0
        %v7373 = vadd.f32 0.0, %v7372
        %v7374 = vpop.f32.mrb[0].mxu0
        %7375 = vdwg.mxu0
        %v7377 = vsel %vm4350, %v6947, 0
        %v7380 = vsel %vm4350, %v6948, 0
        %v7383 = vsel %vm4350, %v6949, 0
        %v7386 = vsel %vm4350, %v6950, 0
        %7388 = vmatprep.subr.bf16.mxu0 0
        %7389 = vmatpush1.bf16.msra.mxu0 %v4306
        %7390 = vmatprep.subr.bf16.mxu0 0
        %7391 = vmatpush1.bf16.msra.mxu0 %v4307
        %7392 = vmatprep.subr.bf16.mxu0 0
        %7393 = vmatpush1.bf16.msra.mxu0 %v4308
        %7394 = vmatprep.subr.bf16.mxu0 0
        %7395 = vmatpush1.bf16.msra.mxu0 %v4309
        %7396 = vmatprep.subr.bf16.mxu0 0
        %7397 = vmatpush1.bf16.msra.mxu0 0
        %7398 = vmatprep.subr.bf16.mxu0 0
        %7399 = vmatpush1.bf16.msra.mxu0 0
        %7400 = vmatprep.subr.bf16.mxu0 0
        %7401 = vmatpush1.bf16.msra.mxu0 0
        %7402 = vmatprep.subr.bf16.mxu0 0
        %7403 = vmatpush1.bf16.msra.mxu0 0
        %7404 = vmatprep.subr.bf16.mxu0 0
        %7405 = vmatpush1.bf16.msra.mxu0 0
        %7406 = vmatprep.subr.bf16.mxu0 0
        %7407 = vmatpush1.bf16.msra.mxu0 0
        %7408 = vmatprep.subr.bf16.mxu0 0
        %7409 = vmatpush1.bf16.msra.mxu0 0
        %7410 = vmatprep.subr.bf16.mxu0 0
        %7411 = vmatpush1.bf16.msra.mxu0 0
        %7412 = vmatprep.subr.bf16.mxu0 0
        %7413 = vmatpush1.bf16.msra.mxu0 0
        %7414 = vmatprep.subr.bf16.mxu0 0
        %7415 = vmatpush1.bf16.msra.mxu0 0
        %7416 = vmatprep.subr.bf16.mxu0 0
        %7417 = vmatpush1.bf16.msra.mxu0 0
        %7418 = vmatprep.subr.bf16.mxu0 0
        %7419 = vmatpush1.bf16.msra.mxu0 0
        %7420 = vmatprep.mubr.bf16.mxu0 0
        %7421 = vmatmul.mubr.bf16.gmra.mrb[0].mxu0 %v7377
        %v7422 = vpop.f32.mrb[0].mxu0
        %v7423 = vadd.f32 0.0, %v7422
        %v7424 = vpop.f32.mrb[0].mxu0
        %v7425 = vpop.f32.mrb[0].mxu0
        %v7426 = vadd.f32 0.0, %v7425
        %v7427 = vpop.f32.mrb[0].mxu0
        %7428 = vmatprep.mubr.bf16.mxu0 0
        %7429 = vmatmul.mubr.bf16.gmra.mrb[0].mxu0 %v7380
        %v7430 = vpop.f32.mrb[0].mxu0
        %v7431 = vadd.f32 0.0, %v7430
        %v7432 = vpop.f32.mrb[0].mxu0
        %v7433 = vpop.f32.mrb[0].mxu0
        %v7434 = vadd.f32 0.0, %v7433
        %v7435 = vpop.f32.mrb[0].mxu0
        %7436 = vmatprep.mubr.bf16.mxu0 0
        %7437 = vmatmul.mubr.bf16.gmra.mrb[0].mxu0 %v7383
        %v7438 = vpop.f32.mrb[0].mxu0
        %v7439 = vadd.f32 0.0, %v7438
        %v7440 = vpop.f32.mrb[0].mxu0
        %v7441 = vpop.f32.mrb[0].mxu0
        %v7442 = vadd.f32 0.0, %v7441
        %v7443 = vpop.f32.mrb[0].mxu0
        %7444 = vmatprep.mubr.bf16.mxu0 0
        %7445 = vmatmul.mubr.bf16.gmra.mrb[0].mxu0 %v7386
        %v7446 = vpop.f32.mrb[0].mxu0
        %v7447 = vadd.f32 0.0, %v7446
        %v7448 = vpop.f32.mrb[0].mxu0
        %v7449 = vpop.f32.mrb[0].mxu0
        %v7450 = vadd.f32 0.0, %v7449
        %v7451 = vpop.f32.mrb[0].mxu0
        %7452 = vdwg.mxu0
        %v7454 = vsel %vm4350, %v6951, 0
        %v7457 = vsel %vm4350, %v6952, 0
        %v7460 = vsel %vm4350, %v6953, 0
        %v7463 = vsel %vm4350, %v6954, 0
        %7465 = vmatprep.subr.bf16.mxu0 0
        %7466 = vmatpush1.bf16.msra.mxu0 %v4310
        %7467 = vmatprep.subr.bf16.mxu0 0
        %7468 = vmatpush1.bf16.msra.mxu0 %v4311
        %7469 = vmatprep.subr.bf16.mxu0 0
        %7470 = vmatpush1.bf16.msra.mxu0 %v4312
        %7471 = vmatprep.subr.bf16.mxu0 0
        %7472 = vmatpush1.bf16.msra.mxu0 %v4313
        %7473 = vmatprep.subr.bf16.mxu0 0
        %7474 = vmatpush1.bf16.msra.mxu0 0
        %7475 = vmatprep.subr.bf16.mxu0 0
        %7476 = vmatpush1.bf16.msra.mxu0 0
        %7477 = vmatprep.subr.bf16.mxu0 0
        %7478 = vmatpush1.bf16.msra.mxu0 0
        %7479 = vmatprep.subr.bf16.mxu0 0
        %7480 = vmatpush1.bf16.msra.mxu0 0
        %7481 = vmatprep.subr.bf16.mxu0 0
        %7482 = vmatpush1.bf16.msra.mxu0 0
        %7483 = vmatprep.subr.bf16.mxu0 0
        %7484 = vmatpush1.bf16.msra.mxu0 0
        %7485 = vmatprep.subr.bf16.mxu0 0
        %7486 = vmatpush1.bf16.msra.mxu0 0
        %7487 = vmatprep.subr.bf16.mxu0 0
        %7488 = vmatpush1.bf16.msra.mxu0 0
        %7489 = vmatprep.subr.bf16.mxu0 0
        %7490 = vmatpush1.bf16.msra.mxu0 0
        %7491 = vmatprep.subr.bf16.mxu0 0
        %7492 = vmatpush1.bf16.msra.mxu0 0
        %7493 = vmatprep.subr.bf16.mxu0 0
        %7494 = vmatpush1.bf16.msra.mxu0 0
        %7495 = vmatprep.subr.bf16.mxu0 0
        %7496 = vmatpush1.bf16.msra.mxu0 0
        %7497 = vmatprep.mubr.bf16.mxu0 0
        %7498 = vmatmul.mubr.bf16.gmra.mrb[0].mxu0 %v7454
        %v7499 = vpop.f32.mrb[0].mxu0
        %v7500 = vadd.f32 0.0, %v7499
        %v7501 = vpop.f32.mrb[0].mxu0
        %v7502 = vpop.f32.mrb[0].mxu0
        %v7503 = vadd.f32 0.0, %v7502
        %v7504 = vpop.f32.mrb[0].mxu0
        %7505 = vmatprep.mubr.bf16.mxu0 0
        %7506 = vmatmul.mubr.bf16.gmra.mrb[0].mxu0 %v7457
        %v7507 = vpop.f32.mrb[0].mxu0
        %v7508 = vadd.f32 0.0, %v7507
        %v7509 = vpop.f32.mrb[0].mxu0
        %v7510 = vpop.f32.mrb[0].mxu0
        %v7511 = vadd.f32 0.0, %v7510
        %v7512 = vpop.f32.mrb[0].mxu0
        %7513 = vmatprep.mubr.bf16.mxu0 0
        %7514 = vmatmul.mubr.bf16.gmra.mrb[0].mxu0 %v7460
        %v7515 = vpop.f32.mrb[0].mxu0
        %v7516 = vadd.f32 0.0, %v7515
        %v7517 = vpop.f32.mrb[0].mxu0
        %v7518 = vpop.f32.mrb[0].mxu0
        %v7519 = vadd.f32 0.0, %v7518
        %v7520 = vpop.f32.mrb[0].mxu0
        %7521 = vmatprep.mubr.bf16.mxu0 0
        %7522 = vmatmul.mubr.bf16.gmra.mrb[0].mxu0 %v7463
        %v7523 = vpop.f32.mrb[0].mxu0
        %v7524 = vadd.f32 0.0, %v7523
        %v7525 = vpop.f32.mrb[0].mxu0
        %v7526 = vpop.f32.mrb[0].mxu0
        %v7527 = vadd.f32 0.0, %v7526
        %v7528 = vpop.f32.mrb[0].mxu0
        %7529 = vdwg.mxu0
        %v7531 = vsel %vm4350, %v6955, 0
        %v7534 = vsel %vm4350, %v6956, 0
        %v7537 = vsel %vm4350, %v6957, 0
        %v7540 = vsel %vm4350, %v6958, 0
        %7542 = vmatprep.subr.bf16.mxu0 0
        %7543 = vmatpush1.bf16.msra.mxu0 %v4314
        %7544 = vmatprep.subr.bf16.mxu0 0
        %7545 = vmatpush1.bf16.msra.mxu0 %v4315
        %7546 = vmatprep.subr.bf16.mxu0 0
        %7547 = vmatpush1.bf16.msra.mxu0 %v4316
        %7548 = vmatprep.subr.bf16.mxu0 0
        %7549 = vmatpush1.bf16.msra.mxu0 %v4317
        %7550 = vmatprep.subr.bf16.mxu0 0
        %7551 = vmatpush1.bf16.msra.mxu0 0
        %7552 = vmatprep.subr.bf16.mxu0 0
        %7553 = vmatpush1.bf16.msra.mxu0 0
        %7554 = vmatprep.subr.bf16.mxu0 0
        %7555 = vmatpush1.bf16.msra.mxu0 0
        %7556 = vmatprep.subr.bf16.mxu0 0
        %7557 = vmatpush1.bf16.msra.mxu0 0
        %7558 = vmatprep.subr.bf16.mxu0 0
        %7559 = vmatpush1.bf16.msra.mxu0 0
        %7560 = vmatprep.subr.bf16.mxu0 0
        %7561 = vmatpush1.bf16.msra.mxu0 0
        %7562 = vmatprep.subr.bf16.mxu0 0
        %7563 = vmatpush1.bf16.msra.mxu0 0
        %7564 = vmatprep.subr.bf16.mxu0 0
        %7565 = vmatpush1.bf16.msra.mxu0 0
        %7566 = vmatprep.subr.bf16.mxu0 0
        %7567 = vmatpush1.bf16.msra.mxu0 0
        %7568 = vmatprep.subr.bf16.mxu0 0
        %7569 = vmatpush1.bf16.msra.mxu0 0
        %7570 = vmatprep.subr.bf16.mxu0 0
        %7571 = vmatpush1.bf16.msra.mxu0 0
        %7572 = vmatprep.subr.bf16.mxu0 0
        %7573 = vmatpush1.bf16.msra.mxu0 0
        %7574 = vmatprep.mubr.bf16.mxu0 0
        %7575 = vmatmul.mubr.bf16.gmra.mrb[0].mxu0 %v7531
        %v7576 = vpop.f32.mrb[0].mxu0
        %v7577 = vadd.f32 0.0, %v7576
        %v7578 = vpop.f32.mrb[0].mxu0
        %v7579 = vpop.f32.mrb[0].mxu0
        %v7580 = vadd.f32 0.0, %v7579
        %v7581 = vpop.f32.mrb[0].mxu0
        %7582 = vmatprep.mubr.bf16.mxu0 0
        %7583 = vmatmul.mubr.bf16.gmra.mrb[0].mxu0 %v7534
        %v7584 = vpop.f32.mrb[0].mxu0
        %v7585 = vadd.f32 0.0, %v7584
        %v7586 = vpop.f32.mrb[0].mxu0
        %v7587 = vpop.f32.mrb[0].mxu0
        %v7588 = vadd.f32 0.0, %v7587
        %v7589 = vpop.f32.mrb[0].mxu0
        %7590 = vmatprep.mubr.bf16.mxu0 0
        %7591 = vmatmul.mubr.bf16.gmra.mrb[0].mxu0 %v7537
        %v7592 = vpop.f32.mrb[0].mxu0
        %v7593 = vadd.f32 0.0, %v7592
        %v7594 = vpop.f32.mrb[0].mxu0
        %v7595 = vpop.f32.mrb[0].mxu0
        %v7596 = vadd.f32 0.0, %v7595
        %v7597 = vpop.f32.mrb[0].mxu0
        %7598 = vmatprep.mubr.bf16.mxu0 0
        %7599 = vmatmul.mubr.bf16.gmra.mrb[0].mxu0 %v7540
        %v7600 = vpop.f32.mrb[0].mxu0
        %v7601 = vadd.f32 0.0, %v7600
        %v7602 = vpop.f32.mrb[0].mxu0
        %v7603 = vpop.f32.mrb[0].mxu0
        %v7604 = vadd.f32 0.0, %v7603
        %v7605 = vpop.f32.mrb[0].mxu0
        %7606 = vdwg.mxu0
        %v7608 = vsel %vm4350, %v6959, 0
        %v7611 = vsel %vm4350, %v6960, 0
        %v7614 = vsel %vm4350, %v6961, 0
        %v7617 = vsel %vm4350, %v6962, 0
        %7619 = vmatprep.subr.bf16.mxu0 0
        %7620 = vmatpush1.bf16.msra.mxu0 %v4318
        %7621 = vmatprep.subr.bf16.mxu0 0
        %7622 = vmatpush1.bf16.msra.mxu0 %v4319
        %7623 = vmatprep.subr.bf16.mxu0 0
        %7624 = vmatpush1.bf16.msra.mxu0 %v4320
        %7625 = vmatprep.subr.bf16.mxu0 0
        %7626 = vmatpush1.bf16.msra.mxu0 %v4321
        %7627 = vmatprep.subr.bf16.mxu0 0
        %7628 = vmatpush1.bf16.msra.mxu0 0
        %7629 = vmatprep.subr.bf16.mxu0 0
        %7630 = vmatpush1.bf16.msra.mxu0 0
        %7631 = vmatprep.subr.bf16.mxu0 0
        %7632 = vmatpush1.bf16.msra.mxu0 0
        %7633 = vmatprep.subr.bf16.mxu0 0
        %7634 = vmatpush1.bf16.msra.mxu0 0
        %7635 = vmatprep.subr.bf16.mxu0 0
        %7636 = vmatpush1.bf16.msra.mxu0 0
        %7637 = vmatprep.subr.bf16.mxu0 0
        %7638 = vmatpush1.bf16.msra.mxu0 0
        %7639 = vmatprep.subr.bf16.mxu0 0
        %7640 = vmatpush1.bf16.msra.mxu0 0
        %7641 = vmatprep.subr.bf16.mxu0 0
        %7642 = vmatpush1.bf16.msra.mxu0 0
        %7643 = vmatprep.subr.bf16.mxu0 0
        %7644 = vmatpush1.bf16.msra.mxu0 0
        %7645 = vmatprep.subr.bf16.mxu0 0
        %7646 = vmatpush1.bf16.msra.mxu0 0
        %7647 = vmatprep.subr.bf16.mxu0 0
        %7648 = vmatpush1.bf16.msra.mxu0 0
        %7649 = vmatprep.subr.bf16.mxu0 0
        %7650 = vmatpush1.bf16.msra.mxu0 0
        %7651 = vmatprep.mubr.bf16.mxu0 0
        %7652 = vmatmul.mubr.bf16.gmra.mrb[0].mxu0 %v7608
        %v7653 = vpop.f32.mrb[0].mxu0
        %v7654 = vadd.f32 0.0, %v7653
        %v7655 = vpop.f32.mrb[0].mxu0
        %v7656 = vpop.f32.mrb[0].mxu0
        %v7657 = vadd.f32 0.0, %v7656
        %v7658 = vpop.f32.mrb[0].mxu0
        %7659 = vmatprep.mubr.bf16.mxu0 0
        %7660 = vmatmul.mubr.bf16.gmra.mrb[0].mxu0 %v7611
        %v7661 = vpop.f32.mrb[0].mxu0
        %v7662 = vadd.f32 0.0, %v7661
        %v7663 = vpop.f32.mrb[0].mxu0
        %v7664 = vpop.f32.mrb[0].mxu0
        %v7665 = vadd.f32 0.0, %v7664
        %v7666 = vpop.f32.mrb[0].mxu0
        %7667 = vmatprep.mubr.bf16.mxu0 0
        %7668 = vmatmul.mubr.bf16.gmra.mrb[0].mxu0 %v7614
        %v7669 = vpop.f32.mrb[0].mxu0
        %v7670 = vadd.f32 0.0, %v7669
        %v7671 = vpop.f32.mrb[0].mxu0
        %v7672 = vpop.f32.mrb[0].mxu0
        %v7673 = vadd.f32 0.0, %v7672
        %v7674 = vpop.f32.mrb[0].mxu0
        %7675 = vmatprep.mubr.bf16.mxu0 0
        %7676 = vmatmul.mubr.bf16.gmra.mrb[0].mxu0 %v7617
        %v7677 = vpop.f32.mrb[0].mxu0
        %v7678 = vadd.f32 0.0, %v7677
        %v7679 = vpop.f32.mrb[0].mxu0
        %v7680 = vpop.f32.mrb[0].mxu0
        %v7681 = vadd.f32 0.0, %v7680
        %v7682 = vpop.f32.mrb[0].mxu0
        %7683 = vdwg.mxu0
        %v7685 = vsel %vm4350, %v6963, 0
        %v7688 = vsel %vm4350, %v6964, 0
        %v7691 = vsel %vm4350, %v6965, 0
        %v7694 = vsel %vm4350, %v6966, 0
        %7696 = vmatprep.subr.bf16.mxu0 0
        %7697 = vmatpush1.bf16.msra.mxu0 %v4322
        %7698 = vmatprep.subr.bf16.mxu0 0
        %7699 = vmatpush1.bf16.msra.mxu0 %v4323
        %7700 = vmatprep.subr.bf16.mxu0 0
        %7701 = vmatpush1.bf16.msra.mxu0 %v4324
        %7702 = vmatprep.subr.bf16.mxu0 0
        %7703 = vmatpush1.bf16.msra.mxu0 %v4325
        %7704 = vmatprep.subr.bf16.mxu0 0
        %7705 = vmatpush1.bf16.msra.mxu0 0
        %7706 = vmatprep.subr.bf16.mxu0 0
        %7707 = vmatpush1.bf16.msra.mxu0 0
        %7708 = vmatprep.subr.bf16.mxu0 0
        %7709 = vmatpush1.bf16.msra.mxu0 0
        %7710 = vmatprep.subr.bf16.mxu0 0
        %7711 = vmatpush1.bf16.msra.mxu0 0
        %7712 = vmatprep.subr.bf16.mxu0 0
        %7713 = vmatpush1.bf16.msra.mxu0 0
        %7714 = vmatprep.subr.bf16.mxu0 0
        %7715 = vmatpush1.bf16.msra.mxu0 0
        %7716 = vmatprep.subr.bf16.mxu0 0
        %7717 = vmatpush1.bf16.msra.mxu0 0
        %7718 = vmatprep.subr.bf16.mxu0 0
        %7719 = vmatpush1.bf16.msra.mxu0 0
        %7720 = vmatprep.subr.bf16.mxu0 0
        %7721 = vmatpush1.bf16.msra.mxu0 0
        %7722 = vmatprep.subr.bf16.mxu0 0
        %7723 = vmatpush1.bf16.msra.mxu0 0
        %7724 = vmatprep.subr.bf16.mxu0 0
        %7725 = vmatpush1.bf16.msra.mxu0 0
        %7726 = vmatprep.subr.bf16.mxu0 0
        %7727 = vmatpush1.bf16.msra.mxu0 0
        %7728 = vmatprep.mubr.bf16.mxu0 0
        %7729 = vmatmul.mubr.bf16.gmra.mrb[0].mxu0 %v7685
        %v7730 = vpop.f32.mrb[0].mxu0
        %v7731 = vadd.f32 0.0, %v7730
        %v7732 = vpop.f32.mrb[0].mxu0
        %v7733 = vpop.f32.mrb[0].mxu0
        %v7734 = vadd.f32 0.0, %v7733
        %v7735 = vpop.f32.mrb[0].mxu0
        %7736 = vmatprep.mubr.bf16.mxu0 0
        %7737 = vmatmul.mubr.bf16.gmra.mrb[0].mxu0 %v7688
        %v7738 = vpop.f32.mrb[0].mxu0
        %v7739 = vadd.f32 0.0, %v7738
        %v7740 = vpop.f32.mrb[0].mxu0
        %v7741 = vpop.f32.mrb[0].mxu0
        %v7742 = vadd.f32 0.0, %v7741
        %v7743 = vpop.f32.mrb[0].mxu0
        %7744 = vmatprep.mubr.bf16.mxu0 0
        %7745 = vmatmul.mubr.bf16.gmra.mrb[0].mxu0 %v7691
        %v7746 = vpop.f32.mrb[0].mxu0
        %v7747 = vadd.f32 0.0, %v7746
        %v7748 = vpop.f32.mrb[0].mxu0
        %v7749 = vpop.f32.mrb[0].mxu0
        %v7750 = vadd.f32 0.0, %v7749
        %v7751 = vpop.f32.mrb[0].mxu0
        %7752 = vmatprep.mubr.bf16.mxu0 0
        %7753 = vmatmul.mubr.bf16.gmra.mrb[0].mxu0 %v7694
        %v7754 = vpop.f32.mrb[0].mxu0
        %v7755 = vadd.f32 0.0, %v7754
        %v7756 = vpop.f32.mrb[0].mxu0
        %v7757 = vpop.f32.mrb[0].mxu0
        %v7758 = vadd.f32 0.0, %v7757
        %v7759 = vpop.f32.mrb[0].mxu0
        %7760 = vdwg.mxu0
        %v7762 = vsel %vm4350, %v6967, 0
        %v7765 = vsel %vm4350, %v6968, 0
        %v7768 = vsel %vm4350, %v6969, 0
        %v7771 = vsel %vm4350, %v6970, 0
        %7773 = vmatprep.subr.bf16.mxu0 0
        %7774 = vmatpush1.bf16.msra.mxu0 %v4326
        %7775 = vmatprep.subr.bf16.mxu0 0
        %7776 = vmatpush1.bf16.msra.mxu0 %v4327
        %7777 = vmatprep.subr.bf16.mxu0 0
        %7778 = vmatpush1.bf16.msra.mxu0 %v4328
        %7779 = vmatprep.subr.bf16.mxu0 0
        %7780 = vmatpush1.bf16.msra.mxu0 %v4329
        %7781 = vmatprep.subr.bf16.mxu0 0
        %7782 = vmatpush1.bf16.msra.mxu0 0
        %7783 = vmatprep.subr.bf16.mxu0 0
        %7784 = vmatpush1.bf16.msra.mxu0 0
        %7785 = vmatprep.subr.bf16.mxu0 0
        %7786 = vmatpush1.bf16.msra.mxu0 0
        %7787 = vmatprep.subr.bf16.mxu0 0
        %7788 = vmatpush1.bf16.msra.mxu0 0
        %7789 = vmatprep.subr.bf16.mxu0 0
        %7790 = vmatpush1.bf16.msra.mxu0 0
        %7791 = vmatprep.subr.bf16.mxu0 0
        %7792 = vmatpush1.bf16.msra.mxu0 0
        %7793 = vmatprep.subr.bf16.mxu0 0
        %7794 = vmatpush1.bf16.msra.mxu0 0
        %7795 = vmatprep.subr.bf16.mxu0 0
        %7796 = vmatpush1.bf16.msra.mxu0 0
        %7797 = vmatprep.subr.bf16.mxu0 0
        %7798 = vmatpush1.bf16.msra.mxu0 0
        %7799 = vmatprep.subr.bf16.mxu0 0
        %7800 = vmatpush1.bf16.msra.mxu0 0
        %7801 = vmatprep.subr.bf16.mxu0 0
        %7802 = vmatpush1.bf16.msra.mxu0 0
        %7803 = vmatprep.subr.bf16.mxu0 0
        %7804 = vmatpush1.bf16.msra.mxu0 0
        %7805 = vmatprep.mubr.bf16.mxu0 0
        %7806 = vmatmul.mubr.bf16.gmra.mrb[0].mxu0 %v7762
        %v7807 = vpop.f32.mrb[0].mxu0
        %v7808 = vadd.f32 0.0, %v7807
        %v7809 = vpop.f32.mrb[0].mxu0
        %v7810 = vpop.f32.mrb[0].mxu0
        %v7811 = vadd.f32 0.0, %v7810
        %v7812 = vpop.f32.mrb[0].mxu0
        %7813 = vmatprep.mubr.bf16.mxu0 0
        %7814 = vmatmul.mubr.bf16.gmra.mrb[0].mxu0 %v7765
        %v7815 = vpop.f32.mrb[0].mxu0
        %v7816 = vadd.f32 0.0, %v7815
        %v7817 = vpop.f32.mrb[0].mxu0
        %v7818 = vpop.f32.mrb[0].mxu0
        %v7819 = vadd.f32 0.0, %v7818
        %v7820 = vpop.f32.mrb[0].mxu0
        %7821 = vmatprep.mubr.bf16.mxu0 0
        %7822 = vmatmul.mubr.bf16.gmra.mrb[0].mxu0 %v7768
        %v7823 = vpop.f32.mrb[0].mxu0
        %v7824 = vadd.f32 0.0, %v7823
        %v7825 = vpop.f32.mrb[0].mxu0
        %v7826 = vpop.f32.mrb[0].mxu0
        %v7827 = vadd.f32 0.0, %v7826
        %v7828 = vpop.f32.mrb[0].mxu0
        %7829 = vmatprep.mubr.bf16.mxu0 0
        %7830 = vmatmul.mubr.bf16.gmra.mrb[0].mxu0 %v7771
        %v7831 = vpop.f32.mrb[0].mxu0
        %v7832 = vadd.f32 0.0, %v7831
        %v7833 = vpop.f32.mrb[0].mxu0
        %v7834 = vpop.f32.mrb[0].mxu0
        %v7835 = vadd.f32 0.0, %v7834
        %v7836 = vpop.f32.mrb[0].mxu0
        %7837 = vdwg.mxu0
        %v7839 = vsel %vm4350, %v6971, 0
        %v7842 = vsel %vm4350, %v6972, 0
        %v7845 = vsel %vm4350, %v6973, 0
        %v7848 = vsel %vm4350, %v6974, 0
        %7850 = vmatprep.subr.bf16.mxu0 0
        %7851 = vmatpush1.bf16.msra.mxu0 %v4330
        %7852 = vmatprep.subr.bf16.mxu0 0
        %7853 = vmatpush1.bf16.msra.mxu0 %v4331
        %7854 = vmatprep.subr.bf16.mxu0 0
        %7855 = vmatpush1.bf16.msra.mxu0 %v4332
        %7856 = vmatprep.subr.bf16.mxu0 0
        %7857 = vmatpush1.bf16.msra.mxu0 %v4333
        %7858 = vmatprep.subr.bf16.mxu0 0
        %7859 = vmatpush1.bf16.msra.mxu0 0
        %7860 = vmatprep.subr.bf16.mxu0 0
        %7861 = vmatpush1.bf16.msra.mxu0 0
        %7862 = vmatprep.subr.bf16.mxu0 0
        %7863 = vmatpush1.bf16.msra.mxu0 0
        %7864 = vmatprep.subr.bf16.mxu0 0
        %7865 = vmatpush1.bf16.msra.mxu0 0
        %7866 = vmatprep.subr.bf16.mxu0 0
        %7867 = vmatpush1.bf16.msra.mxu0 0
        %7868 = vmatprep.subr.bf16.mxu0 0
        %7869 = vmatpush1.bf16.msra.mxu0 0
        %7870 = vmatprep.subr.bf16.mxu0 0
        %7871 = vmatpush1.bf16.msra.mxu0 0
        %7872 = vmatprep.subr.bf16.mxu0 0
        %7873 = vmatpush1.bf16.msra.mxu0 0
        %7874 = vmatprep.subr.bf16.mxu0 0
        %7875 = vmatpush1.bf16.msra.mxu0 0
        %7876 = vmatprep.subr.bf16.mxu0 0
        %7877 = vmatpush1.bf16.msra.mxu0 0
        %7878 = vmatprep.subr.bf16.mxu0 0
        %7879 = vmatpush1.bf16.msra.mxu0 0
        %7880 = vmatprep.subr.bf16.mxu0 0
        %7881 = vmatpush1.bf16.msra.mxu0 0
        %7882 = vmatprep.mubr.bf16.mxu0 0
        %7883 = vmatmul.mubr.bf16.gmra.mrb[0].mxu0 %v7839
        %v7884 = vpop.f32.mrb[0].mxu0
        %v7885 = vadd.f32 0.0, %v7884
        %v7886 = vpop.f32.mrb[0].mxu0
        %v7887 = vpop.f32.mrb[0].mxu0
        %v7888 = vadd.f32 0.0, %v7887
        %v7889 = vpop.f32.mrb[0].mxu0
        %7890 = vmatprep.mubr.bf16.mxu0 0
        %7891 = vmatmul.mubr.bf16.gmra.mrb[0].mxu0 %v7842
        %v7892 = vpop.f32.mrb[0].mxu0
        %v7893 = vadd.f32 0.0, %v7892
        %v7894 = vpop.f32.mrb[0].mxu0
        %v7895 = vpop.f32.mrb[0].mxu0
        %v7896 = vadd.f32 0.0, %v7895
        %v7897 = vpop.f32.mrb[0].mxu0
        %7898 = vmatprep.mubr.bf16.mxu0 0
        %7899 = vmatmul.mubr.bf16.gmra.mrb[0].mxu0 %v7845
        %v7900 = vpop.f32.mrb[0].mxu0
        %v7901 = vadd.f32 0.0, %v7900
        %v7902 = vpop.f32.mrb[0].mxu0
        %v7903 = vpop.f32.mrb[0].mxu0
        %v7904 = vadd.f32 0.0, %v7903
        %v7905 = vpop.f32.mrb[0].mxu0
        %7906 = vmatprep.mubr.bf16.mxu0 0
        %7907 = vmatmul.mubr.bf16.gmra.mrb[0].mxu0 %v7848
        %v7908 = vpop.f32.mrb[0].mxu0
        %v7909 = vadd.f32 0.0, %v7908
        %v7910 = vpop.f32.mrb[0].mxu0
        %v7911 = vpop.f32.mrb[0].mxu0
        %v7912 = vadd.f32 0.0, %v7911
        %v7913 = vpop.f32.mrb[0].mxu0
        %7914 = vdwg.mxu0
        %v7916 = vsel %vm4350, %v6975, 0
        %v7919 = vsel %vm4350, %v6976, 0
        %v7922 = vsel %vm4350, %v6977, 0
        %v7925 = vsel %vm4350, %v6978, 0
        %7927 = vmatprep.subr.bf16.mxu0 0
        %7928 = vmatpush1.bf16.msra.mxu0 %v4334
        %7929 = vmatprep.subr.bf16.mxu0 0
        %7930 = vmatpush1.bf16.msra.mxu0 %v4335
        %7931 = vmatprep.subr.bf16.mxu0 0
        %7932 = vmatpush1.bf16.msra.mxu0 %v4336
        %7933 = vmatprep.subr.bf16.mxu0 0
        %7934 = vmatpush1.bf16.msra.mxu0 %v4337
        %7935 = vmatprep.subr.bf16.mxu0 0
        %7936 = vmatpush1.bf16.msra.mxu0 0
        %7937 = vmatprep.subr.bf16.mxu0 0
        %7938 = vmatpush1.bf16.msra.mxu0 0
        %7939 = vmatprep.subr.bf16.mxu0 0
        %7940 = vmatpush1.bf16.msra.mxu0 0
        %7941 = vmatprep.subr.bf16.mxu0 0
        %7942 = vmatpush1.bf16.msra.mxu0 0
        %7943 = vmatprep.subr.bf16.mxu0 0
        %7944 = vmatpush1.bf16.msra.mxu0 0
        %7945 = vmatprep.subr.bf16.mxu0 0
        %7946 = vmatpush1.bf16.msra.mxu0 0
        %7947 = vmatprep.subr.bf16.mxu0 0
        %7948 = vmatpush1.bf16.msra.mxu0 0
        %7949 = vmatprep.subr.bf16.mxu0 0
        %7950 = vmatpush1.bf16.msra.mxu0 0
        %7951 = vmatprep.subr.bf16.mxu0 0
        %7952 = vmatpush1.bf16.msra.mxu0 0
        %7953 = vmatprep.subr.bf16.mxu0 0
        %7954 = vmatpush1.bf16.msra.mxu0 0
        %7955 = vmatprep.subr.bf16.mxu0 0
        %7956 = vmatpush1.bf16.msra.mxu0 0
        %7957 = vmatprep.subr.bf16.mxu0 0
        %7958 = vmatpush1.bf16.msra.mxu0 0
        %7959 = vmatprep.mubr.bf16.mxu0 0
        %7960 = vmatmul.mubr.bf16.gmra.mrb[0].mxu0 %v7916
        %v7961 = vpop.f32.mrb[0].mxu0
        %v7962 = vadd.f32 0.0, %v7961
        %v7963 = vpop.f32.mrb[0].mxu0
        %v7964 = vpop.f32.mrb[0].mxu0
        %v7965 = vadd.f32 0.0, %v7964
        %v7966 = vpop.f32.mrb[0].mxu0
        %7967 = vmatprep.mubr.bf16.mxu0 0
        %7968 = vmatmul.mubr.bf16.gmra.mrb[0].mxu0 %v7919
        %v7969 = vpop.f32.mrb[0].mxu0
        %v7970 = vadd.f32 0.0, %v7969
        %v7971 = vpop.f32.mrb[0].mxu0
        %v7972 = vpop.f32.mrb[0].mxu0
        %v7973 = vadd.f32 0.0, %v7972
        %v7974 = vpop.f32.mrb[0].mxu0
        %7975 = vmatprep.mubr.bf16.mxu0 0
        %7976 = vmatmul.mubr.bf16.gmra.mrb[0].mxu0 %v7922
        %v7977 = vpop.f32.mrb[0].mxu0
        %v7978 = vadd.f32 0.0, %v7977
        %v7979 = vpop.f32.mrb[0].mxu0
        %v7980 = vpop.f32.mrb[0].mxu0
        %v7981 = vadd.f32 0.0, %v7980
        %v7982 = vpop.f32.mrb[0].mxu0
        %7983 = vmatprep.mubr.bf16.mxu0 0
        %7984 = vmatmul.mubr.bf16.gmra.mrb[0].mxu0 %v7925
        %v7985 = vpop.f32.mrb[0].mxu0
        %v7986 = vadd.f32 0.0, %v7985
        %v7987 = vpop.f32.mrb[0].mxu0
        %v7988 = vpop.f32.mrb[0].mxu0
        %v7989 = vadd.f32 0.0, %v7988
        %v7990 = vpop.f32.mrb[0].mxu0
        %7991 = vdwg.mxu0
        %v7993 = vsel %vm4350, %v6979, 0
        %v7996 = vsel %vm4350, %v6980, 0
        %v7999 = vsel %vm4350, %v6981, 0
        %v8002 = vsel %vm4350, %v6982, 0
        %8004 = vmatprep.subr.bf16.mxu0 0
        %8005 = vmatpush1.bf16.msra.mxu0 %v4338
        %8006 = vmatprep.subr.bf16.mxu0 0
        %8007 = vmatpush1.bf16.msra.mxu0 %v4339
        %8008 = vmatprep.subr.bf16.mxu0 0
        %8009 = vmatpush1.bf16.msra.mxu0 %v4340
        %8010 = vmatprep.subr.bf16.mxu0 0
        %8011 = vmatpush1.bf16.msra.mxu0 %v4341
        %8012 = vmatprep.subr.bf16.mxu0 0
        %8013 = vmatpush1.bf16.msra.mxu0 0
        %8014 = vmatprep.subr.bf16.mxu0 0
        %8015 = vmatpush1.bf16.msra.mxu0 0
        %8016 = vmatprep.subr.bf16.mxu0 0
        %8017 = vmatpush1.bf16.msra.mxu0 0
        %8018 = vmatprep.subr.bf16.mxu0 0
        %8019 = vmatpush1.bf16.msra.mxu0 0
        %8020 = vmatprep.subr.bf16.mxu0 0
        %8021 = vmatpush1.bf16.msra.mxu0 0
        %8022 = vmatprep.subr.bf16.mxu0 0
        %8023 = vmatpush1.bf16.msra.mxu0 0
        %8024 = vmatprep.subr.bf16.mxu0 0
        %8025 = vmatpush1.bf16.msra.mxu0 0
        %8026 = vmatprep.subr.bf16.mxu0 0
        %8027 = vmatpush1.bf16.msra.mxu0 0
        %8028 = vmatprep.subr.bf16.mxu0 0
        %8029 = vmatpush1.bf16.msra.mxu0 0
        %8030 = vmatprep.subr.bf16.mxu0 0
        %8031 = vmatpush1.bf16.msra.mxu0 0
        %8032 = vmatprep.subr.bf16.mxu0 0
        %8033 = vmatpush1.bf16.msra.mxu0 0
        %8034 = vmatprep.subr.bf16.mxu0 0
        %8035 = vmatpush1.bf16.msra.mxu0 0
        %8036 = vmatprep.mubr.bf16.mxu0 0
        %8037 = vmatmul.mubr.bf16.gmra.mrb[0].mxu0 %v7993
        %v8038 = vpop.f32.mrb[0].mxu0
        %v8039 = vadd.f32 0.0, %v8038
        %v8040 = vpop.f32.mrb[0].mxu0
        %v8041 = vpop.f32.mrb[0].mxu0
        %v8042 = vadd.f32 0.0, %v8041
        %v8043 = vpop.f32.mrb[0].mxu0
        %8044 = vmatprep.mubr.bf16.mxu0 0
        %8045 = vmatmul.mubr.bf16.gmra.mrb[0].mxu0 %v7996
        %v8046 = vpop.f32.mrb[0].mxu0
        %v8047 = vadd.f32 0.0, %v8046
        %v8048 = vpop.f32.mrb[0].mxu0
        %v8049 = vpop.f32.mrb[0].mxu0
        %v8050 = vadd.f32 0.0, %v8049
        %v8051 = vpop.f32.mrb[0].mxu0
        %8052 = vmatprep.mubr.bf16.mxu0 0
        %8053 = vmatmul.mubr.bf16.gmra.mrb[0].mxu0 %v7999
        %v8054 = vpop.f32.mrb[0].mxu0
        %v8055 = vadd.f32 0.0, %v8054
        %v8056 = vpop.f32.mrb[0].mxu0
        %v8057 = vpop.f32.mrb[0].mxu0
        %v8058 = vadd.f32 0.0, %v8057
        %v8059 = vpop.f32.mrb[0].mxu0
        %8060 = vmatprep.mubr.bf16.mxu0 0
        %8061 = vmatmul.mubr.bf16.gmra.mrb[0].mxu0 %v8002
        %v8062 = vpop.f32.mrb[0].mxu0
        %v8063 = vadd.f32 0.0, %v8062
        %v8064 = vpop.f32.mrb[0].mxu0
        %v8065 = vpop.f32.mrb[0].mxu0
        %v8066 = vadd.f32 0.0, %v8065
        %v8067 = vpop.f32.mrb[0].mxu0
        %8068 = vdwg.mxu0
        %v8070 = vsel %vm4350, %v6983, 0
        %v8073 = vsel %vm4350, %v6984, 0
        %v8076 = vsel %vm4350, %v6985, 0
        %v8079 = vsel %vm4350, %v6986, 0
        %8081 = vmatprep.subr.bf16.mxu0 0
        %8082 = vmatpush1.bf16.msra.mxu0 %v4342
        %8083 = vmatprep.subr.bf16.mxu0 0
        %8084 = vmatpush1.bf16.msra.mxu0 %v4343
        %8085 = vmatprep.subr.bf16.mxu0 0
        %8086 = vmatpush1.bf16.msra.mxu0 %v4344
        %8087 = vmatprep.subr.bf16.mxu0 0
        %8088 = vmatpush1.bf16.msra.mxu0 %v4345
        %8089 = vmatprep.subr.bf16.mxu0 0
        %8090 = vmatpush1.bf16.msra.mxu0 0
        %8091 = vmatprep.subr.bf16.mxu0 0
        %8092 = vmatpush1.bf16.msra.mxu0 0
        %8093 = vmatprep.subr.bf16.mxu0 0
        %8094 = vmatpush1.bf16.msra.mxu0 0
        %8095 = vmatprep.subr.bf16.mxu0 0
        %8096 = vmatpush1.bf16.msra.mxu0 0
        %8097 = vmatprep.subr.bf16.mxu0 0
        %8098 = vmatpush1.bf16.msra.mxu0 0
        %8099 = vmatprep.subr.bf16.mxu0 0
        %8100 = vmatpush1.bf16.msra.mxu0 0
        %8101 = vmatprep.subr.bf16.mxu0 0
        %8102 = vmatpush1.bf16.msra.mxu0 0
        %8103 = vmatprep.subr.bf16.mxu0 0
        %8104 = vmatpush1.bf16.msra.mxu0 0
        %8105 = vmatprep.subr.bf16.mxu0 0
        %8106 = vmatpush1.bf16.msra.mxu0 0
        %8107 = vmatprep.subr.bf16.mxu0 0
        %8108 = vmatpush1.bf16.msra.mxu0 0
        %8109 = vmatprep.subr.bf16.mxu0 0
        %8110 = vmatpush1.bf16.msra.mxu0 0
        %8111 = vmatprep.subr.bf16.mxu0 0
        %8112 = vmatpush1.bf16.msra.mxu0 0
        %8113 = vmatprep.mubr.bf16.mxu0 0
        %8114 = vmatmul.mubr.bf16.gmra.mrb[0].mxu0 %v8070
        %v8115 = vpop.f32.mrb[0].mxu0
        %v8116 = vadd.f32 0.0, %v8115
        %v8117 = vpop.f32.mrb[0].mxu0
        %v8118 = vpop.f32.mrb[0].mxu0
        %v8119 = vadd.f32 0.0, %v8118
        %v8120 = vpop.f32.mrb[0].mxu0
        %8121 = vmatprep.mubr.bf16.mxu0 0
        %8122 = vmatmul.mubr.bf16.gmra.mrb[0].mxu0 %v8073
        %v8123 = vpop.f32.mrb[0].mxu0
        %v8124 = vadd.f32 0.0, %v8123
        %v8125 = vpop.f32.mrb[0].mxu0
        %v8126 = vpop.f32.mrb[0].mxu0
        %v8127 = vadd.f32 0.0, %v8126
        %v8128 = vpop.f32.mrb[0].mxu0
        %8129 = vmatprep.mubr.bf16.mxu0 0
        %8130 = vmatmul.mubr.bf16.gmra.mrb[0].mxu0 %v8076
        %v8131 = vpop.f32.mrb[0].mxu0
        %v8132 = vadd.f32 0.0, %v8131
        %v8133 = vpop.f32.mrb[0].mxu0
        %v8134 = vpop.f32.mrb[0].mxu0
        %v8135 = vadd.f32 0.0, %v8134
        %v8136 = vpop.f32.mrb[0].mxu0
        %8137 = vmatprep.mubr.bf16.mxu0 0
        %8138 = vmatmul.mubr.bf16.gmra.mrb[0].mxu0 %v8079
        %v8139 = vpop.f32.mrb[0].mxu0
        %v8140 = vadd.f32 0.0, %v8139
        %v8141 = vpop.f32.mrb[0].mxu0
        %v8142 = vpop.f32.mrb[0].mxu0
        %v8143 = vadd.f32 0.0, %v8142
        %v8144 = vpop.f32.mrb[0].mxu0
        %8145 = vdwg.mxu0
        %v8147 = vsel %vm4350, %v6987, 0
        %v8150 = vsel %vm4350, %v6988, 0
        %v8153 = vsel %vm4350, %v6989, 0
        %v8156 = vsel %vm4350, %v6990, 0
        %8158 = vmatprep.subr.bf16.mxu0 0
        %8159 = vmatpush1.bf16.msra.mxu0 %v4346
        %8160 = vmatprep.subr.bf16.mxu0 0
        %8161 = vmatpush1.bf16.msra.mxu0 %v4347
        %8162 = vmatprep.subr.bf16.mxu0 0
        %8163 = vmatpush1.bf16.msra.mxu0 %v4348
        %8164 = vmatprep.subr.bf16.mxu0 0
        %8165 = vmatpush1.bf16.msra.mxu0 %v4349
        %8166 = vmatprep.subr.bf16.mxu0 0
        %8167 = vmatpush1.bf16.msra.mxu0 0
        %8168 = vmatprep.subr.bf16.mxu0 0
        %8169 = vmatpush1.bf16.msra.mxu0 0
        %8170 = vmatprep.subr.bf16.mxu0 0
        %8171 = vmatpush1.bf16.msra.mxu0 0
        %8172 = vmatprep.subr.bf16.mxu0 0
        %8173 = vmatpush1.bf16.msra.mxu0 0
        %8174 = vmatprep.subr.bf16.mxu0 0
        %8175 = vmatpush1.bf16.msra.mxu0 0
        %8176 = vmatprep.subr.bf16.mxu0 0
        %8177 = vmatpush1.bf16.msra.mxu0 0
        %8178 = vmatprep.subr.bf16.mxu0 0
        %8179 = vmatpush1.bf16.msra.mxu0 0
        %8180 = vmatprep.subr.bf16.mxu0 0
        %8181 = vmatpush1.bf16.msra.mxu0 0
        %8182 = vmatprep.subr.bf16.mxu0 0
        %8183 = vmatpush1.bf16.msra.mxu0 0
        %8184 = vmatprep.subr.bf16.mxu0 0
        %8185 = vmatpush1.bf16.msra.mxu0 0
        %8186 = vmatprep.subr.bf16.mxu0 0
        %8187 = vmatpush1.bf16.msra.mxu0 0
        %8188 = vmatprep.subr.bf16.mxu0 0
        %8189 = vmatpush1.bf16.msra.mxu0 0
        %8190 = vmatprep.mubr.bf16.mxu0 0
        %8191 = vmatmul.mubr.bf16.gmra.mrb[0].mxu0 %v8147
        %v8192 = vpop.f32.mrb[0].mxu0
        %v8193 = vadd.f32 0.0, %v8192
        %v8194 = vpop.f32.mrb[0].mxu0
        %v8195 = vpop.f32.mrb[0].mxu0
        %v8196 = vadd.f32 0.0, %v8195
        %v8197 = vpop.f32.mrb[0].mxu0
        %8198 = vmatprep.mubr.bf16.mxu0 0
        %8199 = vmatmul.mubr.bf16.gmra.mrb[0].mxu0 %v8150
        %v8200 = vpop.f32.mrb[0].mxu0
        %v8201 = vadd.f32 0.0, %v8200
        %v8202 = vpop.f32.mrb[0].mxu0
        %v8203 = vpop.f32.mrb[0].mxu0
        %v8204 = vadd.f32 0.0, %v8203
        %v8205 = vpop.f32.mrb[0].mxu0
        %8206 = vmatprep.mubr.bf16.mxu0 0
        %8207 = vmatmul.mubr.bf16.gmra.mrb[0].mxu0 %v8153
        %v8208 = vpop.f32.mrb[0].mxu0
        %v8209 = vadd.f32 0.0, %v8208
        %v8210 = vpop.f32.mrb[0].mxu0
        %v8211 = vpop.f32.mrb[0].mxu0
        %v8212 = vadd.f32 0.0, %v8211
        %v8213 = vpop.f32.mrb[0].mxu0
        %8214 = vmatprep.mubr.bf16.mxu0 0
        %8215 = vmatmul.mubr.bf16.gmra.mrb[0].mxu0 %v8156
        %v8216 = vpop.f32.mrb[0].mxu0
        %v8217 = vadd.f32 0.0, %v8216
        %v8218 = vpop.f32.mrb[0].mxu0
        %v8219 = vpop.f32.mrb[0].mxu0
        %v8220 = vadd.f32 0.0, %v8219
        %v8221 = vpop.f32.mrb[0].mxu0
        %8222 = vdwg.mxu0
        %v8223 = vrcp.pop %v6545
        %v8224 = vrcp.pop %v6548
        %v8225 = vrcp.pop %v6551
        %v8226 = vrcp.pop %v6554
        %v8227 = vrcp.pop %v6557
        %v8228 = vrcp.pop %v6560
        %v8229 = vrcp.pop %v6563
        %v8230 = vrcp.pop %v6566
        %v8231 = vrcp.pop %v6569
        %v8232 = vrcp.pop %v6572
        %v8233 = vrcp.pop %v6575
        %v8234 = vrcp.pop %v6578
        %v8235 = vrcp.pop %v6581
        %v8236 = vrcp.pop %v6584
        %v8237 = vrcp.pop %v6587
        %v8238 = vrcp.pop %v6590
        %v8239 = vrcp.pop %v6593
        %v8240 = vrcp.pop %v6596
        %v8241 = vrcp.pop %v6599
        %v8242 = vrcp.pop %v6602
        %v8243 = vrcp.pop %v6605
        %v8244 = vrcp.pop %v6608
        %v8245 = vrcp.pop %v6611
        %v8246 = vrcp.pop %v6614
        %v8247 = vrcp.pop %v6617
        %v8248 = vrcp.pop %v6620
        %v8249 = vrcp.pop %v6623
        %v8250 = vrcp.pop %v6626
        %v8251 = vrcp.pop %v6629
        %v8252 = vrcp.pop %v6632
        %v8253 = vrcp.pop %v6635
        %v8254 = vrcp.pop %v6638
        %v8255 = vrcp.pop %v6641
        %v8256 = vrcp.pop %v6644
        %v8257 = vrcp.pop %v6647
        %v8258 = vrcp.pop %v6650
        %v8259 = vrcp.pop %v6653
        %v8260 = vrcp.pop %v6656
        %v8261 = vrcp.pop %v6659
        %v8262 = vrcp.pop %v6662
        %v8263 = vrcp.pop %v6665
        %v8264 = vrcp.pop %v6668
        %v8265 = vrcp.pop %v6671
        %v8266 = vrcp.pop %v6674
        %v8267 = vrcp.pop %v6677
        %v8268 = vrcp.pop %v6680
        %v8269 = vrcp.pop %v6683
        %v8270 = vrcp.pop %v6686
        %v8271 = vrcp.pop %v6689
        %v8272 = vrcp.pop %v6692
        %v8273 = vrcp.pop %v6695
        %v8274 = vrcp.pop %v6698
        %v8275 = vrcp.pop %v6701
        %v8276 = vrcp.pop %v6704
        %v8277 = vrcp.pop %v6707
        %v8278 = vrcp.pop %v6710
        %v8279 = vrcp.pop %v6713
        %v8280 = vrcp.pop %v6716
        %v8281 = vrcp.pop %v6719
        %v8282 = vrcp.pop %v6722
        %v8283 = vrcp.pop %v6725
        %v8284 = vrcp.pop %v6728
        %v8285 = vrcp.pop %v6731
        %v8286 = vrcp.pop %v6734
        %v8287 = vrcp.pop %v6737
        %v8288 = vrcp.pop %v6740
        %v8289 = vrcp.pop %v6743
        %v8290 = vrcp.pop %v6746
        %v8291 = vrcp.pop %v6749
        %v8292 = vrcp.pop %v6752
        %v8293 = vrcp.pop %v6755
        %v8294 = vrcp.pop %v6758
        %v8295 = vrcp.pop %v6761
        %v8296 = vrcp.pop %v6764
        %v8297 = vrcp.pop %v6767
        %v8298 = vrcp.pop %v6770
        %v8299 = vrcp.pop %v6773
        %v8300 = vrcp.pop %v6776
        %v8301 = vrcp.pop %v6779
        %v8302 = vrcp.pop %v6782
        %v8303 = vrcp.pop %v6785
        %v8304 = vrcp.pop %v6788
        %v8305 = vrcp.pop %v6791
        %v8306 = vrcp.pop %v6794
        %v8307 = vrcp.pop %v6797
        %v8308 = vrcp.pop %v6800
        %v8309 = vrcp.pop %v6803
        %v8310 = vrcp.pop %v6806
        %v8311 = vrcp.pop %v6809
        %v8312 = vrcp.pop %v6812
        %v8313 = vrcp.pop %v6815
        %v8314 = vrcp.pop %v6818
        %v8315 = vrcp.pop %v6821
        %v8316 = vrcp.pop %v6824
        %v8317 = vrcp.pop %v6827
        %v8318 = vrcp.pop %v6830
        %v8319 = vrcp.pop %v6833
        %v8320 = vrcp.pop %v6836
        %v8321 = vrcp.pop %v6839
        %v8322 = vrcp.pop %v6842
        %v8323 = vrcp.pop %v6845
        %v8324 = vrcp.pop %v6848
        %v8325 = vrcp.pop %v6851
        %v8326 = vrcp.pop %v6854
        %v8327 = vrcp.pop %v6857
        %v8328 = vrcp.pop %v6860
        %v8329 = vrcp.pop %v6863
        %v8330 = vrcp.pop %v6866
        %v8331 = vrcp.pop %v6869
        %v8332 = vrcp.pop %v6872
        %v8333 = vrcp.pop %v6875
        %v8334 = vrcp.pop %v6878
        %v8335 = vrcp.pop %v6881
        %v8336 = vrcp.pop %v6884
        %v8337 = vrcp.pop %v6887
        %v8338 = vrcp.pop %v6890
        %v8339 = vrcp.pop %v6893
        %v8340 = vrcp.pop %v6896
        %v8341 = vrcp.pop %v6899
        %v8342 = vrcp.pop %v6902
        %v8343 = vrcp.pop %v6905
        %v8344 = vrcp.pop %v6908
        %v8345 = vrcp.pop %v6911
        %v8346 = vrcp.pop %v6914
        %v8347 = vrcp.pop %v6917
        %v8348 = vrcp.pop %v6920
        %v8349 = vrcp.pop %v6923
        %v8350 = vrcp.pop %v6926
        %v8351 = vmul.f32 %v7038, %v8223
        %v8352 = vmul.f32 %v7041, %v8224
        %v8353 = vmul.f32 %v7046, %v8225
        %v8354 = vmul.f32 %v7049, %v8226
        %v8355 = vmul.f32 %v7054, %v8227
        %v8356 = vmul.f32 %v7057, %v8228
        %v8357 = vmul.f32 %v7062, %v8229
        %v8358 = vmul.f32 %v7065, %v8230
        %v8359 = vmul.f32 %v7115, %v8231
        %v8360 = vmul.f32 %v7118, %v8232
        %v8361 = vmul.f32 %v7123, %v8233
        %v8362 = vmul.f32 %v7126, %v8234
        %v8363 = vmul.f32 %v7131, %v8235
        %v8364 = vmul.f32 %v7134, %v8236
        %v8365 = vmul.f32 %v7139, %v8237
        %v8366 = vmul.f32 %v7142, %v8238
        %v8367 = vmul.f32 %v7192, %v8239
        %v8368 = vmul.f32 %v7195, %v8240
        %v8369 = vmul.f32 %v7200, %v8241
        %v8370 = vmul.f32 %v7203, %v8242
        %v8371 = vmul.f32 %v7208, %v8243
        %v8372 = vmul.f32 %v7211, %v8244
        %v8373 = vmul.f32 %v7216, %v8245
        %v8374 = vmul.f32 %v7219, %v8246
        %v8375 = vmul.f32 %v7269, %v8247
        %v8376 = vmul.f32 %v7272, %v8248
        %v8377 = vmul.f32 %v7277, %v8249
        %v8378 = vmul.f32 %v7280, %v8250
        %v8379 = vmul.f32 %v7285, %v8251
        %v8380 = vmul.f32 %v7288, %v8252
        %v8381 = vmul.f32 %v7293, %v8253
        %v8382 = vmul.f32 %v7296, %v8254
        %v8383 = vmul.f32 %v7346, %v8255
        %v8384 = vmul.f32 %v7349, %v8256
        %v8385 = vmul.f32 %v7354, %v8257
        %v8386 = vmul.f32 %v7357, %v8258
        %v8387 = vmul.f32 %v7362, %v8259
        %v8388 = vmul.f32 %v7365, %v8260
        %v8389 = vmul.f32 %v7370, %v8261
        %v8390 = vmul.f32 %v7373, %v8262
        %v8391 = vmul.f32 %v7423, %v8263
        %v8392 = vmul.f32 %v7426, %v8264
        %v8393 = vmul.f32 %v7431, %v8265
        %v8394 = vmul.f32 %v7434, %v8266
        %v8395 = vmul.f32 %v7439, %v8267
        %v8396 = vmul.f32 %v7442, %v8268
        %v8397 = vmul.f32 %v7447, %v8269
        %v8398 = vmul.f32 %v7450, %v8270
        %v8399 = vmul.f32 %v7500, %v8271
        %v8400 = vmul.f32 %v7503, %v8272
        %v8401 = vmul.f32 %v7508, %v8273
        %v8402 = vmul.f32 %v7511, %v8274
        %v8403 = vmul.f32 %v7516, %v8275
        %v8404 = vmul.f32 %v7519, %v8276
        %v8405 = vmul.f32 %v7524, %v8277
        %v8406 = vmul.f32 %v7527, %v8278
        %v8407 = vmul.f32 %v7577, %v8279
        %v8408 = vmul.f32 %v7580, %v8280
        %v8409 = vmul.f32 %v7585, %v8281
        %v8410 = vmul.f32 %v7588, %v8282
        %v8411 = vmul.f32 %v7593, %v8283
        %v8412 = vmul.f32 %v7596, %v8284
        %v8413 = vmul.f32 %v7601, %v8285
        %v8414 = vmul.f32 %v7604, %v8286
        %v8415 = vmul.f32 %v7654, %v8287
        %v8416 = vmul.f32 %v7657, %v8288
        %v8417 = vmul.f32 %v7662, %v8289
        %v8418 = vmul.f32 %v7665, %v8290
        %v8419 = vmul.f32 %v7670, %v8291
        %v8420 = vmul.f32 %v7673, %v8292
        %v8421 = vmul.f32 %v7678, %v8293
        %v8422 = vmul.f32 %v7681, %v8294
        %v8423 = vmul.f32 %v7731, %v8295
        %v8424 = vmul.f32 %v7734, %v8296
        %v8425 = vmul.f32 %v7739, %v8297
        %v8426 = vmul.f32 %v7742, %v8298
        %v8427 = vmul.f32 %v7747, %v8299
        %v8428 = vmul.f32 %v7750, %v8300
        %v8429 = vmul.f32 %v7755, %v8301
        %v8430 = vmul.f32 %v7758, %v8302
        %v8431 = vmul.f32 %v7808, %v8303
        %v8432 = vmul.f32 %v7811, %v8304
        %v8433 = vmul.f32 %v7816, %v8305
        %v8434 = vmul.f32 %v7819, %v8306
        %v8435 = vmul.f32 %v7824, %v8307
        %v8436 = vmul.f32 %v7827, %v8308
        %v8437 = vmul.f32 %v7832, %v8309
        %v8438 = vmul.f32 %v7835, %v8310
        %v8439 = vmul.f32 %v7885, %v8311
        %v8440 = vmul.f32 %v7888, %v8312
        %v8441 = vmul.f32 %v7893, %v8313
        %v8442 = vmul.f32 %v7896, %v8314
        %v8443 = vmul.f32 %v7901, %v8315
        %v8444 = vmul.f32 %v7904, %v8316
        %v8445 = vmul.f32 %v7909, %v8317
        %v8446 = vmul.f32 %v7912, %v8318
        %v8447 = vmul.f32 %v7962, %v8319
        %v8448 = vmul.f32 %v7965, %v8320
        %v8449 = vmul.f32 %v7970, %v8321
        %v8450 = vmul.f32 %v7973, %v8322
        %v8451 = vmul.f32 %v7978, %v8323
        %v8452 = vmul.f32 %v7981, %v8324
        %v8453 = vmul.f32 %v7986, %v8325
        %v8454 = vmul.f32 %v7989, %v8326
        %v8455 = vmul.f32 %v8039, %v8327
        %v8456 = vmul.f32 %v8042, %v8328
        %v8457 = vmul.f32 %v8047, %v8329
        %v8458 = vmul.f32 %v8050, %v8330
        %v8459 = vmul.f32 %v8055, %v8331
        %v8460 = vmul.f32 %v8058, %v8332
        %v8461 = vmul.f32 %v8063, %v8333
        %v8462 = vmul.f32 %v8066, %v8334
        %v8463 = vmul.f32 %v8116, %v8335
        %v8464 = vmul.f32 %v8119, %v8336
        %v8465 = vmul.f32 %v8124, %v8337
        %v8466 = vmul.f32 %v8127, %v8338
        %v8467 = vmul.f32 %v8132, %v8339
        %v8468 = vmul.f32 %v8135, %v8340
        %v8469 = vmul.f32 %v8140, %v8341
        %v8470 = vmul.f32 %v8143, %v8342
        %v8471 = vmul.f32 %v8193, %v8343
        %v8472 = vmul.f32 %v8196, %v8344
        %v8473 = vmul.f32 %v8201, %v8345
        %v8474 = vmul.f32 %v8204, %v8346
        %v8475 = vmul.f32 %v8209, %v8347
        %v8476 = vmul.f32 %v8212, %v8348
        %v8477 = vmul.f32 %v8217, %v8349
        %v8478 = vmul.f32 %v8220, %v8350
        %v8479 = vpack.c.bf16 %v8352, %v8351
        %v8480 = vpack.c.bf16 %v8354, %v8353
        %v8481 = vpack.c.bf16 %v8356, %v8355
        %v8482 = vpack.c.bf16 %v8358, %v8357
        %v8483 = vpack.c.bf16 %v8360, %v8359
        %v8484 = vpack.c.bf16 %v8362, %v8361
        %v8485 = vpack.c.bf16 %v8364, %v8363
        %v8486 = vpack.c.bf16 %v8366, %v8365
        %v8487 = vpack.c.bf16 %v8368, %v8367
        %v8488 = vpack.c.bf16 %v8370, %v8369
        %v8489 = vpack.c.bf16 %v8372, %v8371
        %v8490 = vpack.c.bf16 %v8374, %v8373
        %v8491 = vpack.c.bf16 %v8376, %v8375
        %v8492 = vpack.c.bf16 %v8378, %v8377
        %v8493 = vpack.c.bf16 %v8380, %v8379
        %v8494 = vpack.c.bf16 %v8382, %v8381
        %v8495 = vpack.c.bf16 %v8384, %v8383
        %v8496 = vpack.c.bf16 %v8386, %v8385
        %v8497 = vpack.c.bf16 %v8388, %v8387
        %v8498 = vpack.c.bf16 %v8390, %v8389
        %v8499 = vpack.c.bf16 %v8392, %v8391
        %v8500 = vpack.c.bf16 %v8394, %v8393
        %v8501 = vpack.c.bf16 %v8396, %v8395
        %v8502 = vpack.c.bf16 %v8398, %v8397
        %v8503 = vpack.c.bf16 %v8400, %v8399
        %v8504 = vpack.c.bf16 %v8402, %v8401
        %v8505 = vpack.c.bf16 %v8404, %v8403
        %v8506 = vpack.c.bf16 %v8406, %v8405
        %v8507 = vpack.c.bf16 %v8408, %v8407
        %v8508 = vpack.c.bf16 %v8410, %v8409
        %v8509 = vpack.c.bf16 %v8412, %v8411
        %v8510 = vpack.c.bf16 %v8414, %v8413
        %v8511 = vpack.c.bf16 %v8416, %v8415
        %v8512 = vpack.c.bf16 %v8418, %v8417
        %v8513 = vpack.c.bf16 %v8420, %v8419
        %v8514 = vpack.c.bf16 %v8422, %v8421
        %v8515 = vpack.c.bf16 %v8424, %v8423
        %v8516 = vpack.c.bf16 %v8426, %v8425
        %v8517 = vpack.c.bf16 %v8428, %v8427
        %v8518 = vpack.c.bf16 %v8430, %v8429
        %v8519 = vpack.c.bf16 %v8432, %v8431
        %v8520 = vpack.c.bf16 %v8434, %v8433
        %v8521 = vpack.c.bf16 %v8436, %v8435
        %v8522 = vpack.c.bf16 %v8438, %v8437
        %v8523 = vpack.c.bf16 %v8440, %v8439
        %v8524 = vpack.c.bf16 %v8442, %v8441
        %v8525 = vpack.c.bf16 %v8444, %v8443
        %v8526 = vpack.c.bf16 %v8446, %v8445
        %v8527 = vpack.c.bf16 %v8448, %v8447
        %v8528 = vpack.c.bf16 %v8450, %v8449
        %v8529 = vpack.c.bf16 %v8452, %v8451
        %v8530 = vpack.c.bf16 %v8454, %v8453
        %v8531 = vpack.c.bf16 %v8456, %v8455
        %v8532 = vpack.c.bf16 %v8458, %v8457
        %v8533 = vpack.c.bf16 %v8460, %v8459
        %v8534 = vpack.c.bf16 %v8462, %v8461
        %v8535 = vpack.c.bf16 %v8464, %v8463
        %v8536 = vpack.c.bf16 %v8466, %v8465
        %v8537 = vpack.c.bf16 %v8468, %v8467
        %v8538 = vpack.c.bf16 %v8470, %v8469
        %v8539 = vpack.c.bf16 %v8472, %v8471
        %v8540 = vpack.c.bf16 %v8474, %v8473
        %v8541 = vpack.c.bf16 %v8476, %v8475
        %v8542 = vpack.c.bf16 %v8478, %v8477
        %v8543 = vld [vmem:[%s4] sm:$0xf]
        %v8544 = vld [vmem:[%s4 + $0x4] sm:$0xf]
        %v8545 = vld [vmem:[%s4 + $0x8] sm:$0xf]
        %v8546 = vld [vmem:[%s4 + $0xc] sm:$0xf]
        %v8547 = vld [vmem:[%s4 + $0x10] sm:$0xf]
        %v8548 = vld [vmem:[%s4 + $0x14] sm:$0xf]
        %v8549 = vld [vmem:[%s4 + $0x18] sm:$0xf]
        %v8550 = vld [vmem:[%s4 + $0x1c] sm:$0xf]
        %v8551 = vld [vmem:[%s4 + $0x20] sm:$0xf]
        %v8552 = vld [vmem:[%s4 + $0x24] sm:$0xf]
        %v8553 = vld [vmem:[%s4 + $0x28] sm:$0xf]
        %v8554 = vld [vmem:[%s4 + $0x2c] sm:$0xf]
        %v8555 = vld [vmem:[%s4 + $0x30] sm:$0xf]
        %v8556 = vld [vmem:[%s4 + $0x34] sm:$0xf]
        %v8557 = vld [vmem:[%s4 + $0x38] sm:$0xf]
        %v8558 = vld [vmem:[%s4 + $0x3c] sm:$0xf]
        %v8559 = vld [vmem:[%s4 + $0x40] sm:$0xf]
        %v8560 = vld [vmem:[%s4 + $0x44] sm:$0xf]
        %v8561 = vld [vmem:[%s4 + $0x48] sm:$0xf]
        %v8562 = vld [vmem:[%s4 + $0x4c] sm:$0xf]
        %v8563 = vld [vmem:[%s4 + $0x50] sm:$0xf]
        %v8564 = vld [vmem:[%s4 + $0x54] sm:$0xf]
        %v8565 = vld [vmem:[%s4 + $0x58] sm:$0xf]
        %v8566 = vld [vmem:[%s4 + $0x5c] sm:$0xf]
        %v8567 = vld [vmem:[%s4 + $0x60] sm:$0xf]
        %v8568 = vld [vmem:[%s4 + $0x64] sm:$0xf]
        %v8569 = vld [vmem:[%s4 + $0x68] sm:$0xf]
        %v8570 = vld [vmem:[%s4 + $0x6c] sm:$0xf]
        %v8571 = vld [vmem:[%s4 + $0x70] sm:$0xf]
        %v8572 = vld [vmem:[%s4 + $0x74] sm:$0xf]
        %v8573 = vld [vmem:[%s4 + $0x78] sm:$0xf]
        %v8574 = vld [vmem:[%s4 + $0x7c] sm:$0xf]
        %v8575 = vld [vmem:[%s4 + $0x80] sm:$0xf]
        %v8576 = vld [vmem:[%s4 + $0x84] sm:$0xf]
        %v8577 = vld [vmem:[%s4 + $0x88] sm:$0xf]
        %v8578 = vld [vmem:[%s4 + $0x8c] sm:$0xf]
        %v8579 = vld [vmem:[%s4 + $0x90] sm:$0xf]
        %v8580 = vld [vmem:[%s4 + $0x94] sm:$0xf]
        %v8581 = vld [vmem:[%s4 + $0x98] sm:$0xf]
        %v8582 = vld [vmem:[%s4 + $0x9c] sm:$0xf]
        %v8583 = vld [vmem:[%s4 + $0xa0] sm:$0xf]
        %v8584 = vld [vmem:[%s4 + $0xa4] sm:$0xf]
        %v8585 = vld [vmem:[%s4 + $0xa8] sm:$0xf]
        %v8586 = vld [vmem:[%s4 + $0xac] sm:$0xf]
        %v8587 = vld [vmem:[%s4 + $0xb0] sm:$0xf]
        %v8588 = vld [vmem:[%s4 + $0xb4] sm:$0xf]
        %v8589 = vld [vmem:[%s4 + $0xb8] sm:$0xf]
        %v8590 = vld [vmem:[%s4 + $0xbc] sm:$0xf]
        %v8591 = vld [vmem:[%s4 + $0xc0] sm:$0xf]
        %v8592 = vld [vmem:[%s4 + $0xc4] sm:$0xf]
        %v8593 = vld [vmem:[%s4 + $0xc8] sm:$0xf]
        %v8594 = vld [vmem:[%s4 + $0xcc] sm:$0xf]
        %v8595 = vld [vmem:[%s4 + $0xd0] sm:$0xf]
        %v8596 = vld [vmem:[%s4 + $0xd4] sm:$0xf]
        %v8597 = vld [vmem:[%s4 + $0xd8] sm:$0xf]
        %v8598 = vld [vmem:[%s4 + $0xdc] sm:$0xf]
        %v8599 = vld [vmem:[%s4 + $0xe0] sm:$0xf]
        %v8600 = vld [vmem:[%s4 + $0xe4] sm:$0xf]
        %v8601 = vld [vmem:[%s4 + $0xe8] sm:$0xf]
        %v8602 = vld [vmem:[%s4 + $0xec] sm:$0xf]
        %v8603 = vld [vmem:[%s4 + $0xf0] sm:$0xf]
        %v8604 = vld [vmem:[%s4 + $0xf4] sm:$0xf]
        %v8605 = vld [vmem:[%s4 + $0xf8] sm:$0xf]
        %v8606 = vld [vmem:[%s4 + $0xfc] sm:$0xf]
        %v8615 = vunpack.c.l.b16 %v8543
        %v8616 = vunpack.c.l.b16 %v8544
        %v8617 = vunpack.c.l.b16 %v8545
        %v8618 = vunpack.c.l.b16 %v8546
        %v8619 = vunpack.c.l.b16 %v8547
        %v8620 = vunpack.c.l.b16 %v8548
        %v8621 = vunpack.c.l.b16 %v8549
        %v8622 = vunpack.c.l.b16 %v8550
        %v8623 = vpack.c.b16 %v8616, %v8615
        %v8624 = vpack.c.b16 %v8618, %v8617
        %v8625 = vpack.c.b16 %v8620, %v8619
        %v8626 = vpack.c.b16 %v8622, %v8621
        %v8632 = vsel %vm4350, %v8479, 0
        %v8635 = vsel %vm4350, %v8480, 0
        %v8638 = vsel %vm4350, %v8481, 0
        %v8641 = vsel %vm4350, %v8482, 0
        %v8644 = vsel %vm4350, %v8483, 0
        %v8647 = vsel %vm4350, %v8484, 0
        %v8650 = vsel %vm4350, %v8485, 0
        %v8653 = vsel %vm4350, %v8486, 0
        %8655 = vmatprep.subr.bf16.mxu0 0
        %8656 = vmatpush1.bf16.msra.mxu0 %v8623
        %8657 = vmatprep.subr.bf16.mxu0 0
        %8658 = vmatpush1.bf16.msra.mxu0 %v8624
        %8659 = vmatprep.subr.bf16.mxu0 0
        %8660 = vmatpush1.bf16.msra.mxu0 %v8625
        %8661 = vmatprep.subr.bf16.mxu0 0
        %8662 = vmatpush1.bf16.msra.mxu0 %v8626
        %8663 = vmatprep.subr.bf16.mxu0 0
        %8664 = vmatpush1.bf16.msra.mxu0 0
        %8665 = vmatprep.subr.bf16.mxu0 0
        %8666 = vmatpush1.bf16.msra.mxu0 0
        %8667 = vmatprep.subr.bf16.mxu0 0
        %8668 = vmatpush1.bf16.msra.mxu0 0
        %8669 = vmatprep.subr.bf16.mxu0 0
        %8670 = vmatpush1.bf16.msra.mxu0 0
        %8671 = vmatprep.subr.bf16.mxu0 0
        %8672 = vmatpush1.bf16.msra.mxu0 0
        %8673 = vmatprep.subr.bf16.mxu0 0
        %8674 = vmatpush1.bf16.msra.mxu0 0
        %8675 = vmatprep.subr.bf16.mxu0 0
        %8676 = vmatpush1.bf16.msra.mxu0 0
        %8677 = vmatprep.subr.bf16.mxu0 0
        %8678 = vmatpush1.bf16.msra.mxu0 0
        %8679 = vmatprep.subr.bf16.mxu0 0
        %8680 = vmatpush1.bf16.msra.mxu0 0
        %8681 = vmatprep.subr.bf16.mxu0 0
        %8682 = vmatpush1.bf16.msra.mxu0 0
        %8683 = vmatprep.subr.bf16.mxu0 0
        %8684 = vmatpush1.bf16.msra.mxu0 0
        %8685 = vmatprep.subr.bf16.mxu0 0
        %8686 = vmatpush1.bf16.msra.mxu0 0
        %8687 = vmatprep.mubr.bf16.mxu0 0
        %8688 = vmatmul.mubr.bf16.gmra.mrb[0].mxu0 %v8632
        %v8689 = vpop.f32.mrb[0].mxu0
        %v8690 = vadd.f32 0.0, %v8689
        %v8691 = vpop.f32.mrb[0].mxu0
        %v8692 = vpop.f32.mrb[0].mxu0
        %v8693 = vadd.f32 0.0, %v8692
        %v8694 = vpop.f32.mrb[0].mxu0
        %8695 = vmatprep.mubr.bf16.mxu0 0
        %8696 = vmatmul.mubr.bf16.gmra.mrb[0].mxu0 %v8635
        %v8697 = vpop.f32.mrb[0].mxu0
        %v8698 = vadd.f32 0.0, %v8697
        %v8699 = vpop.f32.mrb[0].mxu0
        %v8700 = vpop.f32.mrb[0].mxu0
        %v8701 = vadd.f32 0.0, %v8700
        %v8702 = vpop.f32.mrb[0].mxu0
        %8703 = vmatprep.mubr.bf16.mxu0 0
        %8704 = vmatmul.mubr.bf16.gmra.mrb[0].mxu0 %v8638
        %v8705 = vpop.f32.mrb[0].mxu0
        %v8706 = vadd.f32 0.0, %v8705
        %v8707 = vpop.f32.mrb[0].mxu0
        %v8708 = vpop.f32.mrb[0].mxu0
        %v8709 = vadd.f32 0.0, %v8708
        %v8710 = vpop.f32.mrb[0].mxu0
        %8711 = vmatprep.mubr.bf16.mxu0 0
        %8712 = vmatmul.mubr.bf16.gmra.mrb[0].mxu0 %v8641
        %v8713 = vpop.f32.mrb[0].mxu0
        %v8714 = vadd.f32 0.0, %v8713
        %v8715 = vpop.f32.mrb[0].mxu0
        %v8716 = vpop.f32.mrb[0].mxu0
        %v8717 = vadd.f32 0.0, %v8716
        %v8718 = vpop.f32.mrb[0].mxu0
        %8719 = vmatprep.mubr.bf16.mxu0 0
        %8720 = vmatmul.mubr.bf16.gmra.mrb[0].mxu0 %v8644
        %v8721 = vpop.f32.mrb[0].mxu0
        %v8722 = vadd.f32 0.0, %v8721
        %v8723 = vpop.f32.mrb[0].mxu0
        %v8724 = vpop.f32.mrb[0].mxu0
        %v8725 = vadd.f32 0.0, %v8724
        %v8726 = vpop.f32.mrb[0].mxu0
        %8727 = vmatprep.mubr.bf16.mxu0 0
        %8728 = vmatmul.mubr.bf16.gmra.mrb[0].mxu0 %v8647
        %v8729 = vpop.f32.mrb[0].mxu0
        %v8730 = vadd.f32 0.0, %v8729
        %v8731 = vpop.f32.mrb[0].mxu0
        %v8732 = vpop.f32.mrb[0].mxu0
        %v8733 = vadd.f32 0.0, %v8732
        %v8734 = vpop.f32.mrb[0].mxu0
        %8735 = vmatprep.mubr.bf16.mxu0 0
        %8736 = vmatmul.mubr.bf16.gmra.mrb[0].mxu0 %v8650
        %v8737 = vpop.f32.mrb[0].mxu0
        %v8738 = vadd.f32 0.0, %v8737
        %v8739 = vpop.f32.mrb[0].mxu0
        %v8740 = vpop.f32.mrb[0].mxu0
        %v8741 = vadd.f32 0.0, %v8740
        %v8742 = vpop.f32.mrb[0].mxu0
        %8743 = vmatprep.mubr.bf16.mxu0 0
        %8744 = vmatmul.mubr.bf16.gmra.mrb[0].mxu0 %v8653
        %v8745 = vpop.f32.mrb[0].mxu0
        %v8746 = vadd.f32 0.0, %v8745
        %v8747 = vpop.f32.mrb[0].mxu0
        %v8748 = vpop.f32.mrb[0].mxu0
        %v8749 = vadd.f32 0.0, %v8748
        %v8750 = vpop.f32.mrb[0].mxu0
        %8751 = vdwg.mxu0
        %v8760 = vunpack.c.l.b16 %v8551
        %v8761 = vunpack.c.l.b16 %v8552
        %v8762 = vunpack.c.l.b16 %v8553
        %v8763 = vunpack.c.l.b16 %v8554
        %v8764 = vunpack.c.l.b16 %v8555
        %v8765 = vunpack.c.l.b16 %v8556
        %v8766 = vunpack.c.l.b16 %v8557
        %v8767 = vunpack.c.l.b16 %v8558
        %v8768 = vpack.c.b16 %v8761, %v8760
        %v8769 = vpack.c.b16 %v8763, %v8762
        %v8770 = vpack.c.b16 %v8765, %v8764
        %v8771 = vpack.c.b16 %v8767, %v8766
        %v8777 = vsel %vm4350, %v8487, 0
        %v8780 = vsel %vm4350, %v8488, 0
        %v8783 = vsel %vm4350, %v8489, 0
        %v8786 = vsel %vm4350, %v8490, 0
        %v8789 = vsel %vm4350, %v8491, 0
        %v8792 = vsel %vm4350, %v8492, 0
        %v8795 = vsel %vm4350, %v8493, 0
        %v8798 = vsel %vm4350, %v8494, 0
        %8800 = vmatprep.subr.bf16.mxu0 0
        %8801 = vmatpush1.bf16.msra.mxu0 %v8768
        %8802 = vmatprep.subr.bf16.mxu0 0
        %8803 = vmatpush1.bf16.msra.mxu0 %v8769
        %8804 = vmatprep.subr.bf16.mxu0 0
        %8805 = vmatpush1.bf16.msra.mxu0 %v8770
        %8806 = vmatprep.subr.bf16.mxu0 0
        %8807 = vmatpush1.bf16.msra.mxu0 %v8771
        %8808 = vmatprep.subr.bf16.mxu0 0
        %8809 = vmatpush1.bf16.msra.mxu0 0
        %8810 = vmatprep.subr.bf16.mxu0 0
        %8811 = vmatpush1.bf16.msra.mxu0 0
        %8812 = vmatprep.subr.bf16.mxu0 0
        %8813 = vmatpush1.bf16.msra.mxu0 0
        %8814 = vmatprep.subr.bf16.mxu0 0
        %8815 = vmatpush1.bf16.msra.mxu0 0
        %8816 = vmatprep.subr.bf16.mxu0 0
        %8817 = vmatpush1.bf16.msra.mxu0 0
        %8818 = vmatprep.subr.bf16.mxu0 0
        %8819 = vmatpush1.bf16.msra.mxu0 0
        %8820 = vmatprep.subr.bf16.mxu0 0
        %8821 = vmatpush1.bf16.msra.mxu0 0
        %8822 = vmatprep.subr.bf16.mxu0 0
        %8823 = vmatpush1.bf16.msra.mxu0 0
        %8824 = vmatprep.subr.bf16.mxu0 0
        %8825 = vmatpush1.bf16.msra.mxu0 0
        %8826 = vmatprep.subr.bf16.mxu0 0
        %8827 = vmatpush1.bf16.msra.mxu0 0
        %8828 = vmatprep.subr.bf16.mxu0 0
        %8829 = vmatpush1.bf16.msra.mxu0 0
        %8830 = vmatprep.subr.bf16.mxu0 0
        %8831 = vmatpush1.bf16.msra.mxu0 0
        %8832 = vmatprep.mubr.bf16.mxu0 0
        %8833 = vmatmul.mubr.bf16.gmra.mrb[0].mxu0 %v8777
        %v8834 = vpop.f32.mrb[0].mxu0
        %v8835 = vadd.f32 0.0, %v8834
        %v8836 = vpop.f32.mrb[0].mxu0
        %v8837 = vpop.f32.mrb[0].mxu0
        %v8838 = vadd.f32 0.0, %v8837
        %v8839 = vpop.f32.mrb[0].mxu0
        %8840 = vmatprep.mubr.bf16.mxu0 0
        %8841 = vmatmul.mubr.bf16.gmra.mrb[0].mxu0 %v8780
        %v8842 = vpop.f32.mrb[0].mxu0
        %v8843 = vadd.f32 0.0, %v8842
        %v8844 = vpop.f32.mrb[0].mxu0
        %v8845 = vpop.f32.mrb[0].mxu0
        %v8846 = vadd.f32 0.0, %v8845
        %v8847 = vpop.f32.mrb[0].mxu0
        %8848 = vmatprep.mubr.bf16.mxu0 0
        %8849 = vmatmul.mubr.bf16.gmra.mrb[0].mxu0 %v8783
        %v8850 = vpop.f32.mrb[0].mxu0
        %v8851 = vadd.f32 0.0, %v8850
        %v8852 = vpop.f32.mrb[0].mxu0
        %v8853 = vpop.f32.mrb[0].mxu0
        %v8854 = vadd.f32 0.0, %v8853
        %v8855 = vpop.f32.mrb[0].mxu0
        %8856 = vmatprep.mubr.bf16.mxu0 0
        %8857 = vmatmul.mubr.bf16.gmra.mrb[0].mxu0 %v8786
        %v8858 = vpop.f32.mrb[0].mxu0
        %v8859 = vadd.f32 0.0, %v8858
        %v8860 = vpop.f32.mrb[0].mxu0
        %v8861 = vpop.f32.mrb[0].mxu0
        %v8862 = vadd.f32 0.0, %v8861
        %v8863 = vpop.f32.mrb[0].mxu0
        %8864 = vmatprep.mubr.bf16.mxu0 0
        %8865 = vmatmul.mubr.bf16.gmra.mrb[0].mxu0 %v8789
        %v8866 = vpop.f32.mrb[0].mxu0
        %v8867 = vadd.f32 0.0, %v8866
        %v8868 = vpop.f32.mrb[0].mxu0
        %v8869 = vpop.f32.mrb[0].mxu0
        %v8870 = vadd.f32 0.0, %v8869
        %v8871 = vpop.f32.mrb[0].mxu0
        %8872 = vmatprep.mubr.bf16.mxu0 0
        %8873 = vmatmul.mubr.bf16.gmra.mrb[0].mxu0 %v8792
        %v8874 = vpop.f32.mrb[0].mxu0
        %v8875 = vadd.f32 0.0, %v8874
        %v8876 = vpop.f32.mrb[0].mxu0
        %v8877 = vpop.f32.mrb[0].mxu0
        %v8878 = vadd.f32 0.0, %v8877
        %v8879 = vpop.f32.mrb[0].mxu0
        %8880 = vmatprep.mubr.bf16.mxu0 0
        %8881 = vmatmul.mubr.bf16.gmra.mrb[0].mxu0 %v8795
        %v8882 = vpop.f32.mrb[0].mxu0
        %v8883 = vadd.f32 0.0, %v8882
        %v8884 = vpop.f32.mrb[0].mxu0
        %v8885 = vpop.f32.mrb[0].mxu0
        %v8886 = vadd.f32 0.0, %v8885
        %v8887 = vpop.f32.mrb[0].mxu0
        %8888 = vmatprep.mubr.bf16.mxu0 0
        %8889 = vmatmul.mubr.bf16.gmra.mrb[0].mxu0 %v8798
        %v8890 = vpop.f32.mrb[0].mxu0
        %v8891 = vadd.f32 0.0, %v8890
        %v8892 = vpop.f32.mrb[0].mxu0
        %v8893 = vpop.f32.mrb[0].mxu0
        %v8894 = vadd.f32 0.0, %v8893
        %v8895 = vpop.f32.mrb[0].mxu0
        %8896 = vdwg.mxu0
        %v8905 = vunpack.c.l.b16 %v8559
        %v8906 = vunpack.c.l.b16 %v8560
        %v8907 = vunpack.c.l.b16 %v8561
        %v8908 = vunpack.c.l.b16 %v8562
        %v8909 = vunpack.c.l.b16 %v8563
        %v8910 = vunpack.c.l.b16 %v8564
        %v8911 = vunpack.c.l.b16 %v8565
        %v8912 = vunpack.c.l.b16 %v8566
        %v8913 = vpack.c.b16 %v8906, %v8905
        %v8914 = vpack.c.b16 %v8908, %v8907
        %v8915 = vpack.c.b16 %v8910, %v8909
        %v8916 = vpack.c.b16 %v8912, %v8911
        %v8922 = vsel %vm4350, %v8495, 0
        %v8925 = vsel %vm4350, %v8496, 0
        %v8928 = vsel %vm4350, %v8497, 0
        %v8931 = vsel %vm4350, %v8498, 0
        %v8934 = vsel %vm4350, %v8499, 0
        %v8937 = vsel %vm4350, %v8500, 0
        %v8940 = vsel %vm4350, %v8501, 0
        %v8943 = vsel %vm4350, %v8502, 0
        %8945 = vmatprep.subr.bf16.mxu0 0
        %8946 = vmatpush1.bf16.msra.mxu0 %v8913
        %8947 = vmatprep.subr.bf16.mxu0 0
        %8948 = vmatpush1.bf16.msra.mxu0 %v8914
        %8949 = vmatprep.subr.bf16.mxu0 0
        %8950 = vmatpush1.bf16.msra.mxu0 %v8915
        %8951 = vmatprep.subr.bf16.mxu0 0
        %8952 = vmatpush1.bf16.msra.mxu0 %v8916
        %8953 = vmatprep.subr.bf16.mxu0 0
        %8954 = vmatpush1.bf16.msra.mxu0 0
        %8955 = vmatprep.subr.bf16.mxu0 0
        %8956 = vmatpush1.bf16.msra.mxu0 0
        %8957 = vmatprep.subr.bf16.mxu0 0
        %8958 = vmatpush1.bf16.msra.mxu0 0
        %8959 = vmatprep.subr.bf16.mxu0 0
        %8960 = vmatpush1.bf16.msra.mxu0 0
        %8961 = vmatprep.subr.bf16.mxu0 0
        %8962 = vmatpush1.bf16.msra.mxu0 0
        %8963 = vmatprep.subr.bf16.mxu0 0
        %8964 = vmatpush1.bf16.msra.mxu0 0
        %8965 = vmatprep.subr.bf16.mxu0 0
        %8966 = vmatpush1.bf16.msra.mxu0 0
        %8967 = vmatprep.subr.bf16.mxu0 0
        %8968 = vmatpush1.bf16.msra.mxu0 0
        %8969 = vmatprep.subr.bf16.mxu0 0
        %8970 = vmatpush1.bf16.msra.mxu0 0
        %8971 = vmatprep.subr.bf16.mxu0 0
        %8972 = vmatpush1.bf16.msra.mxu0 0
        %8973 = vmatprep.subr.bf16.mxu0 0
        %8974 = vmatpush1.bf16.msra.mxu0 0
        %8975 = vmatprep.subr.bf16.mxu0 0
        %8976 = vmatpush1.bf16.msra.mxu0 0
        %8977 = vmatprep.mubr.bf16.mxu0 0
        %8978 = vmatmul.mubr.bf16.gmra.mrb[0].mxu0 %v8922
        %v8979 = vpop.f32.mrb[0].mxu0
        %v8980 = vadd.f32 0.0, %v8979
        %v8981 = vpop.f32.mrb[0].mxu0
        %v8982 = vpop.f32.mrb[0].mxu0
        %v8983 = vadd.f32 0.0, %v8982
        %v8984 = vpop.f32.mrb[0].mxu0
        %8985 = vmatprep.mubr.bf16.mxu0 0
        %8986 = vmatmul.mubr.bf16.gmra.mrb[0].mxu0 %v8925
        %v8987 = vpop.f32.mrb[0].mxu0
        %v8988 = vadd.f32 0.0, %v8987
        %v8989 = vpop.f32.mrb[0].mxu0
        %v8990 = vpop.f32.mrb[0].mxu0
        %v8991 = vadd.f32 0.0, %v8990
        %v8992 = vpop.f32.mrb[0].mxu0
        %8993 = vmatprep.mubr.bf16.mxu0 0
        %8994 = vmatmul.mubr.bf16.gmra.mrb[0].mxu0 %v8928
        %v8995 = vpop.f32.mrb[0].mxu0
        %v8996 = vadd.f32 0.0, %v8995
        %v8997 = vpop.f32.mrb[0].mxu0
        %v8998 = vpop.f32.mrb[0].mxu0
        %v8999 = vadd.f32 0.0, %v8998
        %v9000 = vpop.f32.mrb[0].mxu0
        %9001 = vmatprep.mubr.bf16.mxu0 0
        %9002 = vmatmul.mubr.bf16.gmra.mrb[0].mxu0 %v8931
        %v9003 = vpop.f32.mrb[0].mxu0
        %v9004 = vadd.f32 0.0, %v9003
        %v9005 = vpop.f32.mrb[0].mxu0
        %v9006 = vpop.f32.mrb[0].mxu0
        %v9007 = vadd.f32 0.0, %v9006
        %v9008 = vpop.f32.mrb[0].mxu0
        %9009 = vmatprep.mubr.bf16.mxu0 0
        %9010 = vmatmul.mubr.bf16.gmra.mrb[0].mxu0 %v8934
        %v9011 = vpop.f32.mrb[0].mxu0
        %v9012 = vadd.f32 0.0, %v9011
        %v9013 = vpop.f32.mrb[0].mxu0
        %v9014 = vpop.f32.mrb[0].mxu0
        %v9015 = vadd.f32 0.0, %v9014
        %v9016 = vpop.f32.mrb[0].mxu0
        %9017 = vmatprep.mubr.bf16.mxu0 0
        %9018 = vmatmul.mubr.bf16.gmra.mrb[0].mxu0 %v8937
        %v9019 = vpop.f32.mrb[0].mxu0
        %v9020 = vadd.f32 0.0, %v9019
        %v9021 = vpop.f32.mrb[0].mxu0
        %v9022 = vpop.f32.mrb[0].mxu0
        %v9023 = vadd.f32 0.0, %v9022
        %v9024 = vpop.f32.mrb[0].mxu0
        %9025 = vmatprep.mubr.bf16.mxu0 0
        %9026 = vmatmul.mubr.bf16.gmra.mrb[0].mxu0 %v8940
        %v9027 = vpop.f32.mrb[0].mxu0
        %v9028 = vadd.f32 0.0, %v9027
        %v9029 = vpop.f32.mrb[0].mxu0
        %v9030 = vpop.f32.mrb[0].mxu0
        %v9031 = vadd.f32 0.0, %v9030
        %v9032 = vpop.f32.mrb[0].mxu0
        %9033 = vmatprep.mubr.bf16.mxu0 0
        %9034 = vmatmul.mubr.bf16.gmra.mrb[0].mxu0 %v8943
        %v9035 = vpop.f32.mrb[0].mxu0
        %v9036 = vadd.f32 0.0, %v9035
        %v9037 = vpop.f32.mrb[0].mxu0
        %v9038 = vpop.f32.mrb[0].mxu0
        %v9039 = vadd.f32 0.0, %v9038
        %v9040 = vpop.f32.mrb[0].mxu0
        %9041 = vdwg.mxu0
        %v9050 = vunpack.c.l.b16 %v8567
        %v9051 = vunpack.c.l.b16 %v8568
        %v9052 = vunpack.c.l.b16 %v8569
        %v9053 = vunpack.c.l.b16 %v8570
        %v9054 = vunpack.c.l.b16 %v8571
        %v9055 = vunpack.c.l.b16 %v8572
        %v9056 = vunpack.c.l.b16 %v8573
        %v9057 = vunpack.c.l.b16 %v8574
        %v9058 = vpack.c.b16 %v9051, %v9050
        %v9059 = vpack.c.b16 %v9053, %v9052
        %v9060 = vpack.c.b16 %v9055, %v9054
        %v9061 = vpack.c.b16 %v9057, %v9056
        %v9067 = vsel %vm4350, %v8503, 0
        %v9070 = vsel %vm4350, %v8504, 0
        %v9073 = vsel %vm4350, %v8505, 0
        %v9076 = vsel %vm4350, %v8506, 0
        %v9079 = vsel %vm4350, %v8507, 0
        %v9082 = vsel %vm4350, %v8508, 0
        %v9085 = vsel %vm4350, %v8509, 0
        %v9088 = vsel %vm4350, %v8510, 0
        %9090 = vmatprep.subr.bf16.mxu0 0
        %9091 = vmatpush1.bf16.msra.mxu0 %v9058
        %9092 = vmatprep.subr.bf16.mxu0 0
        %9093 = vmatpush1.bf16.msra.mxu0 %v9059
        %9094 = vmatprep.subr.bf16.mxu0 0
        %9095 = vmatpush1.bf16.msra.mxu0 %v9060
        %9096 = vmatprep.subr.bf16.mxu0 0
        %9097 = vmatpush1.bf16.msra.mxu0 %v9061
        %9098 = vmatprep.subr.bf16.mxu0 0
        %9099 = vmatpush1.bf16.msra.mxu0 0
        %9100 = vmatprep.subr.bf16.mxu0 0
        %9101 = vmatpush1.bf16.msra.mxu0 0
        %9102 = vmatprep.subr.bf16.mxu0 0
        %9103 = vmatpush1.bf16.msra.mxu0 0
        %9104 = vmatprep.subr.bf16.mxu0 0
        %9105 = vmatpush1.bf16.msra.mxu0 0
        %9106 = vmatprep.subr.bf16.mxu0 0
        %9107 = vmatpush1.bf16.msra.mxu0 0
        %9108 = vmatprep.subr.bf16.mxu0 0
        %9109 = vmatpush1.bf16.msra.mxu0 0
        %9110 = vmatprep.subr.bf16.mxu0 0
        %9111 = vmatpush1.bf16.msra.mxu0 0
        %9112 = vmatprep.subr.bf16.mxu0 0
        %9113 = vmatpush1.bf16.msra.mxu0 0
        %9114 = vmatprep.subr.bf16.mxu0 0
        %9115 = vmatpush1.bf16.msra.mxu0 0
        %9116 = vmatprep.subr.bf16.mxu0 0
        %9117 = vmatpush1.bf16.msra.mxu0 0
        %9118 = vmatprep.subr.bf16.mxu0 0
        %9119 = vmatpush1.bf16.msra.mxu0 0
        %9120 = vmatprep.subr.bf16.mxu0 0
        %9121 = vmatpush1.bf16.msra.mxu0 0
        %9122 = vmatprep.mubr.bf16.mxu0 0
        %9123 = vmatmul.mubr.bf16.gmra.mrb[0].mxu0 %v9067
        %v9124 = vpop.f32.mrb[0].mxu0
        %v9125 = vadd.f32 0.0, %v9124
        %v9126 = vpop.f32.mrb[0].mxu0
        %v9127 = vpop.f32.mrb[0].mxu0
        %v9128 = vadd.f32 0.0, %v9127
        %v9129 = vpop.f32.mrb[0].mxu0
        %9130 = vmatprep.mubr.bf16.mxu0 0
        %9131 = vmatmul.mubr.bf16.gmra.mrb[0].mxu0 %v9070
        %v9132 = vpop.f32.mrb[0].mxu0
        %v9133 = vadd.f32 0.0, %v9132
        %v9134 = vpop.f32.mrb[0].mxu0
        %v9135 = vpop.f32.mrb[0].mxu0
        %v9136 = vadd.f32 0.0, %v9135
        %v9137 = vpop.f32.mrb[0].mxu0
        %9138 = vmatprep.mubr.bf16.mxu0 0
        %9139 = vmatmul.mubr.bf16.gmra.mrb[0].mxu0 %v9073
        %v9140 = vpop.f32.mrb[0].mxu0
        %v9141 = vadd.f32 0.0, %v9140
        %v9142 = vpop.f32.mrb[0].mxu0
        %v9143 = vpop.f32.mrb[0].mxu0
        %v9144 = vadd.f32 0.0, %v9143
        %v9145 = vpop.f32.mrb[0].mxu0
        %9146 = vmatprep.mubr.bf16.mxu0 0
        %9147 = vmatmul.mubr.bf16.gmra.mrb[0].mxu0 %v9076
        %v9148 = vpop.f32.mrb[0].mxu0
        %v9149 = vadd.f32 0.0, %v9148
        %v9150 = vpop.f32.mrb[0].mxu0
        %v9151 = vpop.f32.mrb[0].mxu0
        %v9152 = vadd.f32 0.0, %v9151
        %v9153 = vpop.f32.mrb[0].mxu0
        %9154 = vmatprep.mubr.bf16.mxu0 0
        %9155 = vmatmul.mubr.bf16.gmra.mrb[0].mxu0 %v9079
        %v9156 = vpop.f32.mrb[0].mxu0
        %v9157 = vadd.f32 0.0, %v9156
        %v9158 = vpop.f32.mrb[0].mxu0
        %v9159 = vpop.f32.mrb[0].mxu0
        %v9160 = vadd.f32 0.0, %v9159
        %v9161 = vpop.f32.mrb[0].mxu0
        %9162 = vmatprep.mubr.bf16.mxu0 0
        %9163 = vmatmul.mubr.bf16.gmra.mrb[0].mxu0 %v9082
        %v9164 = vpop.f32.mrb[0].mxu0
        %v9165 = vadd.f32 0.0, %v9164
        %v9166 = vpop.f32.mrb[0].mxu0
        %v9167 = vpop.f32.mrb[0].mxu0
        %v9168 = vadd.f32 0.0, %v9167
        %v9169 = vpop.f32.mrb[0].mxu0
        %9170 = vmatprep.mubr.bf16.mxu0 0
        %9171 = vmatmul.mubr.bf16.gmra.mrb[0].mxu0 %v9085
        %v9172 = vpop.f32.mrb[0].mxu0
        %v9173 = vadd.f32 0.0, %v9172
        %v9174 = vpop.f32.mrb[0].mxu0
        %v9175 = vpop.f32.mrb[0].mxu0
        %v9176 = vadd.f32 0.0, %v9175
        %v9177 = vpop.f32.mrb[0].mxu0
        %9178 = vmatprep.mubr.bf16.mxu0 0
        %9179 = vmatmul.mubr.bf16.gmra.mrb[0].mxu0 %v9088
        %v9180 = vpop.f32.mrb[0].mxu0
        %v9181 = vadd.f32 0.0, %v9180
        %v9182 = vpop.f32.mrb[0].mxu0
        %v9183 = vpop.f32.mrb[0].mxu0
        %v9184 = vadd.f32 0.0, %v9183
        %v9185 = vpop.f32.mrb[0].mxu0
        %9186 = vdwg.mxu0
        %v9195 = vunpack.c.l.b16 %v8575
        %v9196 = vunpack.c.l.b16 %v8576
        %v9197 = vunpack.c.l.b16 %v8577
        %v9198 = vunpack.c.l.b16 %v8578
        %v9199 = vunpack.c.l.b16 %v8579
        %v9200 = vunpack.c.l.b16 %v8580
        %v9201 = vunpack.c.l.b16 %v8581
        %v9202 = vunpack.c.l.b16 %v8582
        %v9203 = vpack.c.b16 %v9196, %v9195
        %v9204 = vpack.c.b16 %v9198, %v9197
        %v9205 = vpack.c.b16 %v9200, %v9199
        %v9206 = vpack.c.b16 %v9202, %v9201
        %v9212 = vsel %vm4350, %v8511, 0
        %v9215 = vsel %vm4350, %v8512, 0
        %v9218 = vsel %vm4350, %v8513, 0
        %v9221 = vsel %vm4350, %v8514, 0
        %v9224 = vsel %vm4350, %v8515, 0
        %v9227 = vsel %vm4350, %v8516, 0
        %v9230 = vsel %vm4350, %v8517, 0
        %v9233 = vsel %vm4350, %v8518, 0
        %9235 = vmatprep.subr.bf16.mxu0 0
        %9236 = vmatpush1.bf16.msra.mxu0 %v9203
        %9237 = vmatprep.subr.bf16.mxu0 0
        %9238 = vmatpush1.bf16.msra.mxu0 %v9204
        %9239 = vmatprep.subr.bf16.mxu0 0
        %9240 = vmatpush1.bf16.msra.mxu0 %v9205
        %9241 = vmatprep.subr.bf16.mxu0 0
        %9242 = vmatpush1.bf16.msra.mxu0 %v9206
        %9243 = vmatprep.subr.bf16.mxu0 0
        %9244 = vmatpush1.bf16.msra.mxu0 0
        %9245 = vmatprep.subr.bf16.mxu0 0
        %9246 = vmatpush1.bf16.msra.mxu0 0
        %9247 = vmatprep.subr.bf16.mxu0 0
        %9248 = vmatpush1.bf16.msra.mxu0 0
        %9249 = vmatprep.subr.bf16.mxu0 0
        %9250 = vmatpush1.bf16.msra.mxu0 0
        %9251 = vmatprep.subr.bf16.mxu0 0
        %9252 = vmatpush1.bf16.msra.mxu0 0
        %9253 = vmatprep.subr.bf16.mxu0 0
        %9254 = vmatpush1.bf16.msra.mxu0 0
        %9255 = vmatprep.subr.bf16.mxu0 0
        %9256 = vmatpush1.bf16.msra.mxu0 0
        %9257 = vmatprep.subr.bf16.mxu0 0
        %9258 = vmatpush1.bf16.msra.mxu0 0
        %9259 = vmatprep.subr.bf16.mxu0 0
        %9260 = vmatpush1.bf16.msra.mxu0 0
        %9261 = vmatprep.subr.bf16.mxu0 0
        %9262 = vmatpush1.bf16.msra.mxu0 0
        %9263 = vmatprep.subr.bf16.mxu0 0
        %9264 = vmatpush1.bf16.msra.mxu0 0
        %9265 = vmatprep.subr.bf16.mxu0 0
        %9266 = vmatpush1.bf16.msra.mxu0 0
        %9267 = vmatprep.mubr.bf16.mxu0 0
        %9268 = vmatmul.mubr.bf16.gmra.mrb[0].mxu0 %v9212
        %v9269 = vpop.f32.mrb[0].mxu0
        %v9270 = vadd.f32 0.0, %v9269
        %v9271 = vpop.f32.mrb[0].mxu0
        %v9272 = vpop.f32.mrb[0].mxu0
        %v9273 = vadd.f32 0.0, %v9272
        %v9274 = vpop.f32.mrb[0].mxu0
        %9275 = vmatprep.mubr.bf16.mxu0 0
        %9276 = vmatmul.mubr.bf16.gmra.mrb[0].mxu0 %v9215
        %v9277 = vpop.f32.mrb[0].mxu0
        %v9278 = vadd.f32 0.0, %v9277
        %v9279 = vpop.f32.mrb[0].mxu0
        %v9280 = vpop.f32.mrb[0].mxu0
        %v9281 = vadd.f32 0.0, %v9280
        %v9282 = vpop.f32.mrb[0].mxu0
        %9283 = vmatprep.mubr.bf16.mxu0 0
        %9284 = vmatmul.mubr.bf16.gmra.mrb[0].mxu0 %v9218
        %v9285 = vpop.f32.mrb[0].mxu0
        %v9286 = vadd.f32 0.0, %v9285
        %v9287 = vpop.f32.mrb[0].mxu0
        %v9288 = vpop.f32.mrb[0].mxu0
        %v9289 = vadd.f32 0.0, %v9288
        %v9290 = vpop.f32.mrb[0].mxu0
        %9291 = vmatprep.mubr.bf16.mxu0 0
        %9292 = vmatmul.mubr.bf16.gmra.mrb[0].mxu0 %v9221
        %v9293 = vpop.f32.mrb[0].mxu0
        %v9294 = vadd.f32 0.0, %v9293
        %v9295 = vpop.f32.mrb[0].mxu0
        %v9296 = vpop.f32.mrb[0].mxu0
        %v9297 = vadd.f32 0.0, %v9296
        %v9298 = vpop.f32.mrb[0].mxu0
        %9299 = vmatprep.mubr.bf16.mxu0 0
        %9300 = vmatmul.mubr.bf16.gmra.mrb[0].mxu0 %v9224
        %v9301 = vpop.f32.mrb[0].mxu0
        %v9302 = vadd.f32 0.0, %v9301
        %v9303 = vpop.f32.mrb[0].mxu0
        %v9304 = vpop.f32.mrb[0].mxu0
        %v9305 = vadd.f32 0.0, %v9304
        %v9306 = vpop.f32.mrb[0].mxu0
        %9307 = vmatprep.mubr.bf16.mxu0 0
        %9308 = vmatmul.mubr.bf16.gmra.mrb[0].mxu0 %v9227
        %v9309 = vpop.f32.mrb[0].mxu0
        %v9310 = vadd.f32 0.0, %v9309
        %v9311 = vpop.f32.mrb[0].mxu0
        %v9312 = vpop.f32.mrb[0].mxu0
        %v9313 = vadd.f32 0.0, %v9312
        %v9314 = vpop.f32.mrb[0].mxu0
        %9315 = vmatprep.mubr.bf16.mxu0 0
        %9316 = vmatmul.mubr.bf16.gmra.mrb[0].mxu0 %v9230
        %v9317 = vpop.f32.mrb[0].mxu0
        %v9318 = vadd.f32 0.0, %v9317
        %v9319 = vpop.f32.mrb[0].mxu0
        %v9320 = vpop.f32.mrb[0].mxu0
        %v9321 = vadd.f32 0.0, %v9320
        %v9322 = vpop.f32.mrb[0].mxu0
        %9323 = vmatprep.mubr.bf16.mxu0 0
        %9324 = vmatmul.mubr.bf16.gmra.mrb[0].mxu0 %v9233
        %v9325 = vpop.f32.mrb[0].mxu0
        %v9326 = vadd.f32 0.0, %v9325
        %v9327 = vpop.f32.mrb[0].mxu0
        %v9328 = vpop.f32.mrb[0].mxu0
        %v9329 = vadd.f32 0.0, %v9328
        %v9330 = vpop.f32.mrb[0].mxu0
        %9331 = vdwg.mxu0
        %v9340 = vunpack.c.l.b16 %v8583
        %v9341 = vunpack.c.l.b16 %v8584
        %v9342 = vunpack.c.l.b16 %v8585
        %v9343 = vunpack.c.l.b16 %v8586
        %v9344 = vunpack.c.l.b16 %v8587
        %v9345 = vunpack.c.l.b16 %v8588
        %v9346 = vunpack.c.l.b16 %v8589
        %v9347 = vunpack.c.l.b16 %v8590
        %v9348 = vpack.c.b16 %v9341, %v9340
        %v9349 = vpack.c.b16 %v9343, %v9342
        %v9350 = vpack.c.b16 %v9345, %v9344
        %v9351 = vpack.c.b16 %v9347, %v9346
        %v9357 = vsel %vm4350, %v8519, 0
        %v9360 = vsel %vm4350, %v8520, 0
        %v9363 = vsel %vm4350, %v8521, 0
        %v9366 = vsel %vm4350, %v8522, 0
        %v9369 = vsel %vm4350, %v8523, 0
        %v9372 = vsel %vm4350, %v8524, 0
        %v9375 = vsel %vm4350, %v8525, 0
        %v9378 = vsel %vm4350, %v8526, 0
        %9380 = vmatprep.subr.bf16.mxu0 0
        %9381 = vmatpush1.bf16.msra.mxu0 %v9348
        %9382 = vmatprep.subr.bf16.mxu0 0
        %9383 = vmatpush1.bf16.msra.mxu0 %v9349
        %9384 = vmatprep.subr.bf16.mxu0 0
        %9385 = vmatpush1.bf16.msra.mxu0 %v9350
        %9386 = vmatprep.subr.bf16.mxu0 0
        %9387 = vmatpush1.bf16.msra.mxu0 %v9351
        %9388 = vmatprep.subr.bf16.mxu0 0
        %9389 = vmatpush1.bf16.msra.mxu0 0
        %9390 = vmatprep.subr.bf16.mxu0 0
        %9391 = vmatpush1.bf16.msra.mxu0 0
        %9392 = vmatprep.subr.bf16.mxu0 0
        %9393 = vmatpush1.bf16.msra.mxu0 0
        %9394 = vmatprep.subr.bf16.mxu0 0
        %9395 = vmatpush1.bf16.msra.mxu0 0
        %9396 = vmatprep.subr.bf16.mxu0 0
        %9397 = vmatpush1.bf16.msra.mxu0 0
        %9398 = vmatprep.subr.bf16.mxu0 0
        %9399 = vmatpush1.bf16.msra.mxu0 0
        %9400 = vmatprep.subr.bf16.mxu0 0
        %9401 = vmatpush1.bf16.msra.mxu0 0
        %9402 = vmatprep.subr.bf16.mxu0 0
        %9403 = vmatpush1.bf16.msra.mxu0 0
        %9404 = vmatprep.subr.bf16.mxu0 0
        %9405 = vmatpush1.bf16.msra.mxu0 0
        %9406 = vmatprep.subr.bf16.mxu0 0
        %9407 = vmatpush1.bf16.msra.mxu0 0
        %9408 = vmatprep.subr.bf16.mxu0 0
        %9409 = vmatpush1.bf16.msra.mxu0 0
        %9410 = vmatprep.subr.bf16.mxu0 0
        %9411 = vmatpush1.bf16.msra.mxu0 0
        %9412 = vmatprep.mubr.bf16.mxu0 0
        %9413 = vmatmul.mubr.bf16.gmra.mrb[0].mxu0 %v9357
        %v9414 = vpop.f32.mrb[0].mxu0
        %v9415 = vadd.f32 0.0, %v9414
        %v9416 = vpop.f32.mrb[0].mxu0
        %v9417 = vpop.f32.mrb[0].mxu0
        %v9418 = vadd.f32 0.0, %v9417
        %v9419 = vpop.f32.mrb[0].mxu0
        %9420 = vmatprep.mubr.bf16.mxu0 0
        %9421 = vmatmul.mubr.bf16.gmra.mrb[0].mxu0 %v9360
        %v9422 = vpop.f32.mrb[0].mxu0
        %v9423 = vadd.f32 0.0, %v9422
        %v9424 = vpop.f32.mrb[0].mxu0
        %v9425 = vpop.f32.mrb[0].mxu0
        %v9426 = vadd.f32 0.0, %v9425
        %v9427 = vpop.f32.mrb[0].mxu0
        %9428 = vmatprep.mubr.bf16.mxu0 0
        %9429 = vmatmul.mubr.bf16.gmra.mrb[0].mxu0 %v9363
        %v9430 = vpop.f32.mrb[0].mxu0
        %v9431 = vadd.f32 0.0, %v9430
        %v9432 = vpop.f32.mrb[0].mxu0
        %v9433 = vpop.f32.mrb[0].mxu0
        %v9434 = vadd.f32 0.0, %v9433
        %v9435 = vpop.f32.mrb[0].mxu0
        %9436 = vmatprep.mubr.bf16.mxu0 0
        %9437 = vmatmul.mubr.bf16.gmra.mrb[0].mxu0 %v9366
        %v9438 = vpop.f32.mrb[0].mxu0
        %v9439 = vadd.f32 0.0, %v9438
        %v9440 = vpop.f32.mrb[0].mxu0
        %v9441 = vpop.f32.mrb[0].mxu0
        %v9442 = vadd.f32 0.0, %v9441
        %v9443 = vpop.f32.mrb[0].mxu0
        %9444 = vmatprep.mubr.bf16.mxu0 0
        %9445 = vmatmul.mubr.bf16.gmra.mrb[0].mxu0 %v9369
        %v9446 = vpop.f32.mrb[0].mxu0
        %v9447 = vadd.f32 0.0, %v9446
        %v9448 = vpop.f32.mrb[0].mxu0
        %v9449 = vpop.f32.mrb[0].mxu0
        %v9450 = vadd.f32 0.0, %v9449
        %v9451 = vpop.f32.mrb[0].mxu0
        %9452 = vmatprep.mubr.bf16.mxu0 0
        %9453 = vmatmul.mubr.bf16.gmra.mrb[0].mxu0 %v9372
        %v9454 = vpop.f32.mrb[0].mxu0
        %v9455 = vadd.f32 0.0, %v9454
        %v9456 = vpop.f32.mrb[0].mxu0
        %v9457 = vpop.f32.mrb[0].mxu0
        %v9458 = vadd.f32 0.0, %v9457
        %v9459 = vpop.f32.mrb[0].mxu0
        %9460 = vmatprep.mubr.bf16.mxu0 0
        %9461 = vmatmul.mubr.bf16.gmra.mrb[0].mxu0 %v9375
        %v9462 = vpop.f32.mrb[0].mxu0
        %v9463 = vadd.f32 0.0, %v9462
        %v9464 = vpop.f32.mrb[0].mxu0
        %v9465 = vpop.f32.mrb[0].mxu0
        %v9466 = vadd.f32 0.0, %v9465
        %v9467 = vpop.f32.mrb[0].mxu0
        %9468 = vmatprep.mubr.bf16.mxu0 0
        %9469 = vmatmul.mubr.bf16.gmra.mrb[0].mxu0 %v9378
        %v9470 = vpop.f32.mrb[0].mxu0
        %v9471 = vadd.f32 0.0, %v9470
        %v9472 = vpop.f32.mrb[0].mxu0
        %v9473 = vpop.f32.mrb[0].mxu0
        %v9474 = vadd.f32 0.0, %v9473
        %v9475 = vpop.f32.mrb[0].mxu0
        %9476 = vdwg.mxu0
        %v9485 = vunpack.c.l.b16 %v8591
        %v9486 = vunpack.c.l.b16 %v8592
        %v9487 = vunpack.c.l.b16 %v8593
        %v9488 = vunpack.c.l.b16 %v8594
        %v9489 = vunpack.c.l.b16 %v8595
        %v9490 = vunpack.c.l.b16 %v8596
        %v9491 = vunpack.c.l.b16 %v8597
        %v9492 = vunpack.c.l.b16 %v8598
        %v9493 = vpack.c.b16 %v9486, %v9485
        %v9494 = vpack.c.b16 %v9488, %v9487
        %v9495 = vpack.c.b16 %v9490, %v9489
        %v9496 = vpack.c.b16 %v9492, %v9491
        %v9502 = vsel %vm4350, %v8527, 0
        %v9505 = vsel %vm4350, %v8528, 0
        %v9508 = vsel %vm4350, %v8529, 0
        %v9511 = vsel %vm4350, %v8530, 0
        %v9514 = vsel %vm4350, %v8531, 0
        %v9517 = vsel %vm4350, %v8532, 0
        %v9520 = vsel %vm4350, %v8533, 0
        %v9523 = vsel %vm4350, %v8534, 0
        %9525 = vmatprep.subr.bf16.mxu0 0
        %9526 = vmatpush1.bf16.msra.mxu0 %v9493
        %9527 = vmatprep.subr.bf16.mxu0 0
        %9528 = vmatpush1.bf16.msra.mxu0 %v9494
        %9529 = vmatprep.subr.bf16.mxu0 0
        %9530 = vmatpush1.bf16.msra.mxu0 %v9495
        %9531 = vmatprep.subr.bf16.mxu0 0
        %9532 = vmatpush1.bf16.msra.mxu0 %v9496
        %9533 = vmatprep.subr.bf16.mxu0 0
        %9534 = vmatpush1.bf16.msra.mxu0 0
        %9535 = vmatprep.subr.bf16.mxu0 0
        %9536 = vmatpush1.bf16.msra.mxu0 0
        %9537 = vmatprep.subr.bf16.mxu0 0
        %9538 = vmatpush1.bf16.msra.mxu0 0
        %9539 = vmatprep.subr.bf16.mxu0 0
        %9540 = vmatpush1.bf16.msra.mxu0 0
        %9541 = vmatprep.subr.bf16.mxu0 0
        %9542 = vmatpush1.bf16.msra.mxu0 0
        %9543 = vmatprep.subr.bf16.mxu0 0
        %9544 = vmatpush1.bf16.msra.mxu0 0
        %9545 = vmatprep.subr.bf16.mxu0 0
        %9546 = vmatpush1.bf16.msra.mxu0 0
        %9547 = vmatprep.subr.bf16.mxu0 0
        %9548 = vmatpush1.bf16.msra.mxu0 0
        %9549 = vmatprep.subr.bf16.mxu0 0
        %9550 = vmatpush1.bf16.msra.mxu0 0
        %9551 = vmatprep.subr.bf16.mxu0 0
        %9552 = vmatpush1.bf16.msra.mxu0 0
        %9553 = vmatprep.subr.bf16.mxu0 0
        %9554 = vmatpush1.bf16.msra.mxu0 0
        %9555 = vmatprep.subr.bf16.mxu0 0
        %9556 = vmatpush1.bf16.msra.mxu0 0
        %9557 = vmatprep.mubr.bf16.mxu0 0
        %9558 = vmatmul.mubr.bf16.gmra.mrb[0].mxu0 %v9502
        %v9559 = vpop.f32.mrb[0].mxu0
        %v9560 = vadd.f32 0.0, %v9559
        %v9561 = vpop.f32.mrb[0].mxu0
        %v9562 = vpop.f32.mrb[0].mxu0
        %v9563 = vadd.f32 0.0, %v9562
        %v9564 = vpop.f32.mrb[0].mxu0
        %9565 = vmatprep.mubr.bf16.mxu0 0
        %9566 = vmatmul.mubr.bf16.gmra.mrb[0].mxu0 %v9505
        %v9567 = vpop.f32.mrb[0].mxu0
        %v9568 = vadd.f32 0.0, %v9567
        %v9569 = vpop.f32.mrb[0].mxu0
        %v9570 = vpop.f32.mrb[0].mxu0
        %v9571 = vadd.f32 0.0, %v9570
        %v9572 = vpop.f32.mrb[0].mxu0
        %9573 = vmatprep.mubr.bf16.mxu0 0
        %9574 = vmatmul.mubr.bf16.gmra.mrb[0].mxu0 %v9508
        %v9575 = vpop.f32.mrb[0].mxu0
        %v9576 = vadd.f32 0.0, %v9575
        %v9577 = vpop.f32.mrb[0].mxu0
        %v9578 = vpop.f32.mrb[0].mxu0
        %v9579 = vadd.f32 0.0, %v9578
        %v9580 = vpop.f32.mrb[0].mxu0
        %9581 = vmatprep.mubr.bf16.mxu0 0
        %9582 = vmatmul.mubr.bf16.gmra.mrb[0].mxu0 %v9511
        %v9583 = vpop.f32.mrb[0].mxu0
        %v9584 = vadd.f32 0.0, %v9583
        %v9585 = vpop.f32.mrb[0].mxu0
        %v9586 = vpop.f32.mrb[0].mxu0
        %v9587 = vadd.f32 0.0, %v9586
        %v9588 = vpop.f32.mrb[0].mxu0
        %9589 = vmatprep.mubr.bf16.mxu0 0
        %9590 = vmatmul.mubr.bf16.gmra.mrb[0].mxu0 %v9514
        %v9591 = vpop.f32.mrb[0].mxu0
        %v9592 = vadd.f32 0.0, %v9591
        %v9593 = vpop.f32.mrb[0].mxu0
        %v9594 = vpop.f32.mrb[0].mxu0
        %v9595 = vadd.f32 0.0, %v9594
        %v9596 = vpop.f32.mrb[0].mxu0
        %9597 = vmatprep.mubr.bf16.mxu0 0
        %9598 = vmatmul.mubr.bf16.gmra.mrb[0].mxu0 %v9517
        %v9599 = vpop.f32.mrb[0].mxu0
        %v9600 = vadd.f32 0.0, %v9599
        %v9601 = vpop.f32.mrb[0].mxu0
        %v9602 = vpop.f32.mrb[0].mxu0
        %v9603 = vadd.f32 0.0, %v9602
        %v9604 = vpop.f32.mrb[0].mxu0
        %9605 = vmatprep.mubr.bf16.mxu0 0
        %9606 = vmatmul.mubr.bf16.gmra.mrb[0].mxu0 %v9520
        %v9607 = vpop.f32.mrb[0].mxu0
        %v9608 = vadd.f32 0.0, %v9607
        %v9609 = vpop.f32.mrb[0].mxu0
        %v9610 = vpop.f32.mrb[0].mxu0
        %v9611 = vadd.f32 0.0, %v9610
        %v9612 = vpop.f32.mrb[0].mxu0
        %9613 = vmatprep.mubr.bf16.mxu0 0
        %9614 = vmatmul.mubr.bf16.gmra.mrb[0].mxu0 %v9523
        %v9615 = vpop.f32.mrb[0].mxu0
        %v9616 = vadd.f32 0.0, %v9615
        %v9617 = vpop.f32.mrb[0].mxu0
        %v9618 = vpop.f32.mrb[0].mxu0
        %v9619 = vadd.f32 0.0, %v9618
        %v9620 = vpop.f32.mrb[0].mxu0
        %9621 = vdwg.mxu0
        %v9630 = vunpack.c.l.b16 %v8599
        %v9631 = vunpack.c.l.b16 %v8600
        %v9632 = vunpack.c.l.b16 %v8601
        %v9633 = vunpack.c.l.b16 %v8602
        %v9634 = vunpack.c.l.b16 %v8603
        %v9635 = vunpack.c.l.b16 %v8604
        %v9636 = vunpack.c.l.b16 %v8605
        %v9637 = vunpack.c.l.b16 %v8606
        %v9638 = vpack.c.b16 %v9631, %v9630
        %v9639 = vpack.c.b16 %v9633, %v9632
        %v9640 = vpack.c.b16 %v9635, %v9634
        %v9641 = vpack.c.b16 %v9637, %v9636
        %v9647 = vsel %vm4350, %v8535, 0
        %v9650 = vsel %vm4350, %v8536, 0
        %v9653 = vsel %vm4350, %v8537, 0
        %v9656 = vsel %vm4350, %v8538, 0
        %v9659 = vsel %vm4350, %v8539, 0
        %v9662 = vsel %vm4350, %v8540, 0
        %v9665 = vsel %vm4350, %v8541, 0
        %v9668 = vsel %vm4350, %v8542, 0
        %9670 = vmatprep.subr.bf16.mxu0 0
        %9671 = vmatpush1.bf16.msra.mxu0 %v9638
        %9672 = vmatprep.subr.bf16.mxu0 0
        %9673 = vmatpush1.bf16.msra.mxu0 %v9639
        %9674 = vmatprep.subr.bf16.mxu0 0
        %9675 = vmatpush1.bf16.msra.mxu0 %v9640
        %9676 = vmatprep.subr.bf16.mxu0 0
        %9677 = vmatpush1.bf16.msra.mxu0 %v9641
        %9678 = vmatprep.subr.bf16.mxu0 0
        %9679 = vmatpush1.bf16.msra.mxu0 0
        %9680 = vmatprep.subr.bf16.mxu0 0
        %9681 = vmatpush1.bf16.msra.mxu0 0
        %9682 = vmatprep.subr.bf16.mxu0 0
        %9683 = vmatpush1.bf16.msra.mxu0 0
        %9684 = vmatprep.subr.bf16.mxu0 0
        %9685 = vmatpush1.bf16.msra.mxu0 0
        %9686 = vmatprep.subr.bf16.mxu0 0
        %9687 = vmatpush1.bf16.msra.mxu0 0
        %9688 = vmatprep.subr.bf16.mxu0 0
        %9689 = vmatpush1.bf16.msra.mxu0 0
        %9690 = vmatprep.subr.bf16.mxu0 0
        %9691 = vmatpush1.bf16.msra.mxu0 0
        %9692 = vmatprep.subr.bf16.mxu0 0
        %9693 = vmatpush1.bf16.msra.mxu0 0
        %9694 = vmatprep.subr.bf16.mxu0 0
        %9695 = vmatpush1.bf16.msra.mxu0 0
        %9696 = vmatprep.subr.bf16.mxu0 0
        %9697 = vmatpush1.bf16.msra.mxu0 0
        %9698 = vmatprep.subr.bf16.mxu0 0
        %9699 = vmatpush1.bf16.msra.mxu0 0
        %9700 = vmatprep.subr.bf16.mxu0 0
        %9701 = vmatpush1.bf16.msra.mxu0 0
        %9702 = vmatprep.mubr.bf16.mxu0 0
        %9703 = vmatmul.mubr.bf16.gmra.mrb[0].mxu0 %v9647
        %v9704 = vpop.f32.mrb[0].mxu0
        %v9705 = vadd.f32 0.0, %v9704
        %v9706 = vpop.f32.mrb[0].mxu0
        %v9707 = vpop.f32.mrb[0].mxu0
        %v9708 = vadd.f32 0.0, %v9707
        %v9709 = vpop.f32.mrb[0].mxu0
        %9710 = vmatprep.mubr.bf16.mxu0 0
        %9711 = vmatmul.mubr.bf16.gmra.mrb[0].mxu0 %v9650
        %v9712 = vpop.f32.mrb[0].mxu0
        %v9713 = vadd.f32 0.0, %v9712
        %v9714 = vpop.f32.mrb[0].mxu0
        %v9715 = vpop.f32.mrb[0].mxu0
        %v9716 = vadd.f32 0.0, %v9715
        %v9717 = vpop.f32.mrb[0].mxu0
        %9718 = vmatprep.mubr.bf16.mxu0 0
        %9719 = vmatmul.mubr.bf16.gmra.mrb[0].mxu0 %v9653
        %v9720 = vpop.f32.mrb[0].mxu0
        %v9721 = vadd.f32 0.0, %v9720
        %v9722 = vpop.f32.mrb[0].mxu0
        %v9723 = vpop.f32.mrb[0].mxu0
        %v9724 = vadd.f32 0.0, %v9723
        %v9725 = vpop.f32.mrb[0].mxu0
        %9726 = vmatprep.mubr.bf16.mxu0 0
        %9727 = vmatmul.mubr.bf16.gmra.mrb[0].mxu0 %v9656
        %v9728 = vpop.f32.mrb[0].mxu0
        %v9729 = vadd.f32 0.0, %v9728
        %v9730 = vpop.f32.mrb[0].mxu0
        %v9731 = vpop.f32.mrb[0].mxu0
        %v9732 = vadd.f32 0.0, %v9731
        %v9733 = vpop.f32.mrb[0].mxu0
        %9734 = vmatprep.mubr.bf16.mxu0 0
        %9735 = vmatmul.mubr.bf16.gmra.mrb[0].mxu0 %v9659
        %v9736 = vpop.f32.mrb[0].mxu0
        %v9737 = vadd.f32 0.0, %v9736
        %v9738 = vpop.f32.mrb[0].mxu0
        %v9739 = vpop.f32.mrb[0].mxu0
        %v9740 = vadd.f32 0.0, %v9739
        %v9741 = vpop.f32.mrb[0].mxu0
        %9742 = vmatprep.mubr.bf16.mxu0 0
        %9743 = vmatmul.mubr.bf16.gmra.mrb[0].mxu0 %v9662
        %v9744 = vpop.f32.mrb[0].mxu0
        %v9745 = vadd.f32 0.0, %v9744
        %v9746 = vpop.f32.mrb[0].mxu0
        %v9747 = vpop.f32.mrb[0].mxu0
        %v9748 = vadd.f32 0.0, %v9747
        %v9749 = vpop.f32.mrb[0].mxu0
        %9750 = vmatprep.mubr.bf16.mxu0 0
        %9751 = vmatmul.mubr.bf16.gmra.mrb[0].mxu0 %v9665
        %v9752 = vpop.f32.mrb[0].mxu0
        %v9753 = vadd.f32 0.0, %v9752
        %v9754 = vpop.f32.mrb[0].mxu0
        %v9755 = vpop.f32.mrb[0].mxu0
        %v9756 = vadd.f32 0.0, %v9755
        %v9757 = vpop.f32.mrb[0].mxu0
        %9758 = vmatprep.mubr.bf16.mxu0 0
        %9759 = vmatmul.mubr.bf16.gmra.mrb[0].mxu0 %v9668
        %v9760 = vpop.f32.mrb[0].mxu0
        %v9761 = vadd.f32 0.0, %v9760
        %v9762 = vpop.f32.mrb[0].mxu0
        %v9763 = vpop.f32.mrb[0].mxu0
        %v9764 = vadd.f32 0.0, %v9763
        %v9765 = vpop.f32.mrb[0].mxu0
        %9766 = vdwg.mxu0
        %v9767 = vadd.f32 %v8690, %v8835
        %v9768 = vadd.f32 %v9767, %v8980
        %v9769 = vadd.f32 %v9768, %v9125
        %v9770 = vadd.f32 %v9769, %v9270
        %v9771 = vadd.f32 %v9770, %v9415
        %v9772 = vadd.f32 %v9771, %v9560
        %v9773 = vadd.f32 %v9772, %v9705
        %v9774 = vadd.f32 %v8693, %v8838
        %v9775 = vadd.f32 %v9774, %v8983
        %v9776 = vadd.f32 %v9775, %v9128
        %v9777 = vadd.f32 %v9776, %v9273
        %v9778 = vadd.f32 %v9777, %v9418
        %v9779 = vadd.f32 %v9778, %v9563
        %v9780 = vadd.f32 %v9779, %v9708
        %v9781 = vadd.f32 %v8698, %v8843
        %v9782 = vadd.f32 %v9781, %v8988
        %v9783 = vadd.f32 %v9782, %v9133
        %v9784 = vadd.f32 %v9783, %v9278
        %v9785 = vadd.f32 %v9784, %v9423
        %v9786 = vadd.f32 %v9785, %v9568
        %v9787 = vadd.f32 %v9786, %v9713
        %v9788 = vadd.f32 %v8701, %v8846
        %v9789 = vadd.f32 %v9788, %v8991
        %v9790 = vadd.f32 %v9789, %v9136
        %v9791 = vadd.f32 %v9790, %v9281
        %v9792 = vadd.f32 %v9791, %v9426
        %v9793 = vadd.f32 %v9792, %v9571
        %v9794 = vadd.f32 %v9793, %v9716
        %v9795 = vadd.f32 %v8706, %v8851
        %v9796 = vadd.f32 %v9795, %v8996
        %v9797 = vadd.f32 %v9796, %v9141
        %v9798 = vadd.f32 %v9797, %v9286
        %v9799 = vadd.f32 %v9798, %v9431
        %v9800 = vadd.f32 %v9799, %v9576
        %v9801 = vadd.f32 %v9800, %v9721
        %v9802 = vadd.f32 %v8709, %v8854
        %v9803 = vadd.f32 %v9802, %v8999
        %v9804 = vadd.f32 %v9803, %v9144
        %v9805 = vadd.f32 %v9804, %v9289
        %v9806 = vadd.f32 %v9805, %v9434
        %v9807 = vadd.f32 %v9806, %v9579
        %v9808 = vadd.f32 %v9807, %v9724
        %v9809 = vadd.f32 %v8714, %v8859
        %v9810 = vadd.f32 %v9809, %v9004
        %v9811 = vadd.f32 %v9810, %v9149
        %v9812 = vadd.f32 %v9811, %v9294
        %v9813 = vadd.f32 %v9812, %v9439
        %v9814 = vadd.f32 %v9813, %v9584
        %v9815 = vadd.f32 %v9814, %v9729
        %v9816 = vadd.f32 %v8717, %v8862
        %v9817 = vadd.f32 %v9816, %v9007
        %v9818 = vadd.f32 %v9817, %v9152
        %v9819 = vadd.f32 %v9818, %v9297
        %v9820 = vadd.f32 %v9819, %v9442
        %v9821 = vadd.f32 %v9820, %v9587
        %v9822 = vadd.f32 %v9821, %v9732
        %v9823 = vadd.f32 %v8722, %v8867
        %v9824 = vadd.f32 %v9823, %v9012
        %v9825 = vadd.f32 %v9824, %v9157
        %v9826 = vadd.f32 %v9825, %v9302
        %v9827 = vadd.f32 %v9826, %v9447
        %v9828 = vadd.f32 %v9827, %v9592
        %v9829 = vadd.f32 %v9828, %v9737
        %v9830 = vadd.f32 %v8725, %v8870
        %v9831 = vadd.f32 %v9830, %v9015
        %v9832 = vadd.f32 %v9831, %v9160
        %v9833 = vadd.f32 %v9832, %v9305
        %v9834 = vadd.f32 %v9833, %v9450
        %v9835 = vadd.f32 %v9834, %v9595
        %v9836 = vadd.f32 %v9835, %v9740
        %v9837 = vadd.f32 %v8730, %v8875
        %v9838 = vadd.f32 %v9837, %v9020
        %v9839 = vadd.f32 %v9838, %v9165
        %v9840 = vadd.f32 %v9839, %v9310
        %v9841 = vadd.f32 %v9840, %v9455
        %v9842 = vadd.f32 %v9841, %v9600
        %v9843 = vadd.f32 %v9842, %v9745
        %v9844 = vadd.f32 %v8733, %v8878
        %v9845 = vadd.f32 %v9844, %v9023
        %v9846 = vadd.f32 %v9845, %v9168
        %v9847 = vadd.f32 %v9846, %v9313
        %v9848 = vadd.f32 %v9847, %v9458
        %v9849 = vadd.f32 %v9848, %v9603
        %v9850 = vadd.f32 %v9849, %v9748
        %v9851 = vadd.f32 %v8738, %v8883
        %v9852 = vadd.f32 %v9851, %v9028
        %v9853 = vadd.f32 %v9852, %v9173
        %v9854 = vadd.f32 %v9853, %v9318
        %v9855 = vadd.f32 %v9854, %v9463
        %v9856 = vadd.f32 %v9855, %v9608
        %v9857 = vadd.f32 %v9856, %v9753
        %v9858 = vadd.f32 %v8741, %v8886
        %v9859 = vadd.f32 %v9858, %v9031
        %v9860 = vadd.f32 %v9859, %v9176
        %v9861 = vadd.f32 %v9860, %v9321
        %v9862 = vadd.f32 %v9861, %v9466
        %v9863 = vadd.f32 %v9862, %v9611
        %v9864 = vadd.f32 %v9863, %v9756
        %v9865 = vadd.f32 %v8746, %v8891
        %v9866 = vadd.f32 %v9865, %v9036
        %v9867 = vadd.f32 %v9866, %v9181
        %v9868 = vadd.f32 %v9867, %v9326
        %v9869 = vadd.f32 %v9868, %v9471
        %v9870 = vadd.f32 %v9869, %v9616
        %v9871 = vadd.f32 %v9870, %v9761
        %v9872 = vadd.f32 %v8749, %v8894
        %v9873 = vadd.f32 %v9872, %v9039
        %v9874 = vadd.f32 %v9873, %v9184
        %v9875 = vadd.f32 %v9874, %v9329
        %v9876 = vadd.f32 %v9875, %v9474
        %v9877 = vadd.f32 %v9876, %v9619
        %v9878 = vadd.f32 %v9877, %v9764
        %9879 = vst [vmem:[%s220] sm:$0xff] %v9773
        %9880 = vst [vmem:[%s220 + $0x8] sm:$0xff] %v9780
        %9881 = vst [vmem:[%s220 + $0x10] sm:$0xff] %v9787
        %9882 = vst [vmem:[%s220 + $0x18] sm:$0xff] %v9794
        %9883 = vst [vmem:[%s220 + $0x20] sm:$0xff] %v9801
        %9884 = vst [vmem:[%s220 + $0x28] sm:$0xff] %v9808
        %9885 = vst [vmem:[%s220 + $0x30] sm:$0xff] %v9815
        %9886 = vst [vmem:[%s220 + $0x38] sm:$0xff] %v9822
        %9887 = vst [vmem:[%s220 + $0x40] sm:$0xff] %v9829
        %9888 = vst [vmem:[%s220 + $0x48] sm:$0xff] %v9836
        %9889 = vst [vmem:[%s220 + $0x50] sm:$0xff] %v9843
        %9890 = vst [vmem:[%s220 + $0x58] sm:$0xff] %v9850
        %9891 = vst [vmem:[%s220 + $0x60] sm:$0xff] %v9857
        %9892 = vst [vmem:[%s220 + $0x68] sm:$0xff] %v9864
        %9893 = vst [vmem:[%s220 + $0x70] sm:$0xff] %v9871
        %9894 = vst [vmem:[%s220 + $0x78] sm:$0xff] %v9878
        %s9895 = sand.u32 %s137, 1
        %s9896 = scalar_lea.sflag [#allocation3], %s9895
        %s9897 = sand.u32 %s137, 1
        %s9898 = smul.addr %s9897, 128
        %s9899 = scalar_lea.vmem [#allocation2], %s9898
        // Predicated region
        $region41: #{attention_forward.1} parent=39 // pred_check
          %p9900 = pneg %p147
        $region42: #{attention_forward.1} parent=39 // pred_check_branch
          %9902 = sbr.rel (%p9900) target = $region44
        $region43: #{attention_forward.1} parent=39 // pred_region
          %s9903 = smul.u32 2, %s19
          %s9905 = ssub.s32 2048, 2048
          %9906 = vsyncadd %s9896, %s9905
          %s9907 = smul.addr %s9903, 8
          %s9908 = smul.addr %s9907, 128
          %s9909 = scalar_lea.hbm %s5, %s9908
          %s9910 = sshll.u32 %s9899, 4
          %s9911 = int_to_ptr.vmem [resolvable:$true] %s9910
          %9916 = dma.vmem_to_hbm [thread:$0]  %s9911, 2048, %s9909, %s9896, 128, 128, 8
        $region44: #{attention_forward.1} parent=39 // pred_fallthru
          _
      $region40: #{attention_forward.1} parent=5 // pred_fallthru
        _
      %p9917 = scmp.le.s32.totalorder 2, %s14
      // Predicated region
      $region45: #{attention_forward.1} parent=5 // pred_check
        %p9918 = pneg %p9917
      $region46: #{attention_forward.1} parent=5 // pred_check_branch
        %9920 = sbr.rel (%p9918) target = $region48
      $region47: #{attention_forward.1} parent=5 // pred_region
        %s9921 = ssub.s32 %s14, 2
        // Predicated region
        $region49: #{attention_forward.1} parent=47 // pred_check
          %p9922 = pneg %p153
        $region50: #{attention_forward.1} parent=47 // pred_check_branch
          %9924 = sbr.rel (%p9922) target = $region52
        $region51: #{attention_forward.1} parent=47 // pred_region
          %s9925 = sand.u32 %s138, 1
          %s9926 = scalar_lea.sflag [#allocation3], %s9925
          %s9927 = sand.u32 %s138, 1
          %s9928 = smul.addr %s9927, 128
          %s9929 = scalar_lea.vmem [#allocation2], %s9928
          %9930 = dma.done %s9926, 2048
        $region52: #{attention_forward.1} parent=47 // pred_fallthru
          _
      $region48: #{attention_forward.1} parent=5 // pred_fallthru
        _
    $region6: #{attention_forward.1} parent=1 // loop_footer
      %s18 = sadd.s32 1, %s14
    $region7: #{attention_forward.1} parent=1 // loop_footer_branch
      %13 = sbr.rel target = $region3
    $region8: #{attention_forward.1} parent=1 // loop_exit
      _
    %9931 = vsyncpa [#allocation3], 1
    %s9932 = scalar_lea.sflag [#allocation3], 1
    %9933 = vsyncpa %s9932, 1

</llo_original>
